<compile_context>
chip_gen: v5e
topology: v5e:2x2
jax: 0.10.0
libtpu: 0.0.40
codegen_flags: <defaults>
</compile_context>

<pallas_src>
import functools

import numpy as np
import jax
import jax.numpy as jnp
from jax.experimental import pallas as pl
from jax.experimental.pallas import tpu as pltpu

# ----------------------------- model configuration -----------------------------
IN_CH = 1
EMBED = 32
DEPTHS = (1, 1, 1, 1)          # one (un-shifted) Swin block per stage
HEADS = (1, 2, 4, 8)
PATCH = (2, 2, 2)
WINDOW = (2, 2, 2)
DECODE_CH = 32
NUM_CLASSES = 2
POOL_SCALES = (1, 2)


def _round_up(x, m):
    return (x + m - 1) // m * m


def _choose_tm(M, tm_max=2048):
    """Row-block size: big blocks, but >=2 grid steps for moderately large M (v7x dual-TC)."""
    if M <= 256:
        return _round_up(M, 8)
    return min(tm_max, _round_up((M + 1) // 2, 8))


# ------------------ Pallas kernel: (LN?) -> matmul + bias + act (+ post-LN) ------------------
def _mm_kernel(*refs, act, has_ln, has_post_ln, eps=1e-5):
    it = iter(refs)
    a_ref = next(it)
    b_ref = next(it)
    bias_ref = next(it)
    g_ref = bt_ref = pg_ref = pb_ref = None
    if has_ln:
        g_ref = next(it)
        bt_ref = next(it)
    if has_post_ln:
        pg_ref = next(it)
        pb_ref = next(it)
    o_ref = next(it)

    a = a_ref[...]
    if has_ln:
        a = a.astype(jnp.float32)
        mu = jnp.mean(a, axis=-1, keepdims=True)
        ac = a - mu
        var = jnp.mean(ac * ac, axis=-1, keepdims=True)
        a = ac * jax.lax.rsqrt(var + eps) * g_ref[...] + bt_ref[...]
    out = jnp.dot(a.astype(jnp.bfloat16), b_ref[...], preferred_element_type=jnp.float32)
    out = out + bias_ref[...]
    if act == "relu":
        out = jnp.maximum(out, 0.0)
    elif act == "gelu":
        out = jax.nn.gelu(out)     # tanh approximation (EUP friendly)
    if has_post_ln:
        mu = jnp.mean(out, axis=-1, keepdims=True)
        oc = out - mu
        var = jnp.mean(oc * oc, axis=-1, keepdims=True)
        out = oc * jax.lax.rsqrt(var + eps) * pg_ref[...] + pb_ref[...]
    o_ref[...] = out.astype(o_ref.dtype)


def matmul_bias_act(a, b, bias=None, act=None, ln=None, post_ln=None,
                    out_dtype=jnp.bfloat16):
    """y = post_LN?(act(LN?(a) @ b + bias)).  a:(M,K) b:(K,N) -> (M,N) out_dtype.

    Full-K / full-N blocks (K, N <= ~1024 in this model); only M is tiled/padded.
    bf16 operands into the MXU, f32 accumulation, bf16 (by default) back to HBM."""
    M, K = a.shape
    K2, N = b.shape
    assert K == K2
    if bias is None:
        bias = jnp.zeros((N,), jnp.float32)
    tm = _choose_tm(M)
    Mp = _round_up(M, tm)

    a_in = a.astype(jnp.bfloat16)
    if Mp != M:
        a_in = jnp.pad(a_in, ((0, Mp - M), (0, 0)))

    inputs = [a_in, b.astype(jnp.bfloat16), bias.astype(jnp.float32).reshape(1, N)]
    in_specs = [
        pl.BlockSpec((tm, K), lambda i: (i, 0)),
        pl.BlockSpec((K, N), lambda i: (0, 0)),
        pl.BlockSpec((1, N), lambda i: (0, 0)),
    ]
    if ln is not None:
        g, be = ln
        inputs += [g.astype(jnp.float32).reshape(1, K),
                   be.astype(jnp.float32).reshape(1, K)]
        in_specs += [pl.BlockSpec((1, K), lambda i: (0, 0)),
                     pl.BlockSpec((1, K), lambda i: (0, 0))]
    if post_ln is not None:
        g, be = post_ln
        inputs += [g.astype(jnp.float32).reshape(1, N),
                   be.astype(jnp.float32).reshape(1, N)]
        in_specs += [pl.BlockSpec((1, N), lambda i: (0, 0)),
                     pl.BlockSpec((1, N), lambda i: (0, 0))]

    out = pl.pallas_call(
        functools.partial(_mm_kernel, act=act, has_ln=ln is not None,
                          has_post_ln=post_ln is not None),
        out_shape=jax.ShapeDtypeStruct((Mp, N), out_dtype),
        grid_spec=pltpu.PrefetchScalarGridSpec(
            num_scalar_prefetch=0,
            grid=(Mp // tm,),
            in_specs=in_specs,
            out_specs=pl.BlockSpec((tm, N), lambda i: (i, 0)),
        ),
        compiler_params=pltpu.CompilerParams(dimension_semantics=("parallel",)),
    )(*inputs)
    return out[:M] if Mp != M else out


# ----------------------------- Pallas kernel: LayerNorm -----------------------------
def _layernorm_kernel(x_ref, g_ref, b_ref, o_ref, *, eps):
    x = x_ref[...].astype(jnp.float32)
    mu = jnp.mean(x, axis=-1, keepdims=True)
    xc = x - mu
    var = jnp.mean(xc * xc, axis=-1, keepdims=True)
    o_ref[...] = (xc * jax.lax.rsqrt(var + eps) * g_ref[...] + b_ref[...]).astype(o_ref.dtype)


def layernorm(x, gamma, beta, eps=1e-5, out_dtype=jnp.bfloat16):
    """Row-wise LayerNorm of a (M, C) token matrix."""
    M, C = x.shape
    tm = _choose_tm(M)
    Mp = _round_up(M, tm)
    x_in = x.astype(jnp.bfloat16)
    if Mp != M:
        x_in = jnp.pad(x_in, ((0, Mp - M), (0, 0)))
    out = pl.pallas_call(
        functools.partial(_layernorm_kernel, eps=eps),
        out_shape=jax.ShapeDtypeStruct((Mp, C), out_dtype),
        grid_spec=pltpu.PrefetchScalarGridSpec(
            num_scalar_prefetch=0,
            grid=(Mp // tm,),
            in_specs=[pl.BlockSpec((tm, C), lambda i: (i, 0)),
                      pl.BlockSpec((1, C), lambda i: (0, 0)),
                      pl.BlockSpec((1, C), lambda i: (0, 0))],
            out_specs=pl.BlockSpec((tm, C), lambda i: (i, 0)),
        ),
        compiler_params=pltpu.CompilerParams(dimension_semantics=("parallel",)),
    )(x_in,
      gamma.astype(jnp.float32).reshape(1, C),
      beta.astype(jnp.float32).reshape(1, C))
    return out[:M] if Mp != M else out


# ---------------- Pallas kernel: fully fused Swin block (LN->qkv->attn->proj->MLP) -----------
def _swin_block_kernel(x_ref, ln1g_ref, ln1b_ref, wqkv_ref, bqkv_ref, bias_ref,
                       wproj_ref, bproj_ref, ln2g_ref, ln2b_ref,
                       wfc1_ref, bfc1_ref, wfc2_ref, bfc2_ref, o_ref,
                       *, num_heads, window_tokens, eps=1e-5):
    Mb, C = x_ref.shape
    T = window_tokens
    NWb = Mb // T
    Dh = C // num_heads
    scale = float(Dh) ** -0.5

    def ln(v, g, b):
        mu = jnp.mean(v, axis=-1, keepdims=True)
        vc = v - mu
        var = jnp.mean(vc * vc, axis=-1, keepdims=True)
        return vc * jax.lax.rsqrt(var + eps) * g + b

    x = x_ref[...].astype(jnp.float32)                         # (Mb, C) residual basis

    # --- attention branch: LN1 -> qkv -> per-window softmax(QK^T)V -> proj + residual ---
    h = ln(x, ln1g_ref[...], ln1b_ref[...])
    qkv = jnp.dot(h.astype(jnp.bfloat16), wqkv_ref[...],
                  preferred_element_type=jnp.float32) + bqkv_ref[...]     # (Mb, 3C)
    qkv3 = qkv.reshape(NWb, T, 3 * C)                          # window-batched view

    head_outs = []
    for hd in range(num_heads):
        q = qkv3[:, :, hd * Dh:(hd + 1) * Dh] * scale
        k = qkv3[:, :, C + hd * Dh:C + (hd + 1) * Dh]
        v = qkv3[:, :, 2 * C + hd * Dh:2 * C + (hd + 1) * Dh]
        s = jnp.einsum("nqd,nkd->nqk", q.astype(jnp.bfloat16), k.astype(jnp.bfloat16),
                       preferred_element_type=jnp.float32)     # (NWb, T, T)
        s = s + bias_ref[hd]
        s = s - jnp.max(s, axis=-1, keepdims=True)
        p = jnp.exp(s)
        p = p * pl.reciprocal(jnp.sum(p, axis=-1, keepdims=True), approx=True)
        head_outs.append(
            jnp.einsum("nqk,nkd->nqd", p.astype(jnp.bfloat16), v.astype(jnp.bfloat16),
                       preferred_element_type=jnp.float32))    # (NWb, T, Dh)
    attn = head_outs[0] if num_heads == 1 else jnp.concatenate(head_outs, axis=-1)
    attn = attn.reshape(Mb, C)

    x1 = x + jnp.dot(attn.astype(jnp.bfloat16), wproj_ref[...],
                     preferred_element_type=jnp.float32) + bproj_ref[...]

    # --- MLP branch: LN2 -> fc1 -> gelu -> fc2 + residual ---
    h2 = ln(x1, ln2g_ref[...], ln2b_ref[...])
    h2 = jnp.dot(h2.astype(jnp.bfloat16), wfc1_ref[...],
                 preferred_element_type=jnp.float32) + bfc1_ref[...]
    h2 = jax.nn.gelu(h2)
    x2 = x1 + jnp.dot(h2.astype(jnp.bfloat16), wfc2_ref[...],
                      preferred_element_type=jnp.float32) + bfc2_ref[...]

    o_ref[...] = x2.astype(o_ref.dtype)


# ----------------------------- Pallas kernel: 3x3x3 conv (streamed, no im2col) -------------------
def _conv3_kernel(*refs, R, Wp, HpWp, act, has_cls):
    it = iter(refs)
    x_ref = next(it)
    w_ref = next(it)
    b_ref = next(it)
    w2_ref = b2_ref = None
    if has_cls:
        w2_ref = next(it)
        b2_ref = next(it)
    o_ref = next(it)

    Cout = w_ref.shape[-1]
    acc = jnp.zeros((R, Cout), jnp.float32)
    t = 0
    for kd in range(3):
        for kh in range(3):
            for kw in range(3):
                off = kd * HpWp + kh * Wp + kw
                a = x_ref[0, off:off + R, :]                      # shifted row window (VMEM)
                acc = acc + jnp.dot(a, w_ref[t], preferred_element_type=jnp.float32)
                t += 1
    acc = acc + b_ref[...]
    if act == "relu":
        acc = jnp.maximum(acc, 0.0)
    if has_cls:                                                   # fused 1x1 classifier epilogue
        acc = jnp.dot(acc.astype(jnp.bfloat16), w2_ref[...],
                      preferred_element_type=jnp.float32) + b2_ref[...]
    o_ref[0] = acc.astype(o_ref.dtype)


def conv3x3(x, w, b, act=None, w2=None, b2=None, out_dtype=jnp.bfloat16):
    """3x3x3 conv, stride 1, pad 1, channels-last x: (B, D, H, W, Cin).
    w: (Cout, Cin, 3, 3, 3) (torch layout).  Accumulates 27 shifted matmuls in one kernel.
    Optional fused pointwise epilogue: y = (relu(conv(x)) @ w2 + b2)."""
    B, D, H, W, Cin = x.shape
    Cout = w.shape[0]
    Hp, Wp = H + 2, W + 2
    # pad D by (1, 2) so every shifted flat row window stays in range
    xp = jnp.pad(x.astype(jnp.bfloat16), ((0, 0), (1, 2), (1, 1), (1, 1), (0, 0)))
    Rtot = (D + 3) * Hp * Wp
    R = D * Hp * Wp                                               # rows computed (incl. junk edges)
    xflat = xp.reshape(B, Rtot, Cin)
    wt = jnp.transpose(w, (2, 3, 4, 1, 0)).reshape(27, Cin, Cout).astype(jnp.bfloat16)

    inputs = [xflat, wt, b.astype(jnp.float32).reshape(1, Cout)]
    in_specs = [pl.BlockSpec((1, Rtot, Cin), lambda i: (i, 0, 0)),
                pl.BlockSpec((27, Cin, Cout), lambda i: (0, 0, 0)),
                pl.BlockSpec((1, Cout), lambda i: (0, 0))]
    has_cls = w2 is not None
    Nout = Cout
    if has_cls:
        Nout = w2.shape[1]
        inputs += [w2.astype(jnp.bfloat16), b2.astype(jnp.float32).reshape(1, Nout)]
        in_specs += [pl.BlockSpec((Cout, Nout), lambda i: (0, 0)),
                     pl.BlockSpec((1, Nout), lambda i: (0, 0))]

    out = pl.pallas_call(
        functools.partial(_conv3_kernel, R=R, Wp=Wp, HpWp=Hp * Wp, act=act, has_cls=has_cls),
        out_shape=jax.ShapeDtypeStruct((B, R, Nout), out_dtype),
        grid_spec=pltpu.PrefetchScalarGridSpec(
            num_scalar_prefetch=0,
            grid=(B,),
            in_specs=in_specs,
            out_specs=pl.BlockSpec((1, R, Nout), lambda i: (i, 0, 0)),
        ),
        compiler_params=pltpu.CompilerParams(dimension_semantics=("parallel",)),
    )(*inputs)
    out = out.reshape(B, D, Hp, Wp, Nout)[:, :, :H, :W, :]
    return out


def conv1x1(x, w, b, act=None, ln=None, out_dtype=jnp.bfloat16):
    """1x1x1 conv on channels-last x: (B, D, H, W, Cin); w: (Cin, Cout). Optional fused LN prologue."""
    B, D, H, W, C = x.shape
    out = matmul_bias_act(x.reshape(-1, C), w, b, act=act, ln=ln, out_dtype=out_dtype)
    return out.reshape(B, D, H, W, -1)


# ----------------------------- glue: windows, pooling, resize -----------------------------
def window_partition(x, window):
    B, D, H, W, C = x.shape
    wd, wh, ww = window
    x = x.reshape(B, D // wd, wd, H // wh, wh, W // ww, ww, C)
    x = x.transpose(0, 1, 3, 5, 2, 4, 6, 7)
    return x.reshape(-1, wd * wh * ww, C)


def window_reverse(win, window, B, D, H, W):
    wd, wh, ww = window
    C = win.shape[-1]
    x = win.reshape(B, D // wd, H // wh, W // ww, wd, wh, ww, C)
    x = x.transpose(0, 1, 4, 2, 5, 3, 6, 7)
    return x.reshape(B, D, H, W, C)


def _rel_pos_index(window):
    wd, wh, ww = window
    coords = np.stack(np.meshgrid(np.arange(wd), np.arange(wh), np.arange(ww), indexing="ij"))
    cf = coords.reshape(3, -1)
    rel = (cf[:, :, None] - cf[:, None, :]).transpose(1, 2, 0).astype(np.int64)
    rel[..., 0] += wd - 1
    rel[..., 1] += wh - 1
    rel[..., 2] += ww - 1
    rel[..., 0] *= (2 * wh - 1) * (2 * ww - 1)
    rel[..., 1] *= (2 * ww - 1)
    return rel.sum(-1)   # (T, T)


def adaptive_avg_pool3d(x, s):
    B, D, H, W, C = x.shape
    x = x.reshape(B, s, D // s, s, H // s, s, W // s, C)
    return x.mean(axis=(2, 4, 6))


def resize_trilinear(x, size):
    B = x.shape[0]
    C = x.shape[-1]
    return jax.image.resize(x, (B,) + tuple(size) + (C,), method="trilinear")


# ----------------------------- Swin backbone -----------------------------
def patch_embed(x, p):
    """x: (B, Cin, D, H, W) -> tokens (B, D/pd, H/ph, W/pw, EMBED) bf16."""
    B, Cin, D, H, W = x.shape
    pd, ph, pw = PATCH
    x = x.reshape(B, Cin, D // pd, pd, H // ph, ph, W // pw, pw)
    x = x.transpose(0, 2, 4, 6, 1, 3, 5, 7)
    tok = x.reshape(-1, Cin * pd * ph * pw)
    # projection with the embedding LayerNorm fused as an epilogue
    tok = matmul_bias_act(tok, p["w_proj"], p["b_proj"],
                          post_ln=(p["norm_g"], p["norm_b"]))
    return tok.reshape(B, D // pd, H // ph, W // pw, EMBED)


def swin_block(x, p, num_heads):
    """One (un-shifted) Swin block, fully fused into a single Pallas kernel."""
    B, D, H, W, C = x.shape
    T = WINDOW[0] * WINDOW[1] * WINDOW[2]

    win = window_partition(x.astype(jnp.bfloat16), WINDOW)       # (NW, T, C)
    NW = win.shape[0]
    M = NW * T
    tok = win.reshape(M, C)

    bias = p["rel_bias_table"][p["rel_index"]]                   # (T, T, nH)
    bias = jnp.transpose(bias, (2, 0, 1)).astype(jnp.float32)    # (nH, T, T)

    nblk = 2 if NW >= 2 else 1                                   # >=2 parallel steps for v7x
    Mb = M // nblk

    weights = [
        p["ln1_g"].astype(jnp.float32).reshape(1, C),
        p["ln1_b"].astype(jnp.float32).reshape(1, C),
        p["w_qkv"].astype(jnp.bfloat16),
        p["b_qkv"].astype(jnp.float32).reshape(1, 3 * C),
        bias,
        p["w_proj"].astype(jnp.bfloat16),
        p["b_proj"].astype(jnp.float32).reshape(1, C),
        p["ln2_g"].astype(jnp.float32).reshape(1, C),
        p["ln2_b"].astype(jnp.float32).reshape(1, C),
        p["w_fc1"].astype(jnp.bfloat16),
        p["b_fc1"].astype(jnp.float32).reshape(1, 4 * C),
        p["w_fc2"].astype(jnp.bfloat16),
        p["b_fc2"].astype(jnp.float32).reshape(1, C),
    ]
    w_specs = [
        pl.BlockSpec((1, C), lambda i: (0, 0)),
        pl.BlockSpec((1, C), lambda i: (0, 0)),
        pl.BlockSpec((C, 3 * C), lambda i: (0, 0)),
        pl.BlockSpec((1, 3 * C), lambda i: (0, 0)),
        pl.BlockSpec((num_heads, T, T), lambda i: (0, 0, 0)),
        pl.BlockSpec((C, C), lambda i: (0, 0)),
        pl.BlockSpec((1, C), lambda i: (0, 0)),
        pl.BlockSpec((1, C), lambda i: (0, 0)),
        pl.BlockSpec((1, C), lambda i: (0, 0)),
        pl.BlockSpec((C, 4 * C), lambda i: (0, 0)),
        pl.BlockSpec((1, 4 * C), lambda i: (0, 0)),
        pl.BlockSpec((4 * C, C), lambda i: (0, 0)),
        pl.BlockSpec((1, C), lambda i: (0, 0)),
    ]

    out = pl.pallas_call(
        functools.partial(_swin_block_kernel, num_heads=num_heads, window_tokens=T),
        out_shape=jax.ShapeDtypeStruct((M, C), jnp.bfloat16),
        grid_spec=pltpu.PrefetchScalarGridSpec(
            num_scalar_prefetch=0,
            grid=(nblk,),
            in_specs=[pl.BlockSpec((Mb, C), lambda i: (i, 0))] + w_specs,
            out_specs=pl.BlockSpec((Mb, C), lambda i: (i, 0)),
        ),
        compiler_params=pltpu.CompilerParams(dimension_semantics=("parallel",)),
    )(tok, *weights)

    return window_reverse(out.reshape(NW, T, C), WINDOW, B, D, H, W)


def patch_merging(x, p):
    B, D, H, W, C = x.shape
    parts = []
    for i in range(2):
        for j in range(2):
            for k in range(2):
                parts.append(x[:, i::2, j::2, k::2, :])
    cat = jnp.concatenate(parts, axis=-1)                # (B, D/2, H/2, W/2, 8C)
    tok = cat.reshape(-1, 8 * C)
    tok = matmul_bias_act(tok, p["w_reduce"], None, ln=(p["norm_g"], p["norm_b"]))
    return tok.reshape(B, D // 2, H // 2, W // 2, 2 * C)


def backbone_forward(x_ncdhw, p):
    """Returns raw (pre-out-norm) per-stage feature maps, channels-last bf16."""
    x = patch_embed(x_ncdhw, p["patch_embed"])
    stage_raw = []
    for i in range(4):
        sp = p["stages"][i]
        for blk in sp["blocks"]:
            x = swin_block(x, blk, HEADS[i])
        stage_raw.append(x)
        if i < 3:
            x = patch_merging(x, sp["merge"])
    return stage_raw


# ----------------------------- UperNet3D decode head (channels-last) -----------------------------
def decode_head_forward(stage_raw, stage_norms, p):
    # stage-3 out-norm is applied standalone (it feeds pooling + direct concat use);
    # stage 0-2 out-norms are fused into the lateral 1x1 convs below.
    x3 = stage_raw[3]
    B, D, H, W, C = x3.shape
    g3, b3 = stage_norms[3]
    x = layernorm(x3.reshape(-1, C), g3, b3).reshape(B, D, H, W, C)

    psp_outs = [x]
    for s, pp in zip(POOL_SCALES, p["psp"]):
        pooled = adaptive_avg_pool3d(x, s)
        conv = conv1x1(pooled, pp["w"], pp["b"], act="relu")
        psp_outs.append(resize_trilinear(conv, (D, H, W)))
    psp_cat = jnp.concatenate([o.astype(jnp.bfloat16) for o in psp_outs], axis=-1)
    psp_out = conv3x3(psp_cat, p["psp_bottleneck_w"], p["psp_bottleneck_b"], act="relu")

    laterals = []
    for i in range(3):
        gi, bi = stage_norms[i]
        laterals.append(conv1x1(stage_raw[i], p["lateral"][i]["w"], p["lateral"][i]["b"],
                                act="relu", ln=(gi, bi)))
    laterals.append(psp_out)

    # top-down pathway
    for i in range(3, 0, -1):
        size = laterals[i - 1].shape[1:4]
        laterals[i - 1] = (laterals[i - 1] +
                           resize_trilinear(laterals[i], size)).astype(jnp.bfloat16)

    fpn_outs = [conv3x3(laterals[i], p["fpn"][i]["w"], p["fpn"][i]["b"], act="relu")
                for i in range(3)]
    fpn_outs.append(laterals[3])
    size0 = fpn_outs[0].shape[1:4]
    fpn_outs = [fpn_outs[0]] + [resize_trilinear(f, size0) for f in fpn_outs[1:]]
    cat = jnp.concatenate([f.astype(jnp.bfloat16) for f in fpn_outs], axis=-1)
    # fpn_bottleneck 3x3x3 conv with the 1x1 classifier fused into its epilogue
    out = conv3x3(cat, p["fpn_bottleneck_w"], p["fpn_bottleneck_b"], act="relu",
                  w2=p["cls_w"], b2=p["cls_b"], out_dtype=jnp.float32)
    return out                                           # (B, D0, H0, W0, NUM_CLASSES) f32


# ----------------------------- full model forward -----------------------------
def upernet_swin_forward(x_in, params):
    """x_in: (B, C_in, H, W, D)  ->  (B, NUM_CLASSES, H/2, W/2, D/2)."""
    x = jnp.transpose(x_in, (0, 1, 4, 2, 3))             # (B, C_in, D, H, W)
    stage_raw = backbone_forward(x, params["backbone"])
    stage_norms = [(s["out_norm_g"], s["out_norm_b"]) for s in params["backbone"]["stages"]]
    y = decode_head_forward(stage_raw, stage_norms, params["decode_head"])   # (B, D', H', W', cls)
    return jnp.transpose(y, (0, 4, 2, 3, 1))             # (B, cls, H', W', D')


# ----------------------------- deterministic parameter init -----------------------------
class ParamFactory:
    def __init__(self, seed):
        self.key = jax.random.PRNGKey(seed)
        self.count = 0

    def __call__(self, shape, scale=0.02):
        self.count += 1
        k = jax.random.fold_in(self.key, self.count)
        return scale * jax.random.normal(k, shape, dtype=jnp.float32)


def init_params():
    pf = ParamFactory(1234)
    rel_index = _rel_pos_index(WINDOW)
    n_rel = (2 * WINDOW[0] - 1) * (2 * WINDOW[1] - 1) * (2 * WINDOW[2] - 1)

    backbone = {
        "patch_embed": dict(
            w_proj=pf((IN_CH * PATCH[0] * PATCH[1] * PATCH[2], EMBED)),
            b_proj=jnp.zeros((EMBED,), jnp.float32),
            norm_g=jnp.ones((EMBED,), jnp.float32),
            norm_b=jnp.zeros((EMBED,), jnp.float32)),
        "stages": [],
    }
    C = EMBED
    for i in range(4):
        blocks = []
        for _ in range(DEPTHS[i]):
            blocks.append(dict(
                ln1_g=jnp.ones((C,), jnp.float32), ln1_b=jnp.zeros((C,), jnp.float32),
                w_qkv=pf((C, 3 * C)), b_qkv=jnp.zeros((3 * C,), jnp.float32),
                rel_bias_table=pf((n_rel, HEADS[i])), rel_index=rel_index,
                w_proj=pf((C, C)), b_proj=jnp.zeros((C,), jnp.float32),
                ln2_g=jnp.ones((C,), jnp.float32), ln2_b=jnp.zeros((C,), jnp.float32),
                w_fc1=pf((C, 4 * C)), b_fc1=jnp.zeros((4 * C,), jnp.float32),
                w_fc2=pf((4 * C, C)), b_fc2=jnp.zeros((C,), jnp.float32)))
        stage = dict(blocks=blocks,
                     out_norm_g=jnp.ones((C,), jnp.float32),
                     out_norm_b=jnp.zeros((C,), jnp.float32))
        if i < 3:
            stage["merge"] = dict(
                norm_g=jnp.ones((8 * C,), jnp.float32),
                norm_b=jnp.zeros((8 * C,), jnp.float32),
                w_reduce=pf((8 * C, 2 * C)))
            C *= 2
        backbone["stages"].append(stage)

    in_chs = [EMBED, 2 * EMBED, 4 * EMBED, 8 * EMBED]
    decode = dict(
        psp=[dict(w=pf((in_chs[-1], DECODE_CH)), b=jnp.zeros((DECODE_CH,), jnp.float32))
             for _ in POOL_SCALES],
        psp_bottleneck_w=pf((DECODE_CH, in_chs[-1] + DECODE_CH * len(POOL_SCALES), 3, 3, 3)),
        psp_bottleneck_b=jnp.zeros((DECODE_CH,), jnp.float32),
        lateral=[dict(w=pf((in_chs[i], DECODE_CH)), b=jnp.zeros((DECODE_CH,), jnp.float32))
                 for i in range(3)],
        fpn=[dict(w=pf((DECODE_CH, DECODE_CH, 3, 3, 3)), b=jnp.zeros((DECODE_CH,), jnp.float32))
             for _ in range(3)],
        fpn_bottleneck_w=pf((DECODE_CH, DECODE_CH * 4, 3, 3, 3)),
        fpn_bottleneck_b=jnp.zeros((DECODE_CH,), jnp.float32),
        cls_w=pf((DECODE_CH, NUM_CLASSES)),
        cls_b=jnp.zeros((NUM_CLASSES,), jnp.float32))

    return {"backbone": backbone, "decode_head": decode}


# ----------------------------- main -----------------------------
if __name__ == "__main__":
    params = init_params()
    # input (B, C_in, H, W, D)
    x = jax.random.normal(jax.random.PRNGKey(0), (1, IN_CH, 32, 32, 32), dtype=jnp.float32)
    y = upernet_swin_forward(x, params)
    y = jax.block_until_ready(y)
    assert y.shape == (1, NUM_CLASSES, 16, 16, 16), y.shape
    assert bool(jnp.all(jnp.isfinite(y)))
    print("KERNEL_OK")
</pallas_src>

<mosaic_0001>
module attributes {stable_mosaic.version = 11 : i64} {
  func.func @_mm_kernel(%arg0: i32, %arg1: memref<2048x8xbf16, #tpu.memory_space<vmem>>, %arg2: memref<8x32xbf16, #tpu.memory_space<vmem>>, %arg3: memref<1x32xf32, #tpu.memory_space<vmem>>, %arg4: memref<1x32xf32, #tpu.memory_space<vmem>>, %arg5: memref<1x32xf32, #tpu.memory_space<vmem>>, %arg6: memref<2048x32xbf16, #tpu.memory_space<vmem>>) attributes {dimension_semantics = [#tpu.dimension_semantics<parallel>], iteration_bounds = array<i64: 2>, scalar_prefetch = 0 : i64, scratch_operands = 0 : i64, tpu.core_type = #tpu.core_type<tc>, window_params = [{transform_indices = @transform_0, window_bounds = array<i64: 2048, 8>}, {pipeline_mode = #tpu.pipeline_mode<synchronous>, transform_indices = @transform_1, window_bounds = array<i64: 8, 32>}, {pipeline_mode = #tpu.pipeline_mode<synchronous>, transform_indices = @transform_2, window_bounds = array<i64: 1, 32>}, {pipeline_mode = #tpu.pipeline_mode<synchronous>, transform_indices = @transform_3, window_bounds = array<i64: 1, 32>}, {pipeline_mode = #tpu.pipeline_mode<synchronous>, transform_indices = @transform_4, window_bounds = array<i64: 1, 32>}, {transform_indices = @transform_5, window_bounds = array<i64: 2048, 32>}]} {
    %c0 = arith.constant 0 : index
    %c0_0 = arith.constant 0 : index
    %0 = vector.load %arg1[%c0, %c0_0] : memref<2048x8xbf16, #tpu.memory_space<vmem>>, vector<2048x8xbf16>
    %c0_1 = arith.constant 0 : index
    %c0_2 = arith.constant 0 : index
    %1 = vector.load %arg2[%c0_1, %c0_2] : memref<8x32xbf16, #tpu.memory_space<vmem>>, vector<8x32xbf16>
    %cst = arith.constant dense<0.000000e+00> : vector<2048x32xf32>
    %2 = tpu.matmul %0, %1, %cst {dimension_numbers = #tpu.dot_dimension_numbers<[1], [0], [0], [1], [0, 0, 1, 1], [], []>} : vector<2048x8xbf16>, vector<8x32xbf16>, vector<2048x32xf32> -> vector<2048x32xf32>
    %c0_3 = arith.constant 0 : index
    %c0_4 = arith.constant 0 : index
    %3 = vector.load %arg3[%c0_3, %c0_4] : memref<1x32xf32, #tpu.memory_space<vmem>>, vector<1x32xf32>
    %4 = vector.broadcast %3 : vector<1x32xf32> to vector<2048x32xf32>
    %5 = arith.addf %2, %4 : vector<2048x32xf32>
    %cst_5 = arith.constant dense<0.000000e+00> : vector<2048xf32>
    %6 = vector.multi_reduction <add>, %5, %cst_5 [1] : vector<2048x32xf32> to vector<2048xf32>
    %7 = vector.shape_cast %6 : vector<2048xf32> to vector<2048x1xf32>
    %cst_6 = arith.constant 3.200000e+01 : f32
    %8 = vector.broadcast %cst_6 : f32 to vector<2048x1xf32>
    %9 = arith.divf %7, %8 : vector<2048x1xf32>
    %10 = vector.broadcast %9 : vector<2048x1xf32> to vector<2048x32xf32>
    %11 = arith.subf %5, %10 : vector<2048x32xf32>
    %12 = arith.mulf %11, %11 : vector<2048x32xf32>
    %cst_7 = arith.constant dense<0.000000e+00> : vector<2048xf32>
    %13 = vector.multi_reduction <add>, %12, %cst_7 [1] : vector<2048x32xf32> to vector<2048xf32>
    %14 = vector.shape_cast %13 : vector<2048xf32> to vector<2048x1xf32>
    %cst_8 = arith.constant 3.200000e+01 : f32
    %15 = vector.broadcast %cst_8 : f32 to vector<2048x1xf32>
    %16 = arith.divf %14, %15 : vector<2048x1xf32>
    %cst_9 = arith.constant 9.99999974E-6 : f32
    %17 = vector.broadcast %cst_9 : f32 to vector<2048x1xf32>
    %18 = arith.addf %16, %17 : vector<2048x1xf32>
    %19 = math.rsqrt %18 : vector<2048x1xf32>
    %20 = vector.broadcast %19 : vector<2048x1xf32> to vector<2048x32xf32>
    %21 = arith.mulf %11, %20 : vector<2048x32xf32>
    %c0_10 = arith.constant 0 : index
    %c0_11 = arith.constant 0 : index
    %22 = vector.load %arg4[%c0_10, %c0_11] : memref<1x32xf32, #tpu.memory_space<vmem>>, vector<1x32xf32>
    %23 = vector.broadcast %22 : vector<1x32xf32> to vector<2048x32xf32>
    %24 = arith.mulf %21, %23 : vector<2048x32xf32>
    %c0_12 = arith.constant 0 : index
    %c0_13 = arith.constant 0 : index
    %25 = vector.load %arg5[%c0_12, %c0_13] : memref<1x32xf32, #tpu.memory_space<vmem>>, vector<1x32xf32>
    %26 = vector.broadcast %25 : vector<1x32xf32> to vector<2048x32xf32>
    %27 = arith.addf %24, %26 : vector<2048x32xf32>
    %28 = arith.truncf %27 : vector<2048x32xf32> to vector<2048x32xbf16>
    %c0_14 = arith.constant 0 : index
    %c0_15 = arith.constant 0 : index
    %29 = vector.load %arg6[%c0_14, %c0_15] : memref<2048x32xbf16, #tpu.memory_space<vmem>>, vector<2048x32xbf16>
    tpu.vector_store %arg6[%c0_14, %c0_15], %28 {strides = array<i32>} : memref<2048x32xbf16, #tpu.memory_space<vmem>>, vector<2048x32xbf16>,
    return
  }
  func.func @transform_0(%arg0: i32) -> (i32, i32) {
    %c0_i32 = arith.constant 0 : i32
    %c0_i32_0 = arith.constant 0 : i32
    return %arg0, %c0_i32 : i32, i32
  }
  func.func @transform_1(%arg0: i32) -> (i32, i32) {
    %c0_i32 = arith.constant 0 : i32
    %c0_i32_0 = arith.constant 0 : i32
    %c0_i32_1 = arith.constant 0 : i32
    return %c0_i32, %c0_i32_0 : i32, i32
  }
  func.func @transform_2(%arg0: i32) -> (i32, i32) {
    %c0_i32 = arith.constant 0 : i32
    %c0_i32_0 = arith.constant 0 : i32
    %c0_i32_1 = arith.constant 0 : i32
    return %c0_i32, %c0_i32_0 : i32, i32
  }
  func.func @transform_3(%arg0: i32) -> (i32, i32) {
    %c0_i32 = arith.constant 0 : i32
    %c0_i32_0 = arith.constant 0 : i32
    %c0_i32_1 = arith.constant 0 : i32
    return %c0_i32, %c0_i32_0 : i32, i32
  }
  func.func @transform_4(%arg0: i32) -> (i32, i32) {
    %c0_i32 = arith.constant 0 : i32
    %c0_i32_0 = arith.constant 0 : i32
    %c0_i32_1 = arith.constant 0 : i32
    return %c0_i32, %c0_i32_0 : i32, i32
  }
  func.func @transform_5(%arg0: i32) -> (i32, i32) {
    %c0_i32 = arith.constant 0 : i32
    %c0_i32_0 = arith.constant 0 : i32
    return %arg0, %c0_i32 : i32, i32
  }
}

</mosaic_0001>

<llo_original>
// kernel: tpu_custom_call.1
$region0: #{tpu_custom_call.1}
  #allocation0 [shape = 'u32[]', space=smem, size = 0x4, offset = 0x4, fixed_abs, tag = 'smem constant byte address 0x4 - core index']
  #allocation1 [shape = 'u32[72,128]{1,0:T(1,128)}', space=vmem, size = 0x9000, scoped, tag = 'internal scratch']
  %s0 = inlined_call_operand.vmem [shape: bf16[4096,8], index: 0, kind: input, shape index: {}]
  %s1 = inlined_call_operand.vmem [shape: bf16[8,32], index: 1, kind: input, shape index: {}]
  %s2 = inlined_call_operand.vmem [shape: f32[1,32], index: 2, kind: input, shape index: {}]
  %s3 = inlined_call_operand.vmem [shape: f32[1,32], index: 3, kind: input, shape index: {}]
  %s4 = inlined_call_operand.vmem [shape: f32[1,32], index: 4, kind: input, shape index: {}]
  %s5 = inlined_call_operand.vmem [shape: bf16[4096,32], index: 5, kind: output, shape index: {}]
  %s6 = sld [smem:[#allocation0]]
  $region53: #{tpu_custom_call.1} parent=0
    _
  %s8 = ssub.s32 1, %s6
  %s9 = scalar_select 0, %s8, %s6
  loop: start=0, step=1, limit=4
  $region2: #{tpu_custom_call.1} parent=0 // loop_pre_header
    _
  $region3: #{tpu_custom_call.1} parent=0 // loop_header
    %s11 = sphi 0, %s15
    %p12 = scmp.ge.s32.totalorder %s11, 4
    %s21 = sphi 0, %s23
    %s24 = sphi 0, %s21
    %s25 = sphi 0, %s24
    %s41 = sphi 0, %s25
    %s45 = sphi 0, %s45
    %s47 = sphi 0, %s45
    %s48 = sphi 0, %s47
    %s62 = sphi 0, %s48
    %s66 = sphi 0, %s66
    %s68 = sphi 0, %s66
    %s69 = sphi 0, %s68
    %s83 = sphi 0, %s69
    %s87 = sphi 0, %s87
    %s89 = sphi 0, %s87
    %s90 = sphi 0, %s89
    %s104 = sphi 0, %s90
    %s108 = sphi 0, %s108
    %s110 = sphi 0, %s108
    %s111 = sphi 0, %s110
    %s125 = sphi 0, %s111
    %s131 = sphi 0, %s133
    %s134 = sphi 0, %s131
    %s135 = sphi 0, %s134
    %s151 = sphi 0, %s135
  $region4: #{tpu_custom_call.1} parent=0 // loop_header_branch
    %14 = sbr.rel (%p12) target = $region8
  $region5: #{tpu_custom_call.1} parent=0 // loop_body
    %s16 = ssub.s32 %s11, 1
    %s17 = ssub.s32 %s11, 2
    %s18 = sadd.s32 %s11, 1
    %s19 = ssub.s32 %s11, %s18
    %p20 = scmp.eq.s32.totalorder %s19, 0
    %s22 = sadd.s32 %s21, 1
    %s23 = scalar_select %p20, %s21, %s22
    %p26 = pneg %p20
    %p27 = scmp.eq.s32.totalorder %s11, 1
    %p28 = por %p26, %p27
    %p29 = scmp.ne.s32.totalorder %s21, %s24
    %p30 = scmp.eq.s32.totalorder %s11, 0
    %p31 = por %p29, %p30
    %p32 = scmp.ne.s32.totalorder %s21, %s24
    %p33 = scmp.eq.s32.totalorder %s16, 1
    %p34 = por %p32, %p33
    %p35 = scmp.ne.s32.totalorder %s24, %s25
    %p36 = scmp.eq.s32.totalorder %s16, 0
    %p37 = por %p35, %p36
    %p38 = scmp.ne.s32.totalorder %s24, %s25
    %p39 = scmp.eq.s32.totalorder %s17, 1
    %p40 = por %p38, %p39
    %p42 = scmp.ne.s32.totalorder %s25, %s41
    %p43 = scmp.eq.s32.totalorder %s17, 0
    %p44 = por %p42, %p43
    %s46 = sadd.s32 %s45, 1
    %p49 = scmp.eq.s32.totalorder %s11, 1
    %p50 = scmp.ne.s32.totalorder %s45, %s47
    %p51 = scmp.eq.s32.totalorder %s11, 0
    %p52 = por %p50, %p51
    %p53 = scmp.ne.s32.totalorder %s45, %s47
    %p54 = scmp.eq.s32.totalorder %s16, 1
    %p55 = por %p53, %p54
    %p56 = scmp.ne.s32.totalorder %s47, %s48
    %p57 = scmp.eq.s32.totalorder %s16, 0
    %p58 = por %p56, %p57
    %p59 = scmp.ne.s32.totalorder %s47, %s48
    %p60 = scmp.eq.s32.totalorder %s17, 1
    %p61 = por %p59, %p60
    %p63 = scmp.ne.s32.totalorder %s48, %s62
    %p64 = scmp.eq.s32.totalorder %s17, 0
    %p65 = por %p63, %p64
    %s67 = sadd.s32 %s66, 1
    %p70 = scmp.eq.s32.totalorder %s11, 1
    %p71 = scmp.ne.s32.totalorder %s66, %s68
    %p72 = scmp.eq.s32.totalorder %s11, 0
    %p73 = por %p71, %p72
    %p74 = scmp.ne.s32.totalorder %s66, %s68
    %p75 = scmp.eq.s32.totalorder %s16, 1
    %p76 = por %p74, %p75
    %p77 = scmp.ne.s32.totalorder %s68, %s69
    %p78 = scmp.eq.s32.totalorder %s16, 0
    %p79 = por %p77, %p78
    %p80 = scmp.ne.s32.totalorder %s68, %s69
    %p81 = scmp.eq.s32.totalorder %s17, 1
    %p82 = por %p80, %p81
    %p84 = scmp.ne.s32.totalorder %s69, %s83
    %p85 = scmp.eq.s32.totalorder %s17, 0
    %p86 = por %p84, %p85
    %s88 = sadd.s32 %s87, 1
    %p91 = scmp.eq.s32.totalorder %s11, 1
    %p92 = scmp.ne.s32.totalorder %s87, %s89
    %p93 = scmp.eq.s32.totalorder %s11, 0
    %p94 = por %p92, %p93
    %p95 = scmp.ne.s32.totalorder %s87, %s89
    %p96 = scmp.eq.s32.totalorder %s16, 1
    %p97 = por %p95, %p96
    %p98 = scmp.ne.s32.totalorder %s89, %s90
    %p99 = scmp.eq.s32.totalorder %s16, 0
    %p100 = por %p98, %p99
    %p101 = scmp.ne.s32.totalorder %s89, %s90
    %p102 = scmp.eq.s32.totalorder %s17, 1
    %p103 = por %p101, %p102
    %p105 = scmp.ne.s32.totalorder %s90, %s104
    %p106 = scmp.eq.s32.totalorder %s17, 0
    %p107 = por %p105, %p106
    %s109 = sadd.s32 %s108, 1
    %p112 = scmp.eq.s32.totalorder %s11, 1
    %p113 = scmp.ne.s32.totalorder %s108, %s110
    %p114 = scmp.eq.s32.totalorder %s11, 0
    %p115 = por %p113, %p114
    %p116 = scmp.ne.s32.totalorder %s108, %s110
    %p117 = scmp.eq.s32.totalorder %s16, 1
    %p118 = por %p116, %p117
    %p119 = scmp.ne.s32.totalorder %s110, %s111
    %p120 = scmp.eq.s32.totalorder %s16, 0
    %p121 = por %p119, %p120
    %p122 = scmp.ne.s32.totalorder %s110, %s111
    %p123 = scmp.eq.s32.totalorder %s17, 1
    %p124 = por %p122, %p123
    %p126 = scmp.ne.s32.totalorder %s111, %s125
    %p127 = scmp.eq.s32.totalorder %s17, 0
    %p128 = por %p126, %p127
    %s129 = ssub.s32 %s11, %s18
    %p130 = scmp.eq.s32.totalorder %s129, 0
    %s132 = sadd.s32 %s131, 1
    %s133 = scalar_select %p130, %s131, %s132
    %p136 = pneg %p130
    %p137 = scmp.eq.s32.totalorder %s11, 1
    %p138 = por %p136, %p137
    %p139 = scmp.ne.s32.totalorder %s131, %s134
    %p140 = scmp.eq.s32.totalorder %s11, 0
    %p141 = por %p139, %p140
    %p142 = scmp.ne.s32.totalorder %s131, %s134
    %p143 = scmp.eq.s32.totalorder %s16, 1
    %p144 = por %p142, %p143
    %p145 = scmp.ne.s32.totalorder %s134, %s135
    %p146 = scmp.eq.s32.totalorder %s16, 0
    %p147 = por %p145, %p146
    %p148 = scmp.ne.s32.totalorder %s134, %s135
    %p149 = scmp.eq.s32.totalorder %s17, 1
    %p150 = por %p148, %p149
    %p152 = scmp.ne.s32.totalorder %s135, %s151
    %p153 = scmp.eq.s32.totalorder %s17, 0
    %p154 = por %p152, %p153
    %p155 = scmp.le.s32.totalorder 1, %s11
    %p156 = scmp.lt.s32.totalorder %s11, 3
    %p157 = pnand %p155, %p156
    %p158 = pneg %p157
    // Predicated region
    $region9: #{tpu_custom_call.1} parent=5 // pred_check
      _
    $region10: #{tpu_custom_call.1} parent=5 // pred_check_branch
      %160 = sbr.rel (%p157) target = $region12
    $region11: #{tpu_custom_call.1} parent=5 // pred_region
      %s161 = ssub.s32 %s11, 1
      // Predicated region
      $region13: #{tpu_custom_call.1} parent=11 // pred_check
        %p162 = pneg %p58
      $region14: #{tpu_custom_call.1} parent=11 // pred_check_branch
        %164 = sbr.rel (%p162) target = $region16
      $region15: #{tpu_custom_call.1} parent=11 // pred_region
        _
      $region16: #{tpu_custom_call.1} parent=11 // pred_fallthru
        _
      // Predicated region
      $region17: #{tpu_custom_call.1} parent=11 // pred_check
        %p165 = pneg %p79
      $region18: #{tpu_custom_call.1} parent=11 // pred_check_branch
        %167 = sbr.rel (%p165) target = $region20
      $region19: #{tpu_custom_call.1} parent=11 // pred_region
        _
      $region20: #{tpu_custom_call.1} parent=11 // pred_fallthru
        _
      // Predicated region
      $region21: #{tpu_custom_call.1} parent=11 // pred_check
        %p168 = pneg %p100
      $region22: #{tpu_custom_call.1} parent=11 // pred_check_branch
        %170 = sbr.rel (%p168) target = $region24
      $region23: #{tpu_custom_call.1} parent=11 // pred_region
        _
      $region24: #{tpu_custom_call.1} parent=11 // pred_fallthru
        _
      // Predicated region
      $region25: #{tpu_custom_call.1} parent=11 // pred_check
        %p171 = pneg %p121
      $region26: #{tpu_custom_call.1} parent=11 // pred_check_branch
        %173 = sbr.rel (%p171) target = $region28
      $region27: #{tpu_custom_call.1} parent=11 // pred_region
        _
      $region28: #{tpu_custom_call.1} parent=11 // pred_fallthru
        _
    $region12: #{tpu_custom_call.1} parent=5 // pred_fallthru
      _
    %p174 = scmp.lt.s32.totalorder %s11, 2
    // Predicated region
    $region29: #{tpu_custom_call.1} parent=5 // pred_check
      %p175 = pneg %p174
    $region30: #{tpu_custom_call.1} parent=5 // pred_check_branch
      %177 = sbr.rel (%p175) target = $region32
    $region31: #{tpu_custom_call.1} parent=5 // pred_region
      // Predicated region
      $region33: #{tpu_custom_call.1} parent=31 // pred_check
        %p178 = pneg %p31
      $region34: #{tpu_custom_call.1} parent=31 // pred_check_branch
        %180 = sbr.rel (%p178) target = $region36
      $region35: #{tpu_custom_call.1} parent=31 // pred_region
        %s181 = smul.u32 256, %s11
        %p182 = scmp.lt.s32.totalorder %s181, 511
        %s183 = scalar_select %p182, %s181, 511
        %s184 = smul.addr %s183, 4
        %s185 = scalar_lea.vmem %s0, %s184
        %s186 = smul.u32 256, %s11
      $region36: #{tpu_custom_call.1} parent=31 // pred_fallthru
        _
    $region32: #{tpu_custom_call.1} parent=5 // pred_fallthru
      _
    %p187 = scmp.le.s32.totalorder 1, %s11
    %p188 = scmp.lt.s32.totalorder %s11, 3
    %p189 = pnand %p187, %p188
    %p190 = pneg %p189
    // Predicated region
    $region37: #{tpu_custom_call.1} parent=5 // pred_check
      _
    $region38: #{tpu_custom_call.1} parent=5 // pred_check_branch
      %192 = sbr.rel (%p189) target = $region40
    $region39: #{tpu_custom_call.1} parent=5 // pred_region
      %s193 = ssub.s32 %s11, 1
      %s194 = smul.u32 256, %s16
      %p195 = scmp.lt.s32.totalorder %s194, 511
      %s196 = scalar_select %p195, %s194, 511
      %s197 = smul.addr %s196, 4
      %s198 = scalar_lea.vmem %s0, %s197
      %p199 = pneg %p37
      %p200 = pneg %p34
      %p201 = pneg %p58
      %p202 = pneg %p55
      %p203 = pneg %p79
      %p204 = pneg %p76
      %p205 = pneg %p100
      %p206 = pneg %p97
      %p207 = pneg %p121
      %p208 = pneg %p118
      %p209 = pneg %p147
      %p210 = pneg %p144
      %s211 = smul.u32 256, %s16
      %p212 = scmp.lt.s32.totalorder %s211, 511
      %s213 = scalar_select %p212, %s211, 511
      %s214 = smul.addr %s213, 4
      %s215 = scalar_lea.vmem %s5, %s214
      %s216 = smul.u32 256, %s16
      %p217 = scmp.lt.s32.totalorder %s216, 511
      %s218 = scalar_select %p217, %s216, 511
      %s219 = smul.addr %s218, 4
      %s220 = scalar_lea.vmem %s0, %s219
      %s221 = smul.u32 256, %s16
      %s222 = smul.u32 256, %s16
      %p223 = scmp.lt.s32.totalorder %s222, 511
      %s224 = scalar_select %p223, %s222, 511
      %s225 = smul.addr %s224, 4
      %s226 = scalar_lea.vmem %s5, %s225
      %s227 = smul.u32 256, %s16
      %v229 = vld [vmem:[%s220] sm:$0xf]
      %v230 = vld [vmem:[%s220 + $0x4] sm:$0xf]
      %v231 = vld [vmem:[%s220 + $0x8] sm:$0xf]
      %v232 = vld [vmem:[%s220 + $0xc] sm:$0xf]
      %v233 = vld [vmem:[%s220 + $0x10] sm:$0xf]
      %v234 = vld [vmem:[%s220 + $0x14] sm:$0xf]
      %v235 = vld [vmem:[%s220 + $0x18] sm:$0xf]
      %v236 = vld [vmem:[%s220 + $0x1c] sm:$0xf]
      %v237 = vld [vmem:[%s220 + $0x20] sm:$0xf]
      %v238 = vld [vmem:[%s220 + $0x24] sm:$0xf]
      %v239 = vld [vmem:[%s220 + $0x28] sm:$0xf]
      %v240 = vld [vmem:[%s220 + $0x2c] sm:$0xf]
      %v241 = vld [vmem:[%s220 + $0x30] sm:$0xf]
      %v242 = vld [vmem:[%s220 + $0x34] sm:$0xf]
      %v243 = vld [vmem:[%s220 + $0x38] sm:$0xf]
      %v244 = vld [vmem:[%s220 + $0x3c] sm:$0xf]
      %v245 = vld [vmem:[%s220 + $0x40] sm:$0xf]
      %v246 = vld [vmem:[%s220 + $0x44] sm:$0xf]
      %v247 = vld [vmem:[%s220 + $0x48] sm:$0xf]
      %v248 = vld [vmem:[%s220 + $0x4c] sm:$0xf]
      %v249 = vld [vmem:[%s220 + $0x50] sm:$0xf]
      %v250 = vld [vmem:[%s220 + $0x54] sm:$0xf]
      %v251 = vld [vmem:[%s220 + $0x58] sm:$0xf]
      %v252 = vld [vmem:[%s220 + $0x5c] sm:$0xf]
      %v253 = vld [vmem:[%s220 + $0x60] sm:$0xf]
      %v254 = vld [vmem:[%s220 + $0x64] sm:$0xf]
      %v255 = vld [vmem:[%s220 + $0x68] sm:$0xf]
      %v256 = vld [vmem:[%s220 + $0x6c] sm:$0xf]
      %v257 = vld [vmem:[%s220 + $0x70] sm:$0xf]
      %v258 = vld [vmem:[%s220 + $0x74] sm:$0xf]
      %v259 = vld [vmem:[%s220 + $0x78] sm:$0xf]
      %v260 = vld [vmem:[%s220 + $0x7c] sm:$0xf]
      %v261 = vld [vmem:[%s220 + $0x80] sm:$0xf]
      %v262 = vld [vmem:[%s220 + $0x84] sm:$0xf]
      %v263 = vld [vmem:[%s220 + $0x88] sm:$0xf]
      %v264 = vld [vmem:[%s220 + $0x8c] sm:$0xf]
      %v265 = vld [vmem:[%s220 + $0x90] sm:$0xf]
      %v266 = vld [vmem:[%s220 + $0x94] sm:$0xf]
      %v267 = vld [vmem:[%s220 + $0x98] sm:$0xf]
      %v268 = vld [vmem:[%s220 + $0x9c] sm:$0xf]
      %v269 = vld [vmem:[%s220 + $0xa0] sm:$0xf]
      %v270 = vld [vmem:[%s220 + $0xa4] sm:$0xf]
      %v271 = vld [vmem:[%s220 + $0xa8] sm:$0xf]
      %v272 = vld [vmem:[%s220 + $0xac] sm:$0xf]
      %v273 = vld [vmem:[%s220 + $0xb0] sm:$0xf]
      %v274 = vld [vmem:[%s220 + $0xb4] sm:$0xf]
      %v275 = vld [vmem:[%s220 + $0xb8] sm:$0xf]
      %v276 = vld [vmem:[%s220 + $0xbc] sm:$0xf]
      %v277 = vld [vmem:[%s220 + $0xc0] sm:$0xf]
      %v278 = vld [vmem:[%s220 + $0xc4] sm:$0xf]
      %v279 = vld [vmem:[%s220 + $0xc8] sm:$0xf]
      %v280 = vld [vmem:[%s220 + $0xcc] sm:$0xf]
      %v281 = vld [vmem:[%s220 + $0xd0] sm:$0xf]
      %v282 = vld [vmem:[%s220 + $0xd4] sm:$0xf]
      %v283 = vld [vmem:[%s220 + $0xd8] sm:$0xf]
      %v284 = vld [vmem:[%s220 + $0xdc] sm:$0xf]
      %v285 = vld [vmem:[%s220 + $0xe0] sm:$0xf]
      %v286 = vld [vmem:[%s220 + $0xe4] sm:$0xf]
      %v287 = vld [vmem:[%s220 + $0xe8] sm:$0xf]
      %v288 = vld [vmem:[%s220 + $0xec] sm:$0xf]
      %v289 = vld [vmem:[%s220 + $0xf0] sm:$0xf]
      %v290 = vld [vmem:[%s220 + $0xf4] sm:$0xf]
      %v291 = vld [vmem:[%s220 + $0xf8] sm:$0xf]
      %v292 = vld [vmem:[%s220 + $0xfc] sm:$0xf]
      %v293 = vld [vmem:[%s220 + $0x100] sm:$0xf]
      %v294 = vld [vmem:[%s220 + $0x104] sm:$0xf]
      %v295 = vld [vmem:[%s220 + $0x108] sm:$0xf]
      %v296 = vld [vmem:[%s220 + $0x10c] sm:$0xf]
      %v297 = vld [vmem:[%s220 + $0x110] sm:$0xf]
      %v298 = vld [vmem:[%s220 + $0x114] sm:$0xf]
      %v299 = vld [vmem:[%s220 + $0x118] sm:$0xf]
      %v300 = vld [vmem:[%s220 + $0x11c] sm:$0xf]
      %v301 = vld [vmem:[%s220 + $0x120] sm:$0xf]
      %v302 = vld [vmem:[%s220 + $0x124] sm:$0xf]
      %v303 = vld [vmem:[%s220 + $0x128] sm:$0xf]
      %v304 = vld [vmem:[%s220 + $0x12c] sm:$0xf]
      %v305 = vld [vmem:[%s220 + $0x130] sm:$0xf]
      %v306 = vld [vmem:[%s220 + $0x134] sm:$0xf]
      %v307 = vld [vmem:[%s220 + $0x138] sm:$0xf]
      %v308 = vld [vmem:[%s220 + $0x13c] sm:$0xf]
      %v309 = vld [vmem:[%s220 + $0x140] sm:$0xf]
      %v310 = vld [vmem:[%s220 + $0x144] sm:$0xf]
      %v311 = vld [vmem:[%s220 + $0x148] sm:$0xf]
      %v312 = vld [vmem:[%s220 + $0x14c] sm:$0xf]
      %v313 = vld [vmem:[%s220 + $0x150] sm:$0xf]
      %v314 = vld [vmem:[%s220 + $0x154] sm:$0xf]
      %v315 = vld [vmem:[%s220 + $0x158] sm:$0xf]
      %v316 = vld [vmem:[%s220 + $0x15c] sm:$0xf]
      %v317 = vld [vmem:[%s220 + $0x160] sm:$0xf]
      %v318 = vld [vmem:[%s220 + $0x164] sm:$0xf]
      %v319 = vld [vmem:[%s220 + $0x168] sm:$0xf]
      %v320 = vld [vmem:[%s220 + $0x16c] sm:$0xf]
      %v321 = vld [vmem:[%s220 + $0x170] sm:$0xf]
      %v322 = vld [vmem:[%s220 + $0x174] sm:$0xf]
      %v323 = vld [vmem:[%s220 + $0x178] sm:$0xf]
      %v324 = vld [vmem:[%s220 + $0x17c] sm:$0xf]
      %v325 = vld [vmem:[%s220 + $0x180] sm:$0xf]
      %v326 = vld [vmem:[%s220 + $0x184] sm:$0xf]
      %v327 = vld [vmem:[%s220 + $0x188] sm:$0xf]
      %v328 = vld [vmem:[%s220 + $0x18c] sm:$0xf]
      %v329 = vld [vmem:[%s220 + $0x190] sm:$0xf]
      %v330 = vld [vmem:[%s220 + $0x194] sm:$0xf]
      %v331 = vld [vmem:[%s220 + $0x198] sm:$0xf]
      %v332 = vld [vmem:[%s220 + $0x19c] sm:$0xf]
      %v333 = vld [vmem:[%s220 + $0x1a0] sm:$0xf]
      %v334 = vld [vmem:[%s220 + $0x1a4] sm:$0xf]
      %v335 = vld [vmem:[%s220 + $0x1a8] sm:$0xf]
      %v336 = vld [vmem:[%s220 + $0x1ac] sm:$0xf]
      %v337 = vld [vmem:[%s220 + $0x1b0] sm:$0xf]
      %v338 = vld [vmem:[%s220 + $0x1b4] sm:$0xf]
      %v339 = vld [vmem:[%s220 + $0x1b8] sm:$0xf]
      %v340 = vld [vmem:[%s220 + $0x1bc] sm:$0xf]
      %v341 = vld [vmem:[%s220 + $0x1c0] sm:$0xf]
      %v342 = vld [vmem:[%s220 + $0x1c4] sm:$0xf]
      %v343 = vld [vmem:[%s220 + $0x1c8] sm:$0xf]
      %v344 = vld [vmem:[%s220 + $0x1cc] sm:$0xf]
      %v345 = vld [vmem:[%s220 + $0x1d0] sm:$0xf]
      %v346 = vld [vmem:[%s220 + $0x1d4] sm:$0xf]
      %v347 = vld [vmem:[%s220 + $0x1d8] sm:$0xf]
      %v348 = vld [vmem:[%s220 + $0x1dc] sm:$0xf]
      %v349 = vld [vmem:[%s220 + $0x1e0] sm:$0xf]
      %v350 = vld [vmem:[%s220 + $0x1e4] sm:$0xf]
      %v351 = vld [vmem:[%s220 + $0x1e8] sm:$0xf]
      %v352 = vld [vmem:[%s220 + $0x1ec] sm:$0xf]
      %v353 = vld [vmem:[%s220 + $0x1f0] sm:$0xf]
      %v354 = vld [vmem:[%s220 + $0x1f4] sm:$0xf]
      %v355 = vld [vmem:[%s220 + $0x1f8] sm:$0xf]
      %v356 = vld [vmem:[%s220 + $0x1fc] sm:$0xf]
      %v357 = vld [vmem:[%s220 + $0x200] sm:$0xf]
      %v358 = vld [vmem:[%s220 + $0x204] sm:$0xf]
      %v359 = vld [vmem:[%s220 + $0x208] sm:$0xf]
      %v360 = vld [vmem:[%s220 + $0x20c] sm:$0xf]
      %v361 = vld [vmem:[%s220 + $0x210] sm:$0xf]
      %v362 = vld [vmem:[%s220 + $0x214] sm:$0xf]
      %v363 = vld [vmem:[%s220 + $0x218] sm:$0xf]
      %v364 = vld [vmem:[%s220 + $0x21c] sm:$0xf]
      %v365 = vld [vmem:[%s220 + $0x220] sm:$0xf]
      %v366 = vld [vmem:[%s220 + $0x224] sm:$0xf]
      %v367 = vld [vmem:[%s220 + $0x228] sm:$0xf]
      %v368 = vld [vmem:[%s220 + $0x22c] sm:$0xf]
      %v369 = vld [vmem:[%s220 + $0x230] sm:$0xf]
      %v370 = vld [vmem:[%s220 + $0x234] sm:$0xf]
      %v371 = vld [vmem:[%s220 + $0x238] sm:$0xf]
      %v372 = vld [vmem:[%s220 + $0x23c] sm:$0xf]
      %v373 = vld [vmem:[%s220 + $0x240] sm:$0xf]
      %v374 = vld [vmem:[%s220 + $0x244] sm:$0xf]
      %v375 = vld [vmem:[%s220 + $0x248] sm:$0xf]
      %v376 = vld [vmem:[%s220 + $0x24c] sm:$0xf]
      %v377 = vld [vmem:[%s220 + $0x250] sm:$0xf]
      %v378 = vld [vmem:[%s220 + $0x254] sm:$0xf]
      %v379 = vld [vmem:[%s220 + $0x258] sm:$0xf]
      %v380 = vld [vmem:[%s220 + $0x25c] sm:$0xf]
      %v381 = vld [vmem:[%s220 + $0x260] sm:$0xf]
      %v382 = vld [vmem:[%s220 + $0x264] sm:$0xf]
      %v383 = vld [vmem:[%s220 + $0x268] sm:$0xf]
      %v384 = vld [vmem:[%s220 + $0x26c] sm:$0xf]
      %v385 = vld [vmem:[%s220 + $0x270] sm:$0xf]
      %v386 = vld [vmem:[%s220 + $0x274] sm:$0xf]
      %v387 = vld [vmem:[%s220 + $0x278] sm:$0xf]
      %v388 = vld [vmem:[%s220 + $0x27c] sm:$0xf]
      %v389 = vld [vmem:[%s220 + $0x280] sm:$0xf]
      %v390 = vld [vmem:[%s220 + $0x284] sm:$0xf]
      %v391 = vld [vmem:[%s220 + $0x288] sm:$0xf]
      %v392 = vld [vmem:[%s220 + $0x28c] sm:$0xf]
      %v393 = vld [vmem:[%s220 + $0x290] sm:$0xf]
      %v394 = vld [vmem:[%s220 + $0x294] sm:$0xf]
      %v395 = vld [vmem:[%s220 + $0x298] sm:$0xf]
      %v396 = vld [vmem:[%s220 + $0x29c] sm:$0xf]
      %v397 = vld [vmem:[%s220 + $0x2a0] sm:$0xf]
      %v398 = vld [vmem:[%s220 + $0x2a4] sm:$0xf]
      %v399 = vld [vmem:[%s220 + $0x2a8] sm:$0xf]
      %v400 = vld [vmem:[%s220 + $0x2ac] sm:$0xf]
      %v401 = vld [vmem:[%s220 + $0x2b0] sm:$0xf]
      %v402 = vld [vmem:[%s220 + $0x2b4] sm:$0xf]
      %v403 = vld [vmem:[%s220 + $0x2b8] sm:$0xf]
      %v404 = vld [vmem:[%s220 + $0x2bc] sm:$0xf]
      %v405 = vld [vmem:[%s220 + $0x2c0] sm:$0xf]
      %v406 = vld [vmem:[%s220 + $0x2c4] sm:$0xf]
      %v407 = vld [vmem:[%s220 + $0x2c8] sm:$0xf]
      %v408 = vld [vmem:[%s220 + $0x2cc] sm:$0xf]
      %v409 = vld [vmem:[%s220 + $0x2d0] sm:$0xf]
      %v410 = vld [vmem:[%s220 + $0x2d4] sm:$0xf]
      %v411 = vld [vmem:[%s220 + $0x2d8] sm:$0xf]
      %v412 = vld [vmem:[%s220 + $0x2dc] sm:$0xf]
      %v413 = vld [vmem:[%s220 + $0x2e0] sm:$0xf]
      %v414 = vld [vmem:[%s220 + $0x2e4] sm:$0xf]
      %v415 = vld [vmem:[%s220 + $0x2e8] sm:$0xf]
      %v416 = vld [vmem:[%s220 + $0x2ec] sm:$0xf]
      %v417 = vld [vmem:[%s220 + $0x2f0] sm:$0xf]
      %v418 = vld [vmem:[%s220 + $0x2f4] sm:$0xf]
      %v419 = vld [vmem:[%s220 + $0x2f8] sm:$0xf]
      %v420 = vld [vmem:[%s220 + $0x2fc] sm:$0xf]
      %v421 = vld [vmem:[%s220 + $0x300] sm:$0xf]
      %v422 = vld [vmem:[%s220 + $0x304] sm:$0xf]
      %v423 = vld [vmem:[%s220 + $0x308] sm:$0xf]
      %v424 = vld [vmem:[%s220 + $0x30c] sm:$0xf]
      %v425 = vld [vmem:[%s220 + $0x310] sm:$0xf]
      %v426 = vld [vmem:[%s220 + $0x314] sm:$0xf]
      %v427 = vld [vmem:[%s220 + $0x318] sm:$0xf]
      %v428 = vld [vmem:[%s220 + $0x31c] sm:$0xf]
      %v429 = vld [vmem:[%s220 + $0x320] sm:$0xf]
      %v430 = vld [vmem:[%s220 + $0x324] sm:$0xf]
      %v431 = vld [vmem:[%s220 + $0x328] sm:$0xf]
      %v432 = vld [vmem:[%s220 + $0x32c] sm:$0xf]
      %v433 = vld [vmem:[%s220 + $0x330] sm:$0xf]
      %v434 = vld [vmem:[%s220 + $0x334] sm:$0xf]
      %v435 = vld [vmem:[%s220 + $0x338] sm:$0xf]
      %v436 = vld [vmem:[%s220 + $0x33c] sm:$0xf]
      %v437 = vld [vmem:[%s220 + $0x340] sm:$0xf]
      %v438 = vld [vmem:[%s220 + $0x344] sm:$0xf]
      %v439 = vld [vmem:[%s220 + $0x348] sm:$0xf]
      %v440 = vld [vmem:[%s220 + $0x34c] sm:$0xf]
      %v441 = vld [vmem:[%s220 + $0x350] sm:$0xf]
      %v442 = vld [vmem:[%s220 + $0x354] sm:$0xf]
      %v443 = vld [vmem:[%s220 + $0x358] sm:$0xf]
      %v444 = vld [vmem:[%s220 + $0x35c] sm:$0xf]
      %v445 = vld [vmem:[%s220 + $0x360] sm:$0xf]
      %v446 = vld [vmem:[%s220 + $0x364] sm:$0xf]
      %v447 = vld [vmem:[%s220 + $0x368] sm:$0xf]
      %v448 = vld [vmem:[%s220 + $0x36c] sm:$0xf]
      %v449 = vld [vmem:[%s220 + $0x370] sm:$0xf]
      %v450 = vld [vmem:[%s220 + $0x374] sm:$0xf]
      %v451 = vld [vmem:[%s220 + $0x378] sm:$0xf]
      %v452 = vld [vmem:[%s220 + $0x37c] sm:$0xf]
      %v453 = vld [vmem:[%s220 + $0x380] sm:$0xf]
      %v454 = vld [vmem:[%s220 + $0x384] sm:$0xf]
      %v455 = vld [vmem:[%s220 + $0x388] sm:$0xf]
      %v456 = vld [vmem:[%s220 + $0x38c] sm:$0xf]
      %v457 = vld [vmem:[%s220 + $0x390] sm:$0xf]
      %v458 = vld [vmem:[%s220 + $0x394] sm:$0xf]
      %v459 = vld [vmem:[%s220 + $0x398] sm:$0xf]
      %v460 = vld [vmem:[%s220 + $0x39c] sm:$0xf]
      %v461 = vld [vmem:[%s220 + $0x3a0] sm:$0xf]
      %v462 = vld [vmem:[%s220 + $0x3a4] sm:$0xf]
      %v463 = vld [vmem:[%s220 + $0x3a8] sm:$0xf]
      %v464 = vld [vmem:[%s220 + $0x3ac] sm:$0xf]
      %v465 = vld [vmem:[%s220 + $0x3b0] sm:$0xf]
      %v466 = vld [vmem:[%s220 + $0x3b4] sm:$0xf]
      %v467 = vld [vmem:[%s220 + $0x3b8] sm:$0xf]
      %v468 = vld [vmem:[%s220 + $0x3bc] sm:$0xf]
      %v469 = vld [vmem:[%s220 + $0x3c0] sm:$0xf]
      %v470 = vld [vmem:[%s220 + $0x3c4] sm:$0xf]
      %v471 = vld [vmem:[%s220 + $0x3c8] sm:$0xf]
      %v472 = vld [vmem:[%s220 + $0x3cc] sm:$0xf]
      %v473 = vld [vmem:[%s220 + $0x3d0] sm:$0xf]
      %v474 = vld [vmem:[%s220 + $0x3d4] sm:$0xf]
      %v475 = vld [vmem:[%s220 + $0x3d8] sm:$0xf]
      %v476 = vld [vmem:[%s220 + $0x3dc] sm:$0xf]
      %v477 = vld [vmem:[%s220 + $0x3e0] sm:$0xf]
      %v478 = vld [vmem:[%s220 + $0x3e4] sm:$0xf]
      %v479 = vld [vmem:[%s220 + $0x3e8] sm:$0xf]
      %v480 = vld [vmem:[%s220 + $0x3ec] sm:$0xf]
      %v481 = vld [vmem:[%s220 + $0x3f0] sm:$0xf]
      %v482 = vld [vmem:[%s220 + $0x3f4] sm:$0xf]
      %v483 = vld [vmem:[%s220 + $0x3f8] sm:$0xf]
      %v484 = vld [vmem:[%s220 + $0x3fc] sm:$0xf]
      %v485 = vld [vmem:[%s1] sm:$0xf]
      %v486 = vld [vmem:[%s2] sm:$0x1]
      %v488 = vperm.slane %v486, 0
      %v746 = vunpack.c.l.b16 %v229
      %v747 = vunpack.c.l.b16 %v230
      %v748 = vunpack.c.l.b16 %v231
      %v749 = vunpack.c.l.b16 %v232
      %v750 = vunpack.c.l.b16 %v233
      %v751 = vunpack.c.l.b16 %v234
      %v752 = vunpack.c.l.b16 %v235
      %v753 = vunpack.c.l.b16 %v236
      %v754 = vunpack.c.l.b16 %v237
      %v755 = vunpack.c.l.b16 %v238
      %v756 = vunpack.c.l.b16 %v239
      %v757 = vunpack.c.l.b16 %v240
      %v758 = vunpack.c.l.b16 %v241
      %v759 = vunpack.c.l.b16 %v242
      %v760 = vunpack.c.l.b16 %v243
      %v761 = vunpack.c.l.b16 %v244
      %v762 = vunpack.c.l.b16 %v245
      %v763 = vunpack.c.l.b16 %v246
      %v764 = vunpack.c.l.b16 %v247
      %v765 = vunpack.c.l.b16 %v248
      %v766 = vunpack.c.l.b16 %v249
      %v767 = vunpack.c.l.b16 %v250
      %v768 = vunpack.c.l.b16 %v251
      %v769 = vunpack.c.l.b16 %v252
      %v770 = vunpack.c.l.b16 %v253
      %v771 = vunpack.c.l.b16 %v254
      %v772 = vunpack.c.l.b16 %v255
      %v773 = vunpack.c.l.b16 %v256
      %v774 = vunpack.c.l.b16 %v257
      %v775 = vunpack.c.l.b16 %v258
      %v776 = vunpack.c.l.b16 %v259
      %v777 = vunpack.c.l.b16 %v260
      %v778 = vunpack.c.l.b16 %v261
      %v779 = vunpack.c.l.b16 %v262
      %v780 = vunpack.c.l.b16 %v263
      %v781 = vunpack.c.l.b16 %v264
      %v782 = vunpack.c.l.b16 %v265
      %v783 = vunpack.c.l.b16 %v266
      %v784 = vunpack.c.l.b16 %v267
      %v785 = vunpack.c.l.b16 %v268
      %v786 = vunpack.c.l.b16 %v269
      %v787 = vunpack.c.l.b16 %v270
      %v788 = vunpack.c.l.b16 %v271
      %v789 = vunpack.c.l.b16 %v272
      %v790 = vunpack.c.l.b16 %v273
      %v791 = vunpack.c.l.b16 %v274
      %v792 = vunpack.c.l.b16 %v275
      %v793 = vunpack.c.l.b16 %v276
      %v794 = vunpack.c.l.b16 %v277
      %v795 = vunpack.c.l.b16 %v278
      %v796 = vunpack.c.l.b16 %v279
      %v797 = vunpack.c.l.b16 %v280
      %v798 = vunpack.c.l.b16 %v281
      %v799 = vunpack.c.l.b16 %v282
      %v800 = vunpack.c.l.b16 %v283
      %v801 = vunpack.c.l.b16 %v284
      %v802 = vunpack.c.l.b16 %v285
      %v803 = vunpack.c.l.b16 %v286
      %v804 = vunpack.c.l.b16 %v287
      %v805 = vunpack.c.l.b16 %v288
      %v806 = vunpack.c.l.b16 %v289
      %v807 = vunpack.c.l.b16 %v290
      %v808 = vunpack.c.l.b16 %v291
      %v809 = vunpack.c.l.b16 %v292
      %v810 = vunpack.c.l.b16 %v293
      %v811 = vunpack.c.l.b16 %v294
      %v812 = vunpack.c.l.b16 %v295
      %v813 = vunpack.c.l.b16 %v296
      %v814 = vunpack.c.l.b16 %v297
      %v815 = vunpack.c.l.b16 %v298
      %v816 = vunpack.c.l.b16 %v299
      %v817 = vunpack.c.l.b16 %v300
      %v818 = vunpack.c.l.b16 %v301
      %v819 = vunpack.c.l.b16 %v302
      %v820 = vunpack.c.l.b16 %v303
      %v821 = vunpack.c.l.b16 %v304
      %v822 = vunpack.c.l.b16 %v305
      %v823 = vunpack.c.l.b16 %v306
      %v824 = vunpack.c.l.b16 %v307
      %v825 = vunpack.c.l.b16 %v308
      %v826 = vunpack.c.l.b16 %v309
      %v827 = vunpack.c.l.b16 %v310
      %v828 = vunpack.c.l.b16 %v311
      %v829 = vunpack.c.l.b16 %v312
      %v830 = vunpack.c.l.b16 %v313
      %v831 = vunpack.c.l.b16 %v314
      %v832 = vunpack.c.l.b16 %v315
      %v833 = vunpack.c.l.b16 %v316
      %v834 = vunpack.c.l.b16 %v317
      %v835 = vunpack.c.l.b16 %v318
      %v836 = vunpack.c.l.b16 %v319
      %v837 = vunpack.c.l.b16 %v320
      %v838 = vunpack.c.l.b16 %v321
      %v839 = vunpack.c.l.b16 %v322
      %v840 = vunpack.c.l.b16 %v323
      %v841 = vunpack.c.l.b16 %v324
      %v842 = vunpack.c.l.b16 %v325
      %v843 = vunpack.c.l.b16 %v326
      %v844 = vunpack.c.l.b16 %v327
      %v845 = vunpack.c.l.b16 %v328
      %v846 = vunpack.c.l.b16 %v329
      %v847 = vunpack.c.l.b16 %v330
      %v848 = vunpack.c.l.b16 %v331
      %v849 = vunpack.c.l.b16 %v332
      %v850 = vunpack.c.l.b16 %v333
      %v851 = vunpack.c.l.b16 %v334
      %v852 = vunpack.c.l.b16 %v335
      %v853 = vunpack.c.l.b16 %v336
      %v854 = vunpack.c.l.b16 %v337
      %v855 = vunpack.c.l.b16 %v338
      %v856 = vunpack.c.l.b16 %v339
      %v857 = vunpack.c.l.b16 %v340
      %v858 = vunpack.c.l.b16 %v341
      %v859 = vunpack.c.l.b16 %v342
      %v860 = vunpack.c.l.b16 %v343
      %v861 = vunpack.c.l.b16 %v344
      %v862 = vunpack.c.l.b16 %v345
      %v863 = vunpack.c.l.b16 %v346
      %v864 = vunpack.c.l.b16 %v347
      %v865 = vunpack.c.l.b16 %v348
      %v866 = vunpack.c.l.b16 %v349
      %v867 = vunpack.c.l.b16 %v350
      %v868 = vunpack.c.l.b16 %v351
      %v869 = vunpack.c.l.b16 %v352
      %v870 = vunpack.c.l.b16 %v353
      %v871 = vunpack.c.l.b16 %v354
      %v872 = vunpack.c.l.b16 %v355
      %v873 = vunpack.c.l.b16 %v356
      %v874 = vunpack.c.l.b16 %v357
      %v875 = vunpack.c.l.b16 %v358
      %v876 = vunpack.c.l.b16 %v359
      %v877 = vunpack.c.l.b16 %v360
      %v878 = vunpack.c.l.b16 %v361
      %v879 = vunpack.c.l.b16 %v362
      %v880 = vunpack.c.l.b16 %v363
      %v881 = vunpack.c.l.b16 %v364
      %v882 = vunpack.c.l.b16 %v365
      %v883 = vunpack.c.l.b16 %v366
      %v884 = vunpack.c.l.b16 %v367
      %v885 = vunpack.c.l.b16 %v368
      %v886 = vunpack.c.l.b16 %v369
      %v887 = vunpack.c.l.b16 %v370
      %v888 = vunpack.c.l.b16 %v371
      %v889 = vunpack.c.l.b16 %v372
      %v890 = vunpack.c.l.b16 %v373
      %v891 = vunpack.c.l.b16 %v374
      %v892 = vunpack.c.l.b16 %v375
      %v893 = vunpack.c.l.b16 %v376
      %v894 = vunpack.c.l.b16 %v377
      %v895 = vunpack.c.l.b16 %v378
      %v896 = vunpack.c.l.b16 %v379
      %v897 = vunpack.c.l.b16 %v380
      %v898 = vunpack.c.l.b16 %v381
      %v899 = vunpack.c.l.b16 %v382
      %v900 = vunpack.c.l.b16 %v383
      %v901 = vunpack.c.l.b16 %v384
      %v902 = vunpack.c.l.b16 %v385
      %v903 = vunpack.c.l.b16 %v386
      %v904 = vunpack.c.l.b16 %v387
      %v905 = vunpack.c.l.b16 %v388
      %v906 = vunpack.c.l.b16 %v389
      %v907 = vunpack.c.l.b16 %v390
      %v908 = vunpack.c.l.b16 %v391
      %v909 = vunpack.c.l.b16 %v392
      %v910 = vunpack.c.l.b16 %v393
      %v911 = vunpack.c.l.b16 %v394
      %v912 = vunpack.c.l.b16 %v395
      %v913 = vunpack.c.l.b16 %v396
      %v914 = vunpack.c.l.b16 %v397
      %v915 = vunpack.c.l.b16 %v398
      %v916 = vunpack.c.l.b16 %v399
      %v917 = vunpack.c.l.b16 %v400
      %v918 = vunpack.c.l.b16 %v401
      %v919 = vunpack.c.l.b16 %v402
      %v920 = vunpack.c.l.b16 %v403
      %v921 = vunpack.c.l.b16 %v404
      %v922 = vunpack.c.l.b16 %v405
      %v923 = vunpack.c.l.b16 %v406
      %v924 = vunpack.c.l.b16 %v407
      %v925 = vunpack.c.l.b16 %v408
      %v926 = vunpack.c.l.b16 %v409
      %v927 = vunpack.c.l.b16 %v410
      %v928 = vunpack.c.l.b16 %v411
      %v929 = vunpack.c.l.b16 %v412
      %v930 = vunpack.c.l.b16 %v413
      %v931 = vunpack.c.l.b16 %v414
      %v932 = vunpack.c.l.b16 %v415
      %v933 = vunpack.c.l.b16 %v416
      %v934 = vunpack.c.l.b16 %v417
      %v935 = vunpack.c.l.b16 %v418
      %v936 = vunpack.c.l.b16 %v419
      %v937 = vunpack.c.l.b16 %v420
      %v938 = vunpack.c.l.b16 %v421
      %v939 = vunpack.c.l.b16 %v422
      %v940 = vunpack.c.l.b16 %v423
      %v941 = vunpack.c.l.b16 %v424
      %v942 = vunpack.c.l.b16 %v425
      %v943 = vunpack.c.l.b16 %v426
      %v944 = vunpack.c.l.b16 %v427
      %v945 = vunpack.c.l.b16 %v428
      %v946 = vunpack.c.l.b16 %v429
      %v947 = vunpack.c.l.b16 %v430
      %v948 = vunpack.c.l.b16 %v431
      %v949 = vunpack.c.l.b16 %v432
      %v950 = vunpack.c.l.b16 %v433
      %v951 = vunpack.c.l.b16 %v434
      %v952 = vunpack.c.l.b16 %v435
      %v953 = vunpack.c.l.b16 %v436
      %v954 = vunpack.c.l.b16 %v437
      %v955 = vunpack.c.l.b16 %v438
      %v956 = vunpack.c.l.b16 %v439
      %v957 = vunpack.c.l.b16 %v440
      %v958 = vunpack.c.l.b16 %v441
      %v959 = vunpack.c.l.b16 %v442
      %v960 = vunpack.c.l.b16 %v443
      %v961 = vunpack.c.l.b16 %v444
      %v962 = vunpack.c.l.b16 %v445
      %v963 = vunpack.c.l.b16 %v446
      %v964 = vunpack.c.l.b16 %v447
      %v965 = vunpack.c.l.b16 %v448
      %v966 = vunpack.c.l.b16 %v449
      %v967 = vunpack.c.l.b16 %v450
      %v968 = vunpack.c.l.b16 %v451
      %v969 = vunpack.c.l.b16 %v452
      %v970 = vunpack.c.l.b16 %v453
      %v971 = vunpack.c.l.b16 %v454
      %v972 = vunpack.c.l.b16 %v455
      %v973 = vunpack.c.l.b16 %v456
      %v974 = vunpack.c.l.b16 %v457
      %v975 = vunpack.c.l.b16 %v458
      %v976 = vunpack.c.l.b16 %v459
      %v977 = vunpack.c.l.b16 %v460
      %v978 = vunpack.c.l.b16 %v461
      %v979 = vunpack.c.l.b16 %v462
      %v980 = vunpack.c.l.b16 %v463
      %v981 = vunpack.c.l.b16 %v464
      %v982 = vunpack.c.l.b16 %v465
      %v983 = vunpack.c.l.b16 %v466
      %v984 = vunpack.c.l.b16 %v467
      %v985 = vunpack.c.l.b16 %v468
      %v986 = vunpack.c.l.b16 %v469
      %v987 = vunpack.c.l.b16 %v470
      %v988 = vunpack.c.l.b16 %v471
      %v989 = vunpack.c.l.b16 %v472
      %v990 = vunpack.c.l.b16 %v473
      %v991 = vunpack.c.l.b16 %v474
      %v992 = vunpack.c.l.b16 %v475
      %v993 = vunpack.c.l.b16 %v476
      %v994 = vunpack.c.l.b16 %v477
      %v995 = vunpack.c.l.b16 %v478
      %v996 = vunpack.c.l.b16 %v479
      %v997 = vunpack.c.l.b16 %v480
      %v998 = vunpack.c.l.b16 %v481
      %v999 = vunpack.c.l.b16 %v482
      %v1000 = vunpack.c.l.b16 %v483
      %v1001 = vunpack.c.l.b16 %v484
      %v1002 = vpack.c.b16 %v747, %v746
      %v1003 = vpack.c.b16 %v749, %v748
      %v1004 = vpack.c.b16 %v751, %v750
      %v1005 = vpack.c.b16 %v753, %v752
      %v1006 = vpack.c.b16 %v755, %v754
      %v1007 = vpack.c.b16 %v757, %v756
      %v1008 = vpack.c.b16 %v759, %v758
      %v1009 = vpack.c.b16 %v761, %v760
      %v1010 = vpack.c.b16 %v763, %v762
      %v1011 = vpack.c.b16 %v765, %v764
      %v1012 = vpack.c.b16 %v767, %v766
      %v1013 = vpack.c.b16 %v769, %v768
      %v1014 = vpack.c.b16 %v771, %v770
      %v1015 = vpack.c.b16 %v773, %v772
      %v1016 = vpack.c.b16 %v775, %v774
      %v1017 = vpack.c.b16 %v777, %v776
      %v1018 = vpack.c.b16 %v779, %v778
      %v1019 = vpack.c.b16 %v781, %v780
      %v1020 = vpack.c.b16 %v783, %v782
      %v1021 = vpack.c.b16 %v785, %v784
      %v1022 = vpack.c.b16 %v787, %v786
      %v1023 = vpack.c.b16 %v789, %v788
      %v1024 = vpack.c.b16 %v791, %v790
      %v1025 = vpack.c.b16 %v793, %v792
      %v1026 = vpack.c.b16 %v795, %v794
      %v1027 = vpack.c.b16 %v797, %v796
      %v1028 = vpack.c.b16 %v799, %v798
      %v1029 = vpack.c.b16 %v801, %v800
      %v1030 = vpack.c.b16 %v803, %v802
      %v1031 = vpack.c.b16 %v805, %v804
      %v1032 = vpack.c.b16 %v807, %v806
      %v1033 = vpack.c.b16 %v809, %v808
      %v1034 = vpack.c.b16 %v811, %v810
      %v1035 = vpack.c.b16 %v813, %v812
      %v1036 = vpack.c.b16 %v815, %v814
      %v1037 = vpack.c.b16 %v817, %v816
      %v1038 = vpack.c.b16 %v819, %v818
      %v1039 = vpack.c.b16 %v821, %v820
      %v1040 = vpack.c.b16 %v823, %v822
      %v1041 = vpack.c.b16 %v825, %v824
      %v1042 = vpack.c.b16 %v827, %v826
      %v1043 = vpack.c.b16 %v829, %v828
      %v1044 = vpack.c.b16 %v831, %v830
      %v1045 = vpack.c.b16 %v833, %v832
      %v1046 = vpack.c.b16 %v835, %v834
      %v1047 = vpack.c.b16 %v837, %v836
      %v1048 = vpack.c.b16 %v839, %v838
      %v1049 = vpack.c.b16 %v841, %v840
      %v1050 = vpack.c.b16 %v843, %v842
      %v1051 = vpack.c.b16 %v845, %v844
      %v1052 = vpack.c.b16 %v847, %v846
      %v1053 = vpack.c.b16 %v849, %v848
      %v1054 = vpack.c.b16 %v851, %v850
      %v1055 = vpack.c.b16 %v853, %v852
      %v1056 = vpack.c.b16 %v855, %v854
      %v1057 = vpack.c.b16 %v857, %v856
      %v1058 = vpack.c.b16 %v859, %v858
      %v1059 = vpack.c.b16 %v861, %v860
      %v1060 = vpack.c.b16 %v863, %v862
      %v1061 = vpack.c.b16 %v865, %v864
      %v1062 = vpack.c.b16 %v867, %v866
      %v1063 = vpack.c.b16 %v869, %v868
      %v1064 = vpack.c.b16 %v871, %v870
      %v1065 = vpack.c.b16 %v873, %v872
      %v1066 = vpack.c.b16 %v875, %v874
      %v1067 = vpack.c.b16 %v877, %v876
      %v1068 = vpack.c.b16 %v879, %v878
      %v1069 = vpack.c.b16 %v881, %v880
      %v1070 = vpack.c.b16 %v883, %v882
      %v1071 = vpack.c.b16 %v885, %v884
      %v1072 = vpack.c.b16 %v887, %v886
      %v1073 = vpack.c.b16 %v889, %v888
      %v1074 = vpack.c.b16 %v891, %v890
      %v1075 = vpack.c.b16 %v893, %v892
      %v1076 = vpack.c.b16 %v895, %v894
      %v1077 = vpack.c.b16 %v897, %v896
      %v1078 = vpack.c.b16 %v899, %v898
      %v1079 = vpack.c.b16 %v901, %v900
      %v1080 = vpack.c.b16 %v903, %v902
      %v1081 = vpack.c.b16 %v905, %v904
      %v1082 = vpack.c.b16 %v907, %v906
      %v1083 = vpack.c.b16 %v909, %v908
      %v1084 = vpack.c.b16 %v911, %v910
      %v1085 = vpack.c.b16 %v913, %v912
      %v1086 = vpack.c.b16 %v915, %v914
      %v1087 = vpack.c.b16 %v917, %v916
      %v1088 = vpack.c.b16 %v919, %v918
      %v1089 = vpack.c.b16 %v921, %v920
      %v1090 = vpack.c.b16 %v923, %v922
      %v1091 = vpack.c.b16 %v925, %v924
      %v1092 = vpack.c.b16 %v927, %v926
      %v1093 = vpack.c.b16 %v929, %v928
      %v1094 = vpack.c.b16 %v931, %v930
      %v1095 = vpack.c.b16 %v933, %v932
      %v1096 = vpack.c.b16 %v935, %v934
      %v1097 = vpack.c.b16 %v937, %v936
      %v1098 = vpack.c.b16 %v939, %v938
      %v1099 = vpack.c.b16 %v941, %v940
      %v1100 = vpack.c.b16 %v943, %v942
      %v1101 = vpack.c.b16 %v945, %v944
      %v1102 = vpack.c.b16 %v947, %v946
      %v1103 = vpack.c.b16 %v949, %v948
      %v1104 = vpack.c.b16 %v951, %v950
      %v1105 = vpack.c.b16 %v953, %v952
      %v1106 = vpack.c.b16 %v955, %v954
      %v1107 = vpack.c.b16 %v957, %v956
      %v1108 = vpack.c.b16 %v959, %v958
      %v1109 = vpack.c.b16 %v961, %v960
      %v1110 = vpack.c.b16 %v963, %v962
      %v1111 = vpack.c.b16 %v965, %v964
      %v1112 = vpack.c.b16 %v967, %v966
      %v1113 = vpack.c.b16 %v969, %v968
      %v1114 = vpack.c.b16 %v971, %v970
      %v1115 = vpack.c.b16 %v973, %v972
      %v1116 = vpack.c.b16 %v975, %v974
      %v1117 = vpack.c.b16 %v977, %v976
      %v1118 = vpack.c.b16 %v979, %v978
      %v1119 = vpack.c.b16 %v981, %v980
      %v1120 = vpack.c.b16 %v983, %v982
      %v1121 = vpack.c.b16 %v985, %v984
      %v1122 = vpack.c.b16 %v987, %v986
      %v1123 = vpack.c.b16 %v989, %v988
      %v1124 = vpack.c.b16 %v991, %v990
      %v1125 = vpack.c.b16 %v993, %v992
      %v1126 = vpack.c.b16 %v995, %v994
      %v1127 = vpack.c.b16 %v997, %v996
      %v1128 = vpack.c.b16 %v999, %v998
      %v1129 = vpack.c.b16 %v1001, %v1000
      %vm1130 = vcmask 64512
      %v1132 = vsel %vm1130, %v1002, 0
      %v1135 = vsel %vm1130, %v1003, 0
      %v1138 = vsel %vm1130, %v1004, 0
      %v1141 = vsel %vm1130, %v1005, 0
      %v1144 = vsel %vm1130, %v1006, 0
      %v1147 = vsel %vm1130, %v1007, 0
      %v1150 = vsel %vm1130, %v1008, 0
      %v1153 = vsel %vm1130, %v1009, 0
      %v1156 = vsel %vm1130, %v1010, 0
      %v1159 = vsel %vm1130, %v1011, 0
      %v1162 = vsel %vm1130, %v1012, 0
      %v1165 = vsel %vm1130, %v1013, 0
      %v1168 = vsel %vm1130, %v1014, 0
      %v1171 = vsel %vm1130, %v1015, 0
      %v1174 = vsel %vm1130, %v1016, 0
      %v1177 = vsel %vm1130, %v1017, 0
      %v1180 = vsel %vm1130, %v1018, 0
      %v1183 = vsel %vm1130, %v1019, 0
      %v1186 = vsel %vm1130, %v1020, 0
      %v1189 = vsel %vm1130, %v1021, 0
      %v1192 = vsel %vm1130, %v1022, 0
      %v1195 = vsel %vm1130, %v1023, 0
      %v1198 = vsel %vm1130, %v1024, 0
      %v1201 = vsel %vm1130, %v1025, 0
      %v1204 = vsel %vm1130, %v1026, 0
      %v1207 = vsel %vm1130, %v1027, 0
      %v1210 = vsel %vm1130, %v1028, 0
      %v1213 = vsel %vm1130, %v1029, 0
      %v1216 = vsel %vm1130, %v1030, 0
      %v1219 = vsel %vm1130, %v1031, 0
      %v1222 = vsel %vm1130, %v1032, 0
      %v1225 = vsel %vm1130, %v1033, 0
      %v1228 = vsel %vm1130, %v1034, 0
      %v1231 = vsel %vm1130, %v1035, 0
      %v1234 = vsel %vm1130, %v1036, 0
      %v1237 = vsel %vm1130, %v1037, 0
      %v1240 = vsel %vm1130, %v1038, 0
      %v1243 = vsel %vm1130, %v1039, 0
      %v1246 = vsel %vm1130, %v1040, 0
      %v1249 = vsel %vm1130, %v1041, 0
      %v1252 = vsel %vm1130, %v1042, 0
      %v1255 = vsel %vm1130, %v1043, 0
      %v1258 = vsel %vm1130, %v1044, 0
      %v1261 = vsel %vm1130, %v1045, 0
      %v1264 = vsel %vm1130, %v1046, 0
      %v1267 = vsel %vm1130, %v1047, 0
      %v1270 = vsel %vm1130, %v1048, 0
      %v1273 = vsel %vm1130, %v1049, 0
      %v1276 = vsel %vm1130, %v1050, 0
      %v1279 = vsel %vm1130, %v1051, 0
      %v1282 = vsel %vm1130, %v1052, 0
      %v1285 = vsel %vm1130, %v1053, 0
      %v1288 = vsel %vm1130, %v1054, 0
      %v1291 = vsel %vm1130, %v1055, 0
      %v1294 = vsel %vm1130, %v1056, 0
      %v1297 = vsel %vm1130, %v1057, 0
      %v1300 = vsel %vm1130, %v1058, 0
      %v1303 = vsel %vm1130, %v1059, 0
      %v1306 = vsel %vm1130, %v1060, 0
      %v1309 = vsel %vm1130, %v1061, 0
      %v1312 = vsel %vm1130, %v1062, 0
      %v1315 = vsel %vm1130, %v1063, 0
      %v1318 = vsel %vm1130, %v1064, 0
      %v1321 = vsel %vm1130, %v1065, 0
      %v1324 = vsel %vm1130, %v1066, 0
      %v1327 = vsel %vm1130, %v1067, 0
      %v1330 = vsel %vm1130, %v1068, 0
      %v1333 = vsel %vm1130, %v1069, 0
      %v1336 = vsel %vm1130, %v1070, 0
      %v1339 = vsel %vm1130, %v1071, 0
      %v1342 = vsel %vm1130, %v1072, 0
      %v1345 = vsel %vm1130, %v1073, 0
      %v1348 = vsel %vm1130, %v1074, 0
      %v1351 = vsel %vm1130, %v1075, 0
      %v1354 = vsel %vm1130, %v1076, 0
      %v1357 = vsel %vm1130, %v1077, 0
      %v1360 = vsel %vm1130, %v1078, 0
      %v1363 = vsel %vm1130, %v1079, 0
      %v1366 = vsel %vm1130, %v1080, 0
      %v1369 = vsel %vm1130, %v1081, 0
      %v1372 = vsel %vm1130, %v1082, 0
      %v1375 = vsel %vm1130, %v1083, 0
      %v1378 = vsel %vm1130, %v1084, 0
      %v1381 = vsel %vm1130, %v1085, 0
      %v1384 = vsel %vm1130, %v1086, 0
      %v1387 = vsel %vm1130, %v1087, 0
      %v1390 = vsel %vm1130, %v1088, 0
      %v1393 = vsel %vm1130, %v1089, 0
      %v1396 = vsel %vm1130, %v1090, 0
      %v1399 = vsel %vm1130, %v1091, 0
      %v1402 = vsel %vm1130, %v1092, 0
      %v1405 = vsel %vm1130, %v1093, 0
      %v1408 = vsel %vm1130, %v1094, 0
      %v1411 = vsel %vm1130, %v1095, 0
      %v1414 = vsel %vm1130, %v1096, 0
      %v1417 = vsel %vm1130, %v1097, 0
      %v1420 = vsel %vm1130, %v1098, 0
      %v1423 = vsel %vm1130, %v1099, 0
      %v1426 = vsel %vm1130, %v1100, 0
      %v1429 = vsel %vm1130, %v1101, 0
      %v1432 = vsel %vm1130, %v1102, 0
      %v1435 = vsel %vm1130, %v1103, 0
      %v1438 = vsel %vm1130, %v1104, 0
      %v1441 = vsel %vm1130, %v1105, 0
      %v1444 = vsel %vm1130, %v1106, 0
      %v1447 = vsel %vm1130, %v1107, 0
      %v1450 = vsel %vm1130, %v1108, 0
      %v1453 = vsel %vm1130, %v1109, 0
      %v1456 = vsel %vm1130, %v1110, 0
      %v1459 = vsel %vm1130, %v1111, 0
      %v1462 = vsel %vm1130, %v1112, 0
      %v1465 = vsel %vm1130, %v1113, 0
      %v1468 = vsel %vm1130, %v1114, 0
      %v1471 = vsel %vm1130, %v1115, 0
      %v1474 = vsel %vm1130, %v1116, 0
      %v1477 = vsel %vm1130, %v1117, 0
      %v1480 = vsel %vm1130, %v1118, 0
      %v1483 = vsel %vm1130, %v1119, 0
      %v1486 = vsel %vm1130, %v1120, 0
      %v1489 = vsel %vm1130, %v1121, 0
      %v1492 = vsel %vm1130, %v1122, 0
      %v1495 = vsel %vm1130, %v1123, 0
      %v1498 = vsel %vm1130, %v1124, 0
      %v1501 = vsel %vm1130, %v1125, 0
      %v1504 = vsel %vm1130, %v1126, 0
      %v1507 = vsel %vm1130, %v1127, 0
      %v1510 = vsel %vm1130, %v1128, 0
      %v1513 = vsel %vm1130, %v1129, 0
      %vm1515 = vcmask 1043456
      %v1517 = vsel %vm1515, %v485, 0
      %1519 = vmatpush.bf16.msra.mxu0 0
      %1520 = vmatpush.bf16.msra.mxu0 0
      %1521 = vmatpush.bf16.msra.mxu0 0
      %1522 = vmatpush.bf16.msra.mxu0 0
      %1523 = vmatpush.bf16.msra.mxu0 0
      %1524 = vmatpush.bf16.msra.mxu0 0
      %1525 = vmatpush.bf16.msra.mxu0 0
      %1526 = vmatpush.bf16.msra.mxu0 %v1517
      %1527 = vmatmul.bf16.gmra.mxu0 %v1132
      %v1528 = vpop.f32.mrf.mxu0
      %v1529 = vadd.f32 %v488, %v1528
      %v1530 = vpop.f32.mrf.mxu0
      %v1531 = vadd.f32 %v488, %v1530
      %1532 = vmatmul.bf16.gmra.mxu0 %v1135
      %v1533 = vpop.f32.mrf.mxu0
      %v1534 = vadd.f32 %v488, %v1533
      %v1535 = vpop.f32.mrf.mxu0
      %v1536 = vadd.f32 %v488, %v1535
      %1537 = vmatmul.bf16.gmra.mxu0 %v1138
      %v1538 = vpop.f32.mrf.mxu0
      %v1539 = vadd.f32 %v488, %v1538
      %v1540 = vpop.f32.mrf.mxu0
      %v1541 = vadd.f32 %v488, %v1540
      %1542 = vmatmul.bf16.gmra.mxu0 %v1141
      %v1543 = vpop.f32.mrf.mxu0
      %v1544 = vadd.f32 %v488, %v1543
      %v1545 = vpop.f32.mrf.mxu0
      %v1546 = vadd.f32 %v488, %v1545
      %1547 = vmatmul.bf16.gmra.mxu0 %v1144
      %v1548 = vpop.f32.mrf.mxu0
      %v1549 = vadd.f32 %v488, %v1548
      %v1550 = vpop.f32.mrf.mxu0
      %v1551 = vadd.f32 %v488, %v1550
      %1552 = vmatmul.bf16.gmra.mxu0 %v1147
      %v1553 = vpop.f32.mrf.mxu0
      %v1554 = vadd.f32 %v488, %v1553
      %v1555 = vpop.f32.mrf.mxu0
      %v1556 = vadd.f32 %v488, %v1555
      %1557 = vmatmul.bf16.gmra.mxu0 %v1150
      %v1558 = vpop.f32.mrf.mxu0
      %v1559 = vadd.f32 %v488, %v1558
      %v1560 = vpop.f32.mrf.mxu0
      %v1561 = vadd.f32 %v488, %v1560
      %1562 = vmatmul.bf16.gmra.mxu0 %v1153
      %v1563 = vpop.f32.mrf.mxu0
      %v1564 = vadd.f32 %v488, %v1563
      %v1565 = vpop.f32.mrf.mxu0
      %v1566 = vadd.f32 %v488, %v1565
      %1567 = vmatmul.bf16.gmra.mxu0 %v1156
      %v1568 = vpop.f32.mrf.mxu0
      %v1569 = vadd.f32 %v488, %v1568
      %v1570 = vpop.f32.mrf.mxu0
      %v1571 = vadd.f32 %v488, %v1570
      %1572 = vmatmul.bf16.gmra.mxu0 %v1159
      %v1573 = vpop.f32.mrf.mxu0
      %v1574 = vadd.f32 %v488, %v1573
      %v1575 = vpop.f32.mrf.mxu0
      %v1576 = vadd.f32 %v488, %v1575
      %1577 = vmatmul.bf16.gmra.mxu0 %v1162
      %v1578 = vpop.f32.mrf.mxu0
      %v1579 = vadd.f32 %v488, %v1578
      %v1580 = vpop.f32.mrf.mxu0
      %v1581 = vadd.f32 %v488, %v1580
      %1582 = vmatmul.bf16.gmra.mxu0 %v1165
      %v1583 = vpop.f32.mrf.mxu0
      %v1584 = vadd.f32 %v488, %v1583
      %v1585 = vpop.f32.mrf.mxu0
      %v1586 = vadd.f32 %v488, %v1585
      %1587 = vmatmul.bf16.gmra.mxu0 %v1168
      %v1588 = vpop.f32.mrf.mxu0
      %v1589 = vadd.f32 %v488, %v1588
      %v1590 = vpop.f32.mrf.mxu0
      %v1591 = vadd.f32 %v488, %v1590
      %1592 = vmatmul.bf16.gmra.mxu0 %v1171
      %v1593 = vpop.f32.mrf.mxu0
      %v1594 = vadd.f32 %v488, %v1593
      %v1595 = vpop.f32.mrf.mxu0
      %v1596 = vadd.f32 %v488, %v1595
      %1597 = vmatmul.bf16.gmra.mxu0 %v1174
      %v1598 = vpop.f32.mrf.mxu0
      %v1599 = vadd.f32 %v488, %v1598
      %v1600 = vpop.f32.mrf.mxu0
      %v1601 = vadd.f32 %v488, %v1600
      %1602 = vmatmul.bf16.gmra.mxu0 %v1177
      %v1603 = vpop.f32.mrf.mxu0
      %v1604 = vadd.f32 %v488, %v1603
      %v1605 = vpop.f32.mrf.mxu0
      %v1606 = vadd.f32 %v488, %v1605
      %1607 = vmatmul.bf16.gmra.mxu0 %v1180
      %v1608 = vpop.f32.mrf.mxu0
      %v1609 = vadd.f32 %v488, %v1608
      %v1610 = vpop.f32.mrf.mxu0
      %v1611 = vadd.f32 %v488, %v1610
      %1612 = vmatmul.bf16.gmra.mxu0 %v1183
      %v1613 = vpop.f32.mrf.mxu0
      %v1614 = vadd.f32 %v488, %v1613
      %v1615 = vpop.f32.mrf.mxu0
      %v1616 = vadd.f32 %v488, %v1615
      %1617 = vmatmul.bf16.gmra.mxu0 %v1186
      %v1618 = vpop.f32.mrf.mxu0
      %v1619 = vadd.f32 %v488, %v1618
      %v1620 = vpop.f32.mrf.mxu0
      %v1621 = vadd.f32 %v488, %v1620
      %1622 = vmatmul.bf16.gmra.mxu0 %v1189
      %v1623 = vpop.f32.mrf.mxu0
      %v1624 = vadd.f32 %v488, %v1623
      %v1625 = vpop.f32.mrf.mxu0
      %v1626 = vadd.f32 %v488, %v1625
      %1627 = vmatmul.bf16.gmra.mxu0 %v1192
      %v1628 = vpop.f32.mrf.mxu0
      %v1629 = vadd.f32 %v488, %v1628
      %v1630 = vpop.f32.mrf.mxu0
      %v1631 = vadd.f32 %v488, %v1630
      %1632 = vmatmul.bf16.gmra.mxu0 %v1195
      %v1633 = vpop.f32.mrf.mxu0
      %v1634 = vadd.f32 %v488, %v1633
      %v1635 = vpop.f32.mrf.mxu0
      %v1636 = vadd.f32 %v488, %v1635
      %1637 = vmatmul.bf16.gmra.mxu0 %v1198
      %v1638 = vpop.f32.mrf.mxu0
      %v1639 = vadd.f32 %v488, %v1638
      %v1640 = vpop.f32.mrf.mxu0
      %v1641 = vadd.f32 %v488, %v1640
      %1642 = vmatmul.bf16.gmra.mxu0 %v1201
      %v1643 = vpop.f32.mrf.mxu0
      %v1644 = vadd.f32 %v488, %v1643
      %v1645 = vpop.f32.mrf.mxu0
      %v1646 = vadd.f32 %v488, %v1645
      %1647 = vmatmul.bf16.gmra.mxu0 %v1204
      %v1648 = vpop.f32.mrf.mxu0
      %v1649 = vadd.f32 %v488, %v1648
      %v1650 = vpop.f32.mrf.mxu0
      %v1651 = vadd.f32 %v488, %v1650
      %1652 = vmatmul.bf16.gmra.mxu0 %v1207
      %v1653 = vpop.f32.mrf.mxu0
      %v1654 = vadd.f32 %v488, %v1653
      %v1655 = vpop.f32.mrf.mxu0
      %v1656 = vadd.f32 %v488, %v1655
      %1657 = vmatmul.bf16.gmra.mxu0 %v1210
      %v1658 = vpop.f32.mrf.mxu0
      %v1659 = vadd.f32 %v488, %v1658
      %v1660 = vpop.f32.mrf.mxu0
      %v1661 = vadd.f32 %v488, %v1660
      %1662 = vmatmul.bf16.gmra.mxu0 %v1213
      %v1663 = vpop.f32.mrf.mxu0
      %v1664 = vadd.f32 %v488, %v1663
      %v1665 = vpop.f32.mrf.mxu0
      %v1666 = vadd.f32 %v488, %v1665
      %1667 = vmatmul.bf16.gmra.mxu0 %v1216
      %v1668 = vpop.f32.mrf.mxu0
      %v1669 = vadd.f32 %v488, %v1668
      %v1670 = vpop.f32.mrf.mxu0
      %v1671 = vadd.f32 %v488, %v1670
      %1672 = vmatmul.bf16.gmra.mxu0 %v1219
      %v1673 = vpop.f32.mrf.mxu0
      %v1674 = vadd.f32 %v488, %v1673
      %v1675 = vpop.f32.mrf.mxu0
      %v1676 = vadd.f32 %v488, %v1675
      %1677 = vmatmul.bf16.gmra.mxu0 %v1222
      %v1678 = vpop.f32.mrf.mxu0
      %v1679 = vadd.f32 %v488, %v1678
      %v1680 = vpop.f32.mrf.mxu0
      %v1681 = vadd.f32 %v488, %v1680
      %1682 = vmatmul.bf16.gmra.mxu0 %v1225
      %v1683 = vpop.f32.mrf.mxu0
      %v1684 = vadd.f32 %v488, %v1683
      %v1685 = vpop.f32.mrf.mxu0
      %v1686 = vadd.f32 %v488, %v1685
      %1687 = vmatmul.bf16.gmra.mxu0 %v1228
      %v1688 = vpop.f32.mrf.mxu0
      %v1689 = vadd.f32 %v488, %v1688
      %v1690 = vpop.f32.mrf.mxu0
      %v1691 = vadd.f32 %v488, %v1690
      %1692 = vmatmul.bf16.gmra.mxu0 %v1231
      %v1693 = vpop.f32.mrf.mxu0
      %v1694 = vadd.f32 %v488, %v1693
      %v1695 = vpop.f32.mrf.mxu0
      %v1696 = vadd.f32 %v488, %v1695
      %1697 = vmatmul.bf16.gmra.mxu0 %v1234
      %v1698 = vpop.f32.mrf.mxu0
      %v1699 = vadd.f32 %v488, %v1698
      %v1700 = vpop.f32.mrf.mxu0
      %v1701 = vadd.f32 %v488, %v1700
      %1702 = vmatmul.bf16.gmra.mxu0 %v1237
      %v1703 = vpop.f32.mrf.mxu0
      %v1704 = vadd.f32 %v488, %v1703
      %v1705 = vpop.f32.mrf.mxu0
      %v1706 = vadd.f32 %v488, %v1705
      %1707 = vmatmul.bf16.gmra.mxu0 %v1240
      %v1708 = vpop.f32.mrf.mxu0
      %v1709 = vadd.f32 %v488, %v1708
      %v1710 = vpop.f32.mrf.mxu0
      %v1711 = vadd.f32 %v488, %v1710
      %1712 = vmatmul.bf16.gmra.mxu0 %v1243
      %v1713 = vpop.f32.mrf.mxu0
      %v1714 = vadd.f32 %v488, %v1713
      %v1715 = vpop.f32.mrf.mxu0
      %v1716 = vadd.f32 %v488, %v1715
      %1717 = vmatmul.bf16.gmra.mxu0 %v1246
      %v1718 = vpop.f32.mrf.mxu0
      %v1719 = vadd.f32 %v488, %v1718
      %v1720 = vpop.f32.mrf.mxu0
      %v1721 = vadd.f32 %v488, %v1720
      %1722 = vmatmul.bf16.gmra.mxu0 %v1249
      %v1723 = vpop.f32.mrf.mxu0
      %v1724 = vadd.f32 %v488, %v1723
      %v1725 = vpop.f32.mrf.mxu0
      %v1726 = vadd.f32 %v488, %v1725
      %1727 = vmatmul.bf16.gmra.mxu0 %v1252
      %v1728 = vpop.f32.mrf.mxu0
      %v1729 = vadd.f32 %v488, %v1728
      %v1730 = vpop.f32.mrf.mxu0
      %v1731 = vadd.f32 %v488, %v1730
      %1732 = vmatmul.bf16.gmra.mxu0 %v1255
      %v1733 = vpop.f32.mrf.mxu0
      %v1734 = vadd.f32 %v488, %v1733
      %v1735 = vpop.f32.mrf.mxu0
      %v1736 = vadd.f32 %v488, %v1735
      %1737 = vmatmul.bf16.gmra.mxu0 %v1258
      %v1738 = vpop.f32.mrf.mxu0
      %v1739 = vadd.f32 %v488, %v1738
      %v1740 = vpop.f32.mrf.mxu0
      %v1741 = vadd.f32 %v488, %v1740
      %1742 = vmatmul.bf16.gmra.mxu0 %v1261
      %v1743 = vpop.f32.mrf.mxu0
      %v1744 = vadd.f32 %v488, %v1743
      %v1745 = vpop.f32.mrf.mxu0
      %v1746 = vadd.f32 %v488, %v1745
      %1747 = vmatmul.bf16.gmra.mxu0 %v1264
      %v1748 = vpop.f32.mrf.mxu0
      %v1749 = vadd.f32 %v488, %v1748
      %v1750 = vpop.f32.mrf.mxu0
      %v1751 = vadd.f32 %v488, %v1750
      %1752 = vmatmul.bf16.gmra.mxu0 %v1267
      %v1753 = vpop.f32.mrf.mxu0
      %v1754 = vadd.f32 %v488, %v1753
      %v1755 = vpop.f32.mrf.mxu0
      %v1756 = vadd.f32 %v488, %v1755
      %1757 = vmatmul.bf16.gmra.mxu0 %v1270
      %v1758 = vpop.f32.mrf.mxu0
      %v1759 = vadd.f32 %v488, %v1758
      %v1760 = vpop.f32.mrf.mxu0
      %v1761 = vadd.f32 %v488, %v1760
      %1762 = vmatmul.bf16.gmra.mxu0 %v1273
      %v1763 = vpop.f32.mrf.mxu0
      %v1764 = vadd.f32 %v488, %v1763
      %v1765 = vpop.f32.mrf.mxu0
      %v1766 = vadd.f32 %v488, %v1765
      %1767 = vmatmul.bf16.gmra.mxu0 %v1276
      %v1768 = vpop.f32.mrf.mxu0
      %v1769 = vadd.f32 %v488, %v1768
      %v1770 = vpop.f32.mrf.mxu0
      %v1771 = vadd.f32 %v488, %v1770
      %1772 = vmatmul.bf16.gmra.mxu0 %v1279
      %v1773 = vpop.f32.mrf.mxu0
      %v1774 = vadd.f32 %v488, %v1773
      %v1775 = vpop.f32.mrf.mxu0
      %v1776 = vadd.f32 %v488, %v1775
      %1777 = vmatmul.bf16.gmra.mxu0 %v1282
      %v1778 = vpop.f32.mrf.mxu0
      %v1779 = vadd.f32 %v488, %v1778
      %v1780 = vpop.f32.mrf.mxu0
      %v1781 = vadd.f32 %v488, %v1780
      %1782 = vmatmul.bf16.gmra.mxu0 %v1285
      %v1783 = vpop.f32.mrf.mxu0
      %v1784 = vadd.f32 %v488, %v1783
      %v1785 = vpop.f32.mrf.mxu0
      %v1786 = vadd.f32 %v488, %v1785
      %1787 = vmatmul.bf16.gmra.mxu0 %v1288
      %v1788 = vpop.f32.mrf.mxu0
      %v1789 = vadd.f32 %v488, %v1788
      %v1790 = vpop.f32.mrf.mxu0
      %v1791 = vadd.f32 %v488, %v1790
      %1792 = vmatmul.bf16.gmra.mxu0 %v1291
      %v1793 = vpop.f32.mrf.mxu0
      %v1794 = vadd.f32 %v488, %v1793
      %v1795 = vpop.f32.mrf.mxu0
      %v1796 = vadd.f32 %v488, %v1795
      %1797 = vmatmul.bf16.gmra.mxu0 %v1294
      %v1798 = vpop.f32.mrf.mxu0
      %v1799 = vadd.f32 %v488, %v1798
      %v1800 = vpop.f32.mrf.mxu0
      %v1801 = vadd.f32 %v488, %v1800
      %1802 = vmatmul.bf16.gmra.mxu0 %v1297
      %v1803 = vpop.f32.mrf.mxu0
      %v1804 = vadd.f32 %v488, %v1803
      %v1805 = vpop.f32.mrf.mxu0
      %v1806 = vadd.f32 %v488, %v1805
      %1807 = vmatmul.bf16.gmra.mxu0 %v1300
      %v1808 = vpop.f32.mrf.mxu0
      %v1809 = vadd.f32 %v488, %v1808
      %v1810 = vpop.f32.mrf.mxu0
      %v1811 = vadd.f32 %v488, %v1810
      %1812 = vmatmul.bf16.gmra.mxu0 %v1303
      %v1813 = vpop.f32.mrf.mxu0
      %v1814 = vadd.f32 %v488, %v1813
      %v1815 = vpop.f32.mrf.mxu0
      %v1816 = vadd.f32 %v488, %v1815
      %1817 = vmatmul.bf16.gmra.mxu0 %v1306
      %v1818 = vpop.f32.mrf.mxu0
      %v1819 = vadd.f32 %v488, %v1818
      %v1820 = vpop.f32.mrf.mxu0
      %v1821 = vadd.f32 %v488, %v1820
      %1822 = vmatmul.bf16.gmra.mxu0 %v1309
      %v1823 = vpop.f32.mrf.mxu0
      %v1824 = vadd.f32 %v488, %v1823
      %v1825 = vpop.f32.mrf.mxu0
      %v1826 = vadd.f32 %v488, %v1825
      %1827 = vmatmul.bf16.gmra.mxu0 %v1312
      %v1828 = vpop.f32.mrf.mxu0
      %v1829 = vadd.f32 %v488, %v1828
      %v1830 = vpop.f32.mrf.mxu0
      %v1831 = vadd.f32 %v488, %v1830
      %1832 = vmatmul.bf16.gmra.mxu0 %v1315
      %v1833 = vpop.f32.mrf.mxu0
      %v1834 = vadd.f32 %v488, %v1833
      %v1835 = vpop.f32.mrf.mxu0
      %v1836 = vadd.f32 %v488, %v1835
      %1837 = vmatmul.bf16.gmra.mxu0 %v1318
      %v1838 = vpop.f32.mrf.mxu0
      %v1839 = vadd.f32 %v488, %v1838
      %v1840 = vpop.f32.mrf.mxu0
      %v1841 = vadd.f32 %v488, %v1840
      %1842 = vmatmul.bf16.gmra.mxu0 %v1321
      %v1843 = vpop.f32.mrf.mxu0
      %v1844 = vadd.f32 %v488, %v1843
      %v1845 = vpop.f32.mrf.mxu0
      %v1846 = vadd.f32 %v488, %v1845
      %1847 = vmatmul.bf16.gmra.mxu0 %v1324
      %v1848 = vpop.f32.mrf.mxu0
      %v1849 = vadd.f32 %v488, %v1848
      %v1850 = vpop.f32.mrf.mxu0
      %v1851 = vadd.f32 %v488, %v1850
      %1852 = vmatmul.bf16.gmra.mxu0 %v1327
      %v1853 = vpop.f32.mrf.mxu0
      %v1854 = vadd.f32 %v488, %v1853
      %v1855 = vpop.f32.mrf.mxu0
      %v1856 = vadd.f32 %v488, %v1855
      %1857 = vmatmul.bf16.gmra.mxu0 %v1330
      %v1858 = vpop.f32.mrf.mxu0
      %v1859 = vadd.f32 %v488, %v1858
      %v1860 = vpop.f32.mrf.mxu0
      %v1861 = vadd.f32 %v488, %v1860
      %1862 = vmatmul.bf16.gmra.mxu0 %v1333
      %v1863 = vpop.f32.mrf.mxu0
      %v1864 = vadd.f32 %v488, %v1863
      %v1865 = vpop.f32.mrf.mxu0
      %v1866 = vadd.f32 %v488, %v1865
      %1867 = vmatmul.bf16.gmra.mxu0 %v1336
      %v1868 = vpop.f32.mrf.mxu0
      %v1869 = vadd.f32 %v488, %v1868
      %v1870 = vpop.f32.mrf.mxu0
      %v1871 = vadd.f32 %v488, %v1870
      %1872 = vmatmul.bf16.gmra.mxu0 %v1339
      %v1873 = vpop.f32.mrf.mxu0
      %v1874 = vadd.f32 %v488, %v1873
      %v1875 = vpop.f32.mrf.mxu0
      %v1876 = vadd.f32 %v488, %v1875
      %1877 = vmatmul.bf16.gmra.mxu0 %v1342
      %v1878 = vpop.f32.mrf.mxu0
      %v1879 = vadd.f32 %v488, %v1878
      %v1880 = vpop.f32.mrf.mxu0
      %v1881 = vadd.f32 %v488, %v1880
      %1882 = vmatmul.bf16.gmra.mxu0 %v1345
      %v1883 = vpop.f32.mrf.mxu0
      %v1884 = vadd.f32 %v488, %v1883
      %v1885 = vpop.f32.mrf.mxu0
      %v1886 = vadd.f32 %v488, %v1885
      %1887 = vmatmul.bf16.gmra.mxu0 %v1348
      %v1888 = vpop.f32.mrf.mxu0
      %v1889 = vadd.f32 %v488, %v1888
      %v1890 = vpop.f32.mrf.mxu0
      %v1891 = vadd.f32 %v488, %v1890
      %1892 = vmatmul.bf16.gmra.mxu0 %v1351
      %v1893 = vpop.f32.mrf.mxu0
      %v1894 = vadd.f32 %v488, %v1893
      %v1895 = vpop.f32.mrf.mxu0
      %v1896 = vadd.f32 %v488, %v1895
      %1897 = vmatmul.bf16.gmra.mxu0 %v1354
      %v1898 = vpop.f32.mrf.mxu0
      %v1899 = vadd.f32 %v488, %v1898
      %v1900 = vpop.f32.mrf.mxu0
      %v1901 = vadd.f32 %v488, %v1900
      %1902 = vmatmul.bf16.gmra.mxu0 %v1357
      %v1903 = vpop.f32.mrf.mxu0
      %v1904 = vadd.f32 %v488, %v1903
      %v1905 = vpop.f32.mrf.mxu0
      %v1906 = vadd.f32 %v488, %v1905
      %1907 = vmatmul.bf16.gmra.mxu0 %v1360
      %v1908 = vpop.f32.mrf.mxu0
      %v1909 = vadd.f32 %v488, %v1908
      %v1910 = vpop.f32.mrf.mxu0
      %v1911 = vadd.f32 %v488, %v1910
      %1912 = vmatmul.bf16.gmra.mxu0 %v1363
      %v1913 = vpop.f32.mrf.mxu0
      %v1914 = vadd.f32 %v488, %v1913
      %v1915 = vpop.f32.mrf.mxu0
      %v1916 = vadd.f32 %v488, %v1915
      %1917 = vmatmul.bf16.gmra.mxu0 %v1366
      %v1918 = vpop.f32.mrf.mxu0
      %v1919 = vadd.f32 %v488, %v1918
      %v1920 = vpop.f32.mrf.mxu0
      %v1921 = vadd.f32 %v488, %v1920
      %1922 = vmatmul.bf16.gmra.mxu0 %v1369
      %v1923 = vpop.f32.mrf.mxu0
      %v1924 = vadd.f32 %v488, %v1923
      %v1925 = vpop.f32.mrf.mxu0
      %v1926 = vadd.f32 %v488, %v1925
      %1927 = vmatmul.bf16.gmra.mxu0 %v1372
      %v1928 = vpop.f32.mrf.mxu0
      %v1929 = vadd.f32 %v488, %v1928
      %v1930 = vpop.f32.mrf.mxu0
      %v1931 = vadd.f32 %v488, %v1930
      %1932 = vmatmul.bf16.gmra.mxu0 %v1375
      %v1933 = vpop.f32.mrf.mxu0
      %v1934 = vadd.f32 %v488, %v1933
      %v1935 = vpop.f32.mrf.mxu0
      %v1936 = vadd.f32 %v488, %v1935
      %1937 = vmatmul.bf16.gmra.mxu0 %v1378
      %v1938 = vpop.f32.mrf.mxu0
      %v1939 = vadd.f32 %v488, %v1938
      %v1940 = vpop.f32.mrf.mxu0
      %v1941 = vadd.f32 %v488, %v1940
      %1942 = vmatmul.bf16.gmra.mxu0 %v1381
      %v1943 = vpop.f32.mrf.mxu0
      %v1944 = vadd.f32 %v488, %v1943
      %v1945 = vpop.f32.mrf.mxu0
      %v1946 = vadd.f32 %v488, %v1945
      %1947 = vmatmul.bf16.gmra.mxu0 %v1384
      %v1948 = vpop.f32.mrf.mxu0
      %v1949 = vadd.f32 %v488, %v1948
      %v1950 = vpop.f32.mrf.mxu0
      %v1951 = vadd.f32 %v488, %v1950
      %1952 = vmatmul.bf16.gmra.mxu0 %v1387
      %v1953 = vpop.f32.mrf.mxu0
      %v1954 = vadd.f32 %v488, %v1953
      %v1955 = vpop.f32.mrf.mxu0
      %v1956 = vadd.f32 %v488, %v1955
      %1957 = vmatmul.bf16.gmra.mxu0 %v1390
      %v1958 = vpop.f32.mrf.mxu0
      %v1959 = vadd.f32 %v488, %v1958
      %v1960 = vpop.f32.mrf.mxu0
      %v1961 = vadd.f32 %v488, %v1960
      %1962 = vmatmul.bf16.gmra.mxu0 %v1393
      %v1963 = vpop.f32.mrf.mxu0
      %v1964 = vadd.f32 %v488, %v1963
      %v1965 = vpop.f32.mrf.mxu0
      %v1966 = vadd.f32 %v488, %v1965
      %1967 = vmatmul.bf16.gmra.mxu0 %v1396
      %v1968 = vpop.f32.mrf.mxu0
      %v1969 = vadd.f32 %v488, %v1968
      %v1970 = vpop.f32.mrf.mxu0
      %v1971 = vadd.f32 %v488, %v1970
      %1972 = vmatmul.bf16.gmra.mxu0 %v1399
      %v1973 = vpop.f32.mrf.mxu0
      %v1974 = vadd.f32 %v488, %v1973
      %v1975 = vpop.f32.mrf.mxu0
      %v1976 = vadd.f32 %v488, %v1975
      %1977 = vmatmul.bf16.gmra.mxu0 %v1402
      %v1978 = vpop.f32.mrf.mxu0
      %v1979 = vadd.f32 %v488, %v1978
      %v1980 = vpop.f32.mrf.mxu0
      %v1981 = vadd.f32 %v488, %v1980
      %1982 = vmatmul.bf16.gmra.mxu0 %v1405
      %v1983 = vpop.f32.mrf.mxu0
      %v1984 = vadd.f32 %v488, %v1983
      %v1985 = vpop.f32.mrf.mxu0
      %v1986 = vadd.f32 %v488, %v1985
      %1987 = vmatmul.bf16.gmra.mxu0 %v1408
      %v1988 = vpop.f32.mrf.mxu0
      %v1989 = vadd.f32 %v488, %v1988
      %v1990 = vpop.f32.mrf.mxu0
      %v1991 = vadd.f32 %v488, %v1990
      %1992 = vmatmul.bf16.gmra.mxu0 %v1411
      %v1993 = vpop.f32.mrf.mxu0
      %v1994 = vadd.f32 %v488, %v1993
      %v1995 = vpop.f32.mrf.mxu0
      %v1996 = vadd.f32 %v488, %v1995
      %1997 = vmatmul.bf16.gmra.mxu0 %v1414
      %v1998 = vpop.f32.mrf.mxu0
      %v1999 = vadd.f32 %v488, %v1998
      %v2000 = vpop.f32.mrf.mxu0
      %v2001 = vadd.f32 %v488, %v2000
      %2002 = vmatmul.bf16.gmra.mxu0 %v1417
      %v2003 = vpop.f32.mrf.mxu0
      %v2004 = vadd.f32 %v488, %v2003
      %v2005 = vpop.f32.mrf.mxu0
      %v2006 = vadd.f32 %v488, %v2005
      %2007 = vmatmul.bf16.gmra.mxu0 %v1420
      %v2008 = vpop.f32.mrf.mxu0
      %v2009 = vadd.f32 %v488, %v2008
      %v2010 = vpop.f32.mrf.mxu0
      %v2011 = vadd.f32 %v488, %v2010
      %2012 = vmatmul.bf16.gmra.mxu0 %v1423
      %v2013 = vpop.f32.mrf.mxu0
      %v2014 = vadd.f32 %v488, %v2013
      %v2015 = vpop.f32.mrf.mxu0
      %v2016 = vadd.f32 %v488, %v2015
      %2017 = vmatmul.bf16.gmra.mxu0 %v1426
      %v2018 = vpop.f32.mrf.mxu0
      %v2019 = vadd.f32 %v488, %v2018
      %v2020 = vpop.f32.mrf.mxu0
      %v2021 = vadd.f32 %v488, %v2020
      %2022 = vmatmul.bf16.gmra.mxu0 %v1429
      %v2023 = vpop.f32.mrf.mxu0
      %v2024 = vadd.f32 %v488, %v2023
      %v2025 = vpop.f32.mrf.mxu0
      %v2026 = vadd.f32 %v488, %v2025
      %2027 = vmatmul.bf16.gmra.mxu0 %v1432
      %v2028 = vpop.f32.mrf.mxu0
      %v2029 = vadd.f32 %v488, %v2028
      %v2030 = vpop.f32.mrf.mxu0
      %v2031 = vadd.f32 %v488, %v2030
      %2032 = vmatmul.bf16.gmra.mxu0 %v1435
      %v2033 = vpop.f32.mrf.mxu0
      %v2034 = vadd.f32 %v488, %v2033
      %v2035 = vpop.f32.mrf.mxu0
      %v2036 = vadd.f32 %v488, %v2035
      %2037 = vmatmul.bf16.gmra.mxu0 %v1438
      %v2038 = vpop.f32.mrf.mxu0
      %v2039 = vadd.f32 %v488, %v2038
      %v2040 = vpop.f32.mrf.mxu0
      %v2041 = vadd.f32 %v488, %v2040
      %2042 = vmatmul.bf16.gmra.mxu0 %v1441
      %v2043 = vpop.f32.mrf.mxu0
      %v2044 = vadd.f32 %v488, %v2043
      %v2045 = vpop.f32.mrf.mxu0
      %v2046 = vadd.f32 %v488, %v2045
      %2047 = vmatmul.bf16.gmra.mxu0 %v1444
      %v2048 = vpop.f32.mrf.mxu0
      %v2049 = vadd.f32 %v488, %v2048
      %v2050 = vpop.f32.mrf.mxu0
      %v2051 = vadd.f32 %v488, %v2050
      %2052 = vmatmul.bf16.gmra.mxu0 %v1447
      %v2053 = vpop.f32.mrf.mxu0
      %v2054 = vadd.f32 %v488, %v2053
      %v2055 = vpop.f32.mrf.mxu0
      %v2056 = vadd.f32 %v488, %v2055
      %2057 = vmatmul.bf16.gmra.mxu0 %v1450
      %v2058 = vpop.f32.mrf.mxu0
      %v2059 = vadd.f32 %v488, %v2058
      %v2060 = vpop.f32.mrf.mxu0
      %v2061 = vadd.f32 %v488, %v2060
      %2062 = vmatmul.bf16.gmra.mxu0 %v1453
      %v2063 = vpop.f32.mrf.mxu0
      %v2064 = vadd.f32 %v488, %v2063
      %v2065 = vpop.f32.mrf.mxu0
      %v2066 = vadd.f32 %v488, %v2065
      %2067 = vmatmul.bf16.gmra.mxu0 %v1456
      %v2068 = vpop.f32.mrf.mxu0
      %v2069 = vadd.f32 %v488, %v2068
      %v2070 = vpop.f32.mrf.mxu0
      %v2071 = vadd.f32 %v488, %v2070
      %2072 = vmatmul.bf16.gmra.mxu0 %v1459
      %v2073 = vpop.f32.mrf.mxu0
      %v2074 = vadd.f32 %v488, %v2073
      %v2075 = vpop.f32.mrf.mxu0
      %v2076 = vadd.f32 %v488, %v2075
      %2077 = vmatmul.bf16.gmra.mxu0 %v1462
      %v2078 = vpop.f32.mrf.mxu0
      %v2079 = vadd.f32 %v488, %v2078
      %v2080 = vpop.f32.mrf.mxu0
      %v2081 = vadd.f32 %v488, %v2080
      %2082 = vmatmul.bf16.gmra.mxu0 %v1465
      %v2083 = vpop.f32.mrf.mxu0
      %v2084 = vadd.f32 %v488, %v2083
      %v2085 = vpop.f32.mrf.mxu0
      %v2086 = vadd.f32 %v488, %v2085
      %2087 = vmatmul.bf16.gmra.mxu0 %v1468
      %v2088 = vpop.f32.mrf.mxu0
      %v2089 = vadd.f32 %v488, %v2088
      %v2090 = vpop.f32.mrf.mxu0
      %v2091 = vadd.f32 %v488, %v2090
      %2092 = vmatmul.bf16.gmra.mxu0 %v1471
      %v2093 = vpop.f32.mrf.mxu0
      %v2094 = vadd.f32 %v488, %v2093
      %v2095 = vpop.f32.mrf.mxu0
      %v2096 = vadd.f32 %v488, %v2095
      %2097 = vmatmul.bf16.gmra.mxu0 %v1474
      %v2098 = vpop.f32.mrf.mxu0
      %v2099 = vadd.f32 %v488, %v2098
      %v2100 = vpop.f32.mrf.mxu0
      %v2101 = vadd.f32 %v488, %v2100
      %2102 = vmatmul.bf16.gmra.mxu0 %v1477
      %v2103 = vpop.f32.mrf.mxu0
      %v2104 = vadd.f32 %v488, %v2103
      %v2105 = vpop.f32.mrf.mxu0
      %v2106 = vadd.f32 %v488, %v2105
      %2107 = vmatmul.bf16.gmra.mxu0 %v1480
      %v2108 = vpop.f32.mrf.mxu0
      %v2109 = vadd.f32 %v488, %v2108
      %v2110 = vpop.f32.mrf.mxu0
      %v2111 = vadd.f32 %v488, %v2110
      %2112 = vmatmul.bf16.gmra.mxu0 %v1483
      %v2113 = vpop.f32.mrf.mxu0
      %v2114 = vadd.f32 %v488, %v2113
      %v2115 = vpop.f32.mrf.mxu0
      %v2116 = vadd.f32 %v488, %v2115
      %2117 = vmatmul.bf16.gmra.mxu0 %v1486
      %v2118 = vpop.f32.mrf.mxu0
      %v2119 = vadd.f32 %v488, %v2118
      %v2120 = vpop.f32.mrf.mxu0
      %v2121 = vadd.f32 %v488, %v2120
      %2122 = vmatmul.bf16.gmra.mxu0 %v1489
      %v2123 = vpop.f32.mrf.mxu0
      %v2124 = vadd.f32 %v488, %v2123
      %v2125 = vpop.f32.mrf.mxu0
      %v2126 = vadd.f32 %v488, %v2125
      %2127 = vmatmul.bf16.gmra.mxu0 %v1492
      %v2128 = vpop.f32.mrf.mxu0
      %v2129 = vadd.f32 %v488, %v2128
      %v2130 = vpop.f32.mrf.mxu0
      %v2131 = vadd.f32 %v488, %v2130
      %2132 = vmatmul.bf16.gmra.mxu0 %v1495
      %v2133 = vpop.f32.mrf.mxu0
      %v2134 = vadd.f32 %v488, %v2133
      %v2135 = vpop.f32.mrf.mxu0
      %v2136 = vadd.f32 %v488, %v2135
      %2137 = vmatmul.bf16.gmra.mxu0 %v1498
      %v2138 = vpop.f32.mrf.mxu0
      %v2139 = vadd.f32 %v488, %v2138
      %v2140 = vpop.f32.mrf.mxu0
      %v2141 = vadd.f32 %v488, %v2140
      %2142 = vmatmul.bf16.gmra.mxu0 %v1501
      %v2143 = vpop.f32.mrf.mxu0
      %v2144 = vadd.f32 %v488, %v2143
      %v2145 = vpop.f32.mrf.mxu0
      %v2146 = vadd.f32 %v488, %v2145
      %2147 = vmatmul.bf16.gmra.mxu0 %v1504
      %v2148 = vpop.f32.mrf.mxu0
      %v2149 = vadd.f32 %v488, %v2148
      %v2150 = vpop.f32.mrf.mxu0
      %v2151 = vadd.f32 %v488, %v2150
      %2152 = vmatmul.bf16.gmra.mxu0 %v1507
      %v2153 = vpop.f32.mrf.mxu0
      %v2154 = vadd.f32 %v488, %v2153
      %v2155 = vpop.f32.mrf.mxu0
      %v2156 = vadd.f32 %v488, %v2155
      %2157 = vmatmul.bf16.gmra.mxu0 %v1510
      %v2158 = vpop.f32.mrf.mxu0
      %v2159 = vadd.f32 %v488, %v2158
      %v2160 = vpop.f32.mrf.mxu0
      %v2161 = vadd.f32 %v488, %v2160
      %2162 = vmatmul.bf16.gmra.mxu0 %v1513
      %v2163 = vpop.f32.mrf.mxu0
      %v2164 = vadd.f32 %v488, %v2163
      %v2165 = vpop.f32.mrf.mxu0
      %v2166 = vadd.f32 %v488, %v2165
      %2167 = vdwg.mxu0
      %vm2168 = vcmask 261120
      %v2169 = vsel %vm2168, %v1529, 0.0
      %2170 = vadd.xlane.f32.xlu0 %v2169
      %v2171 = vpop.xlane.xlu0 %2170
      %v2172 = vsel %vm2168, %v1531, 0.0
      %2173 = vadd.xlane.f32.xlu0 %v2172
      %v2174 = vpop.xlane.xlu0 %2173
      %v2175 = vsel %vm2168, %v1534, 0.0
      %2176 = vadd.xlane.f32.xlu0 %v2175
      %v2177 = vpop.xlane.xlu0 %2176
      %v2178 = vsel %vm2168, %v1536, 0.0
      %2179 = vadd.xlane.f32.xlu0 %v2178
      %v2180 = vpop.xlane.xlu0 %2179
      %v2181 = vsel %vm2168, %v1539, 0.0
      %2182 = vadd.xlane.f32.xlu0 %v2181
      %v2183 = vpop.xlane.xlu0 %2182
      %v2184 = vsel %vm2168, %v1541, 0.0
      %2185 = vadd.xlane.f32.xlu0 %v2184
      %v2186 = vpop.xlane.xlu0 %2185
      %v2187 = vsel %vm2168, %v1544, 0.0
      %2188 = vadd.xlane.f32.xlu0 %v2187
      %v2189 = vpop.xlane.xlu0 %2188
      %v2190 = vsel %vm2168, %v1546, 0.0
      %2191 = vadd.xlane.f32.xlu0 %v2190
      %v2192 = vpop.xlane.xlu0 %2191
      %v2193 = vsel %vm2168, %v1549, 0.0
      %2194 = vadd.xlane.f32.xlu0 %v2193
      %v2195 = vpop.xlane.xlu0 %2194
      %v2196 = vsel %vm2168, %v1551, 0.0
      %2197 = vadd.xlane.f32.xlu0 %v2196
      %v2198 = vpop.xlane.xlu0 %2197
      %v2199 = vsel %vm2168, %v1554, 0.0
      %2200 = vadd.xlane.f32.xlu0 %v2199
      %v2201 = vpop.xlane.xlu0 %2200
      %v2202 = vsel %vm2168, %v1556, 0.0
      %2203 = vadd.xlane.f32.xlu0 %v2202
      %v2204 = vpop.xlane.xlu0 %2203
      %v2205 = vsel %vm2168, %v1559, 0.0
      %2206 = vadd.xlane.f32.xlu0 %v2205
      %v2207 = vpop.xlane.xlu0 %2206
      %v2208 = vsel %vm2168, %v1561, 0.0
      %2209 = vadd.xlane.f32.xlu0 %v2208
      %v2210 = vpop.xlane.xlu0 %2209
      %v2211 = vsel %vm2168, %v1564, 0.0
      %2212 = vadd.xlane.f32.xlu0 %v2211
      %v2213 = vpop.xlane.xlu0 %2212
      %v2214 = vsel %vm2168, %v1566, 0.0
      %2215 = vadd.xlane.f32.xlu0 %v2214
      %v2216 = vpop.xlane.xlu0 %2215
      %v2217 = vsel %vm2168, %v1569, 0.0
      %2218 = vadd.xlane.f32.xlu0 %v2217
      %v2219 = vpop.xlane.xlu0 %2218
      %v2220 = vsel %vm2168, %v1571, 0.0
      %2221 = vadd.xlane.f32.xlu0 %v2220
      %v2222 = vpop.xlane.xlu0 %2221
      %v2223 = vsel %vm2168, %v1574, 0.0
      %2224 = vadd.xlane.f32.xlu0 %v2223
      %v2225 = vpop.xlane.xlu0 %2224
      %v2226 = vsel %vm2168, %v1576, 0.0
      %2227 = vadd.xlane.f32.xlu0 %v2226
      %v2228 = vpop.xlane.xlu0 %2227
      %v2229 = vsel %vm2168, %v1579, 0.0
      %2230 = vadd.xlane.f32.xlu0 %v2229
      %v2231 = vpop.xlane.xlu0 %2230
      %v2232 = vsel %vm2168, %v1581, 0.0
      %2233 = vadd.xlane.f32.xlu0 %v2232
      %v2234 = vpop.xlane.xlu0 %2233
      %v2235 = vsel %vm2168, %v1584, 0.0
      %2236 = vadd.xlane.f32.xlu0 %v2235
      %v2237 = vpop.xlane.xlu0 %2236
      %v2238 = vsel %vm2168, %v1586, 0.0
      %2239 = vadd.xlane.f32.xlu0 %v2238
      %v2240 = vpop.xlane.xlu0 %2239
      %v2241 = vsel %vm2168, %v1589, 0.0
      %2242 = vadd.xlane.f32.xlu0 %v2241
      %v2243 = vpop.xlane.xlu0 %2242
      %v2244 = vsel %vm2168, %v1591, 0.0
      %2245 = vadd.xlane.f32.xlu0 %v2244
      %v2246 = vpop.xlane.xlu0 %2245
      %v2247 = vsel %vm2168, %v1594, 0.0
      %2248 = vadd.xlane.f32.xlu0 %v2247
      %v2249 = vpop.xlane.xlu0 %2248
      %v2250 = vsel %vm2168, %v1596, 0.0
      %2251 = vadd.xlane.f32.xlu0 %v2250
      %v2252 = vpop.xlane.xlu0 %2251
      %v2253 = vsel %vm2168, %v1599, 0.0
      %2254 = vadd.xlane.f32.xlu0 %v2253
      %v2255 = vpop.xlane.xlu0 %2254
      %v2256 = vsel %vm2168, %v1601, 0.0
      %2257 = vadd.xlane.f32.xlu0 %v2256
      %v2258 = vpop.xlane.xlu0 %2257
      %v2259 = vsel %vm2168, %v1604, 0.0
      %2260 = vadd.xlane.f32.xlu0 %v2259
      %v2261 = vpop.xlane.xlu0 %2260
      %v2262 = vsel %vm2168, %v1606, 0.0
      %2263 = vadd.xlane.f32.xlu0 %v2262
      %v2264 = vpop.xlane.xlu0 %2263
      %v2265 = vsel %vm2168, %v1609, 0.0
      %2266 = vadd.xlane.f32.xlu0 %v2265
      %v2267 = vpop.xlane.xlu0 %2266
      %v2268 = vsel %vm2168, %v1611, 0.0
      %2269 = vadd.xlane.f32.xlu0 %v2268
      %v2270 = vpop.xlane.xlu0 %2269
      %v2271 = vsel %vm2168, %v1614, 0.0
      %2272 = vadd.xlane.f32.xlu0 %v2271
      %v2273 = vpop.xlane.xlu0 %2272
      %v2274 = vsel %vm2168, %v1616, 0.0
      %2275 = vadd.xlane.f32.xlu0 %v2274
      %v2276 = vpop.xlane.xlu0 %2275
      %v2277 = vsel %vm2168, %v1619, 0.0
      %2278 = vadd.xlane.f32.xlu0 %v2277
      %v2279 = vpop.xlane.xlu0 %2278
      %v2280 = vsel %vm2168, %v1621, 0.0
      %2281 = vadd.xlane.f32.xlu0 %v2280
      %v2282 = vpop.xlane.xlu0 %2281
      %v2283 = vsel %vm2168, %v1624, 0.0
      %2284 = vadd.xlane.f32.xlu0 %v2283
      %v2285 = vpop.xlane.xlu0 %2284
      %v2286 = vsel %vm2168, %v1626, 0.0
      %2287 = vadd.xlane.f32.xlu0 %v2286
      %v2288 = vpop.xlane.xlu0 %2287
      %v2289 = vsel %vm2168, %v1629, 0.0
      %2290 = vadd.xlane.f32.xlu0 %v2289
      %v2291 = vpop.xlane.xlu0 %2290
      %v2292 = vsel %vm2168, %v1631, 0.0
      %2293 = vadd.xlane.f32.xlu0 %v2292
      %v2294 = vpop.xlane.xlu0 %2293
      %v2295 = vsel %vm2168, %v1634, 0.0
      %2296 = vadd.xlane.f32.xlu0 %v2295
      %v2297 = vpop.xlane.xlu0 %2296
      %v2298 = vsel %vm2168, %v1636, 0.0
      %2299 = vadd.xlane.f32.xlu0 %v2298
      %v2300 = vpop.xlane.xlu0 %2299
      %v2301 = vsel %vm2168, %v1639, 0.0
      %2302 = vadd.xlane.f32.xlu0 %v2301
      %v2303 = vpop.xlane.xlu0 %2302
      %v2304 = vsel %vm2168, %v1641, 0.0
      %2305 = vadd.xlane.f32.xlu0 %v2304
      %v2306 = vpop.xlane.xlu0 %2305
      %v2307 = vsel %vm2168, %v1644, 0.0
      %2308 = vadd.xlane.f32.xlu0 %v2307
      %v2309 = vpop.xlane.xlu0 %2308
      %v2310 = vsel %vm2168, %v1646, 0.0
      %2311 = vadd.xlane.f32.xlu0 %v2310
      %v2312 = vpop.xlane.xlu0 %2311
      %v2313 = vsel %vm2168, %v1649, 0.0
      %2314 = vadd.xlane.f32.xlu0 %v2313
      %v2315 = vpop.xlane.xlu0 %2314
      %v2316 = vsel %vm2168, %v1651, 0.0
      %2317 = vadd.xlane.f32.xlu0 %v2316
      %v2318 = vpop.xlane.xlu0 %2317
      %v2319 = vsel %vm2168, %v1654, 0.0
      %2320 = vadd.xlane.f32.xlu0 %v2319
      %v2321 = vpop.xlane.xlu0 %2320
      %v2322 = vsel %vm2168, %v1656, 0.0
      %2323 = vadd.xlane.f32.xlu0 %v2322
      %v2324 = vpop.xlane.xlu0 %2323
      %v2325 = vsel %vm2168, %v1659, 0.0
      %2326 = vadd.xlane.f32.xlu0 %v2325
      %v2327 = vpop.xlane.xlu0 %2326
      %v2328 = vsel %vm2168, %v1661, 0.0
      %2329 = vadd.xlane.f32.xlu0 %v2328
      %v2330 = vpop.xlane.xlu0 %2329
      %v2331 = vsel %vm2168, %v1664, 0.0
      %2332 = vadd.xlane.f32.xlu0 %v2331
      %v2333 = vpop.xlane.xlu0 %2332
      %v2334 = vsel %vm2168, %v1666, 0.0
      %2335 = vadd.xlane.f32.xlu0 %v2334
      %v2336 = vpop.xlane.xlu0 %2335
      %v2337 = vsel %vm2168, %v1669, 0.0
      %2338 = vadd.xlane.f32.xlu0 %v2337
      %v2339 = vpop.xlane.xlu0 %2338
      %v2340 = vsel %vm2168, %v1671, 0.0
      %2341 = vadd.xlane.f32.xlu0 %v2340
      %v2342 = vpop.xlane.xlu0 %2341
      %v2343 = vsel %vm2168, %v1674, 0.0
      %2344 = vadd.xlane.f32.xlu0 %v2343
      %v2345 = vpop.xlane.xlu0 %2344
      %v2346 = vsel %vm2168, %v1676, 0.0
      %2347 = vadd.xlane.f32.xlu0 %v2346
      %v2348 = vpop.xlane.xlu0 %2347
      %v2349 = vsel %vm2168, %v1679, 0.0
      %2350 = vadd.xlane.f32.xlu0 %v2349
      %v2351 = vpop.xlane.xlu0 %2350
      %v2352 = vsel %vm2168, %v1681, 0.0
      %2353 = vadd.xlane.f32.xlu0 %v2352
      %v2354 = vpop.xlane.xlu0 %2353
      %v2355 = vsel %vm2168, %v1684, 0.0
      %2356 = vadd.xlane.f32.xlu0 %v2355
      %v2357 = vpop.xlane.xlu0 %2356
      %v2358 = vsel %vm2168, %v1686, 0.0
      %2359 = vadd.xlane.f32.xlu0 %v2358
      %v2360 = vpop.xlane.xlu0 %2359
      %v2361 = vsel %vm2168, %v1689, 0.0
      %2362 = vadd.xlane.f32.xlu0 %v2361
      %v2363 = vpop.xlane.xlu0 %2362
      %v2364 = vsel %vm2168, %v1691, 0.0
      %2365 = vadd.xlane.f32.xlu0 %v2364
      %v2366 = vpop.xlane.xlu0 %2365
      %v2367 = vsel %vm2168, %v1694, 0.0
      %2368 = vadd.xlane.f32.xlu0 %v2367
      %v2369 = vpop.xlane.xlu0 %2368
      %v2370 = vsel %vm2168, %v1696, 0.0
      %2371 = vadd.xlane.f32.xlu0 %v2370
      %v2372 = vpop.xlane.xlu0 %2371
      %v2373 = vsel %vm2168, %v1699, 0.0
      %2374 = vadd.xlane.f32.xlu0 %v2373
      %v2375 = vpop.xlane.xlu0 %2374
      %v2376 = vsel %vm2168, %v1701, 0.0
      %2377 = vadd.xlane.f32.xlu0 %v2376
      %v2378 = vpop.xlane.xlu0 %2377
      %v2379 = vsel %vm2168, %v1704, 0.0
      %2380 = vadd.xlane.f32.xlu0 %v2379
      %v2381 = vpop.xlane.xlu0 %2380
      %v2382 = vsel %vm2168, %v1706, 0.0
      %2383 = vadd.xlane.f32.xlu0 %v2382
      %v2384 = vpop.xlane.xlu0 %2383
      %v2385 = vsel %vm2168, %v1709, 0.0
      %2386 = vadd.xlane.f32.xlu0 %v2385
      %v2387 = vpop.xlane.xlu0 %2386
      %v2388 = vsel %vm2168, %v1711, 0.0
      %2389 = vadd.xlane.f32.xlu0 %v2388
      %v2390 = vpop.xlane.xlu0 %2389
      %v2391 = vsel %vm2168, %v1714, 0.0
      %2392 = vadd.xlane.f32.xlu0 %v2391
      %v2393 = vpop.xlane.xlu0 %2392
      %v2394 = vsel %vm2168, %v1716, 0.0
      %2395 = vadd.xlane.f32.xlu0 %v2394
      %v2396 = vpop.xlane.xlu0 %2395
      %v2397 = vsel %vm2168, %v1719, 0.0
      %2398 = vadd.xlane.f32.xlu0 %v2397
      %v2399 = vpop.xlane.xlu0 %2398
      %v2400 = vsel %vm2168, %v1721, 0.0
      %2401 = vadd.xlane.f32.xlu0 %v2400
      %v2402 = vpop.xlane.xlu0 %2401
      %v2403 = vsel %vm2168, %v1724, 0.0
      %2404 = vadd.xlane.f32.xlu0 %v2403
      %v2405 = vpop.xlane.xlu0 %2404
      %v2406 = vsel %vm2168, %v1726, 0.0
      %2407 = vadd.xlane.f32.xlu0 %v2406
      %v2408 = vpop.xlane.xlu0 %2407
      %v2409 = vsel %vm2168, %v1729, 0.0
      %2410 = vadd.xlane.f32.xlu0 %v2409
      %v2411 = vpop.xlane.xlu0 %2410
      %v2412 = vsel %vm2168, %v1731, 0.0
      %2413 = vadd.xlane.f32.xlu0 %v2412
      %v2414 = vpop.xlane.xlu0 %2413
      %v2415 = vsel %vm2168, %v1734, 0.0
      %2416 = vadd.xlane.f32.xlu0 %v2415
      %v2417 = vpop.xlane.xlu0 %2416
      %v2418 = vsel %vm2168, %v1736, 0.0
      %2419 = vadd.xlane.f32.xlu0 %v2418
      %v2420 = vpop.xlane.xlu0 %2419
      %v2421 = vsel %vm2168, %v1739, 0.0
      %2422 = vadd.xlane.f32.xlu0 %v2421
      %v2423 = vpop.xlane.xlu0 %2422
      %v2424 = vsel %vm2168, %v1741, 0.0
      %2425 = vadd.xlane.f32.xlu0 %v2424
      %v2426 = vpop.xlane.xlu0 %2425
      %v2427 = vsel %vm2168, %v1744, 0.0
      %2428 = vadd.xlane.f32.xlu0 %v2427
      %v2429 = vpop.xlane.xlu0 %2428
      %v2430 = vsel %vm2168, %v1746, 0.0
      %2431 = vadd.xlane.f32.xlu0 %v2430
      %v2432 = vpop.xlane.xlu0 %2431
      %v2433 = vsel %vm2168, %v1749, 0.0
      %2434 = vadd.xlane.f32.xlu0 %v2433
      %v2435 = vpop.xlane.xlu0 %2434
      %v2436 = vsel %vm2168, %v1751, 0.0
      %2437 = vadd.xlane.f32.xlu0 %v2436
      %v2438 = vpop.xlane.xlu0 %2437
      %v2439 = vsel %vm2168, %v1754, 0.0
      %2440 = vadd.xlane.f32.xlu0 %v2439
      %v2441 = vpop.xlane.xlu0 %2440
      %v2442 = vsel %vm2168, %v1756, 0.0
      %2443 = vadd.xlane.f32.xlu0 %v2442
      %v2444 = vpop.xlane.xlu0 %2443
      %v2445 = vsel %vm2168, %v1759, 0.0
      %2446 = vadd.xlane.f32.xlu0 %v2445
      %v2447 = vpop.xlane.xlu0 %2446
      %v2448 = vsel %vm2168, %v1761, 0.0
      %2449 = vadd.xlane.f32.xlu0 %v2448
      %v2450 = vpop.xlane.xlu0 %2449
      %v2451 = vsel %vm2168, %v1764, 0.0
      %2452 = vadd.xlane.f32.xlu0 %v2451
      %v2453 = vpop.xlane.xlu0 %2452
      %v2454 = vsel %vm2168, %v1766, 0.0
      %2455 = vadd.xlane.f32.xlu0 %v2454
      %v2456 = vpop.xlane.xlu0 %2455
      %v2457 = vsel %vm2168, %v1769, 0.0
      %2458 = vadd.xlane.f32.xlu0 %v2457
      %v2459 = vpop.xlane.xlu0 %2458
      %v2460 = vsel %vm2168, %v1771, 0.0
      %2461 = vadd.xlane.f32.xlu0 %v2460
      %v2462 = vpop.xlane.xlu0 %2461
      %v2463 = vsel %vm2168, %v1774, 0.0
      %2464 = vadd.xlane.f32.xlu0 %v2463
      %v2465 = vpop.xlane.xlu0 %2464
      %v2466 = vsel %vm2168, %v1776, 0.0
      %2467 = vadd.xlane.f32.xlu0 %v2466
      %v2468 = vpop.xlane.xlu0 %2467
      %v2469 = vsel %vm2168, %v1779, 0.0
      %2470 = vadd.xlane.f32.xlu0 %v2469
      %v2471 = vpop.xlane.xlu0 %2470
      %v2472 = vsel %vm2168, %v1781, 0.0
      %2473 = vadd.xlane.f32.xlu0 %v2472
      %v2474 = vpop.xlane.xlu0 %2473
      %v2475 = vsel %vm2168, %v1784, 0.0
      %2476 = vadd.xlane.f32.xlu0 %v2475
      %v2477 = vpop.xlane.xlu0 %2476
      %v2478 = vsel %vm2168, %v1786, 0.0
      %2479 = vadd.xlane.f32.xlu0 %v2478
      %v2480 = vpop.xlane.xlu0 %2479
      %v2481 = vsel %vm2168, %v1789, 0.0
      %2482 = vadd.xlane.f32.xlu0 %v2481
      %v2483 = vpop.xlane.xlu0 %2482
      %v2484 = vsel %vm2168, %v1791, 0.0
      %2485 = vadd.xlane.f32.xlu0 %v2484
      %v2486 = vpop.xlane.xlu0 %2485
      %v2487 = vsel %vm2168, %v1794, 0.0
      %2488 = vadd.xlane.f32.xlu0 %v2487
      %v2489 = vpop.xlane.xlu0 %2488
      %v2490 = vsel %vm2168, %v1796, 0.0
      %2491 = vadd.xlane.f32.xlu0 %v2490
      %v2492 = vpop.xlane.xlu0 %2491
      %v2493 = vsel %vm2168, %v1799, 0.0
      %2494 = vadd.xlane.f32.xlu0 %v2493
      %v2495 = vpop.xlane.xlu0 %2494
      %v2496 = vsel %vm2168, %v1801, 0.0
      %2497 = vadd.xlane.f32.xlu0 %v2496
      %v2498 = vpop.xlane.xlu0 %2497
      %v2499 = vsel %vm2168, %v1804, 0.0
      %2500 = vadd.xlane.f32.xlu0 %v2499
      %v2501 = vpop.xlane.xlu0 %2500
      %v2502 = vsel %vm2168, %v1806, 0.0
      %2503 = vadd.xlane.f32.xlu0 %v2502
      %v2504 = vpop.xlane.xlu0 %2503
      %v2505 = vsel %vm2168, %v1809, 0.0
      %2506 = vadd.xlane.f32.xlu0 %v2505
      %v2507 = vpop.xlane.xlu0 %2506
      %v2508 = vsel %vm2168, %v1811, 0.0
      %2509 = vadd.xlane.f32.xlu0 %v2508
      %v2510 = vpop.xlane.xlu0 %2509
      %v2511 = vsel %vm2168, %v1814, 0.0
      %2512 = vadd.xlane.f32.xlu0 %v2511
      %v2513 = vpop.xlane.xlu0 %2512
      %v2514 = vsel %vm2168, %v1816, 0.0
      %2515 = vadd.xlane.f32.xlu0 %v2514
      %v2516 = vpop.xlane.xlu0 %2515
      %v2517 = vsel %vm2168, %v1819, 0.0
      %2518 = vadd.xlane.f32.xlu0 %v2517
      %v2519 = vpop.xlane.xlu0 %2518
      %v2520 = vsel %vm2168, %v1821, 0.0
      %2521 = vadd.xlane.f32.xlu0 %v2520
      %v2522 = vpop.xlane.xlu0 %2521
      %v2523 = vsel %vm2168, %v1824, 0.0
      %2524 = vadd.xlane.f32.xlu0 %v2523
      %v2525 = vpop.xlane.xlu0 %2524
      %v2526 = vsel %vm2168, %v1826, 0.0
      %2527 = vadd.xlane.f32.xlu0 %v2526
      %v2528 = vpop.xlane.xlu0 %2527
      %v2529 = vsel %vm2168, %v1829, 0.0
      %2530 = vadd.xlane.f32.xlu0 %v2529
      %v2531 = vpop.xlane.xlu0 %2530
      %v2532 = vsel %vm2168, %v1831, 0.0
      %2533 = vadd.xlane.f32.xlu0 %v2532
      %v2534 = vpop.xlane.xlu0 %2533
      %v2535 = vsel %vm2168, %v1834, 0.0
      %2536 = vadd.xlane.f32.xlu0 %v2535
      %v2537 = vpop.xlane.xlu0 %2536
      %v2538 = vsel %vm2168, %v1836, 0.0
      %2539 = vadd.xlane.f32.xlu0 %v2538
      %v2540 = vpop.xlane.xlu0 %2539
      %v2541 = vsel %vm2168, %v1839, 0.0
      %2542 = vadd.xlane.f32.xlu0 %v2541
      %v2543 = vpop.xlane.xlu0 %2542
      %v2544 = vsel %vm2168, %v1841, 0.0
      %2545 = vadd.xlane.f32.xlu0 %v2544
      %v2546 = vpop.xlane.xlu0 %2545
      %v2547 = vsel %vm2168, %v1844, 0.0
      %2548 = vadd.xlane.f32.xlu0 %v2547
      %v2549 = vpop.xlane.xlu0 %2548
      %v2550 = vsel %vm2168, %v1846, 0.0
      %2551 = vadd.xlane.f32.xlu0 %v2550
      %v2552 = vpop.xlane.xlu0 %2551
      %v2553 = vsel %vm2168, %v1849, 0.0
      %2554 = vadd.xlane.f32.xlu0 %v2553
      %v2555 = vpop.xlane.xlu0 %2554
      %v2556 = vsel %vm2168, %v1851, 0.0
      %2557 = vadd.xlane.f32.xlu0 %v2556
      %v2558 = vpop.xlane.xlu0 %2557
      %v2559 = vsel %vm2168, %v1854, 0.0
      %2560 = vadd.xlane.f32.xlu0 %v2559
      %v2561 = vpop.xlane.xlu0 %2560
      %v2562 = vsel %vm2168, %v1856, 0.0
      %2563 = vadd.xlane.f32.xlu0 %v2562
      %v2564 = vpop.xlane.xlu0 %2563
      %v2565 = vsel %vm2168, %v1859, 0.0
      %2566 = vadd.xlane.f32.xlu0 %v2565
      %v2567 = vpop.xlane.xlu0 %2566
      %v2568 = vsel %vm2168, %v1861, 0.0
      %2569 = vadd.xlane.f32.xlu0 %v2568
      %v2570 = vpop.xlane.xlu0 %2569
      %v2571 = vsel %vm2168, %v1864, 0.0
      %2572 = vadd.xlane.f32.xlu0 %v2571
      %v2573 = vpop.xlane.xlu0 %2572
      %v2574 = vsel %vm2168, %v1866, 0.0
      %2575 = vadd.xlane.f32.xlu0 %v2574
      %v2576 = vpop.xlane.xlu0 %2575
      %v2577 = vsel %vm2168, %v1869, 0.0
      %2578 = vadd.xlane.f32.xlu0 %v2577
      %v2579 = vpop.xlane.xlu0 %2578
      %v2580 = vsel %vm2168, %v1871, 0.0
      %2581 = vadd.xlane.f32.xlu0 %v2580
      %v2582 = vpop.xlane.xlu0 %2581
      %v2583 = vsel %vm2168, %v1874, 0.0
      %2584 = vadd.xlane.f32.xlu0 %v2583
      %v2585 = vpop.xlane.xlu0 %2584
      %v2586 = vsel %vm2168, %v1876, 0.0
      %2587 = vadd.xlane.f32.xlu0 %v2586
      %v2588 = vpop.xlane.xlu0 %2587
      %v2589 = vsel %vm2168, %v1879, 0.0
      %2590 = vadd.xlane.f32.xlu0 %v2589
      %v2591 = vpop.xlane.xlu0 %2590
      %v2592 = vsel %vm2168, %v1881, 0.0
      %2593 = vadd.xlane.f32.xlu0 %v2592
      %v2594 = vpop.xlane.xlu0 %2593
      %v2595 = vsel %vm2168, %v1884, 0.0
      %2596 = vadd.xlane.f32.xlu0 %v2595
      %v2597 = vpop.xlane.xlu0 %2596
      %v2598 = vsel %vm2168, %v1886, 0.0
      %2599 = vadd.xlane.f32.xlu0 %v2598
      %v2600 = vpop.xlane.xlu0 %2599
      %v2601 = vsel %vm2168, %v1889, 0.0
      %2602 = vadd.xlane.f32.xlu0 %v2601
      %v2603 = vpop.xlane.xlu0 %2602
      %v2604 = vsel %vm2168, %v1891, 0.0
      %2605 = vadd.xlane.f32.xlu0 %v2604
      %v2606 = vpop.xlane.xlu0 %2605
      %v2607 = vsel %vm2168, %v1894, 0.0
      %2608 = vadd.xlane.f32.xlu0 %v2607
      %v2609 = vpop.xlane.xlu0 %2608
      %v2610 = vsel %vm2168, %v1896, 0.0
      %2611 = vadd.xlane.f32.xlu0 %v2610
      %v2612 = vpop.xlane.xlu0 %2611
      %v2613 = vsel %vm2168, %v1899, 0.0
      %2614 = vadd.xlane.f32.xlu0 %v2613
      %v2615 = vpop.xlane.xlu0 %2614
      %v2616 = vsel %vm2168, %v1901, 0.0
      %2617 = vadd.xlane.f32.xlu0 %v2616
      %v2618 = vpop.xlane.xlu0 %2617
      %v2619 = vsel %vm2168, %v1904, 0.0
      %2620 = vadd.xlane.f32.xlu0 %v2619
      %v2621 = vpop.xlane.xlu0 %2620
      %v2622 = vsel %vm2168, %v1906, 0.0
      %2623 = vadd.xlane.f32.xlu0 %v2622
      %v2624 = vpop.xlane.xlu0 %2623
      %v2625 = vsel %vm2168, %v1909, 0.0
      %2626 = vadd.xlane.f32.xlu0 %v2625
      %v2627 = vpop.xlane.xlu0 %2626
      %v2628 = vsel %vm2168, %v1911, 0.0
      %2629 = vadd.xlane.f32.xlu0 %v2628
      %v2630 = vpop.xlane.xlu0 %2629
      %v2631 = vsel %vm2168, %v1914, 0.0
      %2632 = vadd.xlane.f32.xlu0 %v2631
      %v2633 = vpop.xlane.xlu0 %2632
      %v2634 = vsel %vm2168, %v1916, 0.0
      %2635 = vadd.xlane.f32.xlu0 %v2634
      %v2636 = vpop.xlane.xlu0 %2635
      %v2637 = vsel %vm2168, %v1919, 0.0
      %2638 = vadd.xlane.f32.xlu0 %v2637
      %v2639 = vpop.xlane.xlu0 %2638
      %v2640 = vsel %vm2168, %v1921, 0.0
      %2641 = vadd.xlane.f32.xlu0 %v2640
      %v2642 = vpop.xlane.xlu0 %2641
      %v2643 = vsel %vm2168, %v1924, 0.0
      %2644 = vadd.xlane.f32.xlu0 %v2643
      %v2645 = vpop.xlane.xlu0 %2644
      %v2646 = vsel %vm2168, %v1926, 0.0
      %2647 = vadd.xlane.f32.xlu0 %v2646
      %v2648 = vpop.xlane.xlu0 %2647
      %v2649 = vsel %vm2168, %v1929, 0.0
      %2650 = vadd.xlane.f32.xlu0 %v2649
      %v2651 = vpop.xlane.xlu0 %2650
      %v2652 = vsel %vm2168, %v1931, 0.0
      %2653 = vadd.xlane.f32.xlu0 %v2652
      %v2654 = vpop.xlane.xlu0 %2653
      %v2655 = vsel %vm2168, %v1934, 0.0
      %2656 = vadd.xlane.f32.xlu0 %v2655
      %v2657 = vpop.xlane.xlu0 %2656
      %v2658 = vsel %vm2168, %v1936, 0.0
      %2659 = vadd.xlane.f32.xlu0 %v2658
      %v2660 = vpop.xlane.xlu0 %2659
      %v2661 = vsel %vm2168, %v1939, 0.0
      %2662 = vadd.xlane.f32.xlu0 %v2661
      %v2663 = vpop.xlane.xlu0 %2662
      %v2664 = vsel %vm2168, %v1941, 0.0
      %2665 = vadd.xlane.f32.xlu0 %v2664
      %v2666 = vpop.xlane.xlu0 %2665
      %v2667 = vsel %vm2168, %v1944, 0.0
      %2668 = vadd.xlane.f32.xlu0 %v2667
      %v2669 = vpop.xlane.xlu0 %2668
      %v2670 = vsel %vm2168, %v1946, 0.0
      %2671 = vadd.xlane.f32.xlu0 %v2670
      %v2672 = vpop.xlane.xlu0 %2671
      %v2673 = vsel %vm2168, %v1949, 0.0
      %2674 = vadd.xlane.f32.xlu0 %v2673
      %v2675 = vpop.xlane.xlu0 %2674
      %v2676 = vsel %vm2168, %v1951, 0.0
      %2677 = vadd.xlane.f32.xlu0 %v2676
      %v2678 = vpop.xlane.xlu0 %2677
      %v2679 = vsel %vm2168, %v1954, 0.0
      %2680 = vadd.xlane.f32.xlu0 %v2679
      %v2681 = vpop.xlane.xlu0 %2680
      %v2682 = vsel %vm2168, %v1956, 0.0
      %2683 = vadd.xlane.f32.xlu0 %v2682
      %v2684 = vpop.xlane.xlu0 %2683
      %v2685 = vsel %vm2168, %v1959, 0.0
      %2686 = vadd.xlane.f32.xlu0 %v2685
      %v2687 = vpop.xlane.xlu0 %2686
      %v2688 = vsel %vm2168, %v1961, 0.0
      %2689 = vadd.xlane.f32.xlu0 %v2688
      %v2690 = vpop.xlane.xlu0 %2689
      %v2691 = vsel %vm2168, %v1964, 0.0
      %2692 = vadd.xlane.f32.xlu0 %v2691
      %v2693 = vpop.xlane.xlu0 %2692
      %v2694 = vsel %vm2168, %v1966, 0.0
      %2695 = vadd.xlane.f32.xlu0 %v2694
      %v2696 = vpop.xlane.xlu0 %2695
      %v2697 = vsel %vm2168, %v1969, 0.0
      %2698 = vadd.xlane.f32.xlu0 %v2697
      %v2699 = vpop.xlane.xlu0 %2698
      %v2700 = vsel %vm2168, %v1971, 0.0
      %2701 = vadd.xlane.f32.xlu0 %v2700
      %v2702 = vpop.xlane.xlu0 %2701
      %v2703 = vsel %vm2168, %v1974, 0.0
      %2704 = vadd.xlane.f32.xlu0 %v2703
      %v2705 = vpop.xlane.xlu0 %2704
      %v2706 = vsel %vm2168, %v1976, 0.0
      %2707 = vadd.xlane.f32.xlu0 %v2706
      %v2708 = vpop.xlane.xlu0 %2707
      %v2709 = vsel %vm2168, %v1979, 0.0
      %2710 = vadd.xlane.f32.xlu0 %v2709
      %v2711 = vpop.xlane.xlu0 %2710
      %v2712 = vsel %vm2168, %v1981, 0.0
      %2713 = vadd.xlane.f32.xlu0 %v2712
      %v2714 = vpop.xlane.xlu0 %2713
      %v2715 = vsel %vm2168, %v1984, 0.0
      %2716 = vadd.xlane.f32.xlu0 %v2715
      %v2717 = vpop.xlane.xlu0 %2716
      %v2718 = vsel %vm2168, %v1986, 0.0
      %2719 = vadd.xlane.f32.xlu0 %v2718
      %v2720 = vpop.xlane.xlu0 %2719
      %v2721 = vsel %vm2168, %v1989, 0.0
      %2722 = vadd.xlane.f32.xlu0 %v2721
      %v2723 = vpop.xlane.xlu0 %2722
      %v2724 = vsel %vm2168, %v1991, 0.0
      %2725 = vadd.xlane.f32.xlu0 %v2724
      %v2726 = vpop.xlane.xlu0 %2725
      %v2727 = vsel %vm2168, %v1994, 0.0
      %2728 = vadd.xlane.f32.xlu0 %v2727
      %v2729 = vpop.xlane.xlu0 %2728
      %v2730 = vsel %vm2168, %v1996, 0.0
      %2731 = vadd.xlane.f32.xlu0 %v2730
      %v2732 = vpop.xlane.xlu0 %2731
      %v2733 = vsel %vm2168, %v1999, 0.0
      %2734 = vadd.xlane.f32.xlu0 %v2733
      %v2735 = vpop.xlane.xlu0 %2734
      %v2736 = vsel %vm2168, %v2001, 0.0
      %2737 = vadd.xlane.f32.xlu0 %v2736
      %v2738 = vpop.xlane.xlu0 %2737
      %v2739 = vsel %vm2168, %v2004, 0.0
      %2740 = vadd.xlane.f32.xlu0 %v2739
      %v2741 = vpop.xlane.xlu0 %2740
      %v2742 = vsel %vm2168, %v2006, 0.0
      %2743 = vadd.xlane.f32.xlu0 %v2742
      %v2744 = vpop.xlane.xlu0 %2743
      %v2745 = vsel %vm2168, %v2009, 0.0
      %2746 = vadd.xlane.f32.xlu0 %v2745
      %v2747 = vpop.xlane.xlu0 %2746
      %v2748 = vsel %vm2168, %v2011, 0.0
      %2749 = vadd.xlane.f32.xlu0 %v2748
      %v2750 = vpop.xlane.xlu0 %2749
      %v2751 = vsel %vm2168, %v2014, 0.0
      %2752 = vadd.xlane.f32.xlu0 %v2751
      %v2753 = vpop.xlane.xlu0 %2752
      %v2754 = vsel %vm2168, %v2016, 0.0
      %2755 = vadd.xlane.f32.xlu0 %v2754
      %v2756 = vpop.xlane.xlu0 %2755
      %v2757 = vsel %vm2168, %v2019, 0.0
      %2758 = vadd.xlane.f32.xlu0 %v2757
      %v2759 = vpop.xlane.xlu0 %2758
      %v2760 = vsel %vm2168, %v2021, 0.0
      %2761 = vadd.xlane.f32.xlu0 %v2760
      %v2762 = vpop.xlane.xlu0 %2761
      %v2763 = vsel %vm2168, %v2024, 0.0
      %2764 = vadd.xlane.f32.xlu0 %v2763
      %v2765 = vpop.xlane.xlu0 %2764
      %v2766 = vsel %vm2168, %v2026, 0.0
      %2767 = vadd.xlane.f32.xlu0 %v2766
      %v2768 = vpop.xlane.xlu0 %2767
      %v2769 = vsel %vm2168, %v2029, 0.0
      %2770 = vadd.xlane.f32.xlu0 %v2769
      %v2771 = vpop.xlane.xlu0 %2770
      %v2772 = vsel %vm2168, %v2031, 0.0
      %2773 = vadd.xlane.f32.xlu0 %v2772
      %v2774 = vpop.xlane.xlu0 %2773
      %v2775 = vsel %vm2168, %v2034, 0.0
      %2776 = vadd.xlane.f32.xlu0 %v2775
      %v2777 = vpop.xlane.xlu0 %2776
      %v2778 = vsel %vm2168, %v2036, 0.0
      %2779 = vadd.xlane.f32.xlu0 %v2778
      %v2780 = vpop.xlane.xlu0 %2779
      %v2781 = vsel %vm2168, %v2039, 0.0
      %2782 = vadd.xlane.f32.xlu0 %v2781
      %v2783 = vpop.xlane.xlu0 %2782
      %v2784 = vsel %vm2168, %v2041, 0.0
      %2785 = vadd.xlane.f32.xlu0 %v2784
      %v2786 = vpop.xlane.xlu0 %2785
      %v2787 = vsel %vm2168, %v2044, 0.0
      %2788 = vadd.xlane.f32.xlu0 %v2787
      %v2789 = vpop.xlane.xlu0 %2788
      %v2790 = vsel %vm2168, %v2046, 0.0
      %2791 = vadd.xlane.f32.xlu0 %v2790
      %v2792 = vpop.xlane.xlu0 %2791
      %v2793 = vsel %vm2168, %v2049, 0.0
      %2794 = vadd.xlane.f32.xlu0 %v2793
      %v2795 = vpop.xlane.xlu0 %2794
      %v2796 = vsel %vm2168, %v2051, 0.0
      %2797 = vadd.xlane.f32.xlu0 %v2796
      %v2798 = vpop.xlane.xlu0 %2797
      %v2799 = vsel %vm2168, %v2054, 0.0
      %2800 = vadd.xlane.f32.xlu0 %v2799
      %v2801 = vpop.xlane.xlu0 %2800
      %v2802 = vsel %vm2168, %v2056, 0.0
      %2803 = vadd.xlane.f32.xlu0 %v2802
      %v2804 = vpop.xlane.xlu0 %2803
      %v2805 = vsel %vm2168, %v2059, 0.0
      %2806 = vadd.xlane.f32.xlu0 %v2805
      %v2807 = vpop.xlane.xlu0 %2806
      %v2808 = vsel %vm2168, %v2061, 0.0
      %2809 = vadd.xlane.f32.xlu0 %v2808
      %v2810 = vpop.xlane.xlu0 %2809
      %v2811 = vsel %vm2168, %v2064, 0.0
      %2812 = vadd.xlane.f32.xlu0 %v2811
      %v2813 = vpop.xlane.xlu0 %2812
      %v2814 = vsel %vm2168, %v2066, 0.0
      %2815 = vadd.xlane.f32.xlu0 %v2814
      %v2816 = vpop.xlane.xlu0 %2815
      %v2817 = vsel %vm2168, %v2069, 0.0
      %2818 = vadd.xlane.f32.xlu0 %v2817
      %v2819 = vpop.xlane.xlu0 %2818
      %v2820 = vsel %vm2168, %v2071, 0.0
      %2821 = vadd.xlane.f32.xlu0 %v2820
      %v2822 = vpop.xlane.xlu0 %2821
      %v2823 = vsel %vm2168, %v2074, 0.0
      %2824 = vadd.xlane.f32.xlu0 %v2823
      %v2825 = vpop.xlane.xlu0 %2824
      %v2826 = vsel %vm2168, %v2076, 0.0
      %2827 = vadd.xlane.f32.xlu0 %v2826
      %v2828 = vpop.xlane.xlu0 %2827
      %v2829 = vsel %vm2168, %v2079, 0.0
      %2830 = vadd.xlane.f32.xlu0 %v2829
      %v2831 = vpop.xlane.xlu0 %2830
      %v2832 = vsel %vm2168, %v2081, 0.0
      %2833 = vadd.xlane.f32.xlu0 %v2832
      %v2834 = vpop.xlane.xlu0 %2833
      %v2835 = vsel %vm2168, %v2084, 0.0
      %2836 = vadd.xlane.f32.xlu0 %v2835
      %v2837 = vpop.xlane.xlu0 %2836
      %v2838 = vsel %vm2168, %v2086, 0.0
      %2839 = vadd.xlane.f32.xlu0 %v2838
      %v2840 = vpop.xlane.xlu0 %2839
      %v2841 = vsel %vm2168, %v2089, 0.0
      %2842 = vadd.xlane.f32.xlu0 %v2841
      %v2843 = vpop.xlane.xlu0 %2842
      %v2844 = vsel %vm2168, %v2091, 0.0
      %2845 = vadd.xlane.f32.xlu0 %v2844
      %v2846 = vpop.xlane.xlu0 %2845
      %v2847 = vsel %vm2168, %v2094, 0.0
      %2848 = vadd.xlane.f32.xlu0 %v2847
      %v2849 = vpop.xlane.xlu0 %2848
      %v2850 = vsel %vm2168, %v2096, 0.0
      %2851 = vadd.xlane.f32.xlu0 %v2850
      %v2852 = vpop.xlane.xlu0 %2851
      %v2853 = vsel %vm2168, %v2099, 0.0
      %2854 = vadd.xlane.f32.xlu0 %v2853
      %v2855 = vpop.xlane.xlu0 %2854
      %v2856 = vsel %vm2168, %v2101, 0.0
      %2857 = vadd.xlane.f32.xlu0 %v2856
      %v2858 = vpop.xlane.xlu0 %2857
      %v2859 = vsel %vm2168, %v2104, 0.0
      %2860 = vadd.xlane.f32.xlu0 %v2859
      %v2861 = vpop.xlane.xlu0 %2860
      %v2862 = vsel %vm2168, %v2106, 0.0
      %2863 = vadd.xlane.f32.xlu0 %v2862
      %v2864 = vpop.xlane.xlu0 %2863
      %v2865 = vsel %vm2168, %v2109, 0.0
      %2866 = vadd.xlane.f32.xlu0 %v2865
      %v2867 = vpop.xlane.xlu0 %2866
      %v2868 = vsel %vm2168, %v2111, 0.0
      %2869 = vadd.xlane.f32.xlu0 %v2868
      %v2870 = vpop.xlane.xlu0 %2869
      %v2871 = vsel %vm2168, %v2114, 0.0
      %2872 = vadd.xlane.f32.xlu0 %v2871
      %v2873 = vpop.xlane.xlu0 %2872
      %v2874 = vsel %vm2168, %v2116, 0.0
      %2875 = vadd.xlane.f32.xlu0 %v2874
      %v2876 = vpop.xlane.xlu0 %2875
      %v2877 = vsel %vm2168, %v2119, 0.0
      %2878 = vadd.xlane.f32.xlu0 %v2877
      %v2879 = vpop.xlane.xlu0 %2878
      %v2880 = vsel %vm2168, %v2121, 0.0
      %2881 = vadd.xlane.f32.xlu0 %v2880
      %v2882 = vpop.xlane.xlu0 %2881
      %v2883 = vsel %vm2168, %v2124, 0.0
      %2884 = vadd.xlane.f32.xlu0 %v2883
      %v2885 = vpop.xlane.xlu0 %2884
      %v2886 = vsel %vm2168, %v2126, 0.0
      %2887 = vadd.xlane.f32.xlu0 %v2886
      %v2888 = vpop.xlane.xlu0 %2887
      %v2889 = vsel %vm2168, %v2129, 0.0
      %2890 = vadd.xlane.f32.xlu0 %v2889
      %v2891 = vpop.xlane.xlu0 %2890
      %v2892 = vsel %vm2168, %v2131, 0.0
      %2893 = vadd.xlane.f32.xlu0 %v2892
      %v2894 = vpop.xlane.xlu0 %2893
      %v2895 = vsel %vm2168, %v2134, 0.0
      %2896 = vadd.xlane.f32.xlu0 %v2895
      %v2897 = vpop.xlane.xlu0 %2896
      %v2898 = vsel %vm2168, %v2136, 0.0
      %2899 = vadd.xlane.f32.xlu0 %v2898
      %v2900 = vpop.xlane.xlu0 %2899
      %v2901 = vsel %vm2168, %v2139, 0.0
      %2902 = vadd.xlane.f32.xlu0 %v2901
      %v2903 = vpop.xlane.xlu0 %2902
      %v2904 = vsel %vm2168, %v2141, 0.0
      %2905 = vadd.xlane.f32.xlu0 %v2904
      %v2906 = vpop.xlane.xlu0 %2905
      %v2907 = vsel %vm2168, %v2144, 0.0
      %2908 = vadd.xlane.f32.xlu0 %v2907
      %v2909 = vpop.xlane.xlu0 %2908
      %v2910 = vsel %vm2168, %v2146, 0.0
      %2911 = vadd.xlane.f32.xlu0 %v2910
      %v2912 = vpop.xlane.xlu0 %2911
      %v2913 = vsel %vm2168, %v2149, 0.0
      %2914 = vadd.xlane.f32.xlu0 %v2913
      %v2915 = vpop.xlane.xlu0 %2914
      %v2916 = vsel %vm2168, %v2151, 0.0
      %2917 = vadd.xlane.f32.xlu0 %v2916
      %v2918 = vpop.xlane.xlu0 %2917
      %v2919 = vsel %vm2168, %v2154, 0.0
      %2920 = vadd.xlane.f32.xlu0 %v2919
      %v2921 = vpop.xlane.xlu0 %2920
      %v2922 = vsel %vm2168, %v2156, 0.0
      %2923 = vadd.xlane.f32.xlu0 %v2922
      %v2924 = vpop.xlane.xlu0 %2923
      %v2925 = vsel %vm2168, %v2159, 0.0
      %2926 = vadd.xlane.f32.xlu0 %v2925
      %v2927 = vpop.xlane.xlu0 %2926
      %v2928 = vsel %vm2168, %v2161, 0.0
      %2929 = vadd.xlane.f32.xlu0 %v2928
      %v2930 = vpop.xlane.xlu0 %2929
      %v2931 = vsel %vm2168, %v2164, 0.0
      %2932 = vadd.xlane.f32.xlu0 %v2931
      %v2933 = vpop.xlane.xlu0 %2932
      %v2934 = vsel %vm2168, %v2166, 0.0
      %2935 = vadd.xlane.f32.xlu0 %v2934
      %v2936 = vpop.xlane.xlu0 %2935
      %v2937 = vrcp.pop 32.0
      %v2938 = vmul.f32 32.0, %v2937
      %v2939 = vsub.f32 1.0, %v2938
      %v2940 = vmul.f32 %v2937, %v2939
      %v2941 = vadd.f32 %v2937, %v2940
      %vm2942 = vweird.f32 %v2937
      %v2943 = vsel %vm2942, %v2937, %v2941
      %v2944 = vmul.f32 %v2171, %v2943
      %v2945 = vmul.f32 %v2174, %v2943
      %v2946 = vmul.f32 %v2177, %v2943
      %v2947 = vmul.f32 %v2180, %v2943
      %v2948 = vmul.f32 %v2183, %v2943
      %v2949 = vmul.f32 %v2186, %v2943
      %v2950 = vmul.f32 %v2189, %v2943
      %v2951 = vmul.f32 %v2192, %v2943
      %v2952 = vmul.f32 %v2195, %v2943
      %v2953 = vmul.f32 %v2198, %v2943
      %v2954 = vmul.f32 %v2201, %v2943
      %v2955 = vmul.f32 %v2204, %v2943
      %v2956 = vmul.f32 %v2207, %v2943
      %v2957 = vmul.f32 %v2210, %v2943
      %v2958 = vmul.f32 %v2213, %v2943
      %v2959 = vmul.f32 %v2216, %v2943
      %v2960 = vmul.f32 %v2219, %v2943
      %v2961 = vmul.f32 %v2222, %v2943
      %v2962 = vmul.f32 %v2225, %v2943
      %v2963 = vmul.f32 %v2228, %v2943
      %v2964 = vmul.f32 %v2231, %v2943
      %v2965 = vmul.f32 %v2234, %v2943
      %v2966 = vmul.f32 %v2237, %v2943
      %v2967 = vmul.f32 %v2240, %v2943
      %v2968 = vmul.f32 %v2243, %v2943
      %v2969 = vmul.f32 %v2246, %v2943
      %v2970 = vmul.f32 %v2249, %v2943
      %v2971 = vmul.f32 %v2252, %v2943
      %v2972 = vmul.f32 %v2255, %v2943
      %v2973 = vmul.f32 %v2258, %v2943
      %v2974 = vmul.f32 %v2261, %v2943
      %v2975 = vmul.f32 %v2264, %v2943
      %v2976 = vmul.f32 %v2267, %v2943
      %v2977 = vmul.f32 %v2270, %v2943
      %v2978 = vmul.f32 %v2273, %v2943
      %v2979 = vmul.f32 %v2276, %v2943
      %v2980 = vmul.f32 %v2279, %v2943
      %v2981 = vmul.f32 %v2282, %v2943
      %v2982 = vmul.f32 %v2285, %v2943
      %v2983 = vmul.f32 %v2288, %v2943
      %v2984 = vmul.f32 %v2291, %v2943
      %v2985 = vmul.f32 %v2294, %v2943
      %v2986 = vmul.f32 %v2297, %v2943
      %v2987 = vmul.f32 %v2300, %v2943
      %v2988 = vmul.f32 %v2303, %v2943
      %v2989 = vmul.f32 %v2306, %v2943
      %v2990 = vmul.f32 %v2309, %v2943
      %v2991 = vmul.f32 %v2312, %v2943
      %v2992 = vmul.f32 %v2315, %v2943
      %v2993 = vmul.f32 %v2318, %v2943
      %v2994 = vmul.f32 %v2321, %v2943
      %v2995 = vmul.f32 %v2324, %v2943
      %v2996 = vmul.f32 %v2327, %v2943
      %v2997 = vmul.f32 %v2330, %v2943
      %v2998 = vmul.f32 %v2333, %v2943
      %v2999 = vmul.f32 %v2336, %v2943
      %v3000 = vmul.f32 %v2339, %v2943
      %v3001 = vmul.f32 %v2342, %v2943
      %v3002 = vmul.f32 %v2345, %v2943
      %v3003 = vmul.f32 %v2348, %v2943
      %v3004 = vmul.f32 %v2351, %v2943
      %v3005 = vmul.f32 %v2354, %v2943
      %v3006 = vmul.f32 %v2357, %v2943
      %v3007 = vmul.f32 %v2360, %v2943
      %v3008 = vmul.f32 %v2363, %v2943
      %v3009 = vmul.f32 %v2366, %v2943
      %v3010 = vmul.f32 %v2369, %v2943
      %v3011 = vmul.f32 %v2372, %v2943
      %v3012 = vmul.f32 %v2375, %v2943
      %v3013 = vmul.f32 %v2378, %v2943
      %v3014 = vmul.f32 %v2381, %v2943
      %v3015 = vmul.f32 %v2384, %v2943
      %v3016 = vmul.f32 %v2387, %v2943
      %v3017 = vmul.f32 %v2390, %v2943
      %v3018 = vmul.f32 %v2393, %v2943
      %v3019 = vmul.f32 %v2396, %v2943
      %v3020 = vmul.f32 %v2399, %v2943
      %v3021 = vmul.f32 %v2402, %v2943
      %v3022 = vmul.f32 %v2405, %v2943
      %v3023 = vmul.f32 %v2408, %v2943
      %v3024 = vmul.f32 %v2411, %v2943
      %v3025 = vmul.f32 %v2414, %v2943
      %v3026 = vmul.f32 %v2417, %v2943
      %v3027 = vmul.f32 %v2420, %v2943
      %v3028 = vmul.f32 %v2423, %v2943
      %v3029 = vmul.f32 %v2426, %v2943
      %v3030 = vmul.f32 %v2429, %v2943
      %v3031 = vmul.f32 %v2432, %v2943
      %v3032 = vmul.f32 %v2435, %v2943
      %v3033 = vmul.f32 %v2438, %v2943
      %v3034 = vmul.f32 %v2441, %v2943
      %v3035 = vmul.f32 %v2444, %v2943
      %v3036 = vmul.f32 %v2447, %v2943
      %v3037 = vmul.f32 %v2450, %v2943
      %v3038 = vmul.f32 %v2453, %v2943
      %v3039 = vmul.f32 %v2456, %v2943
      %v3040 = vmul.f32 %v2459, %v2943
      %v3041 = vmul.f32 %v2462, %v2943
      %v3042 = vmul.f32 %v2465, %v2943
      %v3043 = vmul.f32 %v2468, %v2943
      %v3044 = vmul.f32 %v2471, %v2943
      %v3045 = vmul.f32 %v2474, %v2943
      %v3046 = vmul.f32 %v2477, %v2943
      %v3047 = vmul.f32 %v2480, %v2943
      %v3048 = vmul.f32 %v2483, %v2943
      %v3049 = vmul.f32 %v2486, %v2943
      %v3050 = vmul.f32 %v2489, %v2943
      %v3051 = vmul.f32 %v2492, %v2943
      %v3052 = vmul.f32 %v2495, %v2943
      %v3053 = vmul.f32 %v2498, %v2943
      %v3054 = vmul.f32 %v2501, %v2943
      %v3055 = vmul.f32 %v2504, %v2943
      %v3056 = vmul.f32 %v2507, %v2943
      %v3057 = vmul.f32 %v2510, %v2943
      %v3058 = vmul.f32 %v2513, %v2943
      %v3059 = vmul.f32 %v2516, %v2943
      %v3060 = vmul.f32 %v2519, %v2943
      %v3061 = vmul.f32 %v2522, %v2943
      %v3062 = vmul.f32 %v2525, %v2943
      %v3063 = vmul.f32 %v2528, %v2943
      %v3064 = vmul.f32 %v2531, %v2943
      %v3065 = vmul.f32 %v2534, %v2943
      %v3066 = vmul.f32 %v2537, %v2943
      %v3067 = vmul.f32 %v2540, %v2943
      %v3068 = vmul.f32 %v2543, %v2943
      %v3069 = vmul.f32 %v2546, %v2943
      %v3070 = vmul.f32 %v2549, %v2943
      %v3071 = vmul.f32 %v2552, %v2943
      %v3072 = vmul.f32 %v2555, %v2943
      %v3073 = vmul.f32 %v2558, %v2943
      %v3074 = vmul.f32 %v2561, %v2943
      %v3075 = vmul.f32 %v2564, %v2943
      %v3076 = vmul.f32 %v2567, %v2943
      %v3077 = vmul.f32 %v2570, %v2943
      %v3078 = vmul.f32 %v2573, %v2943
      %v3079 = vmul.f32 %v2576, %v2943
      %v3080 = vmul.f32 %v2579, %v2943
      %v3081 = vmul.f32 %v2582, %v2943
      %v3082 = vmul.f32 %v2585, %v2943
      %v3083 = vmul.f32 %v2588, %v2943
      %v3084 = vmul.f32 %v2591, %v2943
      %v3085 = vmul.f32 %v2594, %v2943
      %v3086 = vmul.f32 %v2597, %v2943
      %v3087 = vmul.f32 %v2600, %v2943
      %v3088 = vmul.f32 %v2603, %v2943
      %v3089 = vmul.f32 %v2606, %v2943
      %v3090 = vmul.f32 %v2609, %v2943
      %v3091 = vmul.f32 %v2612, %v2943
      %v3092 = vmul.f32 %v2615, %v2943
      %v3093 = vmul.f32 %v2618, %v2943
      %v3094 = vmul.f32 %v2621, %v2943
      %v3095 = vmul.f32 %v2624, %v2943
      %v3096 = vmul.f32 %v2627, %v2943
      %v3097 = vmul.f32 %v2630, %v2943
      %v3098 = vmul.f32 %v2633, %v2943
      %v3099 = vmul.f32 %v2636, %v2943
      %v3100 = vmul.f32 %v2639, %v2943
      %v3101 = vmul.f32 %v2642, %v2943
      %v3102 = vmul.f32 %v2645, %v2943
      %v3103 = vmul.f32 %v2648, %v2943
      %v3104 = vmul.f32 %v2651, %v2943
      %v3105 = vmul.f32 %v2654, %v2943
      %v3106 = vmul.f32 %v2657, %v2943
      %v3107 = vmul.f32 %v2660, %v2943
      %v3108 = vmul.f32 %v2663, %v2943
      %v3109 = vmul.f32 %v2666, %v2943
      %v3110 = vmul.f32 %v2669, %v2943
      %v3111 = vmul.f32 %v2672, %v2943
      %v3112 = vmul.f32 %v2675, %v2943
      %v3113 = vmul.f32 %v2678, %v2943
      %v3114 = vmul.f32 %v2681, %v2943
      %v3115 = vmul.f32 %v2684, %v2943
      %v3116 = vmul.f32 %v2687, %v2943
      %v3117 = vmul.f32 %v2690, %v2943
      %v3118 = vmul.f32 %v2693, %v2943
      %v3119 = vmul.f32 %v2696, %v2943
      %v3120 = vmul.f32 %v2699, %v2943
      %v3121 = vmul.f32 %v2702, %v2943
      %v3122 = vmul.f32 %v2705, %v2943
      %v3123 = vmul.f32 %v2708, %v2943
      %v3124 = vmul.f32 %v2711, %v2943
      %v3125 = vmul.f32 %v2714, %v2943
      %v3126 = vmul.f32 %v2717, %v2943
      %v3127 = vmul.f32 %v2720, %v2943
      %v3128 = vmul.f32 %v2723, %v2943
      %v3129 = vmul.f32 %v2726, %v2943
      %v3130 = vmul.f32 %v2729, %v2943
      %v3131 = vmul.f32 %v2732, %v2943
      %v3132 = vmul.f32 %v2735, %v2943
      %v3133 = vmul.f32 %v2738, %v2943
      %v3134 = vmul.f32 %v2741, %v2943
      %v3135 = vmul.f32 %v2744, %v2943
      %v3136 = vmul.f32 %v2747, %v2943
      %v3137 = vmul.f32 %v2750, %v2943
      %v3138 = vmul.f32 %v2753, %v2943
      %v3139 = vmul.f32 %v2756, %v2943
      %v3140 = vmul.f32 %v2759, %v2943
      %v3141 = vmul.f32 %v2762, %v2943
      %v3142 = vmul.f32 %v2765, %v2943
      %v3143 = vmul.f32 %v2768, %v2943
      %v3144 = vmul.f32 %v2771, %v2943
      %v3145 = vmul.f32 %v2774, %v2943
      %v3146 = vmul.f32 %v2777, %v2943
      %v3147 = vmul.f32 %v2780, %v2943
      %v3148 = vmul.f32 %v2783, %v2943
      %v3149 = vmul.f32 %v2786, %v2943
      %v3150 = vmul.f32 %v2789, %v2943
      %v3151 = vmul.f32 %v2792, %v2943
      %v3152 = vmul.f32 %v2795, %v2943
      %v3153 = vmul.f32 %v2798, %v2943
      %v3154 = vmul.f32 %v2801, %v2943
      %v3155 = vmul.f32 %v2804, %v2943
      %v3156 = vmul.f32 %v2807, %v2943
      %v3157 = vmul.f32 %v2810, %v2943
      %v3158 = vmul.f32 %v2813, %v2943
      %v3159 = vmul.f32 %v2816, %v2943
      %v3160 = vmul.f32 %v2819, %v2943
      %v3161 = vmul.f32 %v2822, %v2943
      %v3162 = vmul.f32 %v2825, %v2943
      %v3163 = vmul.f32 %v2828, %v2943
      %v3164 = vmul.f32 %v2831, %v2943
      %v3165 = vmul.f32 %v2834, %v2943
      %v3166 = vmul.f32 %v2837, %v2943
      %v3167 = vmul.f32 %v2840, %v2943
      %v3168 = vmul.f32 %v2843, %v2943
      %v3169 = vmul.f32 %v2846, %v2943
      %v3170 = vmul.f32 %v2849, %v2943
      %v3171 = vmul.f32 %v2852, %v2943
      %v3172 = vmul.f32 %v2855, %v2943
      %v3173 = vmul.f32 %v2858, %v2943
      %v3174 = vmul.f32 %v2861, %v2943
      %v3175 = vmul.f32 %v2864, %v2943
      %v3176 = vmul.f32 %v2867, %v2943
      %v3177 = vmul.f32 %v2870, %v2943
      %v3178 = vmul.f32 %v2873, %v2943
      %v3179 = vmul.f32 %v2876, %v2943
      %v3180 = vmul.f32 %v2879, %v2943
      %v3181 = vmul.f32 %v2882, %v2943
      %v3182 = vmul.f32 %v2885, %v2943
      %v3183 = vmul.f32 %v2888, %v2943
      %v3184 = vmul.f32 %v2891, %v2943
      %v3185 = vmul.f32 %v2894, %v2943
      %v3186 = vmul.f32 %v2897, %v2943
      %v3187 = vmul.f32 %v2900, %v2943
      %v3188 = vmul.f32 %v2903, %v2943
      %v3189 = vmul.f32 %v2906, %v2943
      %v3190 = vmul.f32 %v2909, %v2943
      %v3191 = vmul.f32 %v2912, %v2943
      %v3192 = vmul.f32 %v2915, %v2943
      %v3193 = vmul.f32 %v2918, %v2943
      %v3194 = vmul.f32 %v2921, %v2943
      %v3195 = vmul.f32 %v2924, %v2943
      %v3196 = vmul.f32 %v2927, %v2943
      %v3197 = vmul.f32 %v2930, %v2943
      %v3198 = vmul.f32 %v2933, %v2943
      %v3199 = vmul.f32 %v2936, %v2943
      %v3200 = vsub.f32 %v1529, %v2944
      %v3201 = vsub.f32 %v1531, %v2945
      %v3202 = vsub.f32 %v1534, %v2946
      %v3203 = vsub.f32 %v1536, %v2947
      %v3204 = vsub.f32 %v1539, %v2948
      %v3205 = vsub.f32 %v1541, %v2949
      %v3206 = vsub.f32 %v1544, %v2950
      %v3207 = vsub.f32 %v1546, %v2951
      %v3208 = vsub.f32 %v1549, %v2952
      %v3209 = vsub.f32 %v1551, %v2953
      %v3210 = vsub.f32 %v1554, %v2954
      %v3211 = vsub.f32 %v1556, %v2955
      %v3212 = vsub.f32 %v1559, %v2956
      %v3213 = vsub.f32 %v1561, %v2957
      %v3214 = vsub.f32 %v1564, %v2958
      %v3215 = vsub.f32 %v1566, %v2959
      %v3216 = vsub.f32 %v1569, %v2960
      %v3217 = vsub.f32 %v1571, %v2961
      %v3218 = vsub.f32 %v1574, %v2962
      %v3219 = vsub.f32 %v1576, %v2963
      %v3220 = vsub.f32 %v1579, %v2964
      %v3221 = vsub.f32 %v1581, %v2965
      %v3222 = vsub.f32 %v1584, %v2966
      %v3223 = vsub.f32 %v1586, %v2967
      %v3224 = vsub.f32 %v1589, %v2968
      %v3225 = vsub.f32 %v1591, %v2969
      %v3226 = vsub.f32 %v1594, %v2970
      %v3227 = vsub.f32 %v1596, %v2971
      %v3228 = vsub.f32 %v1599, %v2972
      %v3229 = vsub.f32 %v1601, %v2973
      %v3230 = vsub.f32 %v1604, %v2974
      %v3231 = vsub.f32 %v1606, %v2975
      %v3232 = vsub.f32 %v1609, %v2976
      %v3233 = vsub.f32 %v1611, %v2977
      %v3234 = vsub.f32 %v1614, %v2978
      %v3235 = vsub.f32 %v1616, %v2979
      %v3236 = vsub.f32 %v1619, %v2980
      %v3237 = vsub.f32 %v1621, %v2981
      %v3238 = vsub.f32 %v1624, %v2982
      %v3239 = vsub.f32 %v1626, %v2983
      %v3240 = vsub.f32 %v1629, %v2984
      %v3241 = vsub.f32 %v1631, %v2985
      %v3242 = vsub.f32 %v1634, %v2986
      %v3243 = vsub.f32 %v1636, %v2987
      %v3244 = vsub.f32 %v1639, %v2988
      %v3245 = vsub.f32 %v1641, %v2989
      %v3246 = vsub.f32 %v1644, %v2990
      %v3247 = vsub.f32 %v1646, %v2991
      %v3248 = vsub.f32 %v1649, %v2992
      %v3249 = vsub.f32 %v1651, %v2993
      %v3250 = vsub.f32 %v1654, %v2994
      %v3251 = vsub.f32 %v1656, %v2995
      %v3252 = vsub.f32 %v1659, %v2996
      %v3253 = vsub.f32 %v1661, %v2997
      %v3254 = vsub.f32 %v1664, %v2998
      %v3255 = vsub.f32 %v1666, %v2999
      %v3256 = vsub.f32 %v1669, %v3000
      %v3257 = vsub.f32 %v1671, %v3001
      %v3258 = vsub.f32 %v1674, %v3002
      %v3259 = vsub.f32 %v1676, %v3003
      %v3260 = vsub.f32 %v1679, %v3004
      %v3261 = vsub.f32 %v1681, %v3005
      %v3262 = vsub.f32 %v1684, %v3006
      %v3263 = vsub.f32 %v1686, %v3007
      %v3264 = vsub.f32 %v1689, %v3008
      %v3265 = vsub.f32 %v1691, %v3009
      %v3266 = vsub.f32 %v1694, %v3010
      %v3267 = vsub.f32 %v1696, %v3011
      %v3268 = vsub.f32 %v1699, %v3012
      %v3269 = vsub.f32 %v1701, %v3013
      %v3270 = vsub.f32 %v1704, %v3014
      %v3271 = vsub.f32 %v1706, %v3015
      %v3272 = vsub.f32 %v1709, %v3016
      %v3273 = vsub.f32 %v1711, %v3017
      %v3274 = vsub.f32 %v1714, %v3018
      %v3275 = vsub.f32 %v1716, %v3019
      %v3276 = vsub.f32 %v1719, %v3020
      %v3277 = vsub.f32 %v1721, %v3021
      %v3278 = vsub.f32 %v1724, %v3022
      %v3279 = vsub.f32 %v1726, %v3023
      %v3280 = vsub.f32 %v1729, %v3024
      %v3281 = vsub.f32 %v1731, %v3025
      %v3282 = vsub.f32 %v1734, %v3026
      %v3283 = vsub.f32 %v1736, %v3027
      %v3284 = vsub.f32 %v1739, %v3028
      %v3285 = vsub.f32 %v1741, %v3029
      %v3286 = vsub.f32 %v1744, %v3030
      %v3287 = vsub.f32 %v1746, %v3031
      %v3288 = vsub.f32 %v1749, %v3032
      %v3289 = vsub.f32 %v1751, %v3033
      %v3290 = vsub.f32 %v1754, %v3034
      %v3291 = vsub.f32 %v1756, %v3035
      %v3292 = vsub.f32 %v1759, %v3036
      %v3293 = vsub.f32 %v1761, %v3037
      %v3294 = vsub.f32 %v1764, %v3038
      %v3295 = vsub.f32 %v1766, %v3039
      %v3296 = vsub.f32 %v1769, %v3040
      %v3297 = vsub.f32 %v1771, %v3041
      %v3298 = vsub.f32 %v1774, %v3042
      %v3299 = vsub.f32 %v1776, %v3043
      %v3300 = vsub.f32 %v1779, %v3044
      %v3301 = vsub.f32 %v1781, %v3045
      %v3302 = vsub.f32 %v1784, %v3046
      %v3303 = vsub.f32 %v1786, %v3047
      %v3304 = vsub.f32 %v1789, %v3048
      %v3305 = vsub.f32 %v1791, %v3049
      %v3306 = vsub.f32 %v1794, %v3050
      %v3307 = vsub.f32 %v1796, %v3051
      %v3308 = vsub.f32 %v1799, %v3052
      %v3309 = vsub.f32 %v1801, %v3053
      %v3310 = vsub.f32 %v1804, %v3054
      %v3311 = vsub.f32 %v1806, %v3055
      %v3312 = vsub.f32 %v1809, %v3056
      %v3313 = vsub.f32 %v1811, %v3057
      %v3314 = vsub.f32 %v1814, %v3058
      %v3315 = vsub.f32 %v1816, %v3059
      %v3316 = vsub.f32 %v1819, %v3060
      %v3317 = vsub.f32 %v1821, %v3061
      %v3318 = vsub.f32 %v1824, %v3062
      %v3319 = vsub.f32 %v1826, %v3063
      %v3320 = vsub.f32 %v1829, %v3064
      %v3321 = vsub.f32 %v1831, %v3065
      %v3322 = vsub.f32 %v1834, %v3066
      %v3323 = vsub.f32 %v1836, %v3067
      %v3324 = vsub.f32 %v1839, %v3068
      %v3325 = vsub.f32 %v1841, %v3069
      %v3326 = vsub.f32 %v1844, %v3070
      %v3327 = vsub.f32 %v1846, %v3071
      %v3328 = vsub.f32 %v1849, %v3072
      %v3329 = vsub.f32 %v1851, %v3073
      %v3330 = vsub.f32 %v1854, %v3074
      %v3331 = vsub.f32 %v1856, %v3075
      %v3332 = vsub.f32 %v1859, %v3076
      %v3333 = vsub.f32 %v1861, %v3077
      %v3334 = vsub.f32 %v1864, %v3078
      %v3335 = vsub.f32 %v1866, %v3079
      %v3336 = vsub.f32 %v1869, %v3080
      %v3337 = vsub.f32 %v1871, %v3081
      %v3338 = vsub.f32 %v1874, %v3082
      %v3339 = vsub.f32 %v1876, %v3083
      %v3340 = vsub.f32 %v1879, %v3084
      %v3341 = vsub.f32 %v1881, %v3085
      %v3342 = vsub.f32 %v1884, %v3086
      %v3343 = vsub.f32 %v1886, %v3087
      %v3344 = vsub.f32 %v1889, %v3088
      %v3345 = vsub.f32 %v1891, %v3089
      %v3346 = vsub.f32 %v1894, %v3090
      %v3347 = vsub.f32 %v1896, %v3091
      %v3348 = vsub.f32 %v1899, %v3092
      %v3349 = vsub.f32 %v1901, %v3093
      %v3350 = vsub.f32 %v1904, %v3094
      %v3351 = vsub.f32 %v1906, %v3095
      %v3352 = vsub.f32 %v1909, %v3096
      %v3353 = vsub.f32 %v1911, %v3097
      %v3354 = vsub.f32 %v1914, %v3098
      %v3355 = vsub.f32 %v1916, %v3099
      %v3356 = vsub.f32 %v1919, %v3100
      %v3357 = vsub.f32 %v1921, %v3101
      %v3358 = vsub.f32 %v1924, %v3102
      %v3359 = vsub.f32 %v1926, %v3103
      %v3360 = vsub.f32 %v1929, %v3104
      %v3361 = vsub.f32 %v1931, %v3105
      %v3362 = vsub.f32 %v1934, %v3106
      %v3363 = vsub.f32 %v1936, %v3107
      %v3364 = vsub.f32 %v1939, %v3108
      %v3365 = vsub.f32 %v1941, %v3109
      %v3366 = vsub.f32 %v1944, %v3110
      %v3367 = vsub.f32 %v1946, %v3111
      %v3368 = vsub.f32 %v1949, %v3112
      %v3369 = vsub.f32 %v1951, %v3113
      %v3370 = vsub.f32 %v1954, %v3114
      %v3371 = vsub.f32 %v1956, %v3115
      %v3372 = vsub.f32 %v1959, %v3116
      %v3373 = vsub.f32 %v1961, %v3117
      %v3374 = vsub.f32 %v1964, %v3118
      %v3375 = vsub.f32 %v1966, %v3119
      %v3376 = vsub.f32 %v1969, %v3120
      %v3377 = vsub.f32 %v1971, %v3121
      %v3378 = vsub.f32 %v1974, %v3122
      %v3379 = vsub.f32 %v1976, %v3123
      %v3380 = vsub.f32 %v1979, %v3124
      %v3381 = vsub.f32 %v1981, %v3125
      %v3382 = vsub.f32 %v1984, %v3126
      %v3383 = vsub.f32 %v1986, %v3127
      %v3384 = vsub.f32 %v1989, %v3128
      %v3385 = vsub.f32 %v1991, %v3129
      %v3386 = vsub.f32 %v1994, %v3130
      %v3387 = vsub.f32 %v1996, %v3131
      %v3388 = vsub.f32 %v1999, %v3132
      %v3389 = vsub.f32 %v2001, %v3133
      %v3390 = vsub.f32 %v2004, %v3134
      %v3391 = vsub.f32 %v2006, %v3135
      %v3392 = vsub.f32 %v2009, %v3136
      %v3393 = vsub.f32 %v2011, %v3137
      %v3394 = vsub.f32 %v2014, %v3138
      %v3395 = vsub.f32 %v2016, %v3139
      %v3396 = vsub.f32 %v2019, %v3140
      %v3397 = vsub.f32 %v2021, %v3141
      %v3398 = vsub.f32 %v2024, %v3142
      %v3399 = vsub.f32 %v2026, %v3143
      %v3400 = vsub.f32 %v2029, %v3144
      %v3401 = vsub.f32 %v2031, %v3145
      %v3402 = vsub.f32 %v2034, %v3146
      %v3403 = vsub.f32 %v2036, %v3147
      %v3404 = vsub.f32 %v2039, %v3148
      %v3405 = vsub.f32 %v2041, %v3149
      %v3406 = vsub.f32 %v2044, %v3150
      %v3407 = vsub.f32 %v2046, %v3151
      %v3408 = vsub.f32 %v2049, %v3152
      %v3409 = vsub.f32 %v2051, %v3153
      %v3410 = vsub.f32 %v2054, %v3154
      %v3411 = vsub.f32 %v2056, %v3155
      %v3412 = vsub.f32 %v2059, %v3156
      %v3413 = vsub.f32 %v2061, %v3157
      %v3414 = vsub.f32 %v2064, %v3158
      %v3415 = vsub.f32 %v2066, %v3159
      %v3416 = vsub.f32 %v2069, %v3160
      %v3417 = vsub.f32 %v2071, %v3161
      %v3418 = vsub.f32 %v2074, %v3162
      %v3419 = vsub.f32 %v2076, %v3163
      %v3420 = vsub.f32 %v2079, %v3164
      %v3421 = vsub.f32 %v2081, %v3165
      %v3422 = vsub.f32 %v2084, %v3166
      %v3423 = vsub.f32 %v2086, %v3167
      %v3424 = vsub.f32 %v2089, %v3168
      %v3425 = vsub.f32 %v2091, %v3169
      %v3426 = vsub.f32 %v2094, %v3170
      %v3427 = vsub.f32 %v2096, %v3171
      %v3428 = vsub.f32 %v2099, %v3172
      %v3429 = vsub.f32 %v2101, %v3173
      %v3430 = vsub.f32 %v2104, %v3174
      %v3431 = vsub.f32 %v2106, %v3175
      %v3432 = vsub.f32 %v2109, %v3176
      %v3433 = vsub.f32 %v2111, %v3177
      %v3434 = vsub.f32 %v2114, %v3178
      %v3435 = vsub.f32 %v2116, %v3179
      %v3436 = vsub.f32 %v2119, %v3180
      %v3437 = vsub.f32 %v2121, %v3181
      %v3438 = vsub.f32 %v2124, %v3182
      %v3439 = vsub.f32 %v2126, %v3183
      %v3440 = vsub.f32 %v2129, %v3184
      %v3441 = vsub.f32 %v2131, %v3185
      %v3442 = vsub.f32 %v2134, %v3186
      %v3443 = vsub.f32 %v2136, %v3187
      %v3444 = vsub.f32 %v2139, %v3188
      %v3445 = vsub.f32 %v2141, %v3189
      %v3446 = vsub.f32 %v2144, %v3190
      %v3447 = vsub.f32 %v2146, %v3191
      %v3448 = vsub.f32 %v2149, %v3192
      %v3449 = vsub.f32 %v2151, %v3193
      %v3450 = vsub.f32 %v2154, %v3194
      %v3451 = vsub.f32 %v2156, %v3195
      %v3452 = vsub.f32 %v2159, %v3196
      %v3453 = vsub.f32 %v2161, %v3197
      %v3454 = vsub.f32 %v2164, %v3198
      %v3455 = vsub.f32 %v2166, %v3199
      %v3456 = vmul.f32 %v3200, %v3200
      %v3457 = vmul.f32 %v3201, %v3201
      %v3458 = vmul.f32 %v3202, %v3202
      %v3459 = vmul.f32 %v3203, %v3203
      %v3460 = vmul.f32 %v3204, %v3204
      %v3461 = vmul.f32 %v3205, %v3205
      %v3462 = vmul.f32 %v3206, %v3206
      %v3463 = vmul.f32 %v3207, %v3207
      %v3464 = vmul.f32 %v3208, %v3208
      %v3465 = vmul.f32 %v3209, %v3209
      %v3466 = vmul.f32 %v3210, %v3210
      %v3467 = vmul.f32 %v3211, %v3211
      %v3468 = vmul.f32 %v3212, %v3212
      %v3469 = vmul.f32 %v3213, %v3213
      %v3470 = vmul.f32 %v3214, %v3214
      %v3471 = vmul.f32 %v3215, %v3215
      %v3472 = vmul.f32 %v3216, %v3216
      %v3473 = vmul.f32 %v3217, %v3217
      %v3474 = vmul.f32 %v3218, %v3218
      %v3475 = vmul.f32 %v3219, %v3219
      %v3476 = vmul.f32 %v3220, %v3220
      %v3477 = vmul.f32 %v3221, %v3221
      %v3478 = vmul.f32 %v3222, %v3222
      %v3479 = vmul.f32 %v3223, %v3223
      %v3480 = vmul.f32 %v3224, %v3224
      %v3481 = vmul.f32 %v3225, %v3225
      %v3482 = vmul.f32 %v3226, %v3226
      %v3483 = vmul.f32 %v3227, %v3227
      %v3484 = vmul.f32 %v3228, %v3228
      %v3485 = vmul.f32 %v3229, %v3229
      %v3486 = vmul.f32 %v3230, %v3230
      %v3487 = vmul.f32 %v3231, %v3231
      %v3488 = vmul.f32 %v3232, %v3232
      %v3489 = vmul.f32 %v3233, %v3233
      %v3490 = vmul.f32 %v3234, %v3234
      %v3491 = vmul.f32 %v3235, %v3235
      %v3492 = vmul.f32 %v3236, %v3236
      %v3493 = vmul.f32 %v3237, %v3237
      %v3494 = vmul.f32 %v3238, %v3238
      %v3495 = vmul.f32 %v3239, %v3239
      %v3496 = vmul.f32 %v3240, %v3240
      %v3497 = vmul.f32 %v3241, %v3241
      %v3498 = vmul.f32 %v3242, %v3242
      %v3499 = vmul.f32 %v3243, %v3243
      %v3500 = vmul.f32 %v3244, %v3244
      %v3501 = vmul.f32 %v3245, %v3245
      %v3502 = vmul.f32 %v3246, %v3246
      %v3503 = vmul.f32 %v3247, %v3247
      %v3504 = vmul.f32 %v3248, %v3248
      %v3505 = vmul.f32 %v3249, %v3249
      %v3506 = vmul.f32 %v3250, %v3250
      %v3507 = vmul.f32 %v3251, %v3251
      %v3508 = vmul.f32 %v3252, %v3252
      %v3509 = vmul.f32 %v3253, %v3253
      %v3510 = vmul.f32 %v3254, %v3254
      %v3511 = vmul.f32 %v3255, %v3255
      %v3512 = vmul.f32 %v3256, %v3256
      %v3513 = vmul.f32 %v3257, %v3257
      %v3514 = vmul.f32 %v3258, %v3258
      %v3515 = vmul.f32 %v3259, %v3259
      %v3516 = vmul.f32 %v3260, %v3260
      %v3517 = vmul.f32 %v3261, %v3261
      %v3518 = vmul.f32 %v3262, %v3262
      %v3519 = vmul.f32 %v3263, %v3263
      %v3520 = vmul.f32 %v3264, %v3264
      %v3521 = vmul.f32 %v3265, %v3265
      %v3522 = vmul.f32 %v3266, %v3266
      %v3523 = vmul.f32 %v3267, %v3267
      %v3524 = vmul.f32 %v3268, %v3268
      %v3525 = vmul.f32 %v3269, %v3269
      %v3526 = vmul.f32 %v3270, %v3270
      %v3527 = vmul.f32 %v3271, %v3271
      %v3528 = vmul.f32 %v3272, %v3272
      %v3529 = vmul.f32 %v3273, %v3273
      %v3530 = vmul.f32 %v3274, %v3274
      %v3531 = vmul.f32 %v3275, %v3275
      %v3532 = vmul.f32 %v3276, %v3276
      %v3533 = vmul.f32 %v3277, %v3277
      %v3534 = vmul.f32 %v3278, %v3278
      %v3535 = vmul.f32 %v3279, %v3279
      %v3536 = vmul.f32 %v3280, %v3280
      %v3537 = vmul.f32 %v3281, %v3281
      %v3538 = vmul.f32 %v3282, %v3282
      %v3539 = vmul.f32 %v3283, %v3283
      %v3540 = vmul.f32 %v3284, %v3284
      %v3541 = vmul.f32 %v3285, %v3285
      %v3542 = vmul.f32 %v3286, %v3286
      %v3543 = vmul.f32 %v3287, %v3287
      %v3544 = vmul.f32 %v3288, %v3288
      %v3545 = vmul.f32 %v3289, %v3289
      %v3546 = vmul.f32 %v3290, %v3290
      %v3547 = vmul.f32 %v3291, %v3291
      %v3548 = vmul.f32 %v3292, %v3292
      %v3549 = vmul.f32 %v3293, %v3293
      %v3550 = vmul.f32 %v3294, %v3294
      %v3551 = vmul.f32 %v3295, %v3295
      %v3552 = vmul.f32 %v3296, %v3296
      %v3553 = vmul.f32 %v3297, %v3297
      %v3554 = vmul.f32 %v3298, %v3298
      %v3555 = vmul.f32 %v3299, %v3299
      %v3556 = vmul.f32 %v3300, %v3300
      %v3557 = vmul.f32 %v3301, %v3301
      %v3558 = vmul.f32 %v3302, %v3302
      %v3559 = vmul.f32 %v3303, %v3303
      %v3560 = vmul.f32 %v3304, %v3304
      %v3561 = vmul.f32 %v3305, %v3305
      %v3562 = vmul.f32 %v3306, %v3306
      %v3563 = vmul.f32 %v3307, %v3307
      %v3564 = vmul.f32 %v3308, %v3308
      %v3565 = vmul.f32 %v3309, %v3309
      %v3566 = vmul.f32 %v3310, %v3310
      %v3567 = vmul.f32 %v3311, %v3311
      %v3568 = vmul.f32 %v3312, %v3312
      %v3569 = vmul.f32 %v3313, %v3313
      %v3570 = vmul.f32 %v3314, %v3314
      %v3571 = vmul.f32 %v3315, %v3315
      %v3572 = vmul.f32 %v3316, %v3316
      %v3573 = vmul.f32 %v3317, %v3317
      %v3574 = vmul.f32 %v3318, %v3318
      %v3575 = vmul.f32 %v3319, %v3319
      %v3576 = vmul.f32 %v3320, %v3320
      %v3577 = vmul.f32 %v3321, %v3321
      %v3578 = vmul.f32 %v3322, %v3322
      %v3579 = vmul.f32 %v3323, %v3323
      %v3580 = vmul.f32 %v3324, %v3324
      %v3581 = vmul.f32 %v3325, %v3325
      %v3582 = vmul.f32 %v3326, %v3326
      %v3583 = vmul.f32 %v3327, %v3327
      %v3584 = vmul.f32 %v3328, %v3328
      %v3585 = vmul.f32 %v3329, %v3329
      %v3586 = vmul.f32 %v3330, %v3330
      %v3587 = vmul.f32 %v3331, %v3331
      %v3588 = vmul.f32 %v3332, %v3332
      %v3589 = vmul.f32 %v3333, %v3333
      %v3590 = vmul.f32 %v3334, %v3334
      %v3591 = vmul.f32 %v3335, %v3335
      %v3592 = vmul.f32 %v3336, %v3336
      %v3593 = vmul.f32 %v3337, %v3337
      %v3594 = vmul.f32 %v3338, %v3338
      %v3595 = vmul.f32 %v3339, %v3339
      %v3596 = vmul.f32 %v3340, %v3340
      %v3597 = vmul.f32 %v3341, %v3341
      %v3598 = vmul.f32 %v3342, %v3342
      %v3599 = vmul.f32 %v3343, %v3343
      %v3600 = vmul.f32 %v3344, %v3344
      %v3601 = vmul.f32 %v3345, %v3345
      %v3602 = vmul.f32 %v3346, %v3346
      %v3603 = vmul.f32 %v3347, %v3347
      %v3604 = vmul.f32 %v3348, %v3348
      %v3605 = vmul.f32 %v3349, %v3349
      %v3606 = vmul.f32 %v3350, %v3350
      %v3607 = vmul.f32 %v3351, %v3351
      %v3608 = vmul.f32 %v3352, %v3352
      %v3609 = vmul.f32 %v3353, %v3353
      %v3610 = vmul.f32 %v3354, %v3354
      %v3611 = vmul.f32 %v3355, %v3355
      %v3612 = vmul.f32 %v3356, %v3356
      %v3613 = vmul.f32 %v3357, %v3357
      %v3614 = vmul.f32 %v3358, %v3358
      %v3615 = vmul.f32 %v3359, %v3359
      %v3616 = vmul.f32 %v3360, %v3360
      %v3617 = vmul.f32 %v3361, %v3361
      %v3618 = vmul.f32 %v3362, %v3362
      %v3619 = vmul.f32 %v3363, %v3363
      %v3620 = vmul.f32 %v3364, %v3364
      %v3621 = vmul.f32 %v3365, %v3365
      %v3622 = vmul.f32 %v3366, %v3366
      %v3623 = vmul.f32 %v3367, %v3367
      %v3624 = vmul.f32 %v3368, %v3368
      %v3625 = vmul.f32 %v3369, %v3369
      %v3626 = vmul.f32 %v3370, %v3370
      %v3627 = vmul.f32 %v3371, %v3371
      %v3628 = vmul.f32 %v3372, %v3372
      %v3629 = vmul.f32 %v3373, %v3373
      %v3630 = vmul.f32 %v3374, %v3374
      %v3631 = vmul.f32 %v3375, %v3375
      %v3632 = vmul.f32 %v3376, %v3376
      %v3633 = vmul.f32 %v3377, %v3377
      %v3634 = vmul.f32 %v3378, %v3378
      %v3635 = vmul.f32 %v3379, %v3379
      %v3636 = vmul.f32 %v3380, %v3380
      %v3637 = vmul.f32 %v3381, %v3381
      %v3638 = vmul.f32 %v3382, %v3382
      %v3639 = vmul.f32 %v3383, %v3383
      %v3640 = vmul.f32 %v3384, %v3384
      %v3641 = vmul.f32 %v3385, %v3385
      %v3642 = vmul.f32 %v3386, %v3386
      %v3643 = vmul.f32 %v3387, %v3387
      %v3644 = vmul.f32 %v3388, %v3388
      %v3645 = vmul.f32 %v3389, %v3389
      %v3646 = vmul.f32 %v3390, %v3390
      %v3647 = vmul.f32 %v3391, %v3391
      %v3648 = vmul.f32 %v3392, %v3392
      %v3649 = vmul.f32 %v3393, %v3393
      %v3650 = vmul.f32 %v3394, %v3394
      %v3651 = vmul.f32 %v3395, %v3395
      %v3652 = vmul.f32 %v3396, %v3396
      %v3653 = vmul.f32 %v3397, %v3397
      %v3654 = vmul.f32 %v3398, %v3398
      %v3655 = vmul.f32 %v3399, %v3399
      %v3656 = vmul.f32 %v3400, %v3400
      %v3657 = vmul.f32 %v3401, %v3401
      %v3658 = vmul.f32 %v3402, %v3402
      %v3659 = vmul.f32 %v3403, %v3403
      %v3660 = vmul.f32 %v3404, %v3404
      %v3661 = vmul.f32 %v3405, %v3405
      %v3662 = vmul.f32 %v3406, %v3406
      %v3663 = vmul.f32 %v3407, %v3407
      %v3664 = vmul.f32 %v3408, %v3408
      %v3665 = vmul.f32 %v3409, %v3409
      %v3666 = vmul.f32 %v3410, %v3410
      %v3667 = vmul.f32 %v3411, %v3411
      %v3668 = vmul.f32 %v3412, %v3412
      %v3669 = vmul.f32 %v3413, %v3413
      %v3670 = vmul.f32 %v3414, %v3414
      %v3671 = vmul.f32 %v3415, %v3415
      %v3672 = vmul.f32 %v3416, %v3416
      %v3673 = vmul.f32 %v3417, %v3417
      %v3674 = vmul.f32 %v3418, %v3418
      %v3675 = vmul.f32 %v3419, %v3419
      %v3676 = vmul.f32 %v3420, %v3420
      %v3677 = vmul.f32 %v3421, %v3421
      %v3678 = vmul.f32 %v3422, %v3422
      %v3679 = vmul.f32 %v3423, %v3423
      %v3680 = vmul.f32 %v3424, %v3424
      %v3681 = vmul.f32 %v3425, %v3425
      %v3682 = vmul.f32 %v3426, %v3426
      %v3683 = vmul.f32 %v3427, %v3427
      %v3684 = vmul.f32 %v3428, %v3428
      %v3685 = vmul.f32 %v3429, %v3429
      %v3686 = vmul.f32 %v3430, %v3430
      %v3687 = vmul.f32 %v3431, %v3431
      %v3688 = vmul.f32 %v3432, %v3432
      %v3689 = vmul.f32 %v3433, %v3433
      %v3690 = vmul.f32 %v3434, %v3434
      %v3691 = vmul.f32 %v3435, %v3435
      %v3692 = vmul.f32 %v3436, %v3436
      %v3693 = vmul.f32 %v3437, %v3437
      %v3694 = vmul.f32 %v3438, %v3438
      %v3695 = vmul.f32 %v3439, %v3439
      %v3696 = vmul.f32 %v3440, %v3440
      %v3697 = vmul.f32 %v3441, %v3441
      %v3698 = vmul.f32 %v3442, %v3442
      %v3699 = vmul.f32 %v3443, %v3443
      %v3700 = vmul.f32 %v3444, %v3444
      %v3701 = vmul.f32 %v3445, %v3445
      %v3702 = vmul.f32 %v3446, %v3446
      %v3703 = vmul.f32 %v3447, %v3447
      %v3704 = vmul.f32 %v3448, %v3448
      %v3705 = vmul.f32 %v3449, %v3449
      %v3706 = vmul.f32 %v3450, %v3450
      %v3707 = vmul.f32 %v3451, %v3451
      %v3708 = vmul.f32 %v3452, %v3452
      %v3709 = vmul.f32 %v3453, %v3453
      %v3710 = vmul.f32 %v3454, %v3454
      %v3711 = vmul.f32 %v3455, %v3455
      %v3712 = vsel %vm2168, %v3456, 0.0
      %3713 = vadd.xlane.f32.xlu0 %v3712
      %v3714 = vpop.xlane.xlu0 %3713
      %v3715 = vsel %vm2168, %v3457, 0.0
      %3716 = vadd.xlane.f32.xlu0 %v3715
      %v3717 = vpop.xlane.xlu0 %3716
      %v3718 = vsel %vm2168, %v3458, 0.0
      %3719 = vadd.xlane.f32.xlu0 %v3718
      %v3720 = vpop.xlane.xlu0 %3719
      %v3721 = vsel %vm2168, %v3459, 0.0
      %3722 = vadd.xlane.f32.xlu0 %v3721
      %v3723 = vpop.xlane.xlu0 %3722
      %v3724 = vsel %vm2168, %v3460, 0.0
      %3725 = vadd.xlane.f32.xlu0 %v3724
      %v3726 = vpop.xlane.xlu0 %3725
      %v3727 = vsel %vm2168, %v3461, 0.0
      %3728 = vadd.xlane.f32.xlu0 %v3727
      %v3729 = vpop.xlane.xlu0 %3728
      %v3730 = vsel %vm2168, %v3462, 0.0
      %3731 = vadd.xlane.f32.xlu0 %v3730
      %v3732 = vpop.xlane.xlu0 %3731
      %v3733 = vsel %vm2168, %v3463, 0.0
      %3734 = vadd.xlane.f32.xlu0 %v3733
      %v3735 = vpop.xlane.xlu0 %3734
      %v3736 = vsel %vm2168, %v3464, 0.0
      %3737 = vadd.xlane.f32.xlu0 %v3736
      %v3738 = vpop.xlane.xlu0 %3737
      %v3739 = vsel %vm2168, %v3465, 0.0
      %3740 = vadd.xlane.f32.xlu0 %v3739
      %v3741 = vpop.xlane.xlu0 %3740
      %v3742 = vsel %vm2168, %v3466, 0.0
      %3743 = vadd.xlane.f32.xlu0 %v3742
      %v3744 = vpop.xlane.xlu0 %3743
      %v3745 = vsel %vm2168, %v3467, 0.0
      %3746 = vadd.xlane.f32.xlu0 %v3745
      %v3747 = vpop.xlane.xlu0 %3746
      %v3748 = vsel %vm2168, %v3468, 0.0
      %3749 = vadd.xlane.f32.xlu0 %v3748
      %v3750 = vpop.xlane.xlu0 %3749
      %v3751 = vsel %vm2168, %v3469, 0.0
      %3752 = vadd.xlane.f32.xlu0 %v3751
      %v3753 = vpop.xlane.xlu0 %3752
      %v3754 = vsel %vm2168, %v3470, 0.0
      %3755 = vadd.xlane.f32.xlu0 %v3754
      %v3756 = vpop.xlane.xlu0 %3755
      %v3757 = vsel %vm2168, %v3471, 0.0
      %3758 = vadd.xlane.f32.xlu0 %v3757
      %v3759 = vpop.xlane.xlu0 %3758
      %v3760 = vsel %vm2168, %v3472, 0.0
      %3761 = vadd.xlane.f32.xlu0 %v3760
      %v3762 = vpop.xlane.xlu0 %3761
      %v3763 = vsel %vm2168, %v3473, 0.0
      %3764 = vadd.xlane.f32.xlu0 %v3763
      %v3765 = vpop.xlane.xlu0 %3764
      %v3766 = vsel %vm2168, %v3474, 0.0
      %3767 = vadd.xlane.f32.xlu0 %v3766
      %v3768 = vpop.xlane.xlu0 %3767
      %v3769 = vsel %vm2168, %v3475, 0.0
      %3770 = vadd.xlane.f32.xlu0 %v3769
      %v3771 = vpop.xlane.xlu0 %3770
      %v3772 = vsel %vm2168, %v3476, 0.0
      %3773 = vadd.xlane.f32.xlu0 %v3772
      %v3774 = vpop.xlane.xlu0 %3773
      %v3775 = vsel %vm2168, %v3477, 0.0
      %3776 = vadd.xlane.f32.xlu0 %v3775
      %v3777 = vpop.xlane.xlu0 %3776
      %v3778 = vsel %vm2168, %v3478, 0.0
      %3779 = vadd.xlane.f32.xlu0 %v3778
      %v3780 = vpop.xlane.xlu0 %3779
      %v3781 = vsel %vm2168, %v3479, 0.0
      %3782 = vadd.xlane.f32.xlu0 %v3781
      %v3783 = vpop.xlane.xlu0 %3782
      %v3784 = vsel %vm2168, %v3480, 0.0
      %3785 = vadd.xlane.f32.xlu0 %v3784
      %v3786 = vpop.xlane.xlu0 %3785
      %v3787 = vsel %vm2168, %v3481, 0.0
      %3788 = vadd.xlane.f32.xlu0 %v3787
      %v3789 = vpop.xlane.xlu0 %3788
      %v3790 = vsel %vm2168, %v3482, 0.0
      %3791 = vadd.xlane.f32.xlu0 %v3790
      %v3792 = vpop.xlane.xlu0 %3791
      %v3793 = vsel %vm2168, %v3483, 0.0
      %3794 = vadd.xlane.f32.xlu0 %v3793
      %v3795 = vpop.xlane.xlu0 %3794
      %v3796 = vsel %vm2168, %v3484, 0.0
      %3797 = vadd.xlane.f32.xlu0 %v3796
      %v3798 = vpop.xlane.xlu0 %3797
      %v3799 = vsel %vm2168, %v3485, 0.0
      %3800 = vadd.xlane.f32.xlu0 %v3799
      %v3801 = vpop.xlane.xlu0 %3800
      %v3802 = vsel %vm2168, %v3486, 0.0
      %3803 = vadd.xlane.f32.xlu0 %v3802
      %v3804 = vpop.xlane.xlu0 %3803
      %v3805 = vsel %vm2168, %v3487, 0.0
      %3806 = vadd.xlane.f32.xlu0 %v3805
      %v3807 = vpop.xlane.xlu0 %3806
      %v3808 = vsel %vm2168, %v3488, 0.0
      %3809 = vadd.xlane.f32.xlu0 %v3808
      %v3810 = vpop.xlane.xlu0 %3809
      %v3811 = vsel %vm2168, %v3489, 0.0
      %3812 = vadd.xlane.f32.xlu0 %v3811
      %v3813 = vpop.xlane.xlu0 %3812
      %v3814 = vsel %vm2168, %v3490, 0.0
      %3815 = vadd.xlane.f32.xlu0 %v3814
      %v3816 = vpop.xlane.xlu0 %3815
      %v3817 = vsel %vm2168, %v3491, 0.0
      %3818 = vadd.xlane.f32.xlu0 %v3817
      %v3819 = vpop.xlane.xlu0 %3818
      %v3820 = vsel %vm2168, %v3492, 0.0
      %3821 = vadd.xlane.f32.xlu0 %v3820
      %v3822 = vpop.xlane.xlu0 %3821
      %v3823 = vsel %vm2168, %v3493, 0.0
      %3824 = vadd.xlane.f32.xlu0 %v3823
      %v3825 = vpop.xlane.xlu0 %3824
      %v3826 = vsel %vm2168, %v3494, 0.0
      %3827 = vadd.xlane.f32.xlu0 %v3826
      %v3828 = vpop.xlane.xlu0 %3827
      %v3829 = vsel %vm2168, %v3495, 0.0
      %3830 = vadd.xlane.f32.xlu0 %v3829
      %v3831 = vpop.xlane.xlu0 %3830
      %v3832 = vsel %vm2168, %v3496, 0.0
      %3833 = vadd.xlane.f32.xlu0 %v3832
      %v3834 = vpop.xlane.xlu0 %3833
      %v3835 = vsel %vm2168, %v3497, 0.0
      %3836 = vadd.xlane.f32.xlu0 %v3835
      %v3837 = vpop.xlane.xlu0 %3836
      %v3838 = vsel %vm2168, %v3498, 0.0
      %3839 = vadd.xlane.f32.xlu0 %v3838
      %v3840 = vpop.xlane.xlu0 %3839
      %v3841 = vsel %vm2168, %v3499, 0.0
      %3842 = vadd.xlane.f32.xlu0 %v3841
      %v3843 = vpop.xlane.xlu0 %3842
      %v3844 = vsel %vm2168, %v3500, 0.0
      %3845 = vadd.xlane.f32.xlu0 %v3844
      %v3846 = vpop.xlane.xlu0 %3845
      %v3847 = vsel %vm2168, %v3501, 0.0
      %3848 = vadd.xlane.f32.xlu0 %v3847
      %v3849 = vpop.xlane.xlu0 %3848
      %v3850 = vsel %vm2168, %v3502, 0.0
      %3851 = vadd.xlane.f32.xlu0 %v3850
      %v3852 = vpop.xlane.xlu0 %3851
      %v3853 = vsel %vm2168, %v3503, 0.0
      %3854 = vadd.xlane.f32.xlu0 %v3853
      %v3855 = vpop.xlane.xlu0 %3854
      %v3856 = vsel %vm2168, %v3504, 0.0
      %3857 = vadd.xlane.f32.xlu0 %v3856
      %v3858 = vpop.xlane.xlu0 %3857
      %v3859 = vsel %vm2168, %v3505, 0.0
      %3860 = vadd.xlane.f32.xlu0 %v3859
      %v3861 = vpop.xlane.xlu0 %3860
      %v3862 = vsel %vm2168, %v3506, 0.0
      %3863 = vadd.xlane.f32.xlu0 %v3862
      %v3864 = vpop.xlane.xlu0 %3863
      %v3865 = vsel %vm2168, %v3507, 0.0
      %3866 = vadd.xlane.f32.xlu0 %v3865
      %v3867 = vpop.xlane.xlu0 %3866
      %v3868 = vsel %vm2168, %v3508, 0.0
      %3869 = vadd.xlane.f32.xlu0 %v3868
      %v3870 = vpop.xlane.xlu0 %3869
      %v3871 = vsel %vm2168, %v3509, 0.0
      %3872 = vadd.xlane.f32.xlu0 %v3871
      %v3873 = vpop.xlane.xlu0 %3872
      %v3874 = vsel %vm2168, %v3510, 0.0
      %3875 = vadd.xlane.f32.xlu0 %v3874
      %v3876 = vpop.xlane.xlu0 %3875
      %v3877 = vsel %vm2168, %v3511, 0.0
      %3878 = vadd.xlane.f32.xlu0 %v3877
      %v3879 = vpop.xlane.xlu0 %3878
      %v3880 = vsel %vm2168, %v3512, 0.0
      %3881 = vadd.xlane.f32.xlu0 %v3880
      %v3882 = vpop.xlane.xlu0 %3881
      %v3883 = vsel %vm2168, %v3513, 0.0
      %3884 = vadd.xlane.f32.xlu0 %v3883
      %v3885 = vpop.xlane.xlu0 %3884
      %v3886 = vsel %vm2168, %v3514, 0.0
      %3887 = vadd.xlane.f32.xlu0 %v3886
      %v3888 = vpop.xlane.xlu0 %3887
      %v3889 = vsel %vm2168, %v3515, 0.0
      %3890 = vadd.xlane.f32.xlu0 %v3889
      %v3891 = vpop.xlane.xlu0 %3890
      %v3892 = vsel %vm2168, %v3516, 0.0
      %3893 = vadd.xlane.f32.xlu0 %v3892
      %v3894 = vpop.xlane.xlu0 %3893
      %v3895 = vsel %vm2168, %v3517, 0.0
      %3896 = vadd.xlane.f32.xlu0 %v3895
      %v3897 = vpop.xlane.xlu0 %3896
      %v3898 = vsel %vm2168, %v3518, 0.0
      %3899 = vadd.xlane.f32.xlu0 %v3898
      %v3900 = vpop.xlane.xlu0 %3899
      %v3901 = vsel %vm2168, %v3519, 0.0
      %3902 = vadd.xlane.f32.xlu0 %v3901
      %v3903 = vpop.xlane.xlu0 %3902
      %v3904 = vsel %vm2168, %v3520, 0.0
      %3905 = vadd.xlane.f32.xlu0 %v3904
      %v3906 = vpop.xlane.xlu0 %3905
      %v3907 = vsel %vm2168, %v3521, 0.0
      %3908 = vadd.xlane.f32.xlu0 %v3907
      %v3909 = vpop.xlane.xlu0 %3908
      %v3910 = vsel %vm2168, %v3522, 0.0
      %3911 = vadd.xlane.f32.xlu0 %v3910
      %v3912 = vpop.xlane.xlu0 %3911
      %v3913 = vsel %vm2168, %v3523, 0.0
      %3914 = vadd.xlane.f32.xlu0 %v3913
      %v3915 = vpop.xlane.xlu0 %3914
      %v3916 = vsel %vm2168, %v3524, 0.0
      %3917 = vadd.xlane.f32.xlu0 %v3916
      %v3918 = vpop.xlane.xlu0 %3917
      %v3919 = vsel %vm2168, %v3525, 0.0
      %3920 = vadd.xlane.f32.xlu0 %v3919
      %v3921 = vpop.xlane.xlu0 %3920
      %v3922 = vsel %vm2168, %v3526, 0.0
      %3923 = vadd.xlane.f32.xlu0 %v3922
      %v3924 = vpop.xlane.xlu0 %3923
      %v3925 = vsel %vm2168, %v3527, 0.0
      %3926 = vadd.xlane.f32.xlu0 %v3925
      %v3927 = vpop.xlane.xlu0 %3926
      %v3928 = vsel %vm2168, %v3528, 0.0
      %3929 = vadd.xlane.f32.xlu0 %v3928
      %v3930 = vpop.xlane.xlu0 %3929
      %v3931 = vsel %vm2168, %v3529, 0.0
      %3932 = vadd.xlane.f32.xlu0 %v3931
      %v3933 = vpop.xlane.xlu0 %3932
      %v3934 = vsel %vm2168, %v3530, 0.0
      %3935 = vadd.xlane.f32.xlu0 %v3934
      %v3936 = vpop.xlane.xlu0 %3935
      %v3937 = vsel %vm2168, %v3531, 0.0
      %3938 = vadd.xlane.f32.xlu0 %v3937
      %v3939 = vpop.xlane.xlu0 %3938
      %v3940 = vsel %vm2168, %v3532, 0.0
      %3941 = vadd.xlane.f32.xlu0 %v3940
      %v3942 = vpop.xlane.xlu0 %3941
      %v3943 = vsel %vm2168, %v3533, 0.0
      %3944 = vadd.xlane.f32.xlu0 %v3943
      %v3945 = vpop.xlane.xlu0 %3944
      %v3946 = vsel %vm2168, %v3534, 0.0
      %3947 = vadd.xlane.f32.xlu0 %v3946
      %v3948 = vpop.xlane.xlu0 %3947
      %v3949 = vsel %vm2168, %v3535, 0.0
      %3950 = vadd.xlane.f32.xlu0 %v3949
      %v3951 = vpop.xlane.xlu0 %3950
      %v3952 = vsel %vm2168, %v3536, 0.0
      %3953 = vadd.xlane.f32.xlu0 %v3952
      %v3954 = vpop.xlane.xlu0 %3953
      %v3955 = vsel %vm2168, %v3537, 0.0
      %3956 = vadd.xlane.f32.xlu0 %v3955
      %v3957 = vpop.xlane.xlu0 %3956
      %v3958 = vsel %vm2168, %v3538, 0.0
      %3959 = vadd.xlane.f32.xlu0 %v3958
      %v3960 = vpop.xlane.xlu0 %3959
      %v3961 = vsel %vm2168, %v3539, 0.0
      %3962 = vadd.xlane.f32.xlu0 %v3961
      %v3963 = vpop.xlane.xlu0 %3962
      %v3964 = vsel %vm2168, %v3540, 0.0
      %3965 = vadd.xlane.f32.xlu0 %v3964
      %v3966 = vpop.xlane.xlu0 %3965
      %v3967 = vsel %vm2168, %v3541, 0.0
      %3968 = vadd.xlane.f32.xlu0 %v3967
      %v3969 = vpop.xlane.xlu0 %3968
      %v3970 = vsel %vm2168, %v3542, 0.0
      %3971 = vadd.xlane.f32.xlu0 %v3970
      %v3972 = vpop.xlane.xlu0 %3971
      %v3973 = vsel %vm2168, %v3543, 0.0
      %3974 = vadd.xlane.f32.xlu0 %v3973
      %v3975 = vpop.xlane.xlu0 %3974
      %v3976 = vsel %vm2168, %v3544, 0.0
      %3977 = vadd.xlane.f32.xlu0 %v3976
      %v3978 = vpop.xlane.xlu0 %3977
      %v3979 = vsel %vm2168, %v3545, 0.0
      %3980 = vadd.xlane.f32.xlu0 %v3979
      %v3981 = vpop.xlane.xlu0 %3980
      %v3982 = vsel %vm2168, %v3546, 0.0
      %3983 = vadd.xlane.f32.xlu0 %v3982
      %v3984 = vpop.xlane.xlu0 %3983
      %v3985 = vsel %vm2168, %v3547, 0.0
      %3986 = vadd.xlane.f32.xlu0 %v3985
      %v3987 = vpop.xlane.xlu0 %3986
      %v3988 = vsel %vm2168, %v3548, 0.0
      %3989 = vadd.xlane.f32.xlu0 %v3988
      %v3990 = vpop.xlane.xlu0 %3989
      %v3991 = vsel %vm2168, %v3549, 0.0
      %3992 = vadd.xlane.f32.xlu0 %v3991
      %v3993 = vpop.xlane.xlu0 %3992
      %v3994 = vsel %vm2168, %v3550, 0.0
      %3995 = vadd.xlane.f32.xlu0 %v3994
      %v3996 = vpop.xlane.xlu0 %3995
      %v3997 = vsel %vm2168, %v3551, 0.0
      %3998 = vadd.xlane.f32.xlu0 %v3997
      %v3999 = vpop.xlane.xlu0 %3998
      %v4000 = vsel %vm2168, %v3552, 0.0
      %4001 = vadd.xlane.f32.xlu0 %v4000
      %v4002 = vpop.xlane.xlu0 %4001
      %v4003 = vsel %vm2168, %v3553, 0.0
      %4004 = vadd.xlane.f32.xlu0 %v4003
      %v4005 = vpop.xlane.xlu0 %4004
      %v4006 = vsel %vm2168, %v3554, 0.0
      %4007 = vadd.xlane.f32.xlu0 %v4006
      %v4008 = vpop.xlane.xlu0 %4007
      %v4009 = vsel %vm2168, %v3555, 0.0
      %4010 = vadd.xlane.f32.xlu0 %v4009
      %v4011 = vpop.xlane.xlu0 %4010
      %v4012 = vsel %vm2168, %v3556, 0.0
      %4013 = vadd.xlane.f32.xlu0 %v4012
      %v4014 = vpop.xlane.xlu0 %4013
      %v4015 = vsel %vm2168, %v3557, 0.0
      %4016 = vadd.xlane.f32.xlu0 %v4015
      %v4017 = vpop.xlane.xlu0 %4016
      %v4018 = vsel %vm2168, %v3558, 0.0
      %4019 = vadd.xlane.f32.xlu0 %v4018
      %v4020 = vpop.xlane.xlu0 %4019
      %v4021 = vsel %vm2168, %v3559, 0.0
      %4022 = vadd.xlane.f32.xlu0 %v4021
      %v4023 = vpop.xlane.xlu0 %4022
      %v4024 = vsel %vm2168, %v3560, 0.0
      %4025 = vadd.xlane.f32.xlu0 %v4024
      %v4026 = vpop.xlane.xlu0 %4025
      %v4027 = vsel %vm2168, %v3561, 0.0
      %4028 = vadd.xlane.f32.xlu0 %v4027
      %v4029 = vpop.xlane.xlu0 %4028
      %v4030 = vsel %vm2168, %v3562, 0.0
      %4031 = vadd.xlane.f32.xlu0 %v4030
      %v4032 = vpop.xlane.xlu0 %4031
      %v4033 = vsel %vm2168, %v3563, 0.0
      %4034 = vadd.xlane.f32.xlu0 %v4033
      %v4035 = vpop.xlane.xlu0 %4034
      %v4036 = vsel %vm2168, %v3564, 0.0
      %4037 = vadd.xlane.f32.xlu0 %v4036
      %v4038 = vpop.xlane.xlu0 %4037
      %v4039 = vsel %vm2168, %v3565, 0.0
      %4040 = vadd.xlane.f32.xlu0 %v4039
      %v4041 = vpop.xlane.xlu0 %4040
      %v4042 = vsel %vm2168, %v3566, 0.0
      %4043 = vadd.xlane.f32.xlu0 %v4042
      %v4044 = vpop.xlane.xlu0 %4043
      %v4045 = vsel %vm2168, %v3567, 0.0
      %4046 = vadd.xlane.f32.xlu0 %v4045
      %v4047 = vpop.xlane.xlu0 %4046
      %v4048 = vsel %vm2168, %v3568, 0.0
      %4049 = vadd.xlane.f32.xlu0 %v4048
      %v4050 = vpop.xlane.xlu0 %4049
      %v4051 = vsel %vm2168, %v3569, 0.0
      %4052 = vadd.xlane.f32.xlu0 %v4051
      %v4053 = vpop.xlane.xlu0 %4052
      %v4054 = vsel %vm2168, %v3570, 0.0
      %4055 = vadd.xlane.f32.xlu0 %v4054
      %v4056 = vpop.xlane.xlu0 %4055
      %v4057 = vsel %vm2168, %v3571, 0.0
      %4058 = vadd.xlane.f32.xlu0 %v4057
      %v4059 = vpop.xlane.xlu0 %4058
      %v4060 = vsel %vm2168, %v3572, 0.0
      %4061 = vadd.xlane.f32.xlu0 %v4060
      %v4062 = vpop.xlane.xlu0 %4061
      %v4063 = vsel %vm2168, %v3573, 0.0
      %4064 = vadd.xlane.f32.xlu0 %v4063
      %v4065 = vpop.xlane.xlu0 %4064
      %v4066 = vsel %vm2168, %v3574, 0.0
      %4067 = vadd.xlane.f32.xlu0 %v4066
      %v4068 = vpop.xlane.xlu0 %4067
      %v4069 = vsel %vm2168, %v3575, 0.0
      %4070 = vadd.xlane.f32.xlu0 %v4069
      %v4071 = vpop.xlane.xlu0 %4070
      %v4072 = vsel %vm2168, %v3576, 0.0
      %4073 = vadd.xlane.f32.xlu0 %v4072
      %v4074 = vpop.xlane.xlu0 %4073
      %v4075 = vsel %vm2168, %v3577, 0.0
      %4076 = vadd.xlane.f32.xlu0 %v4075
      %v4077 = vpop.xlane.xlu0 %4076
      %v4078 = vsel %vm2168, %v3578, 0.0
      %4079 = vadd.xlane.f32.xlu0 %v4078
      %v4080 = vpop.xlane.xlu0 %4079
      %v4081 = vsel %vm2168, %v3579, 0.0
      %4082 = vadd.xlane.f32.xlu0 %v4081
      %v4083 = vpop.xlane.xlu0 %4082
      %v4084 = vsel %vm2168, %v3580, 0.0
      %4085 = vadd.xlane.f32.xlu0 %v4084
      %v4086 = vpop.xlane.xlu0 %4085
      %v4087 = vsel %vm2168, %v3581, 0.0
      %4088 = vadd.xlane.f32.xlu0 %v4087
      %v4089 = vpop.xlane.xlu0 %4088
      %v4090 = vsel %vm2168, %v3582, 0.0
      %4091 = vadd.xlane.f32.xlu0 %v4090
      %v4092 = vpop.xlane.xlu0 %4091
      %v4093 = vsel %vm2168, %v3583, 0.0
      %4094 = vadd.xlane.f32.xlu0 %v4093
      %v4095 = vpop.xlane.xlu0 %4094
      %v4096 = vsel %vm2168, %v3584, 0.0
      %4097 = vadd.xlane.f32.xlu0 %v4096
      %v4098 = vpop.xlane.xlu0 %4097
      %v4099 = vsel %vm2168, %v3585, 0.0
      %4100 = vadd.xlane.f32.xlu0 %v4099
      %v4101 = vpop.xlane.xlu0 %4100
      %v4102 = vsel %vm2168, %v3586, 0.0
      %4103 = vadd.xlane.f32.xlu0 %v4102
      %v4104 = vpop.xlane.xlu0 %4103
      %v4105 = vsel %vm2168, %v3587, 0.0
      %4106 = vadd.xlane.f32.xlu0 %v4105
      %v4107 = vpop.xlane.xlu0 %4106
      %v4108 = vsel %vm2168, %v3588, 0.0
      %4109 = vadd.xlane.f32.xlu0 %v4108
      %v4110 = vpop.xlane.xlu0 %4109
      %v4111 = vsel %vm2168, %v3589, 0.0
      %4112 = vadd.xlane.f32.xlu0 %v4111
      %v4113 = vpop.xlane.xlu0 %4112
      %v4114 = vsel %vm2168, %v3590, 0.0
      %4115 = vadd.xlane.f32.xlu0 %v4114
      %v4116 = vpop.xlane.xlu0 %4115
      %v4117 = vsel %vm2168, %v3591, 0.0
      %4118 = vadd.xlane.f32.xlu0 %v4117
      %v4119 = vpop.xlane.xlu0 %4118
      %v4120 = vsel %vm2168, %v3592, 0.0
      %4121 = vadd.xlane.f32.xlu0 %v4120
      %v4122 = vpop.xlane.xlu0 %4121
      %v4123 = vsel %vm2168, %v3593, 0.0
      %4124 = vadd.xlane.f32.xlu0 %v4123
      %v4125 = vpop.xlane.xlu0 %4124
      %v4126 = vsel %vm2168, %v3594, 0.0
      %4127 = vadd.xlane.f32.xlu0 %v4126
      %v4128 = vpop.xlane.xlu0 %4127
      %v4129 = vsel %vm2168, %v3595, 0.0
      %4130 = vadd.xlane.f32.xlu0 %v4129
      %v4131 = vpop.xlane.xlu0 %4130
      %v4132 = vsel %vm2168, %v3596, 0.0
      %4133 = vadd.xlane.f32.xlu0 %v4132
      %v4134 = vpop.xlane.xlu0 %4133
      %v4135 = vsel %vm2168, %v3597, 0.0
      %4136 = vadd.xlane.f32.xlu0 %v4135
      %v4137 = vpop.xlane.xlu0 %4136
      %v4138 = vsel %vm2168, %v3598, 0.0
      %4139 = vadd.xlane.f32.xlu0 %v4138
      %v4140 = vpop.xlane.xlu0 %4139
      %v4141 = vsel %vm2168, %v3599, 0.0
      %4142 = vadd.xlane.f32.xlu0 %v4141
      %v4143 = vpop.xlane.xlu0 %4142
      %v4144 = vsel %vm2168, %v3600, 0.0
      %4145 = vadd.xlane.f32.xlu0 %v4144
      %v4146 = vpop.xlane.xlu0 %4145
      %v4147 = vsel %vm2168, %v3601, 0.0
      %4148 = vadd.xlane.f32.xlu0 %v4147
      %v4149 = vpop.xlane.xlu0 %4148
      %v4150 = vsel %vm2168, %v3602, 0.0
      %4151 = vadd.xlane.f32.xlu0 %v4150
      %v4152 = vpop.xlane.xlu0 %4151
      %v4153 = vsel %vm2168, %v3603, 0.0
      %4154 = vadd.xlane.f32.xlu0 %v4153
      %v4155 = vpop.xlane.xlu0 %4154
      %v4156 = vsel %vm2168, %v3604, 0.0
      %4157 = vadd.xlane.f32.xlu0 %v4156
      %v4158 = vpop.xlane.xlu0 %4157
      %v4159 = vsel %vm2168, %v3605, 0.0
      %4160 = vadd.xlane.f32.xlu0 %v4159
      %v4161 = vpop.xlane.xlu0 %4160
      %v4162 = vsel %vm2168, %v3606, 0.0
      %4163 = vadd.xlane.f32.xlu0 %v4162
      %v4164 = vpop.xlane.xlu0 %4163
      %v4165 = vsel %vm2168, %v3607, 0.0
      %4166 = vadd.xlane.f32.xlu0 %v4165
      %v4167 = vpop.xlane.xlu0 %4166
      %v4168 = vsel %vm2168, %v3608, 0.0
      %4169 = vadd.xlane.f32.xlu0 %v4168
      %v4170 = vpop.xlane.xlu0 %4169
      %v4171 = vsel %vm2168, %v3609, 0.0
      %4172 = vadd.xlane.f32.xlu0 %v4171
      %v4173 = vpop.xlane.xlu0 %4172
      %v4174 = vsel %vm2168, %v3610, 0.0
      %4175 = vadd.xlane.f32.xlu0 %v4174
      %v4176 = vpop.xlane.xlu0 %4175
      %v4177 = vsel %vm2168, %v3611, 0.0
      %4178 = vadd.xlane.f32.xlu0 %v4177
      %v4179 = vpop.xlane.xlu0 %4178
      %v4180 = vsel %vm2168, %v3612, 0.0
      %4181 = vadd.xlane.f32.xlu0 %v4180
      %v4182 = vpop.xlane.xlu0 %4181
      %v4183 = vsel %vm2168, %v3613, 0.0
      %4184 = vadd.xlane.f32.xlu0 %v4183
      %v4185 = vpop.xlane.xlu0 %4184
      %v4186 = vsel %vm2168, %v3614, 0.0
      %4187 = vadd.xlane.f32.xlu0 %v4186
      %v4188 = vpop.xlane.xlu0 %4187
      %v4189 = vsel %vm2168, %v3615, 0.0
      %4190 = vadd.xlane.f32.xlu0 %v4189
      %v4191 = vpop.xlane.xlu0 %4190
      %v4192 = vsel %vm2168, %v3616, 0.0
      %4193 = vadd.xlane.f32.xlu0 %v4192
      %v4194 = vpop.xlane.xlu0 %4193
      %v4195 = vsel %vm2168, %v3617, 0.0
      %4196 = vadd.xlane.f32.xlu0 %v4195
      %v4197 = vpop.xlane.xlu0 %4196
      %v4198 = vsel %vm2168, %v3618, 0.0
      %4199 = vadd.xlane.f32.xlu0 %v4198
      %v4200 = vpop.xlane.xlu0 %4199
      %v4201 = vsel %vm2168, %v3619, 0.0
      %4202 = vadd.xlane.f32.xlu0 %v4201
      %v4203 = vpop.xlane.xlu0 %4202
      %v4204 = vsel %vm2168, %v3620, 0.0
      %4205 = vadd.xlane.f32.xlu0 %v4204
      %v4206 = vpop.xlane.xlu0 %4205
      %v4207 = vsel %vm2168, %v3621, 0.0
      %4208 = vadd.xlane.f32.xlu0 %v4207
      %v4209 = vpop.xlane.xlu0 %4208
      %v4210 = vsel %vm2168, %v3622, 0.0
      %4211 = vadd.xlane.f32.xlu0 %v4210
      %v4212 = vpop.xlane.xlu0 %4211
      %v4213 = vsel %vm2168, %v3623, 0.0
      %4214 = vadd.xlane.f32.xlu0 %v4213
      %v4215 = vpop.xlane.xlu0 %4214
      %v4216 = vsel %vm2168, %v3624, 0.0
      %4217 = vadd.xlane.f32.xlu0 %v4216
      %v4218 = vpop.xlane.xlu0 %4217
      %v4219 = vsel %vm2168, %v3625, 0.0
      %4220 = vadd.xlane.f32.xlu0 %v4219
      %v4221 = vpop.xlane.xlu0 %4220
      %v4222 = vsel %vm2168, %v3626, 0.0
      %4223 = vadd.xlane.f32.xlu0 %v4222
      %v4224 = vpop.xlane.xlu0 %4223
      %v4225 = vsel %vm2168, %v3627, 0.0
      %4226 = vadd.xlane.f32.xlu0 %v4225
      %v4227 = vpop.xlane.xlu0 %4226
      %v4228 = vsel %vm2168, %v3628, 0.0
      %4229 = vadd.xlane.f32.xlu0 %v4228
      %v4230 = vpop.xlane.xlu0 %4229
      %v4231 = vsel %vm2168, %v3629, 0.0
      %4232 = vadd.xlane.f32.xlu0 %v4231
      %v4233 = vpop.xlane.xlu0 %4232
      %v4234 = vsel %vm2168, %v3630, 0.0
      %4235 = vadd.xlane.f32.xlu0 %v4234
      %v4236 = vpop.xlane.xlu0 %4235
      %v4237 = vsel %vm2168, %v3631, 0.0
      %4238 = vadd.xlane.f32.xlu0 %v4237
      %v4239 = vpop.xlane.xlu0 %4238
      %v4240 = vsel %vm2168, %v3632, 0.0
      %4241 = vadd.xlane.f32.xlu0 %v4240
      %v4242 = vpop.xlane.xlu0 %4241
      %v4243 = vsel %vm2168, %v3633, 0.0
      %4244 = vadd.xlane.f32.xlu0 %v4243
      %v4245 = vpop.xlane.xlu0 %4244
      %v4246 = vsel %vm2168, %v3634, 0.0
      %4247 = vadd.xlane.f32.xlu0 %v4246
      %v4248 = vpop.xlane.xlu0 %4247
      %v4249 = vsel %vm2168, %v3635, 0.0
      %4250 = vadd.xlane.f32.xlu0 %v4249
      %v4251 = vpop.xlane.xlu0 %4250
      %v4252 = vsel %vm2168, %v3636, 0.0
      %4253 = vadd.xlane.f32.xlu0 %v4252
      %v4254 = vpop.xlane.xlu0 %4253
      %v4255 = vsel %vm2168, %v3637, 0.0
      %4256 = vadd.xlane.f32.xlu0 %v4255
      %v4257 = vpop.xlane.xlu0 %4256
      %v4258 = vsel %vm2168, %v3638, 0.0
      %4259 = vadd.xlane.f32.xlu0 %v4258
      %v4260 = vpop.xlane.xlu0 %4259
      %v4261 = vsel %vm2168, %v3639, 0.0
      %4262 = vadd.xlane.f32.xlu0 %v4261
      %v4263 = vpop.xlane.xlu0 %4262
      %v4264 = vsel %vm2168, %v3640, 0.0
      %4265 = vadd.xlane.f32.xlu0 %v4264
      %v4266 = vpop.xlane.xlu0 %4265
      %v4267 = vsel %vm2168, %v3641, 0.0
      %4268 = vadd.xlane.f32.xlu0 %v4267
      %v4269 = vpop.xlane.xlu0 %4268
      %v4270 = vsel %vm2168, %v3642, 0.0
      %4271 = vadd.xlane.f32.xlu0 %v4270
      %v4272 = vpop.xlane.xlu0 %4271
      %v4273 = vsel %vm2168, %v3643, 0.0
      %4274 = vadd.xlane.f32.xlu0 %v4273
      %v4275 = vpop.xlane.xlu0 %4274
      %v4276 = vsel %vm2168, %v3644, 0.0
      %4277 = vadd.xlane.f32.xlu0 %v4276
      %v4278 = vpop.xlane.xlu0 %4277
      %v4279 = vsel %vm2168, %v3645, 0.0
      %4280 = vadd.xlane.f32.xlu0 %v4279
      %v4281 = vpop.xlane.xlu0 %4280
      %v4282 = vsel %vm2168, %v3646, 0.0
      %4283 = vadd.xlane.f32.xlu0 %v4282
      %v4284 = vpop.xlane.xlu0 %4283
      %v4285 = vsel %vm2168, %v3647, 0.0
      %4286 = vadd.xlane.f32.xlu0 %v4285
      %v4287 = vpop.xlane.xlu0 %4286
      %v4288 = vsel %vm2168, %v3648, 0.0
      %4289 = vadd.xlane.f32.xlu0 %v4288
      %v4290 = vpop.xlane.xlu0 %4289
      %v4291 = vsel %vm2168, %v3649, 0.0
      %4292 = vadd.xlane.f32.xlu0 %v4291
      %v4293 = vpop.xlane.xlu0 %4292
      %v4294 = vsel %vm2168, %v3650, 0.0
      %4295 = vadd.xlane.f32.xlu0 %v4294
      %v4296 = vpop.xlane.xlu0 %4295
      %v4297 = vsel %vm2168, %v3651, 0.0
      %4298 = vadd.xlane.f32.xlu0 %v4297
      %v4299 = vpop.xlane.xlu0 %4298
      %v4300 = vsel %vm2168, %v3652, 0.0
      %4301 = vadd.xlane.f32.xlu0 %v4300
      %v4302 = vpop.xlane.xlu0 %4301
      %v4303 = vsel %vm2168, %v3653, 0.0
      %4304 = vadd.xlane.f32.xlu0 %v4303
      %v4305 = vpop.xlane.xlu0 %4304
      %v4306 = vsel %vm2168, %v3654, 0.0
      %4307 = vadd.xlane.f32.xlu0 %v4306
      %v4308 = vpop.xlane.xlu0 %4307
      %v4309 = vsel %vm2168, %v3655, 0.0
      %4310 = vadd.xlane.f32.xlu0 %v4309
      %v4311 = vpop.xlane.xlu0 %4310
      %v4312 = vsel %vm2168, %v3656, 0.0
      %4313 = vadd.xlane.f32.xlu0 %v4312
      %v4314 = vpop.xlane.xlu0 %4313
      %v4315 = vsel %vm2168, %v3657, 0.0
      %4316 = vadd.xlane.f32.xlu0 %v4315
      %v4317 = vpop.xlane.xlu0 %4316
      %v4318 = vsel %vm2168, %v3658, 0.0
      %4319 = vadd.xlane.f32.xlu0 %v4318
      %v4320 = vpop.xlane.xlu0 %4319
      %v4321 = vsel %vm2168, %v3659, 0.0
      %4322 = vadd.xlane.f32.xlu0 %v4321
      %v4323 = vpop.xlane.xlu0 %4322
      %v4324 = vsel %vm2168, %v3660, 0.0
      %4325 = vadd.xlane.f32.xlu0 %v4324
      %v4326 = vpop.xlane.xlu0 %4325
      %v4327 = vsel %vm2168, %v3661, 0.0
      %4328 = vadd.xlane.f32.xlu0 %v4327
      %v4329 = vpop.xlane.xlu0 %4328
      %v4330 = vsel %vm2168, %v3662, 0.0
      %4331 = vadd.xlane.f32.xlu0 %v4330
      %v4332 = vpop.xlane.xlu0 %4331
      %v4333 = vsel %vm2168, %v3663, 0.0
      %4334 = vadd.xlane.f32.xlu0 %v4333
      %v4335 = vpop.xlane.xlu0 %4334
      %v4336 = vsel %vm2168, %v3664, 0.0
      %4337 = vadd.xlane.f32.xlu0 %v4336
      %v4338 = vpop.xlane.xlu0 %4337
      %v4339 = vsel %vm2168, %v3665, 0.0
      %4340 = vadd.xlane.f32.xlu0 %v4339
      %v4341 = vpop.xlane.xlu0 %4340
      %v4342 = vsel %vm2168, %v3666, 0.0
      %4343 = vadd.xlane.f32.xlu0 %v4342
      %v4344 = vpop.xlane.xlu0 %4343
      %v4345 = vsel %vm2168, %v3667, 0.0
      %4346 = vadd.xlane.f32.xlu0 %v4345
      %v4347 = vpop.xlane.xlu0 %4346
      %v4348 = vsel %vm2168, %v3668, 0.0
      %4349 = vadd.xlane.f32.xlu0 %v4348
      %v4350 = vpop.xlane.xlu0 %4349
      %v4351 = vsel %vm2168, %v3669, 0.0
      %4352 = vadd.xlane.f32.xlu0 %v4351
      %v4353 = vpop.xlane.xlu0 %4352
      %v4354 = vsel %vm2168, %v3670, 0.0
      %4355 = vadd.xlane.f32.xlu0 %v4354
      %v4356 = vpop.xlane.xlu0 %4355
      %v4357 = vsel %vm2168, %v3671, 0.0
      %4358 = vadd.xlane.f32.xlu0 %v4357
      %v4359 = vpop.xlane.xlu0 %4358
      %v4360 = vsel %vm2168, %v3672, 0.0
      %4361 = vadd.xlane.f32.xlu0 %v4360
      %v4362 = vpop.xlane.xlu0 %4361
      %v4363 = vsel %vm2168, %v3673, 0.0
      %4364 = vadd.xlane.f32.xlu0 %v4363
      %v4365 = vpop.xlane.xlu0 %4364
      %v4366 = vsel %vm2168, %v3674, 0.0
      %4367 = vadd.xlane.f32.xlu0 %v4366
      %v4368 = vpop.xlane.xlu0 %4367
      %v4369 = vsel %vm2168, %v3675, 0.0
      %4370 = vadd.xlane.f32.xlu0 %v4369
      %v4371 = vpop.xlane.xlu0 %4370
      %v4372 = vsel %vm2168, %v3676, 0.0
      %4373 = vadd.xlane.f32.xlu0 %v4372
      %v4374 = vpop.xlane.xlu0 %4373
      %v4375 = vsel %vm2168, %v3677, 0.0
      %4376 = vadd.xlane.f32.xlu0 %v4375
      %v4377 = vpop.xlane.xlu0 %4376
      %v4378 = vsel %vm2168, %v3678, 0.0
      %4379 = vadd.xlane.f32.xlu0 %v4378
      %v4380 = vpop.xlane.xlu0 %4379
      %v4381 = vsel %vm2168, %v3679, 0.0
      %4382 = vadd.xlane.f32.xlu0 %v4381
      %v4383 = vpop.xlane.xlu0 %4382
      %v4384 = vsel %vm2168, %v3680, 0.0
      %4385 = vadd.xlane.f32.xlu0 %v4384
      %v4386 = vpop.xlane.xlu0 %4385
      %v4387 = vsel %vm2168, %v3681, 0.0
      %4388 = vadd.xlane.f32.xlu0 %v4387
      %v4389 = vpop.xlane.xlu0 %4388
      %v4390 = vsel %vm2168, %v3682, 0.0
      %4391 = vadd.xlane.f32.xlu0 %v4390
      %v4392 = vpop.xlane.xlu0 %4391
      %v4393 = vsel %vm2168, %v3683, 0.0
      %4394 = vadd.xlane.f32.xlu0 %v4393
      %v4395 = vpop.xlane.xlu0 %4394
      %v4396 = vsel %vm2168, %v3684, 0.0
      %4397 = vadd.xlane.f32.xlu0 %v4396
      %v4398 = vpop.xlane.xlu0 %4397
      %v4399 = vsel %vm2168, %v3685, 0.0
      %4400 = vadd.xlane.f32.xlu0 %v4399
      %v4401 = vpop.xlane.xlu0 %4400
      %v4402 = vsel %vm2168, %v3686, 0.0
      %4403 = vadd.xlane.f32.xlu0 %v4402
      %v4404 = vpop.xlane.xlu0 %4403
      %v4405 = vsel %vm2168, %v3687, 0.0
      %4406 = vadd.xlane.f32.xlu0 %v4405
      %v4407 = vpop.xlane.xlu0 %4406
      %v4408 = vsel %vm2168, %v3688, 0.0
      %4409 = vadd.xlane.f32.xlu0 %v4408
      %v4410 = vpop.xlane.xlu0 %4409
      %v4411 = vsel %vm2168, %v3689, 0.0
      %4412 = vadd.xlane.f32.xlu0 %v4411
      %v4413 = vpop.xlane.xlu0 %4412
      %v4414 = vsel %vm2168, %v3690, 0.0
      %4415 = vadd.xlane.f32.xlu0 %v4414
      %v4416 = vpop.xlane.xlu0 %4415
      %v4417 = vsel %vm2168, %v3691, 0.0
      %4418 = vadd.xlane.f32.xlu0 %v4417
      %v4419 = vpop.xlane.xlu0 %4418
      %v4420 = vsel %vm2168, %v3692, 0.0
      %4421 = vadd.xlane.f32.xlu0 %v4420
      %v4422 = vpop.xlane.xlu0 %4421
      %v4423 = vsel %vm2168, %v3693, 0.0
      %4424 = vadd.xlane.f32.xlu0 %v4423
      %v4425 = vpop.xlane.xlu0 %4424
      %v4426 = vsel %vm2168, %v3694, 0.0
      %4427 = vadd.xlane.f32.xlu0 %v4426
      %v4428 = vpop.xlane.xlu0 %4427
      %v4429 = vsel %vm2168, %v3695, 0.0
      %4430 = vadd.xlane.f32.xlu0 %v4429
      %v4431 = vpop.xlane.xlu0 %4430
      %v4432 = vsel %vm2168, %v3696, 0.0
      %4433 = vadd.xlane.f32.xlu0 %v4432
      %v4434 = vpop.xlane.xlu0 %4433
      %v4435 = vsel %vm2168, %v3697, 0.0
      %4436 = vadd.xlane.f32.xlu0 %v4435
      %v4437 = vpop.xlane.xlu0 %4436
      %v4438 = vsel %vm2168, %v3698, 0.0
      %4439 = vadd.xlane.f32.xlu0 %v4438
      %v4440 = vpop.xlane.xlu0 %4439
      %v4441 = vsel %vm2168, %v3699, 0.0
      %4442 = vadd.xlane.f32.xlu0 %v4441
      %v4443 = vpop.xlane.xlu0 %4442
      %v4444 = vsel %vm2168, %v3700, 0.0
      %4445 = vadd.xlane.f32.xlu0 %v4444
      %v4446 = vpop.xlane.xlu0 %4445
      %v4447 = vsel %vm2168, %v3701, 0.0
      %4448 = vadd.xlane.f32.xlu0 %v4447
      %v4449 = vpop.xlane.xlu0 %4448
      %v4450 = vsel %vm2168, %v3702, 0.0
      %4451 = vadd.xlane.f32.xlu0 %v4450
      %v4452 = vpop.xlane.xlu0 %4451
      %v4453 = vsel %vm2168, %v3703, 0.0
      %4454 = vadd.xlane.f32.xlu0 %v4453
      %v4455 = vpop.xlane.xlu0 %4454
      %v4456 = vsel %vm2168, %v3704, 0.0
      %4457 = vadd.xlane.f32.xlu0 %v4456
      %v4458 = vpop.xlane.xlu0 %4457
      %v4459 = vsel %vm2168, %v3705, 0.0
      %4460 = vadd.xlane.f32.xlu0 %v4459
      %v4461 = vpop.xlane.xlu0 %4460
      %v4462 = vsel %vm2168, %v3706, 0.0
      %4463 = vadd.xlane.f32.xlu0 %v4462
      %v4464 = vpop.xlane.xlu0 %4463
      %v4465 = vsel %vm2168, %v3707, 0.0
      %4466 = vadd.xlane.f32.xlu0 %v4465
      %v4467 = vpop.xlane.xlu0 %4466
      %v4468 = vsel %vm2168, %v3708, 0.0
      %4469 = vadd.xlane.f32.xlu0 %v4468
      %v4470 = vpop.xlane.xlu0 %4469
      %v4471 = vsel %vm2168, %v3709, 0.0
      %4472 = vadd.xlane.f32.xlu0 %v4471
      %v4473 = vpop.xlane.xlu0 %4472
      %v4474 = vsel %vm2168, %v3710, 0.0
      %4475 = vadd.xlane.f32.xlu0 %v4474
      %v4476 = vpop.xlane.xlu0 %4475
      %v4477 = vsel %vm2168, %v3711, 0.0
      %4478 = vadd.xlane.f32.xlu0 %v4477
      %v4479 = vpop.xlane.xlu0 %4478
      %v4480 = vmul.f32 %v3714, %v2943
      %v4481 = vmul.f32 %v3717, %v2943
      %v4482 = vmul.f32 %v3720, %v2943
      %v4483 = vmul.f32 %v3723, %v2943
      %v4484 = vmul.f32 %v3726, %v2943
      %v4485 = vmul.f32 %v3729, %v2943
      %v4486 = vmul.f32 %v3732, %v2943
      %v4487 = vmul.f32 %v3735, %v2943
      %v4488 = vmul.f32 %v3738, %v2943
      %v4489 = vmul.f32 %v3741, %v2943
      %v4490 = vmul.f32 %v3744, %v2943
      %v4491 = vmul.f32 %v3747, %v2943
      %v4492 = vmul.f32 %v3750, %v2943
      %v4493 = vmul.f32 %v3753, %v2943
      %v4494 = vmul.f32 %v3756, %v2943
      %v4495 = vmul.f32 %v3759, %v2943
      %v4496 = vmul.f32 %v3762, %v2943
      %v4497 = vmul.f32 %v3765, %v2943
      %v4498 = vmul.f32 %v3768, %v2943
      %v4499 = vmul.f32 %v3771, %v2943
      %v4500 = vmul.f32 %v3774, %v2943
      %v4501 = vmul.f32 %v3777, %v2943
      %v4502 = vmul.f32 %v3780, %v2943
      %v4503 = vmul.f32 %v3783, %v2943
      %v4504 = vmul.f32 %v3786, %v2943
      %v4505 = vmul.f32 %v3789, %v2943
      %v4506 = vmul.f32 %v3792, %v2943
      %v4507 = vmul.f32 %v3795, %v2943
      %v4508 = vmul.f32 %v3798, %v2943
      %v4509 = vmul.f32 %v3801, %v2943
      %v4510 = vmul.f32 %v3804, %v2943
      %v4511 = vmul.f32 %v3807, %v2943
      %v4512 = vmul.f32 %v3810, %v2943
      %v4513 = vmul.f32 %v3813, %v2943
      %v4514 = vmul.f32 %v3816, %v2943
      %v4515 = vmul.f32 %v3819, %v2943
      %v4516 = vmul.f32 %v3822, %v2943
      %v4517 = vmul.f32 %v3825, %v2943
      %v4518 = vmul.f32 %v3828, %v2943
      %v4519 = vmul.f32 %v3831, %v2943
      %v4520 = vmul.f32 %v3834, %v2943
      %v4521 = vmul.f32 %v3837, %v2943
      %v4522 = vmul.f32 %v3840, %v2943
      %v4523 = vmul.f32 %v3843, %v2943
      %v4524 = vmul.f32 %v3846, %v2943
      %v4525 = vmul.f32 %v3849, %v2943
      %v4526 = vmul.f32 %v3852, %v2943
      %v4527 = vmul.f32 %v3855, %v2943
      %v4528 = vmul.f32 %v3858, %v2943
      %v4529 = vmul.f32 %v3861, %v2943
      %v4530 = vmul.f32 %v3864, %v2943
      %v4531 = vmul.f32 %v3867, %v2943
      %v4532 = vmul.f32 %v3870, %v2943
      %v4533 = vmul.f32 %v3873, %v2943
      %v4534 = vmul.f32 %v3876, %v2943
      %v4535 = vmul.f32 %v3879, %v2943
      %v4536 = vmul.f32 %v3882, %v2943
      %v4537 = vmul.f32 %v3885, %v2943
      %v4538 = vmul.f32 %v3888, %v2943
      %v4539 = vmul.f32 %v3891, %v2943
      %v4540 = vmul.f32 %v3894, %v2943
      %v4541 = vmul.f32 %v3897, %v2943
      %v4542 = vmul.f32 %v3900, %v2943
      %v4543 = vmul.f32 %v3903, %v2943
      %v4544 = vmul.f32 %v3906, %v2943
      %v4545 = vmul.f32 %v3909, %v2943
      %v4546 = vmul.f32 %v3912, %v2943
      %v4547 = vmul.f32 %v3915, %v2943
      %v4548 = vmul.f32 %v3918, %v2943
      %v4549 = vmul.f32 %v3921, %v2943
      %v4550 = vmul.f32 %v3924, %v2943
      %v4551 = vmul.f32 %v3927, %v2943
      %v4552 = vmul.f32 %v3930, %v2943
      %v4553 = vmul.f32 %v3933, %v2943
      %v4554 = vmul.f32 %v3936, %v2943
      %v4555 = vmul.f32 %v3939, %v2943
      %v4556 = vmul.f32 %v3942, %v2943
      %v4557 = vmul.f32 %v3945, %v2943
      %v4558 = vmul.f32 %v3948, %v2943
      %v4559 = vmul.f32 %v3951, %v2943
      %v4560 = vmul.f32 %v3954, %v2943
      %v4561 = vmul.f32 %v3957, %v2943
      %v4562 = vmul.f32 %v3960, %v2943
      %v4563 = vmul.f32 %v3963, %v2943
      %v4564 = vmul.f32 %v3966, %v2943
      %v4565 = vmul.f32 %v3969, %v2943
      %v4566 = vmul.f32 %v3972, %v2943
      %v4567 = vmul.f32 %v3975, %v2943
      %v4568 = vmul.f32 %v3978, %v2943
      %v4569 = vmul.f32 %v3981, %v2943
      %v4570 = vmul.f32 %v3984, %v2943
      %v4571 = vmul.f32 %v3987, %v2943
      %v4572 = vmul.f32 %v3990, %v2943
      %v4573 = vmul.f32 %v3993, %v2943
      %v4574 = vmul.f32 %v3996, %v2943
      %v4575 = vmul.f32 %v3999, %v2943
      %v4576 = vmul.f32 %v4002, %v2943
      %v4577 = vmul.f32 %v4005, %v2943
      %v4578 = vmul.f32 %v4008, %v2943
      %v4579 = vmul.f32 %v4011, %v2943
      %v4580 = vmul.f32 %v4014, %v2943
      %v4581 = vmul.f32 %v4017, %v2943
      %v4582 = vmul.f32 %v4020, %v2943
      %v4583 = vmul.f32 %v4023, %v2943
      %v4584 = vmul.f32 %v4026, %v2943
      %v4585 = vmul.f32 %v4029, %v2943
      %v4586 = vmul.f32 %v4032, %v2943
      %v4587 = vmul.f32 %v4035, %v2943
      %v4588 = vmul.f32 %v4038, %v2943
      %v4589 = vmul.f32 %v4041, %v2943
      %v4590 = vmul.f32 %v4044, %v2943
      %v4591 = vmul.f32 %v4047, %v2943
      %v4592 = vmul.f32 %v4050, %v2943
      %v4593 = vmul.f32 %v4053, %v2943
      %v4594 = vmul.f32 %v4056, %v2943
      %v4595 = vmul.f32 %v4059, %v2943
      %v4596 = vmul.f32 %v4062, %v2943
      %v4597 = vmul.f32 %v4065, %v2943
      %v4598 = vmul.f32 %v4068, %v2943
      %v4599 = vmul.f32 %v4071, %v2943
      %v4600 = vmul.f32 %v4074, %v2943
      %v4601 = vmul.f32 %v4077, %v2943
      %v4602 = vmul.f32 %v4080, %v2943
      %v4603 = vmul.f32 %v4083, %v2943
      %v4604 = vmul.f32 %v4086, %v2943
      %v4605 = vmul.f32 %v4089, %v2943
      %v4606 = vmul.f32 %v4092, %v2943
      %v4607 = vmul.f32 %v4095, %v2943
      %v4608 = vmul.f32 %v4098, %v2943
      %v4609 = vmul.f32 %v4101, %v2943
      %v4610 = vmul.f32 %v4104, %v2943
      %v4611 = vmul.f32 %v4107, %v2943
      %v4612 = vmul.f32 %v4110, %v2943
      %v4613 = vmul.f32 %v4113, %v2943
      %v4614 = vmul.f32 %v4116, %v2943
      %v4615 = vmul.f32 %v4119, %v2943
      %v4616 = vmul.f32 %v4122, %v2943
      %v4617 = vmul.f32 %v4125, %v2943
      %v4618 = vmul.f32 %v4128, %v2943
      %v4619 = vmul.f32 %v4131, %v2943
      %v4620 = vmul.f32 %v4134, %v2943
      %v4621 = vmul.f32 %v4137, %v2943
      %v4622 = vmul.f32 %v4140, %v2943
      %v4623 = vmul.f32 %v4143, %v2943
      %v4624 = vmul.f32 %v4146, %v2943
      %v4625 = vmul.f32 %v4149, %v2943
      %v4626 = vmul.f32 %v4152, %v2943
      %v4627 = vmul.f32 %v4155, %v2943
      %v4628 = vmul.f32 %v4158, %v2943
      %v4629 = vmul.f32 %v4161, %v2943
      %v4630 = vmul.f32 %v4164, %v2943
      %v4631 = vmul.f32 %v4167, %v2943
      %v4632 = vmul.f32 %v4170, %v2943
      %v4633 = vmul.f32 %v4173, %v2943
      %v4634 = vmul.f32 %v4176, %v2943
      %v4635 = vmul.f32 %v4179, %v2943
      %v4636 = vmul.f32 %v4182, %v2943
      %v4637 = vmul.f32 %v4185, %v2943
      %v4638 = vmul.f32 %v4188, %v2943
      %v4639 = vmul.f32 %v4191, %v2943
      %v4640 = vmul.f32 %v4194, %v2943
      %v4641 = vmul.f32 %v4197, %v2943
      %v4642 = vmul.f32 %v4200, %v2943
      %v4643 = vmul.f32 %v4203, %v2943
      %v4644 = vmul.f32 %v4206, %v2943
      %v4645 = vmul.f32 %v4209, %v2943
      %v4646 = vmul.f32 %v4212, %v2943
      %v4647 = vmul.f32 %v4215, %v2943
      %v4648 = vmul.f32 %v4218, %v2943
      %v4649 = vmul.f32 %v4221, %v2943
      %v4650 = vmul.f32 %v4224, %v2943
      %v4651 = vmul.f32 %v4227, %v2943
      %v4652 = vmul.f32 %v4230, %v2943
      %v4653 = vmul.f32 %v4233, %v2943
      %v4654 = vmul.f32 %v4236, %v2943
      %v4655 = vmul.f32 %v4239, %v2943
      %v4656 = vmul.f32 %v4242, %v2943
      %v4657 = vmul.f32 %v4245, %v2943
      %v4658 = vmul.f32 %v4248, %v2943
      %v4659 = vmul.f32 %v4251, %v2943
      %v4660 = vmul.f32 %v4254, %v2943
      %v4661 = vmul.f32 %v4257, %v2943
      %v4662 = vmul.f32 %v4260, %v2943
      %v4663 = vmul.f32 %v4263, %v2943
      %v4664 = vmul.f32 %v4266, %v2943
      %v4665 = vmul.f32 %v4269, %v2943
      %v4666 = vmul.f32 %v4272, %v2943
      %v4667 = vmul.f32 %v4275, %v2943
      %v4668 = vmul.f32 %v4278, %v2943
      %v4669 = vmul.f32 %v4281, %v2943
      %v4670 = vmul.f32 %v4284, %v2943
      %v4671 = vmul.f32 %v4287, %v2943
      %v4672 = vmul.f32 %v4290, %v2943
      %v4673 = vmul.f32 %v4293, %v2943
      %v4674 = vmul.f32 %v4296, %v2943
      %v4675 = vmul.f32 %v4299, %v2943
      %v4676 = vmul.f32 %v4302, %v2943
      %v4677 = vmul.f32 %v4305, %v2943
      %v4678 = vmul.f32 %v4308, %v2943
      %v4679 = vmul.f32 %v4311, %v2943
      %v4680 = vmul.f32 %v4314, %v2943
      %v4681 = vmul.f32 %v4317, %v2943
      %v4682 = vmul.f32 %v4320, %v2943
      %v4683 = vmul.f32 %v4323, %v2943
      %v4684 = vmul.f32 %v4326, %v2943
      %v4685 = vmul.f32 %v4329, %v2943
      %v4686 = vmul.f32 %v4332, %v2943
      %v4687 = vmul.f32 %v4335, %v2943
      %v4688 = vmul.f32 %v4338, %v2943
      %v4689 = vmul.f32 %v4341, %v2943
      %v4690 = vmul.f32 %v4344, %v2943
      %v4691 = vmul.f32 %v4347, %v2943
      %v4692 = vmul.f32 %v4350, %v2943
      %v4693 = vmul.f32 %v4353, %v2943
      %v4694 = vmul.f32 %v4356, %v2943
      %v4695 = vmul.f32 %v4359, %v2943
      %v4696 = vmul.f32 %v4362, %v2943
      %v4697 = vmul.f32 %v4365, %v2943
      %v4698 = vmul.f32 %v4368, %v2943
      %v4699 = vmul.f32 %v4371, %v2943
      %v4700 = vmul.f32 %v4374, %v2943
      %v4701 = vmul.f32 %v4377, %v2943
      %v4702 = vmul.f32 %v4380, %v2943
      %v4703 = vmul.f32 %v4383, %v2943
      %v4704 = vmul.f32 %v4386, %v2943
      %v4705 = vmul.f32 %v4389, %v2943
      %v4706 = vmul.f32 %v4392, %v2943
      %v4707 = vmul.f32 %v4395, %v2943
      %v4708 = vmul.f32 %v4398, %v2943
      %v4709 = vmul.f32 %v4401, %v2943
      %v4710 = vmul.f32 %v4404, %v2943
      %v4711 = vmul.f32 %v4407, %v2943
      %v4712 = vmul.f32 %v4410, %v2943
      %v4713 = vmul.f32 %v4413, %v2943
      %v4714 = vmul.f32 %v4416, %v2943
      %v4715 = vmul.f32 %v4419, %v2943
      %v4716 = vmul.f32 %v4422, %v2943
      %v4717 = vmul.f32 %v4425, %v2943
      %v4718 = vmul.f32 %v4428, %v2943
      %v4719 = vmul.f32 %v4431, %v2943
      %v4720 = vmul.f32 %v4434, %v2943
      %v4721 = vmul.f32 %v4437, %v2943
      %v4722 = vmul.f32 %v4440, %v2943
      %v4723 = vmul.f32 %v4443, %v2943
      %v4724 = vmul.f32 %v4446, %v2943
      %v4725 = vmul.f32 %v4449, %v2943
      %v4726 = vmul.f32 %v4452, %v2943
      %v4727 = vmul.f32 %v4455, %v2943
      %v4728 = vmul.f32 %v4458, %v2943
      %v4729 = vmul.f32 %v4461, %v2943
      %v4730 = vmul.f32 %v4464, %v2943
      %v4731 = vmul.f32 %v4467, %v2943
      %v4732 = vmul.f32 %v4470, %v2943
      %v4733 = vmul.f32 %v4473, %v2943
      %v4734 = vmul.f32 %v4476, %v2943
      %v4735 = vmul.f32 %v4479, %v2943
      %v4736 = vadd.f32 %v4480, 1e-05
      %v4737 = vadd.f32 %v4481, 1e-05
      %v4738 = vadd.f32 %v4482, 1e-05
      %v4739 = vadd.f32 %v4483, 1e-05
      %v4740 = vadd.f32 %v4484, 1e-05
      %v4741 = vadd.f32 %v4485, 1e-05
      %v4742 = vadd.f32 %v4486, 1e-05
      %v4743 = vadd.f32 %v4487, 1e-05
      %v4744 = vadd.f32 %v4488, 1e-05
      %v4745 = vadd.f32 %v4489, 1e-05
      %v4746 = vadd.f32 %v4490, 1e-05
      %v4747 = vadd.f32 %v4491, 1e-05
      %v4748 = vadd.f32 %v4492, 1e-05
      %v4749 = vadd.f32 %v4493, 1e-05
      %v4750 = vadd.f32 %v4494, 1e-05
      %v4751 = vadd.f32 %v4495, 1e-05
      %v4752 = vadd.f32 %v4496, 1e-05
      %v4753 = vadd.f32 %v4497, 1e-05
      %v4754 = vadd.f32 %v4498, 1e-05
      %v4755 = vadd.f32 %v4499, 1e-05
      %v4756 = vadd.f32 %v4500, 1e-05
      %v4757 = vadd.f32 %v4501, 1e-05
      %v4758 = vadd.f32 %v4502, 1e-05
      %v4759 = vadd.f32 %v4503, 1e-05
      %v4760 = vadd.f32 %v4504, 1e-05
      %v4761 = vadd.f32 %v4505, 1e-05
      %v4762 = vadd.f32 %v4506, 1e-05
      %v4763 = vadd.f32 %v4507, 1e-05
      %v4764 = vadd.f32 %v4508, 1e-05
      %v4765 = vadd.f32 %v4509, 1e-05
      %v4766 = vadd.f32 %v4510, 1e-05
      %v4767 = vadd.f32 %v4511, 1e-05
      %v4768 = vadd.f32 %v4512, 1e-05
      %v4769 = vadd.f32 %v4513, 1e-05
      %v4770 = vadd.f32 %v4514, 1e-05
      %v4771 = vadd.f32 %v4515, 1e-05
      %v4772 = vadd.f32 %v4516, 1e-05
      %v4773 = vadd.f32 %v4517, 1e-05
      %v4774 = vadd.f32 %v4518, 1e-05
      %v4775 = vadd.f32 %v4519, 1e-05
      %v4776 = vadd.f32 %v4520, 1e-05
      %v4777 = vadd.f32 %v4521, 1e-05
      %v4778 = vadd.f32 %v4522, 1e-05
      %v4779 = vadd.f32 %v4523, 1e-05
      %v4780 = vadd.f32 %v4524, 1e-05
      %v4781 = vadd.f32 %v4525, 1e-05
      %v4782 = vadd.f32 %v4526, 1e-05
      %v4783 = vadd.f32 %v4527, 1e-05
      %v4784 = vadd.f32 %v4528, 1e-05
      %v4785 = vadd.f32 %v4529, 1e-05
      %v4786 = vadd.f32 %v4530, 1e-05
      %v4787 = vadd.f32 %v4531, 1e-05
      %v4788 = vadd.f32 %v4532, 1e-05
      %v4789 = vadd.f32 %v4533, 1e-05
      %v4790 = vadd.f32 %v4534, 1e-05
      %v4791 = vadd.f32 %v4535, 1e-05
      %v4792 = vadd.f32 %v4536, 1e-05
      %v4793 = vadd.f32 %v4537, 1e-05
      %v4794 = vadd.f32 %v4538, 1e-05
      %v4795 = vadd.f32 %v4539, 1e-05
      %v4796 = vadd.f32 %v4540, 1e-05
      %v4797 = vadd.f32 %v4541, 1e-05
      %v4798 = vadd.f32 %v4542, 1e-05
      %v4799 = vadd.f32 %v4543, 1e-05
      %v4800 = vadd.f32 %v4544, 1e-05
      %v4801 = vadd.f32 %v4545, 1e-05
      %v4802 = vadd.f32 %v4546, 1e-05
      %v4803 = vadd.f32 %v4547, 1e-05
      %v4804 = vadd.f32 %v4548, 1e-05
      %v4805 = vadd.f32 %v4549, 1e-05
      %v4806 = vadd.f32 %v4550, 1e-05
      %v4807 = vadd.f32 %v4551, 1e-05
      %v4808 = vadd.f32 %v4552, 1e-05
      %v4809 = vadd.f32 %v4553, 1e-05
      %v4810 = vadd.f32 %v4554, 1e-05
      %v4811 = vadd.f32 %v4555, 1e-05
      %v4812 = vadd.f32 %v4556, 1e-05
      %v4813 = vadd.f32 %v4557, 1e-05
      %v4814 = vadd.f32 %v4558, 1e-05
      %v4815 = vadd.f32 %v4559, 1e-05
      %v4816 = vadd.f32 %v4560, 1e-05
      %v4817 = vadd.f32 %v4561, 1e-05
      %v4818 = vadd.f32 %v4562, 1e-05
      %v4819 = vadd.f32 %v4563, 1e-05
      %v4820 = vadd.f32 %v4564, 1e-05
      %v4821 = vadd.f32 %v4565, 1e-05
      %v4822 = vadd.f32 %v4566, 1e-05
      %v4823 = vadd.f32 %v4567, 1e-05
      %v4824 = vadd.f32 %v4568, 1e-05
      %v4825 = vadd.f32 %v4569, 1e-05
      %v4826 = vadd.f32 %v4570, 1e-05
      %v4827 = vadd.f32 %v4571, 1e-05
      %v4828 = vadd.f32 %v4572, 1e-05
      %v4829 = vadd.f32 %v4573, 1e-05
      %v4830 = vadd.f32 %v4574, 1e-05
      %v4831 = vadd.f32 %v4575, 1e-05
      %v4832 = vadd.f32 %v4576, 1e-05
      %v4833 = vadd.f32 %v4577, 1e-05
      %v4834 = vadd.f32 %v4578, 1e-05
      %v4835 = vadd.f32 %v4579, 1e-05
      %v4836 = vadd.f32 %v4580, 1e-05
      %v4837 = vadd.f32 %v4581, 1e-05
      %v4838 = vadd.f32 %v4582, 1e-05
      %v4839 = vadd.f32 %v4583, 1e-05
      %v4840 = vadd.f32 %v4584, 1e-05
      %v4841 = vadd.f32 %v4585, 1e-05
      %v4842 = vadd.f32 %v4586, 1e-05
      %v4843 = vadd.f32 %v4587, 1e-05
      %v4844 = vadd.f32 %v4588, 1e-05
      %v4845 = vadd.f32 %v4589, 1e-05
      %v4846 = vadd.f32 %v4590, 1e-05
      %v4847 = vadd.f32 %v4591, 1e-05
      %v4848 = vadd.f32 %v4592, 1e-05
      %v4849 = vadd.f32 %v4593, 1e-05
      %v4850 = vadd.f32 %v4594, 1e-05
      %v4851 = vadd.f32 %v4595, 1e-05
      %v4852 = vadd.f32 %v4596, 1e-05
      %v4853 = vadd.f32 %v4597, 1e-05
      %v4854 = vadd.f32 %v4598, 1e-05
      %v4855 = vadd.f32 %v4599, 1e-05
      %v4856 = vadd.f32 %v4600, 1e-05
      %v4857 = vadd.f32 %v4601, 1e-05
      %v4858 = vadd.f32 %v4602, 1e-05
      %v4859 = vadd.f32 %v4603, 1e-05
      %v4860 = vadd.f32 %v4604, 1e-05
      %v4861 = vadd.f32 %v4605, 1e-05
      %v4862 = vadd.f32 %v4606, 1e-05
      %v4863 = vadd.f32 %v4607, 1e-05
      %v4864 = vadd.f32 %v4608, 1e-05
      %v4865 = vadd.f32 %v4609, 1e-05
      %v4866 = vadd.f32 %v4610, 1e-05
      %v4867 = vadd.f32 %v4611, 1e-05
      %v4868 = vadd.f32 %v4612, 1e-05
      %v4869 = vadd.f32 %v4613, 1e-05
      %v4870 = vadd.f32 %v4614, 1e-05
      %v4871 = vadd.f32 %v4615, 1e-05
      %v4872 = vadd.f32 %v4616, 1e-05
      %v4873 = vadd.f32 %v4617, 1e-05
      %v4874 = vadd.f32 %v4618, 1e-05
      %v4875 = vadd.f32 %v4619, 1e-05
      %v4876 = vadd.f32 %v4620, 1e-05
      %v4877 = vadd.f32 %v4621, 1e-05
      %v4878 = vadd.f32 %v4622, 1e-05
      %v4879 = vadd.f32 %v4623, 1e-05
      %v4880 = vadd.f32 %v4624, 1e-05
      %v4881 = vadd.f32 %v4625, 1e-05
      %v4882 = vadd.f32 %v4626, 1e-05
      %v4883 = vadd.f32 %v4627, 1e-05
      %v4884 = vadd.f32 %v4628, 1e-05
      %v4885 = vadd.f32 %v4629, 1e-05
      %v4886 = vadd.f32 %v4630, 1e-05
      %v4887 = vadd.f32 %v4631, 1e-05
      %v4888 = vadd.f32 %v4632, 1e-05
      %v4889 = vadd.f32 %v4633, 1e-05
      %v4890 = vadd.f32 %v4634, 1e-05
      %v4891 = vadd.f32 %v4635, 1e-05
      %v4892 = vadd.f32 %v4636, 1e-05
      %v4893 = vadd.f32 %v4637, 1e-05
      %v4894 = vadd.f32 %v4638, 1e-05
      %v4895 = vadd.f32 %v4639, 1e-05
      %v4896 = vadd.f32 %v4640, 1e-05
      %v4897 = vadd.f32 %v4641, 1e-05
      %v4898 = vadd.f32 %v4642, 1e-05
      %v4899 = vadd.f32 %v4643, 1e-05
      %v4900 = vadd.f32 %v4644, 1e-05
      %v4901 = vadd.f32 %v4645, 1e-05
      %v4902 = vadd.f32 %v4646, 1e-05
      %v4903 = vadd.f32 %v4647, 1e-05
      %v4904 = vadd.f32 %v4648, 1e-05
      %v4905 = vadd.f32 %v4649, 1e-05
      %v4906 = vadd.f32 %v4650, 1e-05
      %v4907 = vadd.f32 %v4651, 1e-05
      %v4908 = vadd.f32 %v4652, 1e-05
      %v4909 = vadd.f32 %v4653, 1e-05
      %v4910 = vadd.f32 %v4654, 1e-05
      %v4911 = vadd.f32 %v4655, 1e-05
      %v4912 = vadd.f32 %v4656, 1e-05
      %v4913 = vadd.f32 %v4657, 1e-05
      %v4914 = vadd.f32 %v4658, 1e-05
      %v4915 = vadd.f32 %v4659, 1e-05
      %v4916 = vadd.f32 %v4660, 1e-05
      %v4917 = vadd.f32 %v4661, 1e-05
      %v4918 = vadd.f32 %v4662, 1e-05
      %v4919 = vadd.f32 %v4663, 1e-05
      %v4920 = vadd.f32 %v4664, 1e-05
      %v4921 = vadd.f32 %v4665, 1e-05
      %v4922 = vadd.f32 %v4666, 1e-05
      %v4923 = vadd.f32 %v4667, 1e-05
      %v4924 = vadd.f32 %v4668, 1e-05
      %v4925 = vadd.f32 %v4669, 1e-05
      %v4926 = vadd.f32 %v4670, 1e-05
      %v4927 = vadd.f32 %v4671, 1e-05
      %v4928 = vadd.f32 %v4672, 1e-05
      %v4929 = vadd.f32 %v4673, 1e-05
      %v4930 = vadd.f32 %v4674, 1e-05
      %v4931 = vadd.f32 %v4675, 1e-05
      %v4932 = vadd.f32 %v4676, 1e-05
      %v4933 = vadd.f32 %v4677, 1e-05
      %v4934 = vadd.f32 %v4678, 1e-05
      %v4935 = vadd.f32 %v4679, 1e-05
      %v4936 = vadd.f32 %v4680, 1e-05
      %v4937 = vadd.f32 %v4681, 1e-05
      %v4938 = vadd.f32 %v4682, 1e-05
      %v4939 = vadd.f32 %v4683, 1e-05
      %v4940 = vadd.f32 %v4684, 1e-05
      %v4941 = vadd.f32 %v4685, 1e-05
      %v4942 = vadd.f32 %v4686, 1e-05
      %v4943 = vadd.f32 %v4687, 1e-05
      %v4944 = vadd.f32 %v4688, 1e-05
      %v4945 = vadd.f32 %v4689, 1e-05
      %v4946 = vadd.f32 %v4690, 1e-05
      %v4947 = vadd.f32 %v4691, 1e-05
      %v4948 = vadd.f32 %v4692, 1e-05
      %v4949 = vadd.f32 %v4693, 1e-05
      %v4950 = vadd.f32 %v4694, 1e-05
      %v4951 = vadd.f32 %v4695, 1e-05
      %v4952 = vadd.f32 %v4696, 1e-05
      %v4953 = vadd.f32 %v4697, 1e-05
      %v4954 = vadd.f32 %v4698, 1e-05
      %v4955 = vadd.f32 %v4699, 1e-05
      %v4956 = vadd.f32 %v4700, 1e-05
      %v4957 = vadd.f32 %v4701, 1e-05
      %v4958 = vadd.f32 %v4702, 1e-05
      %v4959 = vadd.f32 %v4703, 1e-05
      %v4960 = vadd.f32 %v4704, 1e-05
      %v4961 = vadd.f32 %v4705, 1e-05
      %v4962 = vadd.f32 %v4706, 1e-05
      %v4963 = vadd.f32 %v4707, 1e-05
      %v4964 = vadd.f32 %v4708, 1e-05
      %v4965 = vadd.f32 %v4709, 1e-05
      %v4966 = vadd.f32 %v4710, 1e-05
      %v4967 = vadd.f32 %v4711, 1e-05
      %v4968 = vadd.f32 %v4712, 1e-05
      %v4969 = vadd.f32 %v4713, 1e-05
      %v4970 = vadd.f32 %v4714, 1e-05
      %v4971 = vadd.f32 %v4715, 1e-05
      %v4972 = vadd.f32 %v4716, 1e-05
      %v4973 = vadd.f32 %v4717, 1e-05
      %v4974 = vadd.f32 %v4718, 1e-05
      %v4975 = vadd.f32 %v4719, 1e-05
      %v4976 = vadd.f32 %v4720, 1e-05
      %v4977 = vadd.f32 %v4721, 1e-05
      %v4978 = vadd.f32 %v4722, 1e-05
      %v4979 = vadd.f32 %v4723, 1e-05
      %v4980 = vadd.f32 %v4724, 1e-05
      %v4981 = vadd.f32 %v4725, 1e-05
      %v4982 = vadd.f32 %v4726, 1e-05
      %v4983 = vadd.f32 %v4727, 1e-05
      %v4984 = vadd.f32 %v4728, 1e-05
      %v4985 = vadd.f32 %v4729, 1e-05
      %v4986 = vadd.f32 %v4730, 1e-05
      %v4987 = vadd.f32 %v4731, 1e-05
      %v4988 = vadd.f32 %v4732, 1e-05
      %v4989 = vadd.f32 %v4733, 1e-05
      %v4990 = vadd.f32 %v4734, 1e-05
      %v4991 = vadd.f32 %v4735, 1e-05
      %v4992 = vrsqrt.pop %v4736
      %v4993 = vmul.f32 %v4992, %v4736
      %v4994 = vmul.f32 %v4993, %v4992
      %v4995 = vmul.f32 0.5, %v4994
      %v4996 = vsub.f32 1.5, %v4995
      %v4997 = vmul.f32 %v4992, %v4996
      %vm4998 = vweird.f32 %v4736
      %vm4999 = vweird.f32 %v4992
      %vm5000 = vmor %vm4998, %vm4999
      %v5001 = vsel %vm5000, %v4992, %v4997
      %v5002 = vrsqrt.pop %v4737
      %v5003 = vmul.f32 %v5002, %v4737
      %v5004 = vmul.f32 %v5003, %v5002
      %v5005 = vmul.f32 0.5, %v5004
      %v5006 = vsub.f32 1.5, %v5005
      %v5007 = vmul.f32 %v5002, %v5006
      %vm5008 = vweird.f32 %v4737
      %vm5009 = vweird.f32 %v5002
      %vm5010 = vmor %vm5008, %vm5009
      %v5011 = vsel %vm5010, %v5002, %v5007
      %v5012 = vrsqrt.pop %v4738
      %v5013 = vmul.f32 %v5012, %v4738
      %v5014 = vmul.f32 %v5013, %v5012
      %v5015 = vmul.f32 0.5, %v5014
      %v5016 = vsub.f32 1.5, %v5015
      %v5017 = vmul.f32 %v5012, %v5016
      %vm5018 = vweird.f32 %v4738
      %vm5019 = vweird.f32 %v5012
      %vm5020 = vmor %vm5018, %vm5019
      %v5021 = vsel %vm5020, %v5012, %v5017
      %v5022 = vrsqrt.pop %v4739
      %v5023 = vmul.f32 %v5022, %v4739
      %v5024 = vmul.f32 %v5023, %v5022
      %v5025 = vmul.f32 0.5, %v5024
      %v5026 = vsub.f32 1.5, %v5025
      %v5027 = vmul.f32 %v5022, %v5026
      %vm5028 = vweird.f32 %v4739
      %vm5029 = vweird.f32 %v5022
      %vm5030 = vmor %vm5028, %vm5029
      %v5031 = vsel %vm5030, %v5022, %v5027
      %v5032 = vrsqrt.pop %v4740
      %v5033 = vmul.f32 %v5032, %v4740
      %v5034 = vmul.f32 %v5033, %v5032
      %v5035 = vmul.f32 0.5, %v5034
      %v5036 = vsub.f32 1.5, %v5035
      %v5037 = vmul.f32 %v5032, %v5036
      %vm5038 = vweird.f32 %v4740
      %vm5039 = vweird.f32 %v5032
      %vm5040 = vmor %vm5038, %vm5039
      %v5041 = vsel %vm5040, %v5032, %v5037
      %v5042 = vrsqrt.pop %v4741
      %v5043 = vmul.f32 %v5042, %v4741
      %v5044 = vmul.f32 %v5043, %v5042
      %v5045 = vmul.f32 0.5, %v5044
      %v5046 = vsub.f32 1.5, %v5045
      %v5047 = vmul.f32 %v5042, %v5046
      %vm5048 = vweird.f32 %v4741
      %vm5049 = vweird.f32 %v5042
      %vm5050 = vmor %vm5048, %vm5049
      %v5051 = vsel %vm5050, %v5042, %v5047
      %v5052 = vrsqrt.pop %v4742
      %v5053 = vmul.f32 %v5052, %v4742
      %v5054 = vmul.f32 %v5053, %v5052
      %v5055 = vmul.f32 0.5, %v5054
      %v5056 = vsub.f32 1.5, %v5055
      %v5057 = vmul.f32 %v5052, %v5056
      %vm5058 = vweird.f32 %v4742
      %vm5059 = vweird.f32 %v5052
      %vm5060 = vmor %vm5058, %vm5059
      %v5061 = vsel %vm5060, %v5052, %v5057
      %v5062 = vrsqrt.pop %v4743
      %v5063 = vmul.f32 %v5062, %v4743
      %v5064 = vmul.f32 %v5063, %v5062
      %v5065 = vmul.f32 0.5, %v5064
      %v5066 = vsub.f32 1.5, %v5065
      %v5067 = vmul.f32 %v5062, %v5066
      %vm5068 = vweird.f32 %v4743
      %vm5069 = vweird.f32 %v5062
      %vm5070 = vmor %vm5068, %vm5069
      %v5071 = vsel %vm5070, %v5062, %v5067
      %v5072 = vrsqrt.pop %v4744
      %v5073 = vmul.f32 %v5072, %v4744
      %v5074 = vmul.f32 %v5073, %v5072
      %v5075 = vmul.f32 0.5, %v5074
      %v5076 = vsub.f32 1.5, %v5075
      %v5077 = vmul.f32 %v5072, %v5076
      %vm5078 = vweird.f32 %v4744
      %vm5079 = vweird.f32 %v5072
      %vm5080 = vmor %vm5078, %vm5079
      %v5081 = vsel %vm5080, %v5072, %v5077
      %v5082 = vrsqrt.pop %v4745
      %v5083 = vmul.f32 %v5082, %v4745
      %v5084 = vmul.f32 %v5083, %v5082
      %v5085 = vmul.f32 0.5, %v5084
      %v5086 = vsub.f32 1.5, %v5085
      %v5087 = vmul.f32 %v5082, %v5086
      %vm5088 = vweird.f32 %v4745
      %vm5089 = vweird.f32 %v5082
      %vm5090 = vmor %vm5088, %vm5089
      %v5091 = vsel %vm5090, %v5082, %v5087
      %v5092 = vrsqrt.pop %v4746
      %v5093 = vmul.f32 %v5092, %v4746
      %v5094 = vmul.f32 %v5093, %v5092
      %v5095 = vmul.f32 0.5, %v5094
      %v5096 = vsub.f32 1.5, %v5095
      %v5097 = vmul.f32 %v5092, %v5096
      %vm5098 = vweird.f32 %v4746
      %vm5099 = vweird.f32 %v5092
      %vm5100 = vmor %vm5098, %vm5099
      %v5101 = vsel %vm5100, %v5092, %v5097
      %v5102 = vrsqrt.pop %v4747
      %v5103 = vmul.f32 %v5102, %v4747
      %v5104 = vmul.f32 %v5103, %v5102
      %v5105 = vmul.f32 0.5, %v5104
      %v5106 = vsub.f32 1.5, %v5105
      %v5107 = vmul.f32 %v5102, %v5106
      %vm5108 = vweird.f32 %v4747
      %vm5109 = vweird.f32 %v5102
      %vm5110 = vmor %vm5108, %vm5109
      %v5111 = vsel %vm5110, %v5102, %v5107
      %v5112 = vrsqrt.pop %v4748
      %v5113 = vmul.f32 %v5112, %v4748
      %v5114 = vmul.f32 %v5113, %v5112
      %v5115 = vmul.f32 0.5, %v5114
      %v5116 = vsub.f32 1.5, %v5115
      %v5117 = vmul.f32 %v5112, %v5116
      %vm5118 = vweird.f32 %v4748
      %vm5119 = vweird.f32 %v5112
      %vm5120 = vmor %vm5118, %vm5119
      %v5121 = vsel %vm5120, %v5112, %v5117
      %v5122 = vrsqrt.pop %v4749
      %v5123 = vmul.f32 %v5122, %v4749
      %v5124 = vmul.f32 %v5123, %v5122
      %v5125 = vmul.f32 0.5, %v5124
      %v5126 = vsub.f32 1.5, %v5125
      %v5127 = vmul.f32 %v5122, %v5126
      %vm5128 = vweird.f32 %v4749
      %vm5129 = vweird.f32 %v5122
      %vm5130 = vmor %vm5128, %vm5129
      %v5131 = vsel %vm5130, %v5122, %v5127
      %v5132 = vrsqrt.pop %v4750
      %v5133 = vmul.f32 %v5132, %v4750
      %v5134 = vmul.f32 %v5133, %v5132
      %v5135 = vmul.f32 0.5, %v5134
      %v5136 = vsub.f32 1.5, %v5135
      %v5137 = vmul.f32 %v5132, %v5136
      %vm5138 = vweird.f32 %v4750
      %vm5139 = vweird.f32 %v5132
      %vm5140 = vmor %vm5138, %vm5139
      %v5141 = vsel %vm5140, %v5132, %v5137
      %v5142 = vrsqrt.pop %v4751
      %v5143 = vmul.f32 %v5142, %v4751
      %v5144 = vmul.f32 %v5143, %v5142
      %v5145 = vmul.f32 0.5, %v5144
      %v5146 = vsub.f32 1.5, %v5145
      %v5147 = vmul.f32 %v5142, %v5146
      %vm5148 = vweird.f32 %v4751
      %vm5149 = vweird.f32 %v5142
      %vm5150 = vmor %vm5148, %vm5149
      %v5151 = vsel %vm5150, %v5142, %v5147
      %v5152 = vrsqrt.pop %v4752
      %v5153 = vmul.f32 %v5152, %v4752
      %v5154 = vmul.f32 %v5153, %v5152
      %v5155 = vmul.f32 0.5, %v5154
      %v5156 = vsub.f32 1.5, %v5155
      %v5157 = vmul.f32 %v5152, %v5156
      %vm5158 = vweird.f32 %v4752
      %vm5159 = vweird.f32 %v5152
      %vm5160 = vmor %vm5158, %vm5159
      %v5161 = vsel %vm5160, %v5152, %v5157
      %v5162 = vrsqrt.pop %v4753
      %v5163 = vmul.f32 %v5162, %v4753
      %v5164 = vmul.f32 %v5163, %v5162
      %v5165 = vmul.f32 0.5, %v5164
      %v5166 = vsub.f32 1.5, %v5165
      %v5167 = vmul.f32 %v5162, %v5166
      %vm5168 = vweird.f32 %v4753
      %vm5169 = vweird.f32 %v5162
      %vm5170 = vmor %vm5168, %vm5169
      %v5171 = vsel %vm5170, %v5162, %v5167
      %v5172 = vrsqrt.pop %v4754
      %v5173 = vmul.f32 %v5172, %v4754
      %v5174 = vmul.f32 %v5173, %v5172
      %v5175 = vmul.f32 0.5, %v5174
      %v5176 = vsub.f32 1.5, %v5175
      %v5177 = vmul.f32 %v5172, %v5176
      %vm5178 = vweird.f32 %v4754
      %vm5179 = vweird.f32 %v5172
      %vm5180 = vmor %vm5178, %vm5179
      %v5181 = vsel %vm5180, %v5172, %v5177
      %v5182 = vrsqrt.pop %v4755
      %v5183 = vmul.f32 %v5182, %v4755
      %v5184 = vmul.f32 %v5183, %v5182
      %v5185 = vmul.f32 0.5, %v5184
      %v5186 = vsub.f32 1.5, %v5185
      %v5187 = vmul.f32 %v5182, %v5186
      %vm5188 = vweird.f32 %v4755
      %vm5189 = vweird.f32 %v5182
      %vm5190 = vmor %vm5188, %vm5189
      %v5191 = vsel %vm5190, %v5182, %v5187
      %v5192 = vrsqrt.pop %v4756
      %v5193 = vmul.f32 %v5192, %v4756
      %v5194 = vmul.f32 %v5193, %v5192
      %v5195 = vmul.f32 0.5, %v5194
      %v5196 = vsub.f32 1.5, %v5195
      %v5197 = vmul.f32 %v5192, %v5196
      %vm5198 = vweird.f32 %v4756
      %vm5199 = vweird.f32 %v5192
      %vm5200 = vmor %vm5198, %vm5199
      %v5201 = vsel %vm5200, %v5192, %v5197
      %v5202 = vrsqrt.pop %v4757
      %v5203 = vmul.f32 %v5202, %v4757
      %v5204 = vmul.f32 %v5203, %v5202
      %v5205 = vmul.f32 0.5, %v5204
      %v5206 = vsub.f32 1.5, %v5205
      %v5207 = vmul.f32 %v5202, %v5206
      %vm5208 = vweird.f32 %v4757
      %vm5209 = vweird.f32 %v5202
      %vm5210 = vmor %vm5208, %vm5209
      %v5211 = vsel %vm5210, %v5202, %v5207
      %v5212 = vrsqrt.pop %v4758
      %v5213 = vmul.f32 %v5212, %v4758
      %v5214 = vmul.f32 %v5213, %v5212
      %v5215 = vmul.f32 0.5, %v5214
      %v5216 = vsub.f32 1.5, %v5215
      %v5217 = vmul.f32 %v5212, %v5216
      %vm5218 = vweird.f32 %v4758
      %vm5219 = vweird.f32 %v5212
      %vm5220 = vmor %vm5218, %vm5219
      %v5221 = vsel %vm5220, %v5212, %v5217
      %v5222 = vrsqrt.pop %v4759
      %v5223 = vmul.f32 %v5222, %v4759
      %v5224 = vmul.f32 %v5223, %v5222
      %v5225 = vmul.f32 0.5, %v5224
      %v5226 = vsub.f32 1.5, %v5225
      %v5227 = vmul.f32 %v5222, %v5226
      %vm5228 = vweird.f32 %v4759
      %vm5229 = vweird.f32 %v5222
      %vm5230 = vmor %vm5228, %vm5229
      %v5231 = vsel %vm5230, %v5222, %v5227
      %v5232 = vrsqrt.pop %v4760
      %v5233 = vmul.f32 %v5232, %v4760
      %v5234 = vmul.f32 %v5233, %v5232
      %v5235 = vmul.f32 0.5, %v5234
      %v5236 = vsub.f32 1.5, %v5235
      %v5237 = vmul.f32 %v5232, %v5236
      %vm5238 = vweird.f32 %v4760
      %vm5239 = vweird.f32 %v5232
      %vm5240 = vmor %vm5238, %vm5239
      %v5241 = vsel %vm5240, %v5232, %v5237
      %v5242 = vrsqrt.pop %v4761
      %v5243 = vmul.f32 %v5242, %v4761
      %v5244 = vmul.f32 %v5243, %v5242
      %v5245 = vmul.f32 0.5, %v5244
      %v5246 = vsub.f32 1.5, %v5245
      %v5247 = vmul.f32 %v5242, %v5246
      %vm5248 = vweird.f32 %v4761
      %vm5249 = vweird.f32 %v5242
      %vm5250 = vmor %vm5248, %vm5249
      %v5251 = vsel %vm5250, %v5242, %v5247
      %v5252 = vrsqrt.pop %v4762
      %v5253 = vmul.f32 %v5252, %v4762
      %v5254 = vmul.f32 %v5253, %v5252
      %v5255 = vmul.f32 0.5, %v5254
      %v5256 = vsub.f32 1.5, %v5255
      %v5257 = vmul.f32 %v5252, %v5256
      %vm5258 = vweird.f32 %v4762
      %vm5259 = vweird.f32 %v5252
      %vm5260 = vmor %vm5258, %vm5259
      %v5261 = vsel %vm5260, %v5252, %v5257
      %v5262 = vrsqrt.pop %v4763
      %v5263 = vmul.f32 %v5262, %v4763
      %v5264 = vmul.f32 %v5263, %v5262
      %v5265 = vmul.f32 0.5, %v5264
      %v5266 = vsub.f32 1.5, %v5265
      %v5267 = vmul.f32 %v5262, %v5266
      %vm5268 = vweird.f32 %v4763
      %vm5269 = vweird.f32 %v5262
      %vm5270 = vmor %vm5268, %vm5269
      %v5271 = vsel %vm5270, %v5262, %v5267
      %v5272 = vrsqrt.pop %v4764
      %v5273 = vmul.f32 %v5272, %v4764
      %v5274 = vmul.f32 %v5273, %v5272
      %v5275 = vmul.f32 0.5, %v5274
      %v5276 = vsub.f32 1.5, %v5275
      %v5277 = vmul.f32 %v5272, %v5276
      %vm5278 = vweird.f32 %v4764
      %vm5279 = vweird.f32 %v5272
      %vm5280 = vmor %vm5278, %vm5279
      %v5281 = vsel %vm5280, %v5272, %v5277
      %v5282 = vrsqrt.pop %v4765
      %v5283 = vmul.f32 %v5282, %v4765
      %v5284 = vmul.f32 %v5283, %v5282
      %v5285 = vmul.f32 0.5, %v5284
      %v5286 = vsub.f32 1.5, %v5285
      %v5287 = vmul.f32 %v5282, %v5286
      %vm5288 = vweird.f32 %v4765
      %vm5289 = vweird.f32 %v5282
      %vm5290 = vmor %vm5288, %vm5289
      %v5291 = vsel %vm5290, %v5282, %v5287
      %v5292 = vrsqrt.pop %v4766
      %v5293 = vmul.f32 %v5292, %v4766
      %v5294 = vmul.f32 %v5293, %v5292
      %v5295 = vmul.f32 0.5, %v5294
      %v5296 = vsub.f32 1.5, %v5295
      %v5297 = vmul.f32 %v5292, %v5296
      %vm5298 = vweird.f32 %v4766
      %vm5299 = vweird.f32 %v5292
      %vm5300 = vmor %vm5298, %vm5299
      %v5301 = vsel %vm5300, %v5292, %v5297
      %v5302 = vrsqrt.pop %v4767
      %v5303 = vmul.f32 %v5302, %v4767
      %v5304 = vmul.f32 %v5303, %v5302
      %v5305 = vmul.f32 0.5, %v5304
      %v5306 = vsub.f32 1.5, %v5305
      %v5307 = vmul.f32 %v5302, %v5306
      %vm5308 = vweird.f32 %v4767
      %vm5309 = vweird.f32 %v5302
      %vm5310 = vmor %vm5308, %vm5309
      %v5311 = vsel %vm5310, %v5302, %v5307
      %v5312 = vrsqrt.pop %v4768
      %v5313 = vmul.f32 %v5312, %v4768
      %v5314 = vmul.f32 %v5313, %v5312
      %v5315 = vmul.f32 0.5, %v5314
      %v5316 = vsub.f32 1.5, %v5315
      %v5317 = vmul.f32 %v5312, %v5316
      %vm5318 = vweird.f32 %v4768
      %vm5319 = vweird.f32 %v5312
      %vm5320 = vmor %vm5318, %vm5319
      %v5321 = vsel %vm5320, %v5312, %v5317
      %v5322 = vrsqrt.pop %v4769
      %v5323 = vmul.f32 %v5322, %v4769
      %v5324 = vmul.f32 %v5323, %v5322
      %v5325 = vmul.f32 0.5, %v5324
      %v5326 = vsub.f32 1.5, %v5325
      %v5327 = vmul.f32 %v5322, %v5326
      %vm5328 = vweird.f32 %v4769
      %vm5329 = vweird.f32 %v5322
      %vm5330 = vmor %vm5328, %vm5329
      %v5331 = vsel %vm5330, %v5322, %v5327
      %v5332 = vrsqrt.pop %v4770
      %v5333 = vmul.f32 %v5332, %v4770
      %v5334 = vmul.f32 %v5333, %v5332
      %v5335 = vmul.f32 0.5, %v5334
      %v5336 = vsub.f32 1.5, %v5335
      %v5337 = vmul.f32 %v5332, %v5336
      %vm5338 = vweird.f32 %v4770
      %vm5339 = vweird.f32 %v5332
      %vm5340 = vmor %vm5338, %vm5339
      %v5341 = vsel %vm5340, %v5332, %v5337
      %v5342 = vrsqrt.pop %v4771
      %v5343 = vmul.f32 %v5342, %v4771
      %v5344 = vmul.f32 %v5343, %v5342
      %v5345 = vmul.f32 0.5, %v5344
      %v5346 = vsub.f32 1.5, %v5345
      %v5347 = vmul.f32 %v5342, %v5346
      %vm5348 = vweird.f32 %v4771
      %vm5349 = vweird.f32 %v5342
      %vm5350 = vmor %vm5348, %vm5349
      %v5351 = vsel %vm5350, %v5342, %v5347
      %v5352 = vrsqrt.pop %v4772
      %v5353 = vmul.f32 %v5352, %v4772
      %v5354 = vmul.f32 %v5353, %v5352
      %v5355 = vmul.f32 0.5, %v5354
      %v5356 = vsub.f32 1.5, %v5355
      %v5357 = vmul.f32 %v5352, %v5356
      %vm5358 = vweird.f32 %v4772
      %vm5359 = vweird.f32 %v5352
      %vm5360 = vmor %vm5358, %vm5359
      %v5361 = vsel %vm5360, %v5352, %v5357
      %v5362 = vrsqrt.pop %v4773
      %v5363 = vmul.f32 %v5362, %v4773
      %v5364 = vmul.f32 %v5363, %v5362
      %v5365 = vmul.f32 0.5, %v5364
      %v5366 = vsub.f32 1.5, %v5365
      %v5367 = vmul.f32 %v5362, %v5366
      %vm5368 = vweird.f32 %v4773
      %vm5369 = vweird.f32 %v5362
      %vm5370 = vmor %vm5368, %vm5369
      %v5371 = vsel %vm5370, %v5362, %v5367
      %v5372 = vrsqrt.pop %v4774
      %v5373 = vmul.f32 %v5372, %v4774
      %v5374 = vmul.f32 %v5373, %v5372
      %v5375 = vmul.f32 0.5, %v5374
      %v5376 = vsub.f32 1.5, %v5375
      %v5377 = vmul.f32 %v5372, %v5376
      %vm5378 = vweird.f32 %v4774
      %vm5379 = vweird.f32 %v5372
      %vm5380 = vmor %vm5378, %vm5379
      %v5381 = vsel %vm5380, %v5372, %v5377
      %v5382 = vrsqrt.pop %v4775
      %v5383 = vmul.f32 %v5382, %v4775
      %v5384 = vmul.f32 %v5383, %v5382
      %v5385 = vmul.f32 0.5, %v5384
      %v5386 = vsub.f32 1.5, %v5385
      %v5387 = vmul.f32 %v5382, %v5386
      %vm5388 = vweird.f32 %v4775
      %vm5389 = vweird.f32 %v5382
      %vm5390 = vmor %vm5388, %vm5389
      %v5391 = vsel %vm5390, %v5382, %v5387
      %v5392 = vrsqrt.pop %v4776
      %v5393 = vmul.f32 %v5392, %v4776
      %v5394 = vmul.f32 %v5393, %v5392
      %v5395 = vmul.f32 0.5, %v5394
      %v5396 = vsub.f32 1.5, %v5395
      %v5397 = vmul.f32 %v5392, %v5396
      %vm5398 = vweird.f32 %v4776
      %vm5399 = vweird.f32 %v5392
      %vm5400 = vmor %vm5398, %vm5399
      %v5401 = vsel %vm5400, %v5392, %v5397
      %v5402 = vrsqrt.pop %v4777
      %v5403 = vmul.f32 %v5402, %v4777
      %v5404 = vmul.f32 %v5403, %v5402
      %v5405 = vmul.f32 0.5, %v5404
      %v5406 = vsub.f32 1.5, %v5405
      %v5407 = vmul.f32 %v5402, %v5406
      %vm5408 = vweird.f32 %v4777
      %vm5409 = vweird.f32 %v5402
      %vm5410 = vmor %vm5408, %vm5409
      %v5411 = vsel %vm5410, %v5402, %v5407
      %v5412 = vrsqrt.pop %v4778
      %v5413 = vmul.f32 %v5412, %v4778
      %v5414 = vmul.f32 %v5413, %v5412
      %v5415 = vmul.f32 0.5, %v5414
      %v5416 = vsub.f32 1.5, %v5415
      %v5417 = vmul.f32 %v5412, %v5416
      %vm5418 = vweird.f32 %v4778
      %vm5419 = vweird.f32 %v5412
      %vm5420 = vmor %vm5418, %vm5419
      %v5421 = vsel %vm5420, %v5412, %v5417
      %v5422 = vrsqrt.pop %v4779
      %v5423 = vmul.f32 %v5422, %v4779
      %v5424 = vmul.f32 %v5423, %v5422
      %v5425 = vmul.f32 0.5, %v5424
      %v5426 = vsub.f32 1.5, %v5425
      %v5427 = vmul.f32 %v5422, %v5426
      %vm5428 = vweird.f32 %v4779
      %vm5429 = vweird.f32 %v5422
      %vm5430 = vmor %vm5428, %vm5429
      %v5431 = vsel %vm5430, %v5422, %v5427
      %v5432 = vrsqrt.pop %v4780
      %v5433 = vmul.f32 %v5432, %v4780
      %v5434 = vmul.f32 %v5433, %v5432
      %v5435 = vmul.f32 0.5, %v5434
      %v5436 = vsub.f32 1.5, %v5435
      %v5437 = vmul.f32 %v5432, %v5436
      %vm5438 = vweird.f32 %v4780
      %vm5439 = vweird.f32 %v5432
      %vm5440 = vmor %vm5438, %vm5439
      %v5441 = vsel %vm5440, %v5432, %v5437
      %v5442 = vrsqrt.pop %v4781
      %v5443 = vmul.f32 %v5442, %v4781
      %v5444 = vmul.f32 %v5443, %v5442
      %v5445 = vmul.f32 0.5, %v5444
      %v5446 = vsub.f32 1.5, %v5445
      %v5447 = vmul.f32 %v5442, %v5446
      %vm5448 = vweird.f32 %v4781
      %vm5449 = vweird.f32 %v5442
      %vm5450 = vmor %vm5448, %vm5449
      %v5451 = vsel %vm5450, %v5442, %v5447
      %v5452 = vrsqrt.pop %v4782
      %v5453 = vmul.f32 %v5452, %v4782
      %v5454 = vmul.f32 %v5453, %v5452
      %v5455 = vmul.f32 0.5, %v5454
      %v5456 = vsub.f32 1.5, %v5455
      %v5457 = vmul.f32 %v5452, %v5456
      %vm5458 = vweird.f32 %v4782
      %vm5459 = vweird.f32 %v5452
      %vm5460 = vmor %vm5458, %vm5459
      %v5461 = vsel %vm5460, %v5452, %v5457
      %v5462 = vrsqrt.pop %v4783
      %v5463 = vmul.f32 %v5462, %v4783
      %v5464 = vmul.f32 %v5463, %v5462
      %v5465 = vmul.f32 0.5, %v5464
      %v5466 = vsub.f32 1.5, %v5465
      %v5467 = vmul.f32 %v5462, %v5466
      %vm5468 = vweird.f32 %v4783
      %vm5469 = vweird.f32 %v5462
      %vm5470 = vmor %vm5468, %vm5469
      %v5471 = vsel %vm5470, %v5462, %v5467
      %v5472 = vrsqrt.pop %v4784
      %v5473 = vmul.f32 %v5472, %v4784
      %v5474 = vmul.f32 %v5473, %v5472
      %v5475 = vmul.f32 0.5, %v5474
      %v5476 = vsub.f32 1.5, %v5475
      %v5477 = vmul.f32 %v5472, %v5476
      %vm5478 = vweird.f32 %v4784
      %vm5479 = vweird.f32 %v5472
      %vm5480 = vmor %vm5478, %vm5479
      %v5481 = vsel %vm5480, %v5472, %v5477
      %v5482 = vrsqrt.pop %v4785
      %v5483 = vmul.f32 %v5482, %v4785
      %v5484 = vmul.f32 %v5483, %v5482
      %v5485 = vmul.f32 0.5, %v5484
      %v5486 = vsub.f32 1.5, %v5485
      %v5487 = vmul.f32 %v5482, %v5486
      %vm5488 = vweird.f32 %v4785
      %vm5489 = vweird.f32 %v5482
      %vm5490 = vmor %vm5488, %vm5489
      %v5491 = vsel %vm5490, %v5482, %v5487
      %v5492 = vrsqrt.pop %v4786
      %v5493 = vmul.f32 %v5492, %v4786
      %v5494 = vmul.f32 %v5493, %v5492
      %v5495 = vmul.f32 0.5, %v5494
      %v5496 = vsub.f32 1.5, %v5495
      %v5497 = vmul.f32 %v5492, %v5496
      %vm5498 = vweird.f32 %v4786
      %vm5499 = vweird.f32 %v5492
      %vm5500 = vmor %vm5498, %vm5499
      %v5501 = vsel %vm5500, %v5492, %v5497
      %v5502 = vrsqrt.pop %v4787
      %v5503 = vmul.f32 %v5502, %v4787
      %v5504 = vmul.f32 %v5503, %v5502
      %v5505 = vmul.f32 0.5, %v5504
      %v5506 = vsub.f32 1.5, %v5505
      %v5507 = vmul.f32 %v5502, %v5506
      %vm5508 = vweird.f32 %v4787
      %vm5509 = vweird.f32 %v5502
      %vm5510 = vmor %vm5508, %vm5509
      %v5511 = vsel %vm5510, %v5502, %v5507
      %v5512 = vrsqrt.pop %v4788
      %v5513 = vmul.f32 %v5512, %v4788
      %v5514 = vmul.f32 %v5513, %v5512
      %v5515 = vmul.f32 0.5, %v5514
      %v5516 = vsub.f32 1.5, %v5515
      %v5517 = vmul.f32 %v5512, %v5516
      %vm5518 = vweird.f32 %v4788
      %vm5519 = vweird.f32 %v5512
      %vm5520 = vmor %vm5518, %vm5519
      %v5521 = vsel %vm5520, %v5512, %v5517
      %v5522 = vrsqrt.pop %v4789
      %v5523 = vmul.f32 %v5522, %v4789
      %v5524 = vmul.f32 %v5523, %v5522
      %v5525 = vmul.f32 0.5, %v5524
      %v5526 = vsub.f32 1.5, %v5525
      %v5527 = vmul.f32 %v5522, %v5526
      %vm5528 = vweird.f32 %v4789
      %vm5529 = vweird.f32 %v5522
      %vm5530 = vmor %vm5528, %vm5529
      %v5531 = vsel %vm5530, %v5522, %v5527
      %v5532 = vrsqrt.pop %v4790
      %v5533 = vmul.f32 %v5532, %v4790
      %v5534 = vmul.f32 %v5533, %v5532
      %v5535 = vmul.f32 0.5, %v5534
      %v5536 = vsub.f32 1.5, %v5535
      %v5537 = vmul.f32 %v5532, %v5536
      %vm5538 = vweird.f32 %v4790
      %vm5539 = vweird.f32 %v5532
      %vm5540 = vmor %vm5538, %vm5539
      %v5541 = vsel %vm5540, %v5532, %v5537
      %v5542 = vrsqrt.pop %v4791
      %v5543 = vmul.f32 %v5542, %v4791
      %v5544 = vmul.f32 %v5543, %v5542
      %v5545 = vmul.f32 0.5, %v5544
      %v5546 = vsub.f32 1.5, %v5545
      %v5547 = vmul.f32 %v5542, %v5546
      %vm5548 = vweird.f32 %v4791
      %vm5549 = vweird.f32 %v5542
      %vm5550 = vmor %vm5548, %vm5549
      %v5551 = vsel %vm5550, %v5542, %v5547
      %v5552 = vrsqrt.pop %v4792
      %v5553 = vmul.f32 %v5552, %v4792
      %v5554 = vmul.f32 %v5553, %v5552
      %v5555 = vmul.f32 0.5, %v5554
      %v5556 = vsub.f32 1.5, %v5555
      %v5557 = vmul.f32 %v5552, %v5556
      %vm5558 = vweird.f32 %v4792
      %vm5559 = vweird.f32 %v5552
      %vm5560 = vmor %vm5558, %vm5559
      %v5561 = vsel %vm5560, %v5552, %v5557
      %v5562 = vrsqrt.pop %v4793
      %v5563 = vmul.f32 %v5562, %v4793
      %v5564 = vmul.f32 %v5563, %v5562
      %v5565 = vmul.f32 0.5, %v5564
      %v5566 = vsub.f32 1.5, %v5565
      %v5567 = vmul.f32 %v5562, %v5566
      %vm5568 = vweird.f32 %v4793
      %vm5569 = vweird.f32 %v5562
      %vm5570 = vmor %vm5568, %vm5569
      %v5571 = vsel %vm5570, %v5562, %v5567
      %v5572 = vrsqrt.pop %v4794
      %v5573 = vmul.f32 %v5572, %v4794
      %v5574 = vmul.f32 %v5573, %v5572
      %v5575 = vmul.f32 0.5, %v5574
      %v5576 = vsub.f32 1.5, %v5575
      %v5577 = vmul.f32 %v5572, %v5576
      %vm5578 = vweird.f32 %v4794
      %vm5579 = vweird.f32 %v5572
      %vm5580 = vmor %vm5578, %vm5579
      %v5581 = vsel %vm5580, %v5572, %v5577
      %v5582 = vrsqrt.pop %v4795
      %v5583 = vmul.f32 %v5582, %v4795
      %v5584 = vmul.f32 %v5583, %v5582
      %v5585 = vmul.f32 0.5, %v5584
      %v5586 = vsub.f32 1.5, %v5585
      %v5587 = vmul.f32 %v5582, %v5586
      %vm5588 = vweird.f32 %v4795
      %vm5589 = vweird.f32 %v5582
      %vm5590 = vmor %vm5588, %vm5589
      %v5591 = vsel %vm5590, %v5582, %v5587
      %v5592 = vrsqrt.pop %v4796
      %v5593 = vmul.f32 %v5592, %v4796
      %v5594 = vmul.f32 %v5593, %v5592
      %v5595 = vmul.f32 0.5, %v5594
      %v5596 = vsub.f32 1.5, %v5595
      %v5597 = vmul.f32 %v5592, %v5596
      %vm5598 = vweird.f32 %v4796
      %vm5599 = vweird.f32 %v5592
      %vm5600 = vmor %vm5598, %vm5599
      %v5601 = vsel %vm5600, %v5592, %v5597
      %v5602 = vrsqrt.pop %v4797
      %v5603 = vmul.f32 %v5602, %v4797
      %v5604 = vmul.f32 %v5603, %v5602
      %v5605 = vmul.f32 0.5, %v5604
      %v5606 = vsub.f32 1.5, %v5605
      %v5607 = vmul.f32 %v5602, %v5606
      %vm5608 = vweird.f32 %v4797
      %vm5609 = vweird.f32 %v5602
      %vm5610 = vmor %vm5608, %vm5609
      %v5611 = vsel %vm5610, %v5602, %v5607
      %v5612 = vrsqrt.pop %v4798
      %v5613 = vmul.f32 %v5612, %v4798
      %v5614 = vmul.f32 %v5613, %v5612
      %v5615 = vmul.f32 0.5, %v5614
      %v5616 = vsub.f32 1.5, %v5615
      %v5617 = vmul.f32 %v5612, %v5616
      %vm5618 = vweird.f32 %v4798
      %vm5619 = vweird.f32 %v5612
      %vm5620 = vmor %vm5618, %vm5619
      %v5621 = vsel %vm5620, %v5612, %v5617
      %v5622 = vrsqrt.pop %v4799
      %v5623 = vmul.f32 %v5622, %v4799
      %v5624 = vmul.f32 %v5623, %v5622
      %v5625 = vmul.f32 0.5, %v5624
      %v5626 = vsub.f32 1.5, %v5625
      %v5627 = vmul.f32 %v5622, %v5626
      %vm5628 = vweird.f32 %v4799
      %vm5629 = vweird.f32 %v5622
      %vm5630 = vmor %vm5628, %vm5629
      %v5631 = vsel %vm5630, %v5622, %v5627
      %v5632 = vrsqrt.pop %v4800
      %v5633 = vmul.f32 %v5632, %v4800
      %v5634 = vmul.f32 %v5633, %v5632
      %v5635 = vmul.f32 0.5, %v5634
      %v5636 = vsub.f32 1.5, %v5635
      %v5637 = vmul.f32 %v5632, %v5636
      %vm5638 = vweird.f32 %v4800
      %vm5639 = vweird.f32 %v5632
      %vm5640 = vmor %vm5638, %vm5639
      %v5641 = vsel %vm5640, %v5632, %v5637
      %v5642 = vrsqrt.pop %v4801
      %v5643 = vmul.f32 %v5642, %v4801
      %v5644 = vmul.f32 %v5643, %v5642
      %v5645 = vmul.f32 0.5, %v5644
      %v5646 = vsub.f32 1.5, %v5645
      %v5647 = vmul.f32 %v5642, %v5646
      %vm5648 = vweird.f32 %v4801
      %vm5649 = vweird.f32 %v5642
      %vm5650 = vmor %vm5648, %vm5649
      %v5651 = vsel %vm5650, %v5642, %v5647
      %v5652 = vrsqrt.pop %v4802
      %v5653 = vmul.f32 %v5652, %v4802
      %v5654 = vmul.f32 %v5653, %v5652
      %v5655 = vmul.f32 0.5, %v5654
      %v5656 = vsub.f32 1.5, %v5655
      %v5657 = vmul.f32 %v5652, %v5656
      %vm5658 = vweird.f32 %v4802
      %vm5659 = vweird.f32 %v5652
      %vm5660 = vmor %vm5658, %vm5659
      %v5661 = vsel %vm5660, %v5652, %v5657
      %v5662 = vrsqrt.pop %v4803
      %v5663 = vmul.f32 %v5662, %v4803
      %v5664 = vmul.f32 %v5663, %v5662
      %v5665 = vmul.f32 0.5, %v5664
      %v5666 = vsub.f32 1.5, %v5665
      %v5667 = vmul.f32 %v5662, %v5666
      %vm5668 = vweird.f32 %v4803
      %vm5669 = vweird.f32 %v5662
      %vm5670 = vmor %vm5668, %vm5669
      %v5671 = vsel %vm5670, %v5662, %v5667
      %v5672 = vrsqrt.pop %v4804
      %v5673 = vmul.f32 %v5672, %v4804
      %v5674 = vmul.f32 %v5673, %v5672
      %v5675 = vmul.f32 0.5, %v5674
      %v5676 = vsub.f32 1.5, %v5675
      %v5677 = vmul.f32 %v5672, %v5676
      %vm5678 = vweird.f32 %v4804
      %vm5679 = vweird.f32 %v5672
      %vm5680 = vmor %vm5678, %vm5679
      %v5681 = vsel %vm5680, %v5672, %v5677
      %v5682 = vrsqrt.pop %v4805
      %v5683 = vmul.f32 %v5682, %v4805
      %v5684 = vmul.f32 %v5683, %v5682
      %v5685 = vmul.f32 0.5, %v5684
      %v5686 = vsub.f32 1.5, %v5685
      %v5687 = vmul.f32 %v5682, %v5686
      %vm5688 = vweird.f32 %v4805
      %vm5689 = vweird.f32 %v5682
      %vm5690 = vmor %vm5688, %vm5689
      %v5691 = vsel %vm5690, %v5682, %v5687
      %v5692 = vrsqrt.pop %v4806
      %v5693 = vmul.f32 %v5692, %v4806
      %v5694 = vmul.f32 %v5693, %v5692
      %v5695 = vmul.f32 0.5, %v5694
      %v5696 = vsub.f32 1.5, %v5695
      %v5697 = vmul.f32 %v5692, %v5696
      %vm5698 = vweird.f32 %v4806
      %vm5699 = vweird.f32 %v5692
      %vm5700 = vmor %vm5698, %vm5699
      %v5701 = vsel %vm5700, %v5692, %v5697
      %v5702 = vrsqrt.pop %v4807
      %v5703 = vmul.f32 %v5702, %v4807
      %v5704 = vmul.f32 %v5703, %v5702
      %v5705 = vmul.f32 0.5, %v5704
      %v5706 = vsub.f32 1.5, %v5705
      %v5707 = vmul.f32 %v5702, %v5706
      %vm5708 = vweird.f32 %v4807
      %vm5709 = vweird.f32 %v5702
      %vm5710 = vmor %vm5708, %vm5709
      %v5711 = vsel %vm5710, %v5702, %v5707
      %v5712 = vrsqrt.pop %v4808
      %v5713 = vmul.f32 %v5712, %v4808
      %v5714 = vmul.f32 %v5713, %v5712
      %v5715 = vmul.f32 0.5, %v5714
      %v5716 = vsub.f32 1.5, %v5715
      %v5717 = vmul.f32 %v5712, %v5716
      %vm5718 = vweird.f32 %v4808
      %vm5719 = vweird.f32 %v5712
      %vm5720 = vmor %vm5718, %vm5719
      %v5721 = vsel %vm5720, %v5712, %v5717
      %v5722 = vrsqrt.pop %v4809
      %v5723 = vmul.f32 %v5722, %v4809
      %v5724 = vmul.f32 %v5723, %v5722
      %v5725 = vmul.f32 0.5, %v5724
      %v5726 = vsub.f32 1.5, %v5725
      %v5727 = vmul.f32 %v5722, %v5726
      %vm5728 = vweird.f32 %v4809
      %vm5729 = vweird.f32 %v5722
      %vm5730 = vmor %vm5728, %vm5729
      %v5731 = vsel %vm5730, %v5722, %v5727
      %v5732 = vrsqrt.pop %v4810
      %v5733 = vmul.f32 %v5732, %v4810
      %v5734 = vmul.f32 %v5733, %v5732
      %v5735 = vmul.f32 0.5, %v5734
      %v5736 = vsub.f32 1.5, %v5735
      %v5737 = vmul.f32 %v5732, %v5736
      %vm5738 = vweird.f32 %v4810
      %vm5739 = vweird.f32 %v5732
      %vm5740 = vmor %vm5738, %vm5739
      %v5741 = vsel %vm5740, %v5732, %v5737
      %v5742 = vrsqrt.pop %v4811
      %v5743 = vmul.f32 %v5742, %v4811
      %v5744 = vmul.f32 %v5743, %v5742
      %v5745 = vmul.f32 0.5, %v5744
      %v5746 = vsub.f32 1.5, %v5745
      %v5747 = vmul.f32 %v5742, %v5746
      %vm5748 = vweird.f32 %v4811
      %vm5749 = vweird.f32 %v5742
      %vm5750 = vmor %vm5748, %vm5749
      %v5751 = vsel %vm5750, %v5742, %v5747
      %v5752 = vrsqrt.pop %v4812
      %v5753 = vmul.f32 %v5752, %v4812
      %v5754 = vmul.f32 %v5753, %v5752
      %v5755 = vmul.f32 0.5, %v5754
      %v5756 = vsub.f32 1.5, %v5755
      %v5757 = vmul.f32 %v5752, %v5756
      %vm5758 = vweird.f32 %v4812
      %vm5759 = vweird.f32 %v5752
      %vm5760 = vmor %vm5758, %vm5759
      %v5761 = vsel %vm5760, %v5752, %v5757
      %v5762 = vrsqrt.pop %v4813
      %v5763 = vmul.f32 %v5762, %v4813
      %v5764 = vmul.f32 %v5763, %v5762
      %v5765 = vmul.f32 0.5, %v5764
      %v5766 = vsub.f32 1.5, %v5765
      %v5767 = vmul.f32 %v5762, %v5766
      %vm5768 = vweird.f32 %v4813
      %vm5769 = vweird.f32 %v5762
      %vm5770 = vmor %vm5768, %vm5769
      %v5771 = vsel %vm5770, %v5762, %v5767
      %v5772 = vrsqrt.pop %v4814
      %v5773 = vmul.f32 %v5772, %v4814
      %v5774 = vmul.f32 %v5773, %v5772
      %v5775 = vmul.f32 0.5, %v5774
      %v5776 = vsub.f32 1.5, %v5775
      %v5777 = vmul.f32 %v5772, %v5776
      %vm5778 = vweird.f32 %v4814
      %vm5779 = vweird.f32 %v5772
      %vm5780 = vmor %vm5778, %vm5779
      %v5781 = vsel %vm5780, %v5772, %v5777
      %v5782 = vrsqrt.pop %v4815
      %v5783 = vmul.f32 %v5782, %v4815
      %v5784 = vmul.f32 %v5783, %v5782
      %v5785 = vmul.f32 0.5, %v5784
      %v5786 = vsub.f32 1.5, %v5785
      %v5787 = vmul.f32 %v5782, %v5786
      %vm5788 = vweird.f32 %v4815
      %vm5789 = vweird.f32 %v5782
      %vm5790 = vmor %vm5788, %vm5789
      %v5791 = vsel %vm5790, %v5782, %v5787
      %v5792 = vrsqrt.pop %v4816
      %v5793 = vmul.f32 %v5792, %v4816
      %v5794 = vmul.f32 %v5793, %v5792
      %v5795 = vmul.f32 0.5, %v5794
      %v5796 = vsub.f32 1.5, %v5795
      %v5797 = vmul.f32 %v5792, %v5796
      %vm5798 = vweird.f32 %v4816
      %vm5799 = vweird.f32 %v5792
      %vm5800 = vmor %vm5798, %vm5799
      %v5801 = vsel %vm5800, %v5792, %v5797
      %v5802 = vrsqrt.pop %v4817
      %v5803 = vmul.f32 %v5802, %v4817
      %v5804 = vmul.f32 %v5803, %v5802
      %v5805 = vmul.f32 0.5, %v5804
      %v5806 = vsub.f32 1.5, %v5805
      %v5807 = vmul.f32 %v5802, %v5806
      %vm5808 = vweird.f32 %v4817
      %vm5809 = vweird.f32 %v5802
      %vm5810 = vmor %vm5808, %vm5809
      %v5811 = vsel %vm5810, %v5802, %v5807
      %v5812 = vrsqrt.pop %v4818
      %v5813 = vmul.f32 %v5812, %v4818
      %v5814 = vmul.f32 %v5813, %v5812
      %v5815 = vmul.f32 0.5, %v5814
      %v5816 = vsub.f32 1.5, %v5815
      %v5817 = vmul.f32 %v5812, %v5816
      %vm5818 = vweird.f32 %v4818
      %vm5819 = vweird.f32 %v5812
      %vm5820 = vmor %vm5818, %vm5819
      %v5821 = vsel %vm5820, %v5812, %v5817
      %v5822 = vrsqrt.pop %v4819
      %v5823 = vmul.f32 %v5822, %v4819
      %v5824 = vmul.f32 %v5823, %v5822
      %v5825 = vmul.f32 0.5, %v5824
      %v5826 = vsub.f32 1.5, %v5825
      %v5827 = vmul.f32 %v5822, %v5826
      %vm5828 = vweird.f32 %v4819
      %vm5829 = vweird.f32 %v5822
      %vm5830 = vmor %vm5828, %vm5829
      %v5831 = vsel %vm5830, %v5822, %v5827
      %v5832 = vrsqrt.pop %v4820
      %v5833 = vmul.f32 %v5832, %v4820
      %v5834 = vmul.f32 %v5833, %v5832
      %v5835 = vmul.f32 0.5, %v5834
      %v5836 = vsub.f32 1.5, %v5835
      %v5837 = vmul.f32 %v5832, %v5836
      %vm5838 = vweird.f32 %v4820
      %vm5839 = vweird.f32 %v5832
      %vm5840 = vmor %vm5838, %vm5839
      %v5841 = vsel %vm5840, %v5832, %v5837
      %v5842 = vrsqrt.pop %v4821
      %v5843 = vmul.f32 %v5842, %v4821
      %v5844 = vmul.f32 %v5843, %v5842
      %v5845 = vmul.f32 0.5, %v5844
      %v5846 = vsub.f32 1.5, %v5845
      %v5847 = vmul.f32 %v5842, %v5846
      %vm5848 = vweird.f32 %v4821
      %vm5849 = vweird.f32 %v5842
      %vm5850 = vmor %vm5848, %vm5849
      %v5851 = vsel %vm5850, %v5842, %v5847
      %v5852 = vrsqrt.pop %v4822
      %v5853 = vmul.f32 %v5852, %v4822
      %v5854 = vmul.f32 %v5853, %v5852
      %v5855 = vmul.f32 0.5, %v5854
      %v5856 = vsub.f32 1.5, %v5855
      %v5857 = vmul.f32 %v5852, %v5856
      %vm5858 = vweird.f32 %v4822
      %vm5859 = vweird.f32 %v5852
      %vm5860 = vmor %vm5858, %vm5859
      %v5861 = vsel %vm5860, %v5852, %v5857
      %v5862 = vrsqrt.pop %v4823
      %v5863 = vmul.f32 %v5862, %v4823
      %v5864 = vmul.f32 %v5863, %v5862
      %v5865 = vmul.f32 0.5, %v5864
      %v5866 = vsub.f32 1.5, %v5865
      %v5867 = vmul.f32 %v5862, %v5866
      %vm5868 = vweird.f32 %v4823
      %vm5869 = vweird.f32 %v5862
      %vm5870 = vmor %vm5868, %vm5869
      %v5871 = vsel %vm5870, %v5862, %v5867
      %v5872 = vrsqrt.pop %v4824
      %v5873 = vmul.f32 %v5872, %v4824
      %v5874 = vmul.f32 %v5873, %v5872
      %v5875 = vmul.f32 0.5, %v5874
      %v5876 = vsub.f32 1.5, %v5875
      %v5877 = vmul.f32 %v5872, %v5876
      %vm5878 = vweird.f32 %v4824
      %vm5879 = vweird.f32 %v5872
      %vm5880 = vmor %vm5878, %vm5879
      %v5881 = vsel %vm5880, %v5872, %v5877
      %v5882 = vrsqrt.pop %v4825
      %v5883 = vmul.f32 %v5882, %v4825
      %v5884 = vmul.f32 %v5883, %v5882
      %v5885 = vmul.f32 0.5, %v5884
      %v5886 = vsub.f32 1.5, %v5885
      %v5887 = vmul.f32 %v5882, %v5886
      %vm5888 = vweird.f32 %v4825
      %vm5889 = vweird.f32 %v5882
      %vm5890 = vmor %vm5888, %vm5889
      %v5891 = vsel %vm5890, %v5882, %v5887
      %v5892 = vrsqrt.pop %v4826
      %v5893 = vmul.f32 %v5892, %v4826
      %v5894 = vmul.f32 %v5893, %v5892
      %v5895 = vmul.f32 0.5, %v5894
      %v5896 = vsub.f32 1.5, %v5895
      %v5897 = vmul.f32 %v5892, %v5896
      %vm5898 = vweird.f32 %v4826
      %vm5899 = vweird.f32 %v5892
      %vm5900 = vmor %vm5898, %vm5899
      %v5901 = vsel %vm5900, %v5892, %v5897
      %v5902 = vrsqrt.pop %v4827
      %v5903 = vmul.f32 %v5902, %v4827
      %v5904 = vmul.f32 %v5903, %v5902
      %v5905 = vmul.f32 0.5, %v5904
      %v5906 = vsub.f32 1.5, %v5905
      %v5907 = vmul.f32 %v5902, %v5906
      %vm5908 = vweird.f32 %v4827
      %vm5909 = vweird.f32 %v5902
      %vm5910 = vmor %vm5908, %vm5909
      %v5911 = vsel %vm5910, %v5902, %v5907
      %v5912 = vrsqrt.pop %v4828
      %v5913 = vmul.f32 %v5912, %v4828
      %v5914 = vmul.f32 %v5913, %v5912
      %v5915 = vmul.f32 0.5, %v5914
      %v5916 = vsub.f32 1.5, %v5915
      %v5917 = vmul.f32 %v5912, %v5916
      %vm5918 = vweird.f32 %v4828
      %vm5919 = vweird.f32 %v5912
      %vm5920 = vmor %vm5918, %vm5919
      %v5921 = vsel %vm5920, %v5912, %v5917
      %v5922 = vrsqrt.pop %v4829
      %v5923 = vmul.f32 %v5922, %v4829
      %v5924 = vmul.f32 %v5923, %v5922
      %v5925 = vmul.f32 0.5, %v5924
      %v5926 = vsub.f32 1.5, %v5925
      %v5927 = vmul.f32 %v5922, %v5926
      %vm5928 = vweird.f32 %v4829
      %vm5929 = vweird.f32 %v5922
      %vm5930 = vmor %vm5928, %vm5929
      %v5931 = vsel %vm5930, %v5922, %v5927
      %v5932 = vrsqrt.pop %v4830
      %v5933 = vmul.f32 %v5932, %v4830
      %v5934 = vmul.f32 %v5933, %v5932
      %v5935 = vmul.f32 0.5, %v5934
      %v5936 = vsub.f32 1.5, %v5935
      %v5937 = vmul.f32 %v5932, %v5936
      %vm5938 = vweird.f32 %v4830
      %vm5939 = vweird.f32 %v5932
      %vm5940 = vmor %vm5938, %vm5939
      %v5941 = vsel %vm5940, %v5932, %v5937
      %v5942 = vrsqrt.pop %v4831
      %v5943 = vmul.f32 %v5942, %v4831
      %v5944 = vmul.f32 %v5943, %v5942
      %v5945 = vmul.f32 0.5, %v5944
      %v5946 = vsub.f32 1.5, %v5945
      %v5947 = vmul.f32 %v5942, %v5946
      %vm5948 = vweird.f32 %v4831
      %vm5949 = vweird.f32 %v5942
      %vm5950 = vmor %vm5948, %vm5949
      %v5951 = vsel %vm5950, %v5942, %v5947
      %v5952 = vrsqrt.pop %v4832
      %v5953 = vmul.f32 %v5952, %v4832
      %v5954 = vmul.f32 %v5953, %v5952
      %v5955 = vmul.f32 0.5, %v5954
      %v5956 = vsub.f32 1.5, %v5955
      %v5957 = vmul.f32 %v5952, %v5956
      %vm5958 = vweird.f32 %v4832
      %vm5959 = vweird.f32 %v5952
      %vm5960 = vmor %vm5958, %vm5959
      %v5961 = vsel %vm5960, %v5952, %v5957
      %v5962 = vrsqrt.pop %v4833
      %v5963 = vmul.f32 %v5962, %v4833
      %v5964 = vmul.f32 %v5963, %v5962
      %v5965 = vmul.f32 0.5, %v5964
      %v5966 = vsub.f32 1.5, %v5965
      %v5967 = vmul.f32 %v5962, %v5966
      %vm5968 = vweird.f32 %v4833
      %vm5969 = vweird.f32 %v5962
      %vm5970 = vmor %vm5968, %vm5969
      %v5971 = vsel %vm5970, %v5962, %v5967
      %v5972 = vrsqrt.pop %v4834
      %v5973 = vmul.f32 %v5972, %v4834
      %v5974 = vmul.f32 %v5973, %v5972
      %v5975 = vmul.f32 0.5, %v5974
      %v5976 = vsub.f32 1.5, %v5975
      %v5977 = vmul.f32 %v5972, %v5976
      %vm5978 = vweird.f32 %v4834
      %vm5979 = vweird.f32 %v5972
      %vm5980 = vmor %vm5978, %vm5979
      %v5981 = vsel %vm5980, %v5972, %v5977
      %v5982 = vrsqrt.pop %v4835
      %v5983 = vmul.f32 %v5982, %v4835
      %v5984 = vmul.f32 %v5983, %v5982
      %v5985 = vmul.f32 0.5, %v5984
      %v5986 = vsub.f32 1.5, %v5985
      %v5987 = vmul.f32 %v5982, %v5986
      %vm5988 = vweird.f32 %v4835
      %vm5989 = vweird.f32 %v5982
      %vm5990 = vmor %vm5988, %vm5989
      %v5991 = vsel %vm5990, %v5982, %v5987
      %v5992 = vrsqrt.pop %v4836
      %v5993 = vmul.f32 %v5992, %v4836
      %v5994 = vmul.f32 %v5993, %v5992
      %v5995 = vmul.f32 0.5, %v5994
      %v5996 = vsub.f32 1.5, %v5995
      %v5997 = vmul.f32 %v5992, %v5996
      %vm5998 = vweird.f32 %v4836
      %vm5999 = vweird.f32 %v5992
      %vm6000 = vmor %vm5998, %vm5999
      %v6001 = vsel %vm6000, %v5992, %v5997
      %v6002 = vrsqrt.pop %v4837
      %v6003 = vmul.f32 %v6002, %v4837
      %v6004 = vmul.f32 %v6003, %v6002
      %v6005 = vmul.f32 0.5, %v6004
      %v6006 = vsub.f32 1.5, %v6005
      %v6007 = vmul.f32 %v6002, %v6006
      %vm6008 = vweird.f32 %v4837
      %vm6009 = vweird.f32 %v6002
      %vm6010 = vmor %vm6008, %vm6009
      %v6011 = vsel %vm6010, %v6002, %v6007
      %v6012 = vrsqrt.pop %v4838
      %v6013 = vmul.f32 %v6012, %v4838
      %v6014 = vmul.f32 %v6013, %v6012
      %v6015 = vmul.f32 0.5, %v6014
      %v6016 = vsub.f32 1.5, %v6015
      %v6017 = vmul.f32 %v6012, %v6016
      %vm6018 = vweird.f32 %v4838
      %vm6019 = vweird.f32 %v6012
      %vm6020 = vmor %vm6018, %vm6019
      %v6021 = vsel %vm6020, %v6012, %v6017
      %v6022 = vrsqrt.pop %v4839
      %v6023 = vmul.f32 %v6022, %v4839
      %v6024 = vmul.f32 %v6023, %v6022
      %v6025 = vmul.f32 0.5, %v6024
      %v6026 = vsub.f32 1.5, %v6025
      %v6027 = vmul.f32 %v6022, %v6026
      %vm6028 = vweird.f32 %v4839
      %vm6029 = vweird.f32 %v6022
      %vm6030 = vmor %vm6028, %vm6029
      %v6031 = vsel %vm6030, %v6022, %v6027
      %v6032 = vrsqrt.pop %v4840
      %v6033 = vmul.f32 %v6032, %v4840
      %v6034 = vmul.f32 %v6033, %v6032
      %v6035 = vmul.f32 0.5, %v6034
      %v6036 = vsub.f32 1.5, %v6035
      %v6037 = vmul.f32 %v6032, %v6036
      %vm6038 = vweird.f32 %v4840
      %vm6039 = vweird.f32 %v6032
      %vm6040 = vmor %vm6038, %vm6039
      %v6041 = vsel %vm6040, %v6032, %v6037
      %v6042 = vrsqrt.pop %v4841
      %v6043 = vmul.f32 %v6042, %v4841
      %v6044 = vmul.f32 %v6043, %v6042
      %v6045 = vmul.f32 0.5, %v6044
      %v6046 = vsub.f32 1.5, %v6045
      %v6047 = vmul.f32 %v6042, %v6046
      %vm6048 = vweird.f32 %v4841
      %vm6049 = vweird.f32 %v6042
      %vm6050 = vmor %vm6048, %vm6049
      %v6051 = vsel %vm6050, %v6042, %v6047
      %v6052 = vrsqrt.pop %v4842
      %v6053 = vmul.f32 %v6052, %v4842
      %v6054 = vmul.f32 %v6053, %v6052
      %v6055 = vmul.f32 0.5, %v6054
      %v6056 = vsub.f32 1.5, %v6055
      %v6057 = vmul.f32 %v6052, %v6056
      %vm6058 = vweird.f32 %v4842
      %vm6059 = vweird.f32 %v6052
      %vm6060 = vmor %vm6058, %vm6059
      %v6061 = vsel %vm6060, %v6052, %v6057
      %v6062 = vrsqrt.pop %v4843
      %v6063 = vmul.f32 %v6062, %v4843
      %v6064 = vmul.f32 %v6063, %v6062
      %v6065 = vmul.f32 0.5, %v6064
      %v6066 = vsub.f32 1.5, %v6065
      %v6067 = vmul.f32 %v6062, %v6066
      %vm6068 = vweird.f32 %v4843
      %vm6069 = vweird.f32 %v6062
      %vm6070 = vmor %vm6068, %vm6069
      %v6071 = vsel %vm6070, %v6062, %v6067
      %v6072 = vrsqrt.pop %v4844
      %v6073 = vmul.f32 %v6072, %v4844
      %v6074 = vmul.f32 %v6073, %v6072
      %v6075 = vmul.f32 0.5, %v6074
      %v6076 = vsub.f32 1.5, %v6075
      %v6077 = vmul.f32 %v6072, %v6076
      %vm6078 = vweird.f32 %v4844
      %vm6079 = vweird.f32 %v6072
      %vm6080 = vmor %vm6078, %vm6079
      %v6081 = vsel %vm6080, %v6072, %v6077
      %v6082 = vrsqrt.pop %v4845
      %v6083 = vmul.f32 %v6082, %v4845
      %v6084 = vmul.f32 %v6083, %v6082
      %v6085 = vmul.f32 0.5, %v6084
      %v6086 = vsub.f32 1.5, %v6085
      %v6087 = vmul.f32 %v6082, %v6086
      %vm6088 = vweird.f32 %v4845
      %vm6089 = vweird.f32 %v6082
      %vm6090 = vmor %vm6088, %vm6089
      %v6091 = vsel %vm6090, %v6082, %v6087
      %v6092 = vrsqrt.pop %v4846
      %v6093 = vmul.f32 %v6092, %v4846
      %v6094 = vmul.f32 %v6093, %v6092
      %v6095 = vmul.f32 0.5, %v6094
      %v6096 = vsub.f32 1.5, %v6095
      %v6097 = vmul.f32 %v6092, %v6096
      %vm6098 = vweird.f32 %v4846
      %vm6099 = vweird.f32 %v6092
      %vm6100 = vmor %vm6098, %vm6099
      %v6101 = vsel %vm6100, %v6092, %v6097
      %v6102 = vrsqrt.pop %v4847
      %v6103 = vmul.f32 %v6102, %v4847
      %v6104 = vmul.f32 %v6103, %v6102
      %v6105 = vmul.f32 0.5, %v6104
      %v6106 = vsub.f32 1.5, %v6105
      %v6107 = vmul.f32 %v6102, %v6106
      %vm6108 = vweird.f32 %v4847
      %vm6109 = vweird.f32 %v6102
      %vm6110 = vmor %vm6108, %vm6109
      %v6111 = vsel %vm6110, %v6102, %v6107
      %v6112 = vrsqrt.pop %v4848
      %v6113 = vmul.f32 %v6112, %v4848
      %v6114 = vmul.f32 %v6113, %v6112
      %v6115 = vmul.f32 0.5, %v6114
      %v6116 = vsub.f32 1.5, %v6115
      %v6117 = vmul.f32 %v6112, %v6116
      %vm6118 = vweird.f32 %v4848
      %vm6119 = vweird.f32 %v6112
      %vm6120 = vmor %vm6118, %vm6119
      %v6121 = vsel %vm6120, %v6112, %v6117
      %v6122 = vrsqrt.pop %v4849
      %v6123 = vmul.f32 %v6122, %v4849
      %v6124 = vmul.f32 %v6123, %v6122
      %v6125 = vmul.f32 0.5, %v6124
      %v6126 = vsub.f32 1.5, %v6125
      %v6127 = vmul.f32 %v6122, %v6126
      %vm6128 = vweird.f32 %v4849
      %vm6129 = vweird.f32 %v6122
      %vm6130 = vmor %vm6128, %vm6129
      %v6131 = vsel %vm6130, %v6122, %v6127
      %v6132 = vrsqrt.pop %v4850
      %v6133 = vmul.f32 %v6132, %v4850
      %v6134 = vmul.f32 %v6133, %v6132
      %v6135 = vmul.f32 0.5, %v6134
      %v6136 = vsub.f32 1.5, %v6135
      %v6137 = vmul.f32 %v6132, %v6136
      %vm6138 = vweird.f32 %v4850
      %vm6139 = vweird.f32 %v6132
      %vm6140 = vmor %vm6138, %vm6139
      %v6141 = vsel %vm6140, %v6132, %v6137
      %v6142 = vrsqrt.pop %v4851
      %v6143 = vmul.f32 %v6142, %v4851
      %v6144 = vmul.f32 %v6143, %v6142
      %v6145 = vmul.f32 0.5, %v6144
      %v6146 = vsub.f32 1.5, %v6145
      %v6147 = vmul.f32 %v6142, %v6146
      %vm6148 = vweird.f32 %v4851
      %vm6149 = vweird.f32 %v6142
      %vm6150 = vmor %vm6148, %vm6149
      %v6151 = vsel %vm6150, %v6142, %v6147
      %v6152 = vrsqrt.pop %v4852
      %v6153 = vmul.f32 %v6152, %v4852
      %v6154 = vmul.f32 %v6153, %v6152
      %v6155 = vmul.f32 0.5, %v6154
      %v6156 = vsub.f32 1.5, %v6155
      %v6157 = vmul.f32 %v6152, %v6156
      %vm6158 = vweird.f32 %v4852
      %vm6159 = vweird.f32 %v6152
      %vm6160 = vmor %vm6158, %vm6159
      %v6161 = vsel %vm6160, %v6152, %v6157
      %v6162 = vrsqrt.pop %v4853
      %v6163 = vmul.f32 %v6162, %v4853
      %v6164 = vmul.f32 %v6163, %v6162
      %v6165 = vmul.f32 0.5, %v6164
      %v6166 = vsub.f32 1.5, %v6165
      %v6167 = vmul.f32 %v6162, %v6166
      %vm6168 = vweird.f32 %v4853
      %vm6169 = vweird.f32 %v6162
      %vm6170 = vmor %vm6168, %vm6169
      %v6171 = vsel %vm6170, %v6162, %v6167
      %v6172 = vrsqrt.pop %v4854
      %v6173 = vmul.f32 %v6172, %v4854
      %v6174 = vmul.f32 %v6173, %v6172
      %v6175 = vmul.f32 0.5, %v6174
      %v6176 = vsub.f32 1.5, %v6175
      %v6177 = vmul.f32 %v6172, %v6176
      %vm6178 = vweird.f32 %v4854
      %vm6179 = vweird.f32 %v6172
      %vm6180 = vmor %vm6178, %vm6179
      %v6181 = vsel %vm6180, %v6172, %v6177
      %v6182 = vrsqrt.pop %v4855
      %v6183 = vmul.f32 %v6182, %v4855
      %v6184 = vmul.f32 %v6183, %v6182
      %v6185 = vmul.f32 0.5, %v6184
      %v6186 = vsub.f32 1.5, %v6185
      %v6187 = vmul.f32 %v6182, %v6186
      %vm6188 = vweird.f32 %v4855
      %vm6189 = vweird.f32 %v6182
      %vm6190 = vmor %vm6188, %vm6189
      %v6191 = vsel %vm6190, %v6182, %v6187
      %v6192 = vrsqrt.pop %v4856
      %v6193 = vmul.f32 %v6192, %v4856
      %v6194 = vmul.f32 %v6193, %v6192
      %v6195 = vmul.f32 0.5, %v6194
      %v6196 = vsub.f32 1.5, %v6195
      %v6197 = vmul.f32 %v6192, %v6196
      %vm6198 = vweird.f32 %v4856
      %vm6199 = vweird.f32 %v6192
      %vm6200 = vmor %vm6198, %vm6199
      %v6201 = vsel %vm6200, %v6192, %v6197
      %v6202 = vrsqrt.pop %v4857
      %v6203 = vmul.f32 %v6202, %v4857
      %v6204 = vmul.f32 %v6203, %v6202
      %v6205 = vmul.f32 0.5, %v6204
      %v6206 = vsub.f32 1.5, %v6205
      %v6207 = vmul.f32 %v6202, %v6206
      %vm6208 = vweird.f32 %v4857
      %vm6209 = vweird.f32 %v6202
      %vm6210 = vmor %vm6208, %vm6209
      %v6211 = vsel %vm6210, %v6202, %v6207
      %v6212 = vrsqrt.pop %v4858
      %v6213 = vmul.f32 %v6212, %v4858
      %v6214 = vmul.f32 %v6213, %v6212
      %v6215 = vmul.f32 0.5, %v6214
      %v6216 = vsub.f32 1.5, %v6215
      %v6217 = vmul.f32 %v6212, %v6216
      %vm6218 = vweird.f32 %v4858
      %vm6219 = vweird.f32 %v6212
      %vm6220 = vmor %vm6218, %vm6219
      %v6221 = vsel %vm6220, %v6212, %v6217
      %v6222 = vrsqrt.pop %v4859
      %v6223 = vmul.f32 %v6222, %v4859
      %v6224 = vmul.f32 %v6223, %v6222
      %v6225 = vmul.f32 0.5, %v6224
      %v6226 = vsub.f32 1.5, %v6225
      %v6227 = vmul.f32 %v6222, %v6226
      %vm6228 = vweird.f32 %v4859
      %vm6229 = vweird.f32 %v6222
      %vm6230 = vmor %vm6228, %vm6229
      %v6231 = vsel %vm6230, %v6222, %v6227
      %v6232 = vrsqrt.pop %v4860
      %v6233 = vmul.f32 %v6232, %v4860
      %v6234 = vmul.f32 %v6233, %v6232
      %v6235 = vmul.f32 0.5, %v6234
      %v6236 = vsub.f32 1.5, %v6235
      %v6237 = vmul.f32 %v6232, %v6236
      %vm6238 = vweird.f32 %v4860
      %vm6239 = vweird.f32 %v6232
      %vm6240 = vmor %vm6238, %vm6239
      %v6241 = vsel %vm6240, %v6232, %v6237
      %v6242 = vrsqrt.pop %v4861
      %v6243 = vmul.f32 %v6242, %v4861
      %v6244 = vmul.f32 %v6243, %v6242
      %v6245 = vmul.f32 0.5, %v6244
      %v6246 = vsub.f32 1.5, %v6245
      %v6247 = vmul.f32 %v6242, %v6246
      %vm6248 = vweird.f32 %v4861
      %vm6249 = vweird.f32 %v6242
      %vm6250 = vmor %vm6248, %vm6249
      %v6251 = vsel %vm6250, %v6242, %v6247
      %v6252 = vrsqrt.pop %v4862
      %v6253 = vmul.f32 %v6252, %v4862
      %v6254 = vmul.f32 %v6253, %v6252
      %v6255 = vmul.f32 0.5, %v6254
      %v6256 = vsub.f32 1.5, %v6255
      %v6257 = vmul.f32 %v6252, %v6256
      %vm6258 = vweird.f32 %v4862
      %vm6259 = vweird.f32 %v6252
      %vm6260 = vmor %vm6258, %vm6259
      %v6261 = vsel %vm6260, %v6252, %v6257
      %v6262 = vrsqrt.pop %v4863
      %v6263 = vmul.f32 %v6262, %v4863
      %v6264 = vmul.f32 %v6263, %v6262
      %v6265 = vmul.f32 0.5, %v6264
      %v6266 = vsub.f32 1.5, %v6265
      %v6267 = vmul.f32 %v6262, %v6266
      %vm6268 = vweird.f32 %v4863
      %vm6269 = vweird.f32 %v6262
      %vm6270 = vmor %vm6268, %vm6269
      %v6271 = vsel %vm6270, %v6262, %v6267
      %v6272 = vrsqrt.pop %v4864
      %v6273 = vmul.f32 %v6272, %v4864
      %v6274 = vmul.f32 %v6273, %v6272
      %v6275 = vmul.f32 0.5, %v6274
      %v6276 = vsub.f32 1.5, %v6275
      %v6277 = vmul.f32 %v6272, %v6276
      %vm6278 = vweird.f32 %v4864
      %vm6279 = vweird.f32 %v6272
      %vm6280 = vmor %vm6278, %vm6279
      %v6281 = vsel %vm6280, %v6272, %v6277
      %v6282 = vrsqrt.pop %v4865
      %v6283 = vmul.f32 %v6282, %v4865
      %v6284 = vmul.f32 %v6283, %v6282
      %v6285 = vmul.f32 0.5, %v6284
      %v6286 = vsub.f32 1.5, %v6285
      %v6287 = vmul.f32 %v6282, %v6286
      %vm6288 = vweird.f32 %v4865
      %vm6289 = vweird.f32 %v6282
      %vm6290 = vmor %vm6288, %vm6289
      %v6291 = vsel %vm6290, %v6282, %v6287
      %v6292 = vrsqrt.pop %v4866
      %v6293 = vmul.f32 %v6292, %v4866
      %v6294 = vmul.f32 %v6293, %v6292
      %v6295 = vmul.f32 0.5, %v6294
      %v6296 = vsub.f32 1.5, %v6295
      %v6297 = vmul.f32 %v6292, %v6296
      %vm6298 = vweird.f32 %v4866
      %vm6299 = vweird.f32 %v6292
      %vm6300 = vmor %vm6298, %vm6299
      %v6301 = vsel %vm6300, %v6292, %v6297
      %v6302 = vrsqrt.pop %v4867
      %v6303 = vmul.f32 %v6302, %v4867
      %v6304 = vmul.f32 %v6303, %v6302
      %v6305 = vmul.f32 0.5, %v6304
      %v6306 = vsub.f32 1.5, %v6305
      %v6307 = vmul.f32 %v6302, %v6306
      %vm6308 = vweird.f32 %v4867
      %vm6309 = vweird.f32 %v6302
      %vm6310 = vmor %vm6308, %vm6309
      %v6311 = vsel %vm6310, %v6302, %v6307
      %v6312 = vrsqrt.pop %v4868
      %v6313 = vmul.f32 %v6312, %v4868
      %v6314 = vmul.f32 %v6313, %v6312
      %v6315 = vmul.f32 0.5, %v6314
      %v6316 = vsub.f32 1.5, %v6315
      %v6317 = vmul.f32 %v6312, %v6316
      %vm6318 = vweird.f32 %v4868
      %vm6319 = vweird.f32 %v6312
      %vm6320 = vmor %vm6318, %vm6319
      %v6321 = vsel %vm6320, %v6312, %v6317
      %v6322 = vrsqrt.pop %v4869
      %v6323 = vmul.f32 %v6322, %v4869
      %v6324 = vmul.f32 %v6323, %v6322
      %v6325 = vmul.f32 0.5, %v6324
      %v6326 = vsub.f32 1.5, %v6325
      %v6327 = vmul.f32 %v6322, %v6326
      %vm6328 = vweird.f32 %v4869
      %vm6329 = vweird.f32 %v6322
      %vm6330 = vmor %vm6328, %vm6329
      %v6331 = vsel %vm6330, %v6322, %v6327
      %v6332 = vrsqrt.pop %v4870
      %v6333 = vmul.f32 %v6332, %v4870
      %v6334 = vmul.f32 %v6333, %v6332
      %v6335 = vmul.f32 0.5, %v6334
      %v6336 = vsub.f32 1.5, %v6335
      %v6337 = vmul.f32 %v6332, %v6336
      %vm6338 = vweird.f32 %v4870
      %vm6339 = vweird.f32 %v6332
      %vm6340 = vmor %vm6338, %vm6339
      %v6341 = vsel %vm6340, %v6332, %v6337
      %v6342 = vrsqrt.pop %v4871
      %v6343 = vmul.f32 %v6342, %v4871
      %v6344 = vmul.f32 %v6343, %v6342
      %v6345 = vmul.f32 0.5, %v6344
      %v6346 = vsub.f32 1.5, %v6345
      %v6347 = vmul.f32 %v6342, %v6346
      %vm6348 = vweird.f32 %v4871
      %vm6349 = vweird.f32 %v6342
      %vm6350 = vmor %vm6348, %vm6349
      %v6351 = vsel %vm6350, %v6342, %v6347
      %v6352 = vrsqrt.pop %v4872
      %v6353 = vmul.f32 %v6352, %v4872
      %v6354 = vmul.f32 %v6353, %v6352
      %v6355 = vmul.f32 0.5, %v6354
      %v6356 = vsub.f32 1.5, %v6355
      %v6357 = vmul.f32 %v6352, %v6356
      %vm6358 = vweird.f32 %v4872
      %vm6359 = vweird.f32 %v6352
      %vm6360 = vmor %vm6358, %vm6359
      %v6361 = vsel %vm6360, %v6352, %v6357
      %v6362 = vrsqrt.pop %v4873
      %v6363 = vmul.f32 %v6362, %v4873
      %v6364 = vmul.f32 %v6363, %v6362
      %v6365 = vmul.f32 0.5, %v6364
      %v6366 = vsub.f32 1.5, %v6365
      %v6367 = vmul.f32 %v6362, %v6366
      %vm6368 = vweird.f32 %v4873
      %vm6369 = vweird.f32 %v6362
      %vm6370 = vmor %vm6368, %vm6369
      %v6371 = vsel %vm6370, %v6362, %v6367
      %v6372 = vrsqrt.pop %v4874
      %v6373 = vmul.f32 %v6372, %v4874
      %v6374 = vmul.f32 %v6373, %v6372
      %v6375 = vmul.f32 0.5, %v6374
      %v6376 = vsub.f32 1.5, %v6375
      %v6377 = vmul.f32 %v6372, %v6376
      %vm6378 = vweird.f32 %v4874
      %vm6379 = vweird.f32 %v6372
      %vm6380 = vmor %vm6378, %vm6379
      %v6381 = vsel %vm6380, %v6372, %v6377
      %v6382 = vrsqrt.pop %v4875
      %v6383 = vmul.f32 %v6382, %v4875
      %v6384 = vmul.f32 %v6383, %v6382
      %v6385 = vmul.f32 0.5, %v6384
      %v6386 = vsub.f32 1.5, %v6385
      %v6387 = vmul.f32 %v6382, %v6386
      %vm6388 = vweird.f32 %v4875
      %vm6389 = vweird.f32 %v6382
      %vm6390 = vmor %vm6388, %vm6389
      %v6391 = vsel %vm6390, %v6382, %v6387
      %v6392 = vrsqrt.pop %v4876
      %v6393 = vmul.f32 %v6392, %v4876
      %v6394 = vmul.f32 %v6393, %v6392
      %v6395 = vmul.f32 0.5, %v6394
      %v6396 = vsub.f32 1.5, %v6395
      %v6397 = vmul.f32 %v6392, %v6396
      %vm6398 = vweird.f32 %v4876
      %vm6399 = vweird.f32 %v6392
      %vm6400 = vmor %vm6398, %vm6399
      %v6401 = vsel %vm6400, %v6392, %v6397
      %v6402 = vrsqrt.pop %v4877
      %v6403 = vmul.f32 %v6402, %v4877
      %v6404 = vmul.f32 %v6403, %v6402
      %v6405 = vmul.f32 0.5, %v6404
      %v6406 = vsub.f32 1.5, %v6405
      %v6407 = vmul.f32 %v6402, %v6406
      %vm6408 = vweird.f32 %v4877
      %vm6409 = vweird.f32 %v6402
      %vm6410 = vmor %vm6408, %vm6409
      %v6411 = vsel %vm6410, %v6402, %v6407
      %v6412 = vrsqrt.pop %v4878
      %v6413 = vmul.f32 %v6412, %v4878
      %v6414 = vmul.f32 %v6413, %v6412
      %v6415 = vmul.f32 0.5, %v6414
      %v6416 = vsub.f32 1.5, %v6415
      %v6417 = vmul.f32 %v6412, %v6416
      %vm6418 = vweird.f32 %v4878
      %vm6419 = vweird.f32 %v6412
      %vm6420 = vmor %vm6418, %vm6419
      %v6421 = vsel %vm6420, %v6412, %v6417
      %v6422 = vrsqrt.pop %v4879
      %v6423 = vmul.f32 %v6422, %v4879
      %v6424 = vmul.f32 %v6423, %v6422
      %v6425 = vmul.f32 0.5, %v6424
      %v6426 = vsub.f32 1.5, %v6425
      %v6427 = vmul.f32 %v6422, %v6426
      %vm6428 = vweird.f32 %v4879
      %vm6429 = vweird.f32 %v6422
      %vm6430 = vmor %vm6428, %vm6429
      %v6431 = vsel %vm6430, %v6422, %v6427
      %v6432 = vrsqrt.pop %v4880
      %v6433 = vmul.f32 %v6432, %v4880
      %v6434 = vmul.f32 %v6433, %v6432
      %v6435 = vmul.f32 0.5, %v6434
      %v6436 = vsub.f32 1.5, %v6435
      %v6437 = vmul.f32 %v6432, %v6436
      %vm6438 = vweird.f32 %v4880
      %vm6439 = vweird.f32 %v6432
      %vm6440 = vmor %vm6438, %vm6439
      %v6441 = vsel %vm6440, %v6432, %v6437
      %v6442 = vrsqrt.pop %v4881
      %v6443 = vmul.f32 %v6442, %v4881
      %v6444 = vmul.f32 %v6443, %v6442
      %v6445 = vmul.f32 0.5, %v6444
      %v6446 = vsub.f32 1.5, %v6445
      %v6447 = vmul.f32 %v6442, %v6446
      %vm6448 = vweird.f32 %v4881
      %vm6449 = vweird.f32 %v6442
      %vm6450 = vmor %vm6448, %vm6449
      %v6451 = vsel %vm6450, %v6442, %v6447
      %v6452 = vrsqrt.pop %v4882
      %v6453 = vmul.f32 %v6452, %v4882
      %v6454 = vmul.f32 %v6453, %v6452
      %v6455 = vmul.f32 0.5, %v6454
      %v6456 = vsub.f32 1.5, %v6455
      %v6457 = vmul.f32 %v6452, %v6456
      %vm6458 = vweird.f32 %v4882
      %vm6459 = vweird.f32 %v6452
      %vm6460 = vmor %vm6458, %vm6459
      %v6461 = vsel %vm6460, %v6452, %v6457
      %v6462 = vrsqrt.pop %v4883
      %v6463 = vmul.f32 %v6462, %v4883
      %v6464 = vmul.f32 %v6463, %v6462
      %v6465 = vmul.f32 0.5, %v6464
      %v6466 = vsub.f32 1.5, %v6465
      %v6467 = vmul.f32 %v6462, %v6466
      %vm6468 = vweird.f32 %v4883
      %vm6469 = vweird.f32 %v6462
      %vm6470 = vmor %vm6468, %vm6469
      %v6471 = vsel %vm6470, %v6462, %v6467
      %v6472 = vrsqrt.pop %v4884
      %v6473 = vmul.f32 %v6472, %v4884
      %v6474 = vmul.f32 %v6473, %v6472
      %v6475 = vmul.f32 0.5, %v6474
      %v6476 = vsub.f32 1.5, %v6475
      %v6477 = vmul.f32 %v6472, %v6476
      %vm6478 = vweird.f32 %v4884
      %vm6479 = vweird.f32 %v6472
      %vm6480 = vmor %vm6478, %vm6479
      %v6481 = vsel %vm6480, %v6472, %v6477
      %v6482 = vrsqrt.pop %v4885
      %v6483 = vmul.f32 %v6482, %v4885
      %v6484 = vmul.f32 %v6483, %v6482
      %v6485 = vmul.f32 0.5, %v6484
      %v6486 = vsub.f32 1.5, %v6485
      %v6487 = vmul.f32 %v6482, %v6486
      %vm6488 = vweird.f32 %v4885
      %vm6489 = vweird.f32 %v6482
      %vm6490 = vmor %vm6488, %vm6489
      %v6491 = vsel %vm6490, %v6482, %v6487
      %v6492 = vrsqrt.pop %v4886
      %v6493 = vmul.f32 %v6492, %v4886
      %v6494 = vmul.f32 %v6493, %v6492
      %v6495 = vmul.f32 0.5, %v6494
      %v6496 = vsub.f32 1.5, %v6495
      %v6497 = vmul.f32 %v6492, %v6496
      %vm6498 = vweird.f32 %v4886
      %vm6499 = vweird.f32 %v6492
      %vm6500 = vmor %vm6498, %vm6499
      %v6501 = vsel %vm6500, %v6492, %v6497
      %v6502 = vrsqrt.pop %v4887
      %v6503 = vmul.f32 %v6502, %v4887
      %v6504 = vmul.f32 %v6503, %v6502
      %v6505 = vmul.f32 0.5, %v6504
      %v6506 = vsub.f32 1.5, %v6505
      %v6507 = vmul.f32 %v6502, %v6506
      %vm6508 = vweird.f32 %v4887
      %vm6509 = vweird.f32 %v6502
      %vm6510 = vmor %vm6508, %vm6509
      %v6511 = vsel %vm6510, %v6502, %v6507
      %v6512 = vrsqrt.pop %v4888
      %v6513 = vmul.f32 %v6512, %v4888
      %v6514 = vmul.f32 %v6513, %v6512
      %v6515 = vmul.f32 0.5, %v6514
      %v6516 = vsub.f32 1.5, %v6515
      %v6517 = vmul.f32 %v6512, %v6516
      %vm6518 = vweird.f32 %v4888
      %vm6519 = vweird.f32 %v6512
      %vm6520 = vmor %vm6518, %vm6519
      %v6521 = vsel %vm6520, %v6512, %v6517
      %v6522 = vrsqrt.pop %v4889
      %v6523 = vmul.f32 %v6522, %v4889
      %v6524 = vmul.f32 %v6523, %v6522
      %v6525 = vmul.f32 0.5, %v6524
      %v6526 = vsub.f32 1.5, %v6525
      %v6527 = vmul.f32 %v6522, %v6526
      %vm6528 = vweird.f32 %v4889
      %vm6529 = vweird.f32 %v6522
      %vm6530 = vmor %vm6528, %vm6529
      %v6531 = vsel %vm6530, %v6522, %v6527
      %v6532 = vrsqrt.pop %v4890
      %v6533 = vmul.f32 %v6532, %v4890
      %v6534 = vmul.f32 %v6533, %v6532
      %v6535 = vmul.f32 0.5, %v6534
      %v6536 = vsub.f32 1.5, %v6535
      %v6537 = vmul.f32 %v6532, %v6536
      %vm6538 = vweird.f32 %v4890
      %vm6539 = vweird.f32 %v6532
      %vm6540 = vmor %vm6538, %vm6539
      %v6541 = vsel %vm6540, %v6532, %v6537
      %v6542 = vrsqrt.pop %v4891
      %v6543 = vmul.f32 %v6542, %v4891
      %v6544 = vmul.f32 %v6543, %v6542
      %v6545 = vmul.f32 0.5, %v6544
      %v6546 = vsub.f32 1.5, %v6545
      %v6547 = vmul.f32 %v6542, %v6546
      %vm6548 = vweird.f32 %v4891
      %vm6549 = vweird.f32 %v6542
      %vm6550 = vmor %vm6548, %vm6549
      %v6551 = vsel %vm6550, %v6542, %v6547
      %v6552 = vrsqrt.pop %v4892
      %v6553 = vmul.f32 %v6552, %v4892
      %v6554 = vmul.f32 %v6553, %v6552
      %v6555 = vmul.f32 0.5, %v6554
      %v6556 = vsub.f32 1.5, %v6555
      %v6557 = vmul.f32 %v6552, %v6556
      %vm6558 = vweird.f32 %v4892
      %vm6559 = vweird.f32 %v6552
      %vm6560 = vmor %vm6558, %vm6559
      %v6561 = vsel %vm6560, %v6552, %v6557
      %v6562 = vrsqrt.pop %v4893
      %v6563 = vmul.f32 %v6562, %v4893
      %v6564 = vmul.f32 %v6563, %v6562
      %v6565 = vmul.f32 0.5, %v6564
      %v6566 = vsub.f32 1.5, %v6565
      %v6567 = vmul.f32 %v6562, %v6566
      %vm6568 = vweird.f32 %v4893
      %vm6569 = vweird.f32 %v6562
      %vm6570 = vmor %vm6568, %vm6569
      %v6571 = vsel %vm6570, %v6562, %v6567
      %v6572 = vrsqrt.pop %v4894
      %v6573 = vmul.f32 %v6572, %v4894
      %v6574 = vmul.f32 %v6573, %v6572
      %v6575 = vmul.f32 0.5, %v6574
      %v6576 = vsub.f32 1.5, %v6575
      %v6577 = vmul.f32 %v6572, %v6576
      %vm6578 = vweird.f32 %v4894
      %vm6579 = vweird.f32 %v6572
      %vm6580 = vmor %vm6578, %vm6579
      %v6581 = vsel %vm6580, %v6572, %v6577
      %v6582 = vrsqrt.pop %v4895
      %v6583 = vmul.f32 %v6582, %v4895
      %v6584 = vmul.f32 %v6583, %v6582
      %v6585 = vmul.f32 0.5, %v6584
      %v6586 = vsub.f32 1.5, %v6585
      %v6587 = vmul.f32 %v6582, %v6586
      %vm6588 = vweird.f32 %v4895
      %vm6589 = vweird.f32 %v6582
      %vm6590 = vmor %vm6588, %vm6589
      %v6591 = vsel %vm6590, %v6582, %v6587
      %v6592 = vrsqrt.pop %v4896
      %v6593 = vmul.f32 %v6592, %v4896
      %v6594 = vmul.f32 %v6593, %v6592
      %v6595 = vmul.f32 0.5, %v6594
      %v6596 = vsub.f32 1.5, %v6595
      %v6597 = vmul.f32 %v6592, %v6596
      %vm6598 = vweird.f32 %v4896
      %vm6599 = vweird.f32 %v6592
      %vm6600 = vmor %vm6598, %vm6599
      %v6601 = vsel %vm6600, %v6592, %v6597
      %v6602 = vrsqrt.pop %v4897
      %v6603 = vmul.f32 %v6602, %v4897
      %v6604 = vmul.f32 %v6603, %v6602
      %v6605 = vmul.f32 0.5, %v6604
      %v6606 = vsub.f32 1.5, %v6605
      %v6607 = vmul.f32 %v6602, %v6606
      %vm6608 = vweird.f32 %v4897
      %vm6609 = vweird.f32 %v6602
      %vm6610 = vmor %vm6608, %vm6609
      %v6611 = vsel %vm6610, %v6602, %v6607
      %v6612 = vrsqrt.pop %v4898
      %v6613 = vmul.f32 %v6612, %v4898
      %v6614 = vmul.f32 %v6613, %v6612
      %v6615 = vmul.f32 0.5, %v6614
      %v6616 = vsub.f32 1.5, %v6615
      %v6617 = vmul.f32 %v6612, %v6616
      %vm6618 = vweird.f32 %v4898
      %vm6619 = vweird.f32 %v6612
      %vm6620 = vmor %vm6618, %vm6619
      %v6621 = vsel %vm6620, %v6612, %v6617
      %v6622 = vrsqrt.pop %v4899
      %v6623 = vmul.f32 %v6622, %v4899
      %v6624 = vmul.f32 %v6623, %v6622
      %v6625 = vmul.f32 0.5, %v6624
      %v6626 = vsub.f32 1.5, %v6625
      %v6627 = vmul.f32 %v6622, %v6626
      %vm6628 = vweird.f32 %v4899
      %vm6629 = vweird.f32 %v6622
      %vm6630 = vmor %vm6628, %vm6629
      %v6631 = vsel %vm6630, %v6622, %v6627
      %v6632 = vrsqrt.pop %v4900
      %v6633 = vmul.f32 %v6632, %v4900
      %v6634 = vmul.f32 %v6633, %v6632
      %v6635 = vmul.f32 0.5, %v6634
      %v6636 = vsub.f32 1.5, %v6635
      %v6637 = vmul.f32 %v6632, %v6636
      %vm6638 = vweird.f32 %v4900
      %vm6639 = vweird.f32 %v6632
      %vm6640 = vmor %vm6638, %vm6639
      %v6641 = vsel %vm6640, %v6632, %v6637
      %v6642 = vrsqrt.pop %v4901
      %v6643 = vmul.f32 %v6642, %v4901
      %v6644 = vmul.f32 %v6643, %v6642
      %v6645 = vmul.f32 0.5, %v6644
      %v6646 = vsub.f32 1.5, %v6645
      %v6647 = vmul.f32 %v6642, %v6646
      %vm6648 = vweird.f32 %v4901
      %vm6649 = vweird.f32 %v6642
      %vm6650 = vmor %vm6648, %vm6649
      %v6651 = vsel %vm6650, %v6642, %v6647
      %v6652 = vrsqrt.pop %v4902
      %v6653 = vmul.f32 %v6652, %v4902
      %v6654 = vmul.f32 %v6653, %v6652
      %v6655 = vmul.f32 0.5, %v6654
      %v6656 = vsub.f32 1.5, %v6655
      %v6657 = vmul.f32 %v6652, %v6656
      %vm6658 = vweird.f32 %v4902
      %vm6659 = vweird.f32 %v6652
      %vm6660 = vmor %vm6658, %vm6659
      %v6661 = vsel %vm6660, %v6652, %v6657
      %v6662 = vrsqrt.pop %v4903
      %v6663 = vmul.f32 %v6662, %v4903
      %v6664 = vmul.f32 %v6663, %v6662
      %v6665 = vmul.f32 0.5, %v6664
      %v6666 = vsub.f32 1.5, %v6665
      %v6667 = vmul.f32 %v6662, %v6666
      %vm6668 = vweird.f32 %v4903
      %vm6669 = vweird.f32 %v6662
      %vm6670 = vmor %vm6668, %vm6669
      %v6671 = vsel %vm6670, %v6662, %v6667
      %v6672 = vrsqrt.pop %v4904
      %v6673 = vmul.f32 %v6672, %v4904
      %v6674 = vmul.f32 %v6673, %v6672
      %v6675 = vmul.f32 0.5, %v6674
      %v6676 = vsub.f32 1.5, %v6675
      %v6677 = vmul.f32 %v6672, %v6676
      %vm6678 = vweird.f32 %v4904
      %vm6679 = vweird.f32 %v6672
      %vm6680 = vmor %vm6678, %vm6679
      %v6681 = vsel %vm6680, %v6672, %v6677
      %v6682 = vrsqrt.pop %v4905
      %v6683 = vmul.f32 %v6682, %v4905
      %v6684 = vmul.f32 %v6683, %v6682
      %v6685 = vmul.f32 0.5, %v6684
      %v6686 = vsub.f32 1.5, %v6685
      %v6687 = vmul.f32 %v6682, %v6686
      %vm6688 = vweird.f32 %v4905
      %vm6689 = vweird.f32 %v6682
      %vm6690 = vmor %vm6688, %vm6689
      %v6691 = vsel %vm6690, %v6682, %v6687
      %v6692 = vrsqrt.pop %v4906
      %v6693 = vmul.f32 %v6692, %v4906
      %v6694 = vmul.f32 %v6693, %v6692
      %v6695 = vmul.f32 0.5, %v6694
      %v6696 = vsub.f32 1.5, %v6695
      %v6697 = vmul.f32 %v6692, %v6696
      %vm6698 = vweird.f32 %v4906
      %vm6699 = vweird.f32 %v6692
      %vm6700 = vmor %vm6698, %vm6699
      %v6701 = vsel %vm6700, %v6692, %v6697
      %v6702 = vrsqrt.pop %v4907
      %v6703 = vmul.f32 %v6702, %v4907
      %v6704 = vmul.f32 %v6703, %v6702
      %v6705 = vmul.f32 0.5, %v6704
      %v6706 = vsub.f32 1.5, %v6705
      %v6707 = vmul.f32 %v6702, %v6706
      %vm6708 = vweird.f32 %v4907
      %vm6709 = vweird.f32 %v6702
      %vm6710 = vmor %vm6708, %vm6709
      %v6711 = vsel %vm6710, %v6702, %v6707
      %v6712 = vrsqrt.pop %v4908
      %v6713 = vmul.f32 %v6712, %v4908
      %v6714 = vmul.f32 %v6713, %v6712
      %v6715 = vmul.f32 0.5, %v6714
      %v6716 = vsub.f32 1.5, %v6715
      %v6717 = vmul.f32 %v6712, %v6716
      %vm6718 = vweird.f32 %v4908
      %vm6719 = vweird.f32 %v6712
      %vm6720 = vmor %vm6718, %vm6719
      %v6721 = vsel %vm6720, %v6712, %v6717
      %v6722 = vrsqrt.pop %v4909
      %v6723 = vmul.f32 %v6722, %v4909
      %v6724 = vmul.f32 %v6723, %v6722
      %v6725 = vmul.f32 0.5, %v6724
      %v6726 = vsub.f32 1.5, %v6725
      %v6727 = vmul.f32 %v6722, %v6726
      %vm6728 = vweird.f32 %v4909
      %vm6729 = vweird.f32 %v6722
      %vm6730 = vmor %vm6728, %vm6729
      %v6731 = vsel %vm6730, %v6722, %v6727
      %v6732 = vrsqrt.pop %v4910
      %v6733 = vmul.f32 %v6732, %v4910
      %v6734 = vmul.f32 %v6733, %v6732
      %v6735 = vmul.f32 0.5, %v6734
      %v6736 = vsub.f32 1.5, %v6735
      %v6737 = vmul.f32 %v6732, %v6736
      %vm6738 = vweird.f32 %v4910
      %vm6739 = vweird.f32 %v6732
      %vm6740 = vmor %vm6738, %vm6739
      %v6741 = vsel %vm6740, %v6732, %v6737
      %v6742 = vrsqrt.pop %v4911
      %v6743 = vmul.f32 %v6742, %v4911
      %v6744 = vmul.f32 %v6743, %v6742
      %v6745 = vmul.f32 0.5, %v6744
      %v6746 = vsub.f32 1.5, %v6745
      %v6747 = vmul.f32 %v6742, %v6746
      %vm6748 = vweird.f32 %v4911
      %vm6749 = vweird.f32 %v6742
      %vm6750 = vmor %vm6748, %vm6749
      %v6751 = vsel %vm6750, %v6742, %v6747
      %v6752 = vrsqrt.pop %v4912
      %v6753 = vmul.f32 %v6752, %v4912
      %v6754 = vmul.f32 %v6753, %v6752
      %v6755 = vmul.f32 0.5, %v6754
      %v6756 = vsub.f32 1.5, %v6755
      %v6757 = vmul.f32 %v6752, %v6756
      %vm6758 = vweird.f32 %v4912
      %vm6759 = vweird.f32 %v6752
      %vm6760 = vmor %vm6758, %vm6759
      %v6761 = vsel %vm6760, %v6752, %v6757
      %v6762 = vrsqrt.pop %v4913
      %v6763 = vmul.f32 %v6762, %v4913
      %v6764 = vmul.f32 %v6763, %v6762
      %v6765 = vmul.f32 0.5, %v6764
      %v6766 = vsub.f32 1.5, %v6765
      %v6767 = vmul.f32 %v6762, %v6766
      %vm6768 = vweird.f32 %v4913
      %vm6769 = vweird.f32 %v6762
      %vm6770 = vmor %vm6768, %vm6769
      %v6771 = vsel %vm6770, %v6762, %v6767
      %v6772 = vrsqrt.pop %v4914
      %v6773 = vmul.f32 %v6772, %v4914
      %v6774 = vmul.f32 %v6773, %v6772
      %v6775 = vmul.f32 0.5, %v6774
      %v6776 = vsub.f32 1.5, %v6775
      %v6777 = vmul.f32 %v6772, %v6776
      %vm6778 = vweird.f32 %v4914
      %vm6779 = vweird.f32 %v6772
      %vm6780 = vmor %vm6778, %vm6779
      %v6781 = vsel %vm6780, %v6772, %v6777
      %v6782 = vrsqrt.pop %v4915
      %v6783 = vmul.f32 %v6782, %v4915
      %v6784 = vmul.f32 %v6783, %v6782
      %v6785 = vmul.f32 0.5, %v6784
      %v6786 = vsub.f32 1.5, %v6785
      %v6787 = vmul.f32 %v6782, %v6786
      %vm6788 = vweird.f32 %v4915
      %vm6789 = vweird.f32 %v6782
      %vm6790 = vmor %vm6788, %vm6789
      %v6791 = vsel %vm6790, %v6782, %v6787
      %v6792 = vrsqrt.pop %v4916
      %v6793 = vmul.f32 %v6792, %v4916
      %v6794 = vmul.f32 %v6793, %v6792
      %v6795 = vmul.f32 0.5, %v6794
      %v6796 = vsub.f32 1.5, %v6795
      %v6797 = vmul.f32 %v6792, %v6796
      %vm6798 = vweird.f32 %v4916
      %vm6799 = vweird.f32 %v6792
      %vm6800 = vmor %vm6798, %vm6799
      %v6801 = vsel %vm6800, %v6792, %v6797
      %v6802 = vrsqrt.pop %v4917
      %v6803 = vmul.f32 %v6802, %v4917
      %v6804 = vmul.f32 %v6803, %v6802
      %v6805 = vmul.f32 0.5, %v6804
      %v6806 = vsub.f32 1.5, %v6805
      %v6807 = vmul.f32 %v6802, %v6806
      %vm6808 = vweird.f32 %v4917
      %vm6809 = vweird.f32 %v6802
      %vm6810 = vmor %vm6808, %vm6809
      %v6811 = vsel %vm6810, %v6802, %v6807
      %v6812 = vrsqrt.pop %v4918
      %v6813 = vmul.f32 %v6812, %v4918
      %v6814 = vmul.f32 %v6813, %v6812
      %v6815 = vmul.f32 0.5, %v6814
      %v6816 = vsub.f32 1.5, %v6815
      %v6817 = vmul.f32 %v6812, %v6816
      %vm6818 = vweird.f32 %v4918
      %vm6819 = vweird.f32 %v6812
      %vm6820 = vmor %vm6818, %vm6819
      %v6821 = vsel %vm6820, %v6812, %v6817
      %v6822 = vrsqrt.pop %v4919
      %v6823 = vmul.f32 %v6822, %v4919
      %v6824 = vmul.f32 %v6823, %v6822
      %v6825 = vmul.f32 0.5, %v6824
      %v6826 = vsub.f32 1.5, %v6825
      %v6827 = vmul.f32 %v6822, %v6826
      %vm6828 = vweird.f32 %v4919
      %vm6829 = vweird.f32 %v6822
      %vm6830 = vmor %vm6828, %vm6829
      %v6831 = vsel %vm6830, %v6822, %v6827
      %v6832 = vrsqrt.pop %v4920
      %v6833 = vmul.f32 %v6832, %v4920
      %v6834 = vmul.f32 %v6833, %v6832
      %v6835 = vmul.f32 0.5, %v6834
      %v6836 = vsub.f32 1.5, %v6835
      %v6837 = vmul.f32 %v6832, %v6836
      %vm6838 = vweird.f32 %v4920
      %vm6839 = vweird.f32 %v6832
      %vm6840 = vmor %vm6838, %vm6839
      %v6841 = vsel %vm6840, %v6832, %v6837
      %v6842 = vrsqrt.pop %v4921
      %v6843 = vmul.f32 %v6842, %v4921
      %v6844 = vmul.f32 %v6843, %v6842
      %v6845 = vmul.f32 0.5, %v6844
      %v6846 = vsub.f32 1.5, %v6845
      %v6847 = vmul.f32 %v6842, %v6846
      %vm6848 = vweird.f32 %v4921
      %vm6849 = vweird.f32 %v6842
      %vm6850 = vmor %vm6848, %vm6849
      %v6851 = vsel %vm6850, %v6842, %v6847
      %v6852 = vrsqrt.pop %v4922
      %v6853 = vmul.f32 %v6852, %v4922
      %v6854 = vmul.f32 %v6853, %v6852
      %v6855 = vmul.f32 0.5, %v6854
      %v6856 = vsub.f32 1.5, %v6855
      %v6857 = vmul.f32 %v6852, %v6856
      %vm6858 = vweird.f32 %v4922
      %vm6859 = vweird.f32 %v6852
      %vm6860 = vmor %vm6858, %vm6859
      %v6861 = vsel %vm6860, %v6852, %v6857
      %v6862 = vrsqrt.pop %v4923
      %v6863 = vmul.f32 %v6862, %v4923
      %v6864 = vmul.f32 %v6863, %v6862
      %v6865 = vmul.f32 0.5, %v6864
      %v6866 = vsub.f32 1.5, %v6865
      %v6867 = vmul.f32 %v6862, %v6866
      %vm6868 = vweird.f32 %v4923
      %vm6869 = vweird.f32 %v6862
      %vm6870 = vmor %vm6868, %vm6869
      %v6871 = vsel %vm6870, %v6862, %v6867
      %v6872 = vrsqrt.pop %v4924
      %v6873 = vmul.f32 %v6872, %v4924
      %v6874 = vmul.f32 %v6873, %v6872
      %v6875 = vmul.f32 0.5, %v6874
      %v6876 = vsub.f32 1.5, %v6875
      %v6877 = vmul.f32 %v6872, %v6876
      %vm6878 = vweird.f32 %v4924
      %vm6879 = vweird.f32 %v6872
      %vm6880 = vmor %vm6878, %vm6879
      %v6881 = vsel %vm6880, %v6872, %v6877
      %v6882 = vrsqrt.pop %v4925
      %v6883 = vmul.f32 %v6882, %v4925
      %v6884 = vmul.f32 %v6883, %v6882
      %v6885 = vmul.f32 0.5, %v6884
      %v6886 = vsub.f32 1.5, %v6885
      %v6887 = vmul.f32 %v6882, %v6886
      %vm6888 = vweird.f32 %v4925
      %vm6889 = vweird.f32 %v6882
      %vm6890 = vmor %vm6888, %vm6889
      %v6891 = vsel %vm6890, %v6882, %v6887
      %v6892 = vrsqrt.pop %v4926
      %v6893 = vmul.f32 %v6892, %v4926
      %v6894 = vmul.f32 %v6893, %v6892
      %v6895 = vmul.f32 0.5, %v6894
      %v6896 = vsub.f32 1.5, %v6895
      %v6897 = vmul.f32 %v6892, %v6896
      %vm6898 = vweird.f32 %v4926
      %vm6899 = vweird.f32 %v6892
      %vm6900 = vmor %vm6898, %vm6899
      %v6901 = vsel %vm6900, %v6892, %v6897
      %v6902 = vrsqrt.pop %v4927
      %v6903 = vmul.f32 %v6902, %v4927
      %v6904 = vmul.f32 %v6903, %v6902
      %v6905 = vmul.f32 0.5, %v6904
      %v6906 = vsub.f32 1.5, %v6905
      %v6907 = vmul.f32 %v6902, %v6906
      %vm6908 = vweird.f32 %v4927
      %vm6909 = vweird.f32 %v6902
      %vm6910 = vmor %vm6908, %vm6909
      %v6911 = vsel %vm6910, %v6902, %v6907
      %v6912 = vrsqrt.pop %v4928
      %v6913 = vmul.f32 %v6912, %v4928
      %v6914 = vmul.f32 %v6913, %v6912
      %v6915 = vmul.f32 0.5, %v6914
      %v6916 = vsub.f32 1.5, %v6915
      %v6917 = vmul.f32 %v6912, %v6916
      %vm6918 = vweird.f32 %v4928
      %vm6919 = vweird.f32 %v6912
      %vm6920 = vmor %vm6918, %vm6919
      %v6921 = vsel %vm6920, %v6912, %v6917
      %v6922 = vrsqrt.pop %v4929
      %v6923 = vmul.f32 %v6922, %v4929
      %v6924 = vmul.f32 %v6923, %v6922
      %v6925 = vmul.f32 0.5, %v6924
      %v6926 = vsub.f32 1.5, %v6925
      %v6927 = vmul.f32 %v6922, %v6926
      %vm6928 = vweird.f32 %v4929
      %vm6929 = vweird.f32 %v6922
      %vm6930 = vmor %vm6928, %vm6929
      %v6931 = vsel %vm6930, %v6922, %v6927
      %v6932 = vrsqrt.pop %v4930
      %v6933 = vmul.f32 %v6932, %v4930
      %v6934 = vmul.f32 %v6933, %v6932
      %v6935 = vmul.f32 0.5, %v6934
      %v6936 = vsub.f32 1.5, %v6935
      %v6937 = vmul.f32 %v6932, %v6936
      %vm6938 = vweird.f32 %v4930
      %vm6939 = vweird.f32 %v6932
      %vm6940 = vmor %vm6938, %vm6939
      %v6941 = vsel %vm6940, %v6932, %v6937
      %v6942 = vrsqrt.pop %v4931
      %v6943 = vmul.f32 %v6942, %v4931
      %v6944 = vmul.f32 %v6943, %v6942
      %v6945 = vmul.f32 0.5, %v6944
      %v6946 = vsub.f32 1.5, %v6945
      %v6947 = vmul.f32 %v6942, %v6946
      %vm6948 = vweird.f32 %v4931
      %vm6949 = vweird.f32 %v6942
      %vm6950 = vmor %vm6948, %vm6949
      %v6951 = vsel %vm6950, %v6942, %v6947
      %v6952 = vrsqrt.pop %v4932
      %v6953 = vmul.f32 %v6952, %v4932
      %v6954 = vmul.f32 %v6953, %v6952
      %v6955 = vmul.f32 0.5, %v6954
      %v6956 = vsub.f32 1.5, %v6955
      %v6957 = vmul.f32 %v6952, %v6956
      %vm6958 = vweird.f32 %v4932
      %vm6959 = vweird.f32 %v6952
      %vm6960 = vmor %vm6958, %vm6959
      %v6961 = vsel %vm6960, %v6952, %v6957
      %v6962 = vrsqrt.pop %v4933
      %v6963 = vmul.f32 %v6962, %v4933
      %v6964 = vmul.f32 %v6963, %v6962
      %v6965 = vmul.f32 0.5, %v6964
      %v6966 = vsub.f32 1.5, %v6965
      %v6967 = vmul.f32 %v6962, %v6966
      %vm6968 = vweird.f32 %v4933
      %vm6969 = vweird.f32 %v6962
      %vm6970 = vmor %vm6968, %vm6969
      %v6971 = vsel %vm6970, %v6962, %v6967
      %v6972 = vrsqrt.pop %v4934
      %v6973 = vmul.f32 %v6972, %v4934
      %v6974 = vmul.f32 %v6973, %v6972
      %v6975 = vmul.f32 0.5, %v6974
      %v6976 = vsub.f32 1.5, %v6975
      %v6977 = vmul.f32 %v6972, %v6976
      %vm6978 = vweird.f32 %v4934
      %vm6979 = vweird.f32 %v6972
      %vm6980 = vmor %vm6978, %vm6979
      %v6981 = vsel %vm6980, %v6972, %v6977
      %v6982 = vrsqrt.pop %v4935
      %v6983 = vmul.f32 %v6982, %v4935
      %v6984 = vmul.f32 %v6983, %v6982
      %v6985 = vmul.f32 0.5, %v6984
      %v6986 = vsub.f32 1.5, %v6985
      %v6987 = vmul.f32 %v6982, %v6986
      %vm6988 = vweird.f32 %v4935
      %vm6989 = vweird.f32 %v6982
      %vm6990 = vmor %vm6988, %vm6989
      %v6991 = vsel %vm6990, %v6982, %v6987
      %v6992 = vrsqrt.pop %v4936
      %v6993 = vmul.f32 %v6992, %v4936
      %v6994 = vmul.f32 %v6993, %v6992
      %v6995 = vmul.f32 0.5, %v6994
      %v6996 = vsub.f32 1.5, %v6995
      %v6997 = vmul.f32 %v6992, %v6996
      %vm6998 = vweird.f32 %v4936
      %vm6999 = vweird.f32 %v6992
      %vm7000 = vmor %vm6998, %vm6999
      %v7001 = vsel %vm7000, %v6992, %v6997
      %v7002 = vrsqrt.pop %v4937
      %v7003 = vmul.f32 %v7002, %v4937
      %v7004 = vmul.f32 %v7003, %v7002
      %v7005 = vmul.f32 0.5, %v7004
      %v7006 = vsub.f32 1.5, %v7005
      %v7007 = vmul.f32 %v7002, %v7006
      %vm7008 = vweird.f32 %v4937
      %vm7009 = vweird.f32 %v7002
      %vm7010 = vmor %vm7008, %vm7009
      %v7011 = vsel %vm7010, %v7002, %v7007
      %v7012 = vrsqrt.pop %v4938
      %v7013 = vmul.f32 %v7012, %v4938
      %v7014 = vmul.f32 %v7013, %v7012
      %v7015 = vmul.f32 0.5, %v7014
      %v7016 = vsub.f32 1.5, %v7015
      %v7017 = vmul.f32 %v7012, %v7016
      %vm7018 = vweird.f32 %v4938
      %vm7019 = vweird.f32 %v7012
      %vm7020 = vmor %vm7018, %vm7019
      %v7021 = vsel %vm7020, %v7012, %v7017
      %v7022 = vrsqrt.pop %v4939
      %v7023 = vmul.f32 %v7022, %v4939
      %v7024 = vmul.f32 %v7023, %v7022
      %v7025 = vmul.f32 0.5, %v7024
      %v7026 = vsub.f32 1.5, %v7025
      %v7027 = vmul.f32 %v7022, %v7026
      %vm7028 = vweird.f32 %v4939
      %vm7029 = vweird.f32 %v7022
      %vm7030 = vmor %vm7028, %vm7029
      %v7031 = vsel %vm7030, %v7022, %v7027
      %v7032 = vrsqrt.pop %v4940
      %v7033 = vmul.f32 %v7032, %v4940
      %v7034 = vmul.f32 %v7033, %v7032
      %v7035 = vmul.f32 0.5, %v7034
      %v7036 = vsub.f32 1.5, %v7035
      %v7037 = vmul.f32 %v7032, %v7036
      %vm7038 = vweird.f32 %v4940
      %vm7039 = vweird.f32 %v7032
      %vm7040 = vmor %vm7038, %vm7039
      %v7041 = vsel %vm7040, %v7032, %v7037
      %v7042 = vrsqrt.pop %v4941
      %v7043 = vmul.f32 %v7042, %v4941
      %v7044 = vmul.f32 %v7043, %v7042
      %v7045 = vmul.f32 0.5, %v7044
      %v7046 = vsub.f32 1.5, %v7045
      %v7047 = vmul.f32 %v7042, %v7046
      %vm7048 = vweird.f32 %v4941
      %vm7049 = vweird.f32 %v7042
      %vm7050 = vmor %vm7048, %vm7049
      %v7051 = vsel %vm7050, %v7042, %v7047
      %v7052 = vrsqrt.pop %v4942
      %v7053 = vmul.f32 %v7052, %v4942
      %v7054 = vmul.f32 %v7053, %v7052
      %v7055 = vmul.f32 0.5, %v7054
      %v7056 = vsub.f32 1.5, %v7055
      %v7057 = vmul.f32 %v7052, %v7056
      %vm7058 = vweird.f32 %v4942
      %vm7059 = vweird.f32 %v7052
      %vm7060 = vmor %vm7058, %vm7059
      %v7061 = vsel %vm7060, %v7052, %v7057
      %v7062 = vrsqrt.pop %v4943
      %v7063 = vmul.f32 %v7062, %v4943
      %v7064 = vmul.f32 %v7063, %v7062
      %v7065 = vmul.f32 0.5, %v7064
      %v7066 = vsub.f32 1.5, %v7065
      %v7067 = vmul.f32 %v7062, %v7066
      %vm7068 = vweird.f32 %v4943
      %vm7069 = vweird.f32 %v7062
      %vm7070 = vmor %vm7068, %vm7069
      %v7071 = vsel %vm7070, %v7062, %v7067
      %v7072 = vrsqrt.pop %v4944
      %v7073 = vmul.f32 %v7072, %v4944
      %v7074 = vmul.f32 %v7073, %v7072
      %v7075 = vmul.f32 0.5, %v7074
      %v7076 = vsub.f32 1.5, %v7075
      %v7077 = vmul.f32 %v7072, %v7076
      %vm7078 = vweird.f32 %v4944
      %vm7079 = vweird.f32 %v7072
      %vm7080 = vmor %vm7078, %vm7079
      %v7081 = vsel %vm7080, %v7072, %v7077
      %v7082 = vrsqrt.pop %v4945
      %v7083 = vmul.f32 %v7082, %v4945
      %v7084 = vmul.f32 %v7083, %v7082
      %v7085 = vmul.f32 0.5, %v7084
      %v7086 = vsub.f32 1.5, %v7085
      %v7087 = vmul.f32 %v7082, %v7086
      %vm7088 = vweird.f32 %v4945
      %vm7089 = vweird.f32 %v7082
      %vm7090 = vmor %vm7088, %vm7089
      %v7091 = vsel %vm7090, %v7082, %v7087
      %v7092 = vrsqrt.pop %v4946
      %v7093 = vmul.f32 %v7092, %v4946
      %v7094 = vmul.f32 %v7093, %v7092
      %v7095 = vmul.f32 0.5, %v7094
      %v7096 = vsub.f32 1.5, %v7095
      %v7097 = vmul.f32 %v7092, %v7096
      %vm7098 = vweird.f32 %v4946
      %vm7099 = vweird.f32 %v7092
      %vm7100 = vmor %vm7098, %vm7099
      %v7101 = vsel %vm7100, %v7092, %v7097
      %v7102 = vrsqrt.pop %v4947
      %v7103 = vmul.f32 %v7102, %v4947
      %v7104 = vmul.f32 %v7103, %v7102
      %v7105 = vmul.f32 0.5, %v7104
      %v7106 = vsub.f32 1.5, %v7105
      %v7107 = vmul.f32 %v7102, %v7106
      %vm7108 = vweird.f32 %v4947
      %vm7109 = vweird.f32 %v7102
      %vm7110 = vmor %vm7108, %vm7109
      %v7111 = vsel %vm7110, %v7102, %v7107
      %v7112 = vrsqrt.pop %v4948
      %v7113 = vmul.f32 %v7112, %v4948
      %v7114 = vmul.f32 %v7113, %v7112
      %v7115 = vmul.f32 0.5, %v7114
      %v7116 = vsub.f32 1.5, %v7115
      %v7117 = vmul.f32 %v7112, %v7116
      %vm7118 = vweird.f32 %v4948
      %vm7119 = vweird.f32 %v7112
      %vm7120 = vmor %vm7118, %vm7119
      %v7121 = vsel %vm7120, %v7112, %v7117
      %v7122 = vrsqrt.pop %v4949
      %v7123 = vmul.f32 %v7122, %v4949
      %v7124 = vmul.f32 %v7123, %v7122
      %v7125 = vmul.f32 0.5, %v7124
      %v7126 = vsub.f32 1.5, %v7125
      %v7127 = vmul.f32 %v7122, %v7126
      %vm7128 = vweird.f32 %v4949
      %vm7129 = vweird.f32 %v7122
      %vm7130 = vmor %vm7128, %vm7129
      %v7131 = vsel %vm7130, %v7122, %v7127
      %v7132 = vrsqrt.pop %v4950
      %v7133 = vmul.f32 %v7132, %v4950
      %v7134 = vmul.f32 %v7133, %v7132
      %v7135 = vmul.f32 0.5, %v7134
      %v7136 = vsub.f32 1.5, %v7135
      %v7137 = vmul.f32 %v7132, %v7136
      %vm7138 = vweird.f32 %v4950
      %vm7139 = vweird.f32 %v7132
      %vm7140 = vmor %vm7138, %vm7139
      %v7141 = vsel %vm7140, %v7132, %v7137
      %v7142 = vrsqrt.pop %v4951
      %v7143 = vmul.f32 %v7142, %v4951
      %v7144 = vmul.f32 %v7143, %v7142
      %v7145 = vmul.f32 0.5, %v7144
      %v7146 = vsub.f32 1.5, %v7145
      %v7147 = vmul.f32 %v7142, %v7146
      %vm7148 = vweird.f32 %v4951
      %vm7149 = vweird.f32 %v7142
      %vm7150 = vmor %vm7148, %vm7149
      %v7151 = vsel %vm7150, %v7142, %v7147
      %v7152 = vrsqrt.pop %v4952
      %v7153 = vmul.f32 %v7152, %v4952
      %v7154 = vmul.f32 %v7153, %v7152
      %v7155 = vmul.f32 0.5, %v7154
      %v7156 = vsub.f32 1.5, %v7155
      %v7157 = vmul.f32 %v7152, %v7156
      %vm7158 = vweird.f32 %v4952
      %vm7159 = vweird.f32 %v7152
      %vm7160 = vmor %vm7158, %vm7159
      %v7161 = vsel %vm7160, %v7152, %v7157
      %v7162 = vrsqrt.pop %v4953
      %v7163 = vmul.f32 %v7162, %v4953
      %v7164 = vmul.f32 %v7163, %v7162
      %v7165 = vmul.f32 0.5, %v7164
      %v7166 = vsub.f32 1.5, %v7165
      %v7167 = vmul.f32 %v7162, %v7166
      %vm7168 = vweird.f32 %v4953
      %vm7169 = vweird.f32 %v7162
      %vm7170 = vmor %vm7168, %vm7169
      %v7171 = vsel %vm7170, %v7162, %v7167
      %v7172 = vrsqrt.pop %v4954
      %v7173 = vmul.f32 %v7172, %v4954
      %v7174 = vmul.f32 %v7173, %v7172
      %v7175 = vmul.f32 0.5, %v7174
      %v7176 = vsub.f32 1.5, %v7175
      %v7177 = vmul.f32 %v7172, %v7176
      %vm7178 = vweird.f32 %v4954
      %vm7179 = vweird.f32 %v7172
      %vm7180 = vmor %vm7178, %vm7179
      %v7181 = vsel %vm7180, %v7172, %v7177
      %v7182 = vrsqrt.pop %v4955
      %v7183 = vmul.f32 %v7182, %v4955
      %v7184 = vmul.f32 %v7183, %v7182
      %v7185 = vmul.f32 0.5, %v7184
      %v7186 = vsub.f32 1.5, %v7185
      %v7187 = vmul.f32 %v7182, %v7186
      %vm7188 = vweird.f32 %v4955
      %vm7189 = vweird.f32 %v7182
      %vm7190 = vmor %vm7188, %vm7189
      %v7191 = vsel %vm7190, %v7182, %v7187
      %v7192 = vrsqrt.pop %v4956
      %v7193 = vmul.f32 %v7192, %v4956
      %v7194 = vmul.f32 %v7193, %v7192
      %v7195 = vmul.f32 0.5, %v7194
      %v7196 = vsub.f32 1.5, %v7195
      %v7197 = vmul.f32 %v7192, %v7196
      %vm7198 = vweird.f32 %v4956
      %vm7199 = vweird.f32 %v7192
      %vm7200 = vmor %vm7198, %vm7199
      %v7201 = vsel %vm7200, %v7192, %v7197
      %v7202 = vrsqrt.pop %v4957
      %v7203 = vmul.f32 %v7202, %v4957
      %v7204 = vmul.f32 %v7203, %v7202
      %v7205 = vmul.f32 0.5, %v7204
      %v7206 = vsub.f32 1.5, %v7205
      %v7207 = vmul.f32 %v7202, %v7206
      %vm7208 = vweird.f32 %v4957
      %vm7209 = vweird.f32 %v7202
      %vm7210 = vmor %vm7208, %vm7209
      %v7211 = vsel %vm7210, %v7202, %v7207
      %v7212 = vrsqrt.pop %v4958
      %v7213 = vmul.f32 %v7212, %v4958
      %v7214 = vmul.f32 %v7213, %v7212
      %v7215 = vmul.f32 0.5, %v7214
      %v7216 = vsub.f32 1.5, %v7215
      %v7217 = vmul.f32 %v7212, %v7216
      %vm7218 = vweird.f32 %v4958
      %vm7219 = vweird.f32 %v7212
      %vm7220 = vmor %vm7218, %vm7219
      %v7221 = vsel %vm7220, %v7212, %v7217
      %v7222 = vrsqrt.pop %v4959
      %v7223 = vmul.f32 %v7222, %v4959
      %v7224 = vmul.f32 %v7223, %v7222
      %v7225 = vmul.f32 0.5, %v7224
      %v7226 = vsub.f32 1.5, %v7225
      %v7227 = vmul.f32 %v7222, %v7226
      %vm7228 = vweird.f32 %v4959
      %vm7229 = vweird.f32 %v7222
      %vm7230 = vmor %vm7228, %vm7229
      %v7231 = vsel %vm7230, %v7222, %v7227
      %v7232 = vrsqrt.pop %v4960
      %v7233 = vmul.f32 %v7232, %v4960
      %v7234 = vmul.f32 %v7233, %v7232
      %v7235 = vmul.f32 0.5, %v7234
      %v7236 = vsub.f32 1.5, %v7235
      %v7237 = vmul.f32 %v7232, %v7236
      %vm7238 = vweird.f32 %v4960
      %vm7239 = vweird.f32 %v7232
      %vm7240 = vmor %vm7238, %vm7239
      %v7241 = vsel %vm7240, %v7232, %v7237
      %v7242 = vrsqrt.pop %v4961
      %v7243 = vmul.f32 %v7242, %v4961
      %v7244 = vmul.f32 %v7243, %v7242
      %v7245 = vmul.f32 0.5, %v7244
      %v7246 = vsub.f32 1.5, %v7245
      %v7247 = vmul.f32 %v7242, %v7246
      %vm7248 = vweird.f32 %v4961
      %vm7249 = vweird.f32 %v7242
      %vm7250 = vmor %vm7248, %vm7249
      %v7251 = vsel %vm7250, %v7242, %v7247
      %v7252 = vrsqrt.pop %v4962
      %v7253 = vmul.f32 %v7252, %v4962
      %v7254 = vmul.f32 %v7253, %v7252
      %v7255 = vmul.f32 0.5, %v7254
      %v7256 = vsub.f32 1.5, %v7255
      %v7257 = vmul.f32 %v7252, %v7256
      %vm7258 = vweird.f32 %v4962
      %vm7259 = vweird.f32 %v7252
      %vm7260 = vmor %vm7258, %vm7259
      %v7261 = vsel %vm7260, %v7252, %v7257
      %v7262 = vrsqrt.pop %v4963
      %v7263 = vmul.f32 %v7262, %v4963
      %v7264 = vmul.f32 %v7263, %v7262
      %v7265 = vmul.f32 0.5, %v7264
      %v7266 = vsub.f32 1.5, %v7265
      %v7267 = vmul.f32 %v7262, %v7266
      %vm7268 = vweird.f32 %v4963
      %vm7269 = vweird.f32 %v7262
      %vm7270 = vmor %vm7268, %vm7269
      %v7271 = vsel %vm7270, %v7262, %v7267
      %v7272 = vrsqrt.pop %v4964
      %v7273 = vmul.f32 %v7272, %v4964
      %v7274 = vmul.f32 %v7273, %v7272
      %v7275 = vmul.f32 0.5, %v7274
      %v7276 = vsub.f32 1.5, %v7275
      %v7277 = vmul.f32 %v7272, %v7276
      %vm7278 = vweird.f32 %v4964
      %vm7279 = vweird.f32 %v7272
      %vm7280 = vmor %vm7278, %vm7279
      %v7281 = vsel %vm7280, %v7272, %v7277
      %v7282 = vrsqrt.pop %v4965
      %v7283 = vmul.f32 %v7282, %v4965
      %v7284 = vmul.f32 %v7283, %v7282
      %v7285 = vmul.f32 0.5, %v7284
      %v7286 = vsub.f32 1.5, %v7285
      %v7287 = vmul.f32 %v7282, %v7286
      %vm7288 = vweird.f32 %v4965
      %vm7289 = vweird.f32 %v7282
      %vm7290 = vmor %vm7288, %vm7289
      %v7291 = vsel %vm7290, %v7282, %v7287
      %v7292 = vrsqrt.pop %v4966
      %v7293 = vmul.f32 %v7292, %v4966
      %v7294 = vmul.f32 %v7293, %v7292
      %v7295 = vmul.f32 0.5, %v7294
      %v7296 = vsub.f32 1.5, %v7295
      %v7297 = vmul.f32 %v7292, %v7296
      %vm7298 = vweird.f32 %v4966
      %vm7299 = vweird.f32 %v7292
      %vm7300 = vmor %vm7298, %vm7299
      %v7301 = vsel %vm7300, %v7292, %v7297
      %v7302 = vrsqrt.pop %v4967
      %v7303 = vmul.f32 %v7302, %v4967
      %v7304 = vmul.f32 %v7303, %v7302
      %v7305 = vmul.f32 0.5, %v7304
      %v7306 = vsub.f32 1.5, %v7305
      %v7307 = vmul.f32 %v7302, %v7306
      %vm7308 = vweird.f32 %v4967
      %vm7309 = vweird.f32 %v7302
      %vm7310 = vmor %vm7308, %vm7309
      %v7311 = vsel %vm7310, %v7302, %v7307
      %v7312 = vrsqrt.pop %v4968
      %v7313 = vmul.f32 %v7312, %v4968
      %v7314 = vmul.f32 %v7313, %v7312
      %v7315 = vmul.f32 0.5, %v7314
      %v7316 = vsub.f32 1.5, %v7315
      %v7317 = vmul.f32 %v7312, %v7316
      %vm7318 = vweird.f32 %v4968
      %vm7319 = vweird.f32 %v7312
      %vm7320 = vmor %vm7318, %vm7319
      %v7321 = vsel %vm7320, %v7312, %v7317
      %v7322 = vrsqrt.pop %v4969
      %v7323 = vmul.f32 %v7322, %v4969
      %v7324 = vmul.f32 %v7323, %v7322
      %v7325 = vmul.f32 0.5, %v7324
      %v7326 = vsub.f32 1.5, %v7325
      %v7327 = vmul.f32 %v7322, %v7326
      %vm7328 = vweird.f32 %v4969
      %vm7329 = vweird.f32 %v7322
      %vm7330 = vmor %vm7328, %vm7329
      %v7331 = vsel %vm7330, %v7322, %v7327
      %v7332 = vrsqrt.pop %v4970
      %v7333 = vmul.f32 %v7332, %v4970
      %v7334 = vmul.f32 %v7333, %v7332
      %v7335 = vmul.f32 0.5, %v7334
      %v7336 = vsub.f32 1.5, %v7335
      %v7337 = vmul.f32 %v7332, %v7336
      %vm7338 = vweird.f32 %v4970
      %vm7339 = vweird.f32 %v7332
      %vm7340 = vmor %vm7338, %vm7339
      %v7341 = vsel %vm7340, %v7332, %v7337
      %v7342 = vrsqrt.pop %v4971
      %v7343 = vmul.f32 %v7342, %v4971
      %v7344 = vmul.f32 %v7343, %v7342
      %v7345 = vmul.f32 0.5, %v7344
      %v7346 = vsub.f32 1.5, %v7345
      %v7347 = vmul.f32 %v7342, %v7346
      %vm7348 = vweird.f32 %v4971
      %vm7349 = vweird.f32 %v7342
      %vm7350 = vmor %vm7348, %vm7349
      %v7351 = vsel %vm7350, %v7342, %v7347
      %v7352 = vrsqrt.pop %v4972
      %v7353 = vmul.f32 %v7352, %v4972
      %v7354 = vmul.f32 %v7353, %v7352
      %v7355 = vmul.f32 0.5, %v7354
      %v7356 = vsub.f32 1.5, %v7355
      %v7357 = vmul.f32 %v7352, %v7356
      %vm7358 = vweird.f32 %v4972
      %vm7359 = vweird.f32 %v7352
      %vm7360 = vmor %vm7358, %vm7359
      %v7361 = vsel %vm7360, %v7352, %v7357
      %v7362 = vrsqrt.pop %v4973
      %v7363 = vmul.f32 %v7362, %v4973
      %v7364 = vmul.f32 %v7363, %v7362
      %v7365 = vmul.f32 0.5, %v7364
      %v7366 = vsub.f32 1.5, %v7365
      %v7367 = vmul.f32 %v7362, %v7366
      %vm7368 = vweird.f32 %v4973
      %vm7369 = vweird.f32 %v7362
      %vm7370 = vmor %vm7368, %vm7369
      %v7371 = vsel %vm7370, %v7362, %v7367
      %v7372 = vrsqrt.pop %v4974
      %v7373 = vmul.f32 %v7372, %v4974
      %v7374 = vmul.f32 %v7373, %v7372
      %v7375 = vmul.f32 0.5, %v7374
      %v7376 = vsub.f32 1.5, %v7375
      %v7377 = vmul.f32 %v7372, %v7376
      %vm7378 = vweird.f32 %v4974
      %vm7379 = vweird.f32 %v7372
      %vm7380 = vmor %vm7378, %vm7379
      %v7381 = vsel %vm7380, %v7372, %v7377
      %v7382 = vrsqrt.pop %v4975
      %v7383 = vmul.f32 %v7382, %v4975
      %v7384 = vmul.f32 %v7383, %v7382
      %v7385 = vmul.f32 0.5, %v7384
      %v7386 = vsub.f32 1.5, %v7385
      %v7387 = vmul.f32 %v7382, %v7386
      %vm7388 = vweird.f32 %v4975
      %vm7389 = vweird.f32 %v7382
      %vm7390 = vmor %vm7388, %vm7389
      %v7391 = vsel %vm7390, %v7382, %v7387
      %v7392 = vrsqrt.pop %v4976
      %v7393 = vmul.f32 %v7392, %v4976
      %v7394 = vmul.f32 %v7393, %v7392
      %v7395 = vmul.f32 0.5, %v7394
      %v7396 = vsub.f32 1.5, %v7395
      %v7397 = vmul.f32 %v7392, %v7396
      %vm7398 = vweird.f32 %v4976
      %vm7399 = vweird.f32 %v7392
      %vm7400 = vmor %vm7398, %vm7399
      %v7401 = vsel %vm7400, %v7392, %v7397
      %v7402 = vrsqrt.pop %v4977
      %v7403 = vmul.f32 %v7402, %v4977
      %v7404 = vmul.f32 %v7403, %v7402
      %v7405 = vmul.f32 0.5, %v7404
      %v7406 = vsub.f32 1.5, %v7405
      %v7407 = vmul.f32 %v7402, %v7406
      %vm7408 = vweird.f32 %v4977
      %vm7409 = vweird.f32 %v7402
      %vm7410 = vmor %vm7408, %vm7409
      %v7411 = vsel %vm7410, %v7402, %v7407
      %v7412 = vrsqrt.pop %v4978
      %v7413 = vmul.f32 %v7412, %v4978
      %v7414 = vmul.f32 %v7413, %v7412
      %v7415 = vmul.f32 0.5, %v7414
      %v7416 = vsub.f32 1.5, %v7415
      %v7417 = vmul.f32 %v7412, %v7416
      %vm7418 = vweird.f32 %v4978
      %vm7419 = vweird.f32 %v7412
      %vm7420 = vmor %vm7418, %vm7419
      %v7421 = vsel %vm7420, %v7412, %v7417
      %v7422 = vrsqrt.pop %v4979
      %v7423 = vmul.f32 %v7422, %v4979
      %v7424 = vmul.f32 %v7423, %v7422
      %v7425 = vmul.f32 0.5, %v7424
      %v7426 = vsub.f32 1.5, %v7425
      %v7427 = vmul.f32 %v7422, %v7426
      %vm7428 = vweird.f32 %v4979
      %vm7429 = vweird.f32 %v7422
      %vm7430 = vmor %vm7428, %vm7429
      %v7431 = vsel %vm7430, %v7422, %v7427
      %v7432 = vrsqrt.pop %v4980
      %v7433 = vmul.f32 %v7432, %v4980
      %v7434 = vmul.f32 %v7433, %v7432
      %v7435 = vmul.f32 0.5, %v7434
      %v7436 = vsub.f32 1.5, %v7435
      %v7437 = vmul.f32 %v7432, %v7436
      %vm7438 = vweird.f32 %v4980
      %vm7439 = vweird.f32 %v7432
      %vm7440 = vmor %vm7438, %vm7439
      %v7441 = vsel %vm7440, %v7432, %v7437
      %v7442 = vrsqrt.pop %v4981
      %v7443 = vmul.f32 %v7442, %v4981
      %v7444 = vmul.f32 %v7443, %v7442
      %v7445 = vmul.f32 0.5, %v7444
      %v7446 = vsub.f32 1.5, %v7445
      %v7447 = vmul.f32 %v7442, %v7446
      %vm7448 = vweird.f32 %v4981
      %vm7449 = vweird.f32 %v7442
      %vm7450 = vmor %vm7448, %vm7449
      %v7451 = vsel %vm7450, %v7442, %v7447
      %v7452 = vrsqrt.pop %v4982
      %v7453 = vmul.f32 %v7452, %v4982
      %v7454 = vmul.f32 %v7453, %v7452
      %v7455 = vmul.f32 0.5, %v7454
      %v7456 = vsub.f32 1.5, %v7455
      %v7457 = vmul.f32 %v7452, %v7456
      %vm7458 = vweird.f32 %v4982
      %vm7459 = vweird.f32 %v7452
      %vm7460 = vmor %vm7458, %vm7459
      %v7461 = vsel %vm7460, %v7452, %v7457
      %v7462 = vrsqrt.pop %v4983
      %v7463 = vmul.f32 %v7462, %v4983
      %v7464 = vmul.f32 %v7463, %v7462
      %v7465 = vmul.f32 0.5, %v7464
      %v7466 = vsub.f32 1.5, %v7465
      %v7467 = vmul.f32 %v7462, %v7466
      %vm7468 = vweird.f32 %v4983
      %vm7469 = vweird.f32 %v7462
      %vm7470 = vmor %vm7468, %vm7469
      %v7471 = vsel %vm7470, %v7462, %v7467
      %v7472 = vrsqrt.pop %v4984
      %v7473 = vmul.f32 %v7472, %v4984
      %v7474 = vmul.f32 %v7473, %v7472
      %v7475 = vmul.f32 0.5, %v7474
      %v7476 = vsub.f32 1.5, %v7475
      %v7477 = vmul.f32 %v7472, %v7476
      %vm7478 = vweird.f32 %v4984
      %vm7479 = vweird.f32 %v7472
      %vm7480 = vmor %vm7478, %vm7479
      %v7481 = vsel %vm7480, %v7472, %v7477
      %v7482 = vrsqrt.pop %v4985
      %v7483 = vmul.f32 %v7482, %v4985
      %v7484 = vmul.f32 %v7483, %v7482
      %v7485 = vmul.f32 0.5, %v7484
      %v7486 = vsub.f32 1.5, %v7485
      %v7487 = vmul.f32 %v7482, %v7486
      %vm7488 = vweird.f32 %v4985
      %vm7489 = vweird.f32 %v7482
      %vm7490 = vmor %vm7488, %vm7489
      %v7491 = vsel %vm7490, %v7482, %v7487
      %v7492 = vrsqrt.pop %v4986
      %v7493 = vmul.f32 %v7492, %v4986
      %v7494 = vmul.f32 %v7493, %v7492
      %v7495 = vmul.f32 0.5, %v7494
      %v7496 = vsub.f32 1.5, %v7495
      %v7497 = vmul.f32 %v7492, %v7496
      %vm7498 = vweird.f32 %v4986
      %vm7499 = vweird.f32 %v7492
      %vm7500 = vmor %vm7498, %vm7499
      %v7501 = vsel %vm7500, %v7492, %v7497
      %v7502 = vrsqrt.pop %v4987
      %v7503 = vmul.f32 %v7502, %v4987
      %v7504 = vmul.f32 %v7503, %v7502
      %v7505 = vmul.f32 0.5, %v7504
      %v7506 = vsub.f32 1.5, %v7505
      %v7507 = vmul.f32 %v7502, %v7506
      %vm7508 = vweird.f32 %v4987
      %vm7509 = vweird.f32 %v7502
      %vm7510 = vmor %vm7508, %vm7509
      %v7511 = vsel %vm7510, %v7502, %v7507
      %v7512 = vrsqrt.pop %v4988
      %v7513 = vmul.f32 %v7512, %v4988
      %v7514 = vmul.f32 %v7513, %v7512
      %v7515 = vmul.f32 0.5, %v7514
      %v7516 = vsub.f32 1.5, %v7515
      %v7517 = vmul.f32 %v7512, %v7516
      %vm7518 = vweird.f32 %v4988
      %vm7519 = vweird.f32 %v7512
      %vm7520 = vmor %vm7518, %vm7519
      %v7521 = vsel %vm7520, %v7512, %v7517
      %v7522 = vrsqrt.pop %v4989
      %v7523 = vmul.f32 %v7522, %v4989
      %v7524 = vmul.f32 %v7523, %v7522
      %v7525 = vmul.f32 0.5, %v7524
      %v7526 = vsub.f32 1.5, %v7525
      %v7527 = vmul.f32 %v7522, %v7526
      %vm7528 = vweird.f32 %v4989
      %vm7529 = vweird.f32 %v7522
      %vm7530 = vmor %vm7528, %vm7529
      %v7531 = vsel %vm7530, %v7522, %v7527
      %v7532 = vrsqrt.pop %v4990
      %v7533 = vmul.f32 %v7532, %v4990
      %v7534 = vmul.f32 %v7533, %v7532
      %v7535 = vmul.f32 0.5, %v7534
      %v7536 = vsub.f32 1.5, %v7535
      %v7537 = vmul.f32 %v7532, %v7536
      %vm7538 = vweird.f32 %v4990
      %vm7539 = vweird.f32 %v7532
      %vm7540 = vmor %vm7538, %vm7539
      %v7541 = vsel %vm7540, %v7532, %v7537
      %v7542 = vrsqrt.pop %v4991
      %v7543 = vmul.f32 %v7542, %v4991
      %v7544 = vmul.f32 %v7543, %v7542
      %v7545 = vmul.f32 0.5, %v7544
      %v7546 = vsub.f32 1.5, %v7545
      %v7547 = vmul.f32 %v7542, %v7546
      %vm7548 = vweird.f32 %v4991
      %vm7549 = vweird.f32 %v7542
      %vm7550 = vmor %vm7548, %vm7549
      %v7551 = vsel %vm7550, %v7542, %v7547
      %v7552 = vmul.f32 %v3200, %v5001
      %v7553 = vmul.f32 %v3201, %v5011
      %v7554 = vmul.f32 %v3202, %v5021
      %v7555 = vmul.f32 %v3203, %v5031
      %v7556 = vmul.f32 %v3204, %v5041
      %v7557 = vmul.f32 %v3205, %v5051
      %v7558 = vmul.f32 %v3206, %v5061
      %v7559 = vmul.f32 %v3207, %v5071
      %v7560 = vmul.f32 %v3208, %v5081
      %v7561 = vmul.f32 %v3209, %v5091
      %v7562 = vmul.f32 %v3210, %v5101
      %v7563 = vmul.f32 %v3211, %v5111
      %v7564 = vmul.f32 %v3212, %v5121
      %v7565 = vmul.f32 %v3213, %v5131
      %v7566 = vmul.f32 %v3214, %v5141
      %v7567 = vmul.f32 %v3215, %v5151
      %v7568 = vmul.f32 %v3216, %v5161
      %v7569 = vmul.f32 %v3217, %v5171
      %v7570 = vmul.f32 %v3218, %v5181
      %v7571 = vmul.f32 %v3219, %v5191
      %v7572 = vmul.f32 %v3220, %v5201
      %v7573 = vmul.f32 %v3221, %v5211
      %v7574 = vmul.f32 %v3222, %v5221
      %v7575 = vmul.f32 %v3223, %v5231
      %v7576 = vmul.f32 %v3224, %v5241
      %v7577 = vmul.f32 %v3225, %v5251
      %v7578 = vmul.f32 %v3226, %v5261
      %v7579 = vmul.f32 %v3227, %v5271
      %v7580 = vmul.f32 %v3228, %v5281
      %v7581 = vmul.f32 %v3229, %v5291
      %v7582 = vmul.f32 %v3230, %v5301
      %v7583 = vmul.f32 %v3231, %v5311
      %v7584 = vmul.f32 %v3232, %v5321
      %v7585 = vmul.f32 %v3233, %v5331
      %v7586 = vmul.f32 %v3234, %v5341
      %v7587 = vmul.f32 %v3235, %v5351
      %v7588 = vmul.f32 %v3236, %v5361
      %v7589 = vmul.f32 %v3237, %v5371
      %v7590 = vmul.f32 %v3238, %v5381
      %v7591 = vmul.f32 %v3239, %v5391
      %v7592 = vmul.f32 %v3240, %v5401
      %v7593 = vmul.f32 %v3241, %v5411
      %v7594 = vmul.f32 %v3242, %v5421
      %v7595 = vmul.f32 %v3243, %v5431
      %v7596 = vmul.f32 %v3244, %v5441
      %v7597 = vmul.f32 %v3245, %v5451
      %v7598 = vmul.f32 %v3246, %v5461
      %v7599 = vmul.f32 %v3247, %v5471
      %v7600 = vmul.f32 %v3248, %v5481
      %v7601 = vmul.f32 %v3249, %v5491
      %v7602 = vmul.f32 %v3250, %v5501
      %v7603 = vmul.f32 %v3251, %v5511
      %v7604 = vmul.f32 %v3252, %v5521
      %v7605 = vmul.f32 %v3253, %v5531
      %v7606 = vmul.f32 %v3254, %v5541
      %v7607 = vmul.f32 %v3255, %v5551
      %v7608 = vmul.f32 %v3256, %v5561
      %v7609 = vmul.f32 %v3257, %v5571
      %v7610 = vmul.f32 %v3258, %v5581
      %v7611 = vmul.f32 %v3259, %v5591
      %v7612 = vmul.f32 %v3260, %v5601
      %v7613 = vmul.f32 %v3261, %v5611
      %v7614 = vmul.f32 %v3262, %v5621
      %v7615 = vmul.f32 %v3263, %v5631
      %v7616 = vmul.f32 %v3264, %v5641
      %v7617 = vmul.f32 %v3265, %v5651
      %v7618 = vmul.f32 %v3266, %v5661
      %v7619 = vmul.f32 %v3267, %v5671
      %v7620 = vmul.f32 %v3268, %v5681
      %v7621 = vmul.f32 %v3269, %v5691
      %v7622 = vmul.f32 %v3270, %v5701
      %v7623 = vmul.f32 %v3271, %v5711
      %v7624 = vmul.f32 %v3272, %v5721
      %v7625 = vmul.f32 %v3273, %v5731
      %v7626 = vmul.f32 %v3274, %v5741
      %v7627 = vmul.f32 %v3275, %v5751
      %v7628 = vmul.f32 %v3276, %v5761
      %v7629 = vmul.f32 %v3277, %v5771
      %v7630 = vmul.f32 %v3278, %v5781
      %v7631 = vmul.f32 %v3279, %v5791
      %v7632 = vmul.f32 %v3280, %v5801
      %v7633 = vmul.f32 %v3281, %v5811
      %v7634 = vmul.f32 %v3282, %v5821
      %v7635 = vmul.f32 %v3283, %v5831
      %v7636 = vmul.f32 %v3284, %v5841
      %v7637 = vmul.f32 %v3285, %v5851
      %v7638 = vmul.f32 %v3286, %v5861
      %v7639 = vmul.f32 %v3287, %v5871
      %v7640 = vmul.f32 %v3288, %v5881
      %v7641 = vmul.f32 %v3289, %v5891
      %v7642 = vmul.f32 %v3290, %v5901
      %v7643 = vmul.f32 %v3291, %v5911
      %v7644 = vmul.f32 %v3292, %v5921
      %v7645 = vmul.f32 %v3293, %v5931
      %v7646 = vmul.f32 %v3294, %v5941
      %v7647 = vmul.f32 %v3295, %v5951
      %v7648 = vmul.f32 %v3296, %v5961
      %v7649 = vmul.f32 %v3297, %v5971
      %v7650 = vmul.f32 %v3298, %v5981
      %v7651 = vmul.f32 %v3299, %v5991
      %v7652 = vmul.f32 %v3300, %v6001
      %v7653 = vmul.f32 %v3301, %v6011
      %v7654 = vmul.f32 %v3302, %v6021
      %v7655 = vmul.f32 %v3303, %v6031
      %v7656 = vmul.f32 %v3304, %v6041
      %v7657 = vmul.f32 %v3305, %v6051
      %v7658 = vmul.f32 %v3306, %v6061
      %v7659 = vmul.f32 %v3307, %v6071
      %v7660 = vmul.f32 %v3308, %v6081
      %v7661 = vmul.f32 %v3309, %v6091
      %v7662 = vmul.f32 %v3310, %v6101
      %v7663 = vmul.f32 %v3311, %v6111
      %v7664 = vmul.f32 %v3312, %v6121
      %v7665 = vmul.f32 %v3313, %v6131
      %v7666 = vmul.f32 %v3314, %v6141
      %v7667 = vmul.f32 %v3315, %v6151
      %v7668 = vmul.f32 %v3316, %v6161
      %v7669 = vmul.f32 %v3317, %v6171
      %v7670 = vmul.f32 %v3318, %v6181
      %v7671 = vmul.f32 %v3319, %v6191
      %v7672 = vmul.f32 %v3320, %v6201
      %v7673 = vmul.f32 %v3321, %v6211
      %v7674 = vmul.f32 %v3322, %v6221
      %v7675 = vmul.f32 %v3323, %v6231
      %v7676 = vmul.f32 %v3324, %v6241
      %v7677 = vmul.f32 %v3325, %v6251
      %v7678 = vmul.f32 %v3326, %v6261
      %v7679 = vmul.f32 %v3327, %v6271
      %v7680 = vmul.f32 %v3328, %v6281
      %v7681 = vmul.f32 %v3329, %v6291
      %v7682 = vmul.f32 %v3330, %v6301
      %v7683 = vmul.f32 %v3331, %v6311
      %v7684 = vmul.f32 %v3332, %v6321
      %v7685 = vmul.f32 %v3333, %v6331
      %v7686 = vmul.f32 %v3334, %v6341
      %v7687 = vmul.f32 %v3335, %v6351
      %v7688 = vmul.f32 %v3336, %v6361
      %v7689 = vmul.f32 %v3337, %v6371
      %v7690 = vmul.f32 %v3338, %v6381
      %v7691 = vmul.f32 %v3339, %v6391
      %v7692 = vmul.f32 %v3340, %v6401
      %v7693 = vmul.f32 %v3341, %v6411
      %v7694 = vmul.f32 %v3342, %v6421
      %v7695 = vmul.f32 %v3343, %v6431
      %v7696 = vmul.f32 %v3344, %v6441
      %v7697 = vmul.f32 %v3345, %v6451
      %v7698 = vmul.f32 %v3346, %v6461
      %v7699 = vmul.f32 %v3347, %v6471
      %v7700 = vmul.f32 %v3348, %v6481
      %v7701 = vmul.f32 %v3349, %v6491
      %v7702 = vmul.f32 %v3350, %v6501
      %v7703 = vmul.f32 %v3351, %v6511
      %v7704 = vmul.f32 %v3352, %v6521
      %v7705 = vmul.f32 %v3353, %v6531
      %v7706 = vmul.f32 %v3354, %v6541
      %v7707 = vmul.f32 %v3355, %v6551
      %v7708 = vmul.f32 %v3356, %v6561
      %v7709 = vmul.f32 %v3357, %v6571
      %v7710 = vmul.f32 %v3358, %v6581
      %v7711 = vmul.f32 %v3359, %v6591
      %v7712 = vmul.f32 %v3360, %v6601
      %v7713 = vmul.f32 %v3361, %v6611
      %v7714 = vmul.f32 %v3362, %v6621
      %v7715 = vmul.f32 %v3363, %v6631
      %v7716 = vmul.f32 %v3364, %v6641
      %v7717 = vmul.f32 %v3365, %v6651
      %v7718 = vmul.f32 %v3366, %v6661
      %v7719 = vmul.f32 %v3367, %v6671
      %v7720 = vmul.f32 %v3368, %v6681
      %v7721 = vmul.f32 %v3369, %v6691
      %v7722 = vmul.f32 %v3370, %v6701
      %v7723 = vmul.f32 %v3371, %v6711
      %v7724 = vmul.f32 %v3372, %v6721
      %v7725 = vmul.f32 %v3373, %v6731
      %v7726 = vmul.f32 %v3374, %v6741
      %v7727 = vmul.f32 %v3375, %v6751
      %v7728 = vmul.f32 %v3376, %v6761
      %v7729 = vmul.f32 %v3377, %v6771
      %v7730 = vmul.f32 %v3378, %v6781
      %v7731 = vmul.f32 %v3379, %v6791
      %v7732 = vmul.f32 %v3380, %v6801
      %v7733 = vmul.f32 %v3381, %v6811
      %v7734 = vmul.f32 %v3382, %v6821
      %v7735 = vmul.f32 %v3383, %v6831
      %v7736 = vmul.f32 %v3384, %v6841
      %v7737 = vmul.f32 %v3385, %v6851
      %v7738 = vmul.f32 %v3386, %v6861
      %v7739 = vmul.f32 %v3387, %v6871
      %v7740 = vmul.f32 %v3388, %v6881
      %v7741 = vmul.f32 %v3389, %v6891
      %v7742 = vmul.f32 %v3390, %v6901
      %v7743 = vmul.f32 %v3391, %v6911
      %v7744 = vmul.f32 %v3392, %v6921
      %v7745 = vmul.f32 %v3393, %v6931
      %v7746 = vmul.f32 %v3394, %v6941
      %v7747 = vmul.f32 %v3395, %v6951
      %v7748 = vmul.f32 %v3396, %v6961
      %v7749 = vmul.f32 %v3397, %v6971
      %v7750 = vmul.f32 %v3398, %v6981
      %v7751 = vmul.f32 %v3399, %v6991
      %v7752 = vmul.f32 %v3400, %v7001
      %v7753 = vmul.f32 %v3401, %v7011
      %v7754 = vmul.f32 %v3402, %v7021
      %v7755 = vmul.f32 %v3403, %v7031
      %v7756 = vmul.f32 %v3404, %v7041
      %v7757 = vmul.f32 %v3405, %v7051
      %v7758 = vmul.f32 %v3406, %v7061
      %v7759 = vmul.f32 %v3407, %v7071
      %v7760 = vmul.f32 %v3408, %v7081
      %v7761 = vmul.f32 %v3409, %v7091
      %v7762 = vmul.f32 %v3410, %v7101
      %v7763 = vmul.f32 %v3411, %v7111
      %v7764 = vmul.f32 %v3412, %v7121
      %v7765 = vmul.f32 %v3413, %v7131
      %v7766 = vmul.f32 %v3414, %v7141
      %v7767 = vmul.f32 %v3415, %v7151
      %v7768 = vmul.f32 %v3416, %v7161
      %v7769 = vmul.f32 %v3417, %v7171
      %v7770 = vmul.f32 %v3418, %v7181
      %v7771 = vmul.f32 %v3419, %v7191
      %v7772 = vmul.f32 %v3420, %v7201
      %v7773 = vmul.f32 %v3421, %v7211
      %v7774 = vmul.f32 %v3422, %v7221
      %v7775 = vmul.f32 %v3423, %v7231
      %v7776 = vmul.f32 %v3424, %v7241
      %v7777 = vmul.f32 %v3425, %v7251
      %v7778 = vmul.f32 %v3426, %v7261
      %v7779 = vmul.f32 %v3427, %v7271
      %v7780 = vmul.f32 %v3428, %v7281
      %v7781 = vmul.f32 %v3429, %v7291
      %v7782 = vmul.f32 %v3430, %v7301
      %v7783 = vmul.f32 %v3431, %v7311
      %v7784 = vmul.f32 %v3432, %v7321
      %v7785 = vmul.f32 %v3433, %v7331
      %v7786 = vmul.f32 %v3434, %v7341
      %v7787 = vmul.f32 %v3435, %v7351
      %v7788 = vmul.f32 %v3436, %v7361
      %v7789 = vmul.f32 %v3437, %v7371
      %v7790 = vmul.f32 %v3438, %v7381
      %v7791 = vmul.f32 %v3439, %v7391
      %v7792 = vmul.f32 %v3440, %v7401
      %v7793 = vmul.f32 %v3441, %v7411
      %v7794 = vmul.f32 %v3442, %v7421
      %v7795 = vmul.f32 %v3443, %v7431
      %v7796 = vmul.f32 %v3444, %v7441
      %v7797 = vmul.f32 %v3445, %v7451
      %v7798 = vmul.f32 %v3446, %v7461
      %v7799 = vmul.f32 %v3447, %v7471
      %v7800 = vmul.f32 %v3448, %v7481
      %v7801 = vmul.f32 %v3449, %v7491
      %v7802 = vmul.f32 %v3450, %v7501
      %v7803 = vmul.f32 %v3451, %v7511
      %v7804 = vmul.f32 %v3452, %v7521
      %v7805 = vmul.f32 %v3453, %v7531
      %v7806 = vmul.f32 %v3454, %v7541
      %v7807 = vmul.f32 %v3455, %v7551
      %v7808 = vld [vmem:[%s3] sm:$0x1]
      %v7810 = vperm.slane %v7808, 0
      %v7812 = vmul.f32 %v7552, %v7810
      %v7813 = vmul.f32 %v7553, %v7810
      %v7814 = vmul.f32 %v7554, %v7810
      %v7815 = vmul.f32 %v7555, %v7810
      %v7816 = vmul.f32 %v7556, %v7810
      %v7817 = vmul.f32 %v7557, %v7810
      %v7818 = vmul.f32 %v7558, %v7810
      %v7819 = vmul.f32 %v7559, %v7810
      %v7820 = vmul.f32 %v7560, %v7810
      %v7821 = vmul.f32 %v7561, %v7810
      %v7822 = vmul.f32 %v7562, %v7810
      %v7823 = vmul.f32 %v7563, %v7810
      %v7824 = vmul.f32 %v7564, %v7810
      %v7825 = vmul.f32 %v7565, %v7810
      %v7826 = vmul.f32 %v7566, %v7810
      %v7827 = vmul.f32 %v7567, %v7810
      %v7828 = vmul.f32 %v7568, %v7810
      %v7829 = vmul.f32 %v7569, %v7810
      %v7830 = vmul.f32 %v7570, %v7810
      %v7831 = vmul.f32 %v7571, %v7810
      %v7832 = vmul.f32 %v7572, %v7810
      %v7833 = vmul.f32 %v7573, %v7810
      %v7834 = vmul.f32 %v7574, %v7810
      %v7835 = vmul.f32 %v7575, %v7810
      %v7836 = vmul.f32 %v7576, %v7810
      %v7837 = vmul.f32 %v7577, %v7810
      %v7838 = vmul.f32 %v7578, %v7810
      %v7839 = vmul.f32 %v7579, %v7810
      %v7840 = vmul.f32 %v7580, %v7810
      %v7841 = vmul.f32 %v7581, %v7810
      %v7842 = vmul.f32 %v7582, %v7810
      %v7843 = vmul.f32 %v7583, %v7810
      %v7844 = vmul.f32 %v7584, %v7810
      %v7845 = vmul.f32 %v7585, %v7810
      %v7846 = vmul.f32 %v7586, %v7810
      %v7847 = vmul.f32 %v7587, %v7810
      %v7848 = vmul.f32 %v7588, %v7810
      %v7849 = vmul.f32 %v7589, %v7810
      %v7850 = vmul.f32 %v7590, %v7810
      %v7851 = vmul.f32 %v7591, %v7810
      %v7852 = vmul.f32 %v7592, %v7810
      %v7853 = vmul.f32 %v7593, %v7810
      %v7854 = vmul.f32 %v7594, %v7810
      %v7855 = vmul.f32 %v7595, %v7810
      %v7856 = vmul.f32 %v7596, %v7810
      %v7857 = vmul.f32 %v7597, %v7810
      %v7858 = vmul.f32 %v7598, %v7810
      %v7859 = vmul.f32 %v7599, %v7810
      %v7860 = vmul.f32 %v7600, %v7810
      %v7861 = vmul.f32 %v7601, %v7810
      %v7862 = vmul.f32 %v7602, %v7810
      %v7863 = vmul.f32 %v7603, %v7810
      %v7864 = vmul.f32 %v7604, %v7810
      %v7865 = vmul.f32 %v7605, %v7810
      %v7866 = vmul.f32 %v7606, %v7810
      %v7867 = vmul.f32 %v7607, %v7810
      %v7868 = vmul.f32 %v7608, %v7810
      %v7869 = vmul.f32 %v7609, %v7810
      %v7870 = vmul.f32 %v7610, %v7810
      %v7871 = vmul.f32 %v7611, %v7810
      %v7872 = vmul.f32 %v7612, %v7810
      %v7873 = vmul.f32 %v7613, %v7810
      %v7874 = vmul.f32 %v7614, %v7810
      %v7875 = vmul.f32 %v7615, %v7810
      %v7876 = vmul.f32 %v7616, %v7810
      %v7877 = vmul.f32 %v7617, %v7810
      %v7878 = vmul.f32 %v7618, %v7810
      %v7879 = vmul.f32 %v7619, %v7810
      %v7880 = vmul.f32 %v7620, %v7810
      %v7881 = vmul.f32 %v7621, %v7810
      %v7882 = vmul.f32 %v7622, %v7810
      %v7883 = vmul.f32 %v7623, %v7810
      %v7884 = vmul.f32 %v7624, %v7810
      %v7885 = vmul.f32 %v7625, %v7810
      %v7886 = vmul.f32 %v7626, %v7810
      %v7887 = vmul.f32 %v7627, %v7810
      %v7888 = vmul.f32 %v7628, %v7810
      %v7889 = vmul.f32 %v7629, %v7810
      %v7890 = vmul.f32 %v7630, %v7810
      %v7891 = vmul.f32 %v7631, %v7810
      %v7892 = vmul.f32 %v7632, %v7810
      %v7893 = vmul.f32 %v7633, %v7810
      %v7894 = vmul.f32 %v7634, %v7810
      %v7895 = vmul.f32 %v7635, %v7810
      %v7896 = vmul.f32 %v7636, %v7810
      %v7897 = vmul.f32 %v7637, %v7810
      %v7898 = vmul.f32 %v7638, %v7810
      %v7899 = vmul.f32 %v7639, %v7810
      %v7900 = vmul.f32 %v7640, %v7810
      %v7901 = vmul.f32 %v7641, %v7810
      %v7902 = vmul.f32 %v7642, %v7810
      %v7903 = vmul.f32 %v7643, %v7810
      %v7904 = vmul.f32 %v7644, %v7810
      %v7905 = vmul.f32 %v7645, %v7810
      %v7906 = vmul.f32 %v7646, %v7810
      %v7907 = vmul.f32 %v7647, %v7810
      %v7908 = vmul.f32 %v7648, %v7810
      %v7909 = vmul.f32 %v7649, %v7810
      %v7910 = vmul.f32 %v7650, %v7810
      %v7911 = vmul.f32 %v7651, %v7810
      %v7912 = vmul.f32 %v7652, %v7810
      %v7913 = vmul.f32 %v7653, %v7810
      %v7914 = vmul.f32 %v7654, %v7810
      %v7915 = vmul.f32 %v7655, %v7810
      %v7916 = vmul.f32 %v7656, %v7810
      %v7917 = vmul.f32 %v7657, %v7810
      %v7918 = vmul.f32 %v7658, %v7810
      %v7919 = vmul.f32 %v7659, %v7810
      %v7920 = vmul.f32 %v7660, %v7810
      %v7921 = vmul.f32 %v7661, %v7810
      %v7922 = vmul.f32 %v7662, %v7810
      %v7923 = vmul.f32 %v7663, %v7810
      %v7924 = vmul.f32 %v7664, %v7810
      %v7925 = vmul.f32 %v7665, %v7810
      %v7926 = vmul.f32 %v7666, %v7810
      %v7927 = vmul.f32 %v7667, %v7810
      %v7928 = vmul.f32 %v7668, %v7810
      %v7929 = vmul.f32 %v7669, %v7810
      %v7930 = vmul.f32 %v7670, %v7810
      %v7931 = vmul.f32 %v7671, %v7810
      %v7932 = vmul.f32 %v7672, %v7810
      %v7933 = vmul.f32 %v7673, %v7810
      %v7934 = vmul.f32 %v7674, %v7810
      %v7935 = vmul.f32 %v7675, %v7810
      %v7936 = vmul.f32 %v7676, %v7810
      %v7937 = vmul.f32 %v7677, %v7810
      %v7938 = vmul.f32 %v7678, %v7810
      %v7939 = vmul.f32 %v7679, %v7810
      %v7940 = vmul.f32 %v7680, %v7810
      %v7941 = vmul.f32 %v7681, %v7810
      %v7942 = vmul.f32 %v7682, %v7810
      %v7943 = vmul.f32 %v7683, %v7810
      %v7944 = vmul.f32 %v7684, %v7810
      %v7945 = vmul.f32 %v7685, %v7810
      %v7946 = vmul.f32 %v7686, %v7810
      %v7947 = vmul.f32 %v7687, %v7810
      %v7948 = vmul.f32 %v7688, %v7810
      %v7949 = vmul.f32 %v7689, %v7810
      %v7950 = vmul.f32 %v7690, %v7810
      %v7951 = vmul.f32 %v7691, %v7810
      %v7952 = vmul.f32 %v7692, %v7810
      %v7953 = vmul.f32 %v7693, %v7810
      %v7954 = vmul.f32 %v7694, %v7810
      %v7955 = vmul.f32 %v7695, %v7810
      %v7956 = vmul.f32 %v7696, %v7810
      %v7957 = vmul.f32 %v7697, %v7810
      %v7958 = vmul.f32 %v7698, %v7810
      %v7959 = vmul.f32 %v7699, %v7810
      %v7960 = vmul.f32 %v7700, %v7810
      %v7961 = vmul.f32 %v7701, %v7810
      %v7962 = vmul.f32 %v7702, %v7810
      %v7963 = vmul.f32 %v7703, %v7810
      %v7964 = vmul.f32 %v7704, %v7810
      %v7965 = vmul.f32 %v7705, %v7810
      %v7966 = vmul.f32 %v7706, %v7810
      %v7967 = vmul.f32 %v7707, %v7810
      %v7968 = vmul.f32 %v7708, %v7810
      %v7969 = vmul.f32 %v7709, %v7810
      %v7970 = vmul.f32 %v7710, %v7810
      %v7971 = vmul.f32 %v7711, %v7810
      %v7972 = vmul.f32 %v7712, %v7810
      %v7973 = vmul.f32 %v7713, %v7810
      %v7974 = vmul.f32 %v7714, %v7810
      %v7975 = vmul.f32 %v7715, %v7810
      %v7976 = vmul.f32 %v7716, %v7810
      %v7977 = vmul.f32 %v7717, %v7810
      %v7978 = vmul.f32 %v7718, %v7810
      %v7979 = vmul.f32 %v7719, %v7810
      %v7980 = vmul.f32 %v7720, %v7810
      %v7981 = vmul.f32 %v7721, %v7810
      %v7982 = vmul.f32 %v7722, %v7810
      %v7983 = vmul.f32 %v7723, %v7810
      %v7984 = vmul.f32 %v7724, %v7810
      %v7985 = vmul.f32 %v7725, %v7810
      %v7986 = vmul.f32 %v7726, %v7810
      %v7987 = vmul.f32 %v7727, %v7810
      %v7988 = vmul.f32 %v7728, %v7810
      %v7989 = vmul.f32 %v7729, %v7810
      %v7990 = vmul.f32 %v7730, %v7810
      %v7991 = vmul.f32 %v7731, %v7810
      %v7992 = vmul.f32 %v7732, %v7810
      %v7993 = vmul.f32 %v7733, %v7810
      %v7994 = vmul.f32 %v7734, %v7810
      %v7995 = vmul.f32 %v7735, %v7810
      %v7996 = vmul.f32 %v7736, %v7810
      %v7997 = vmul.f32 %v7737, %v7810
      %v7998 = vmul.f32 %v7738, %v7810
      %v7999 = vmul.f32 %v7739, %v7810
      %v8000 = vmul.f32 %v7740, %v7810
      %v8001 = vmul.f32 %v7741, %v7810
      %v8002 = vmul.f32 %v7742, %v7810
      %v8003 = vmul.f32 %v7743, %v7810
      %v8004 = vmul.f32 %v7744, %v7810
      %v8005 = vmul.f32 %v7745, %v7810
      %v8006 = vmul.f32 %v7746, %v7810
      %v8007 = vmul.f32 %v7747, %v7810
      %v8008 = vmul.f32 %v7748, %v7810
      %v8009 = vmul.f32 %v7749, %v7810
      %v8010 = vmul.f32 %v7750, %v7810
      %v8011 = vmul.f32 %v7751, %v7810
      %v8012 = vmul.f32 %v7752, %v7810
      %v8013 = vmul.f32 %v7753, %v7810
      %v8014 = vmul.f32 %v7754, %v7810
      %v8015 = vmul.f32 %v7755, %v7810
      %v8016 = vmul.f32 %v7756, %v7810
      %v8017 = vmul.f32 %v7757, %v7810
      %v8018 = vmul.f32 %v7758, %v7810
      %v8019 = vmul.f32 %v7759, %v7810
      %v8020 = vmul.f32 %v7760, %v7810
      %v8021 = vmul.f32 %v7761, %v7810
      %v8022 = vmul.f32 %v7762, %v7810
      %v8023 = vmul.f32 %v7763, %v7810
      %v8024 = vmul.f32 %v7764, %v7810
      %v8025 = vmul.f32 %v7765, %v7810
      %v8026 = vmul.f32 %v7766, %v7810
      %v8027 = vmul.f32 %v7767, %v7810
      %v8028 = vmul.f32 %v7768, %v7810
      %v8029 = vmul.f32 %v7769, %v7810
      %v8030 = vmul.f32 %v7770, %v7810
      %v8031 = vmul.f32 %v7771, %v7810
      %v8032 = vmul.f32 %v7772, %v7810
      %v8033 = vmul.f32 %v7773, %v7810
      %v8034 = vmul.f32 %v7774, %v7810
      %v8035 = vmul.f32 %v7775, %v7810
      %v8036 = vmul.f32 %v7776, %v7810
      %v8037 = vmul.f32 %v7777, %v7810
      %v8038 = vmul.f32 %v7778, %v7810
      %v8039 = vmul.f32 %v7779, %v7810
      %v8040 = vmul.f32 %v7780, %v7810
      %v8041 = vmul.f32 %v7781, %v7810
      %v8042 = vmul.f32 %v7782, %v7810
      %v8043 = vmul.f32 %v7783, %v7810
      %v8044 = vmul.f32 %v7784, %v7810
      %v8045 = vmul.f32 %v7785, %v7810
      %v8046 = vmul.f32 %v7786, %v7810
      %v8047 = vmul.f32 %v7787, %v7810
      %v8048 = vmul.f32 %v7788, %v7810
      %v8049 = vmul.f32 %v7789, %v7810
      %v8050 = vmul.f32 %v7790, %v7810
      %v8051 = vmul.f32 %v7791, %v7810
      %v8052 = vmul.f32 %v7792, %v7810
      %v8053 = vmul.f32 %v7793, %v7810
      %v8054 = vmul.f32 %v7794, %v7810
      %v8055 = vmul.f32 %v7795, %v7810
      %v8056 = vmul.f32 %v7796, %v7810
      %v8057 = vmul.f32 %v7797, %v7810
      %v8058 = vmul.f32 %v7798, %v7810
      %v8059 = vmul.f32 %v7799, %v7810
      %v8060 = vmul.f32 %v7800, %v7810
      %v8061 = vmul.f32 %v7801, %v7810
      %v8062 = vmul.f32 %v7802, %v7810
      %v8063 = vmul.f32 %v7803, %v7810
      %v8064 = vmul.f32 %v7804, %v7810
      %v8065 = vmul.f32 %v7805, %v7810
      %v8066 = vmul.f32 %v7806, %v7810
      %v8067 = vmul.f32 %v7807, %v7810
      %v8068 = vld [vmem:[%s4] sm:$0x1]
      %v8070 = vperm.slane %v8068, 0
      %v8072 = vadd.f32 %v7812, %v8070
      %v8073 = vadd.f32 %v7813, %v8070
      %v8074 = vadd.f32 %v7814, %v8070
      %v8075 = vadd.f32 %v7815, %v8070
      %v8076 = vadd.f32 %v7816, %v8070
      %v8077 = vadd.f32 %v7817, %v8070
      %v8078 = vadd.f32 %v7818, %v8070
      %v8079 = vadd.f32 %v7819, %v8070
      %v8080 = vadd.f32 %v7820, %v8070
      %v8081 = vadd.f32 %v7821, %v8070
      %v8082 = vadd.f32 %v7822, %v8070
      %v8083 = vadd.f32 %v7823, %v8070
      %v8084 = vadd.f32 %v7824, %v8070
      %v8085 = vadd.f32 %v7825, %v8070
      %v8086 = vadd.f32 %v7826, %v8070
      %v8087 = vadd.f32 %v7827, %v8070
      %v8088 = vadd.f32 %v7828, %v8070
      %v8089 = vadd.f32 %v7829, %v8070
      %v8090 = vadd.f32 %v7830, %v8070
      %v8091 = vadd.f32 %v7831, %v8070
      %v8092 = vadd.f32 %v7832, %v8070
      %v8093 = vadd.f32 %v7833, %v8070
      %v8094 = vadd.f32 %v7834, %v8070
      %v8095 = vadd.f32 %v7835, %v8070
      %v8096 = vadd.f32 %v7836, %v8070
      %v8097 = vadd.f32 %v7837, %v8070
      %v8098 = vadd.f32 %v7838, %v8070
      %v8099 = vadd.f32 %v7839, %v8070
      %v8100 = vadd.f32 %v7840, %v8070
      %v8101 = vadd.f32 %v7841, %v8070
      %v8102 = vadd.f32 %v7842, %v8070
      %v8103 = vadd.f32 %v7843, %v8070
      %v8104 = vadd.f32 %v7844, %v8070
      %v8105 = vadd.f32 %v7845, %v8070
      %v8106 = vadd.f32 %v7846, %v8070
      %v8107 = vadd.f32 %v7847, %v8070
      %v8108 = vadd.f32 %v7848, %v8070
      %v8109 = vadd.f32 %v7849, %v8070
      %v8110 = vadd.f32 %v7850, %v8070
      %v8111 = vadd.f32 %v7851, %v8070
      %v8112 = vadd.f32 %v7852, %v8070
      %v8113 = vadd.f32 %v7853, %v8070
      %v8114 = vadd.f32 %v7854, %v8070
      %v8115 = vadd.f32 %v7855, %v8070
      %v8116 = vadd.f32 %v7856, %v8070
      %v8117 = vadd.f32 %v7857, %v8070
      %v8118 = vadd.f32 %v7858, %v8070
      %v8119 = vadd.f32 %v7859, %v8070
      %v8120 = vadd.f32 %v7860, %v8070
      %v8121 = vadd.f32 %v7861, %v8070
      %v8122 = vadd.f32 %v7862, %v8070
      %v8123 = vadd.f32 %v7863, %v8070
      %v8124 = vadd.f32 %v7864, %v8070
      %v8125 = vadd.f32 %v7865, %v8070
      %v8126 = vadd.f32 %v7866, %v8070
      %v8127 = vadd.f32 %v7867, %v8070
      %v8128 = vadd.f32 %v7868, %v8070
      %v8129 = vadd.f32 %v7869, %v8070
      %v8130 = vadd.f32 %v7870, %v8070
      %v8131 = vadd.f32 %v7871, %v8070
      %v8132 = vadd.f32 %v7872, %v8070
      %v8133 = vadd.f32 %v7873, %v8070
      %v8134 = vadd.f32 %v7874, %v8070
      %v8135 = vadd.f32 %v7875, %v8070
      %v8136 = vadd.f32 %v7876, %v8070
      %v8137 = vadd.f32 %v7877, %v8070
      %v8138 = vadd.f32 %v7878, %v8070
      %v8139 = vadd.f32 %v7879, %v8070
      %v8140 = vadd.f32 %v7880, %v8070
      %v8141 = vadd.f32 %v7881, %v8070
      %v8142 = vadd.f32 %v7882, %v8070
      %v8143 = vadd.f32 %v7883, %v8070
      %v8144 = vadd.f32 %v7884, %v8070
      %v8145 = vadd.f32 %v7885, %v8070
      %v8146 = vadd.f32 %v7886, %v8070
      %v8147 = vadd.f32 %v7887, %v8070
      %v8148 = vadd.f32 %v7888, %v8070
      %v8149 = vadd.f32 %v7889, %v8070
      %v8150 = vadd.f32 %v7890, %v8070
      %v8151 = vadd.f32 %v7891, %v8070
      %v8152 = vadd.f32 %v7892, %v8070
      %v8153 = vadd.f32 %v7893, %v8070
      %v8154 = vadd.f32 %v7894, %v8070
      %v8155 = vadd.f32 %v7895, %v8070
      %v8156 = vadd.f32 %v7896, %v8070
      %v8157 = vadd.f32 %v7897, %v8070
      %v8158 = vadd.f32 %v7898, %v8070
      %v8159 = vadd.f32 %v7899, %v8070
      %v8160 = vadd.f32 %v7900, %v8070
      %v8161 = vadd.f32 %v7901, %v8070
      %v8162 = vadd.f32 %v7902, %v8070
      %v8163 = vadd.f32 %v7903, %v8070
      %v8164 = vadd.f32 %v7904, %v8070
      %v8165 = vadd.f32 %v7905, %v8070
      %v8166 = vadd.f32 %v7906, %v8070
      %v8167 = vadd.f32 %v7907, %v8070
      %v8168 = vadd.f32 %v7908, %v8070
      %v8169 = vadd.f32 %v7909, %v8070
      %v8170 = vadd.f32 %v7910, %v8070
      %v8171 = vadd.f32 %v7911, %v8070
      %v8172 = vadd.f32 %v7912, %v8070
      %v8173 = vadd.f32 %v7913, %v8070
      %v8174 = vadd.f32 %v7914, %v8070
      %v8175 = vadd.f32 %v7915, %v8070
      %v8176 = vadd.f32 %v7916, %v8070
      %v8177 = vadd.f32 %v7917, %v8070
      %v8178 = vadd.f32 %v7918, %v8070
      %v8179 = vadd.f32 %v7919, %v8070
      %v8180 = vadd.f32 %v7920, %v8070
      %v8181 = vadd.f32 %v7921, %v8070
      %v8182 = vadd.f32 %v7922, %v8070
      %v8183 = vadd.f32 %v7923, %v8070
      %v8184 = vadd.f32 %v7924, %v8070
      %v8185 = vadd.f32 %v7925, %v8070
      %v8186 = vadd.f32 %v7926, %v8070
      %v8187 = vadd.f32 %v7927, %v8070
      %v8188 = vadd.f32 %v7928, %v8070
      %v8189 = vadd.f32 %v7929, %v8070
      %v8190 = vadd.f32 %v7930, %v8070
      %v8191 = vadd.f32 %v7931, %v8070
      %v8192 = vadd.f32 %v7932, %v8070
      %v8193 = vadd.f32 %v7933, %v8070
      %v8194 = vadd.f32 %v7934, %v8070
      %v8195 = vadd.f32 %v7935, %v8070
      %v8196 = vadd.f32 %v7936, %v8070
      %v8197 = vadd.f32 %v7937, %v8070
      %v8198 = vadd.f32 %v7938, %v8070
      %v8199 = vadd.f32 %v7939, %v8070
      %v8200 = vadd.f32 %v7940, %v8070
      %v8201 = vadd.f32 %v7941, %v8070
      %v8202 = vadd.f32 %v7942, %v8070
      %v8203 = vadd.f32 %v7943, %v8070
      %v8204 = vadd.f32 %v7944, %v8070
      %v8205 = vadd.f32 %v7945, %v8070
      %v8206 = vadd.f32 %v7946, %v8070
      %v8207 = vadd.f32 %v7947, %v8070
      %v8208 = vadd.f32 %v7948, %v8070
      %v8209 = vadd.f32 %v7949, %v8070
      %v8210 = vadd.f32 %v7950, %v8070
      %v8211 = vadd.f32 %v7951, %v8070
      %v8212 = vadd.f32 %v7952, %v8070
      %v8213 = vadd.f32 %v7953, %v8070
      %v8214 = vadd.f32 %v7954, %v8070
      %v8215 = vadd.f32 %v7955, %v8070
      %v8216 = vadd.f32 %v7956, %v8070
      %v8217 = vadd.f32 %v7957, %v8070
      %v8218 = vadd.f32 %v7958, %v8070
      %v8219 = vadd.f32 %v7959, %v8070
      %v8220 = vadd.f32 %v7960, %v8070
      %v8221 = vadd.f32 %v7961, %v8070
      %v8222 = vadd.f32 %v7962, %v8070
      %v8223 = vadd.f32 %v7963, %v8070
      %v8224 = vadd.f32 %v7964, %v8070
      %v8225 = vadd.f32 %v7965, %v8070
      %v8226 = vadd.f32 %v7966, %v8070
      %v8227 = vadd.f32 %v7967, %v8070
      %v8228 = vadd.f32 %v7968, %v8070
      %v8229 = vadd.f32 %v7969, %v8070
      %v8230 = vadd.f32 %v7970, %v8070
      %v8231 = vadd.f32 %v7971, %v8070
      %v8232 = vadd.f32 %v7972, %v8070
      %v8233 = vadd.f32 %v7973, %v8070
      %v8234 = vadd.f32 %v7974, %v8070
      %v8235 = vadd.f32 %v7975, %v8070
      %v8236 = vadd.f32 %v7976, %v8070
      %v8237 = vadd.f32 %v7977, %v8070
      %v8238 = vadd.f32 %v7978, %v8070
      %v8239 = vadd.f32 %v7979, %v8070
      %v8240 = vadd.f32 %v7980, %v8070
      %v8241 = vadd.f32 %v7981, %v8070
      %v8242 = vadd.f32 %v7982, %v8070
      %v8243 = vadd.f32 %v7983, %v8070
      %v8244 = vadd.f32 %v7984, %v8070
      %v8245 = vadd.f32 %v7985, %v8070
      %v8246 = vadd.f32 %v7986, %v8070
      %v8247 = vadd.f32 %v7987, %v8070
      %v8248 = vadd.f32 %v7988, %v8070
      %v8249 = vadd.f32 %v7989, %v8070
      %v8250 = vadd.f32 %v7990, %v8070
      %v8251 = vadd.f32 %v7991, %v8070
      %v8252 = vadd.f32 %v7992, %v8070
      %v8253 = vadd.f32 %v7993, %v8070
      %v8254 = vadd.f32 %v7994, %v8070
      %v8255 = vadd.f32 %v7995, %v8070
      %v8256 = vadd.f32 %v7996, %v8070
      %v8257 = vadd.f32 %v7997, %v8070
      %v8258 = vadd.f32 %v7998, %v8070
      %v8259 = vadd.f32 %v7999, %v8070
      %v8260 = vadd.f32 %v8000, %v8070
      %v8261 = vadd.f32 %v8001, %v8070
      %v8262 = vadd.f32 %v8002, %v8070
      %v8263 = vadd.f32 %v8003, %v8070
      %v8264 = vadd.f32 %v8004, %v8070
      %v8265 = vadd.f32 %v8005, %v8070
      %v8266 = vadd.f32 %v8006, %v8070
      %v8267 = vadd.f32 %v8007, %v8070
      %v8268 = vadd.f32 %v8008, %v8070
      %v8269 = vadd.f32 %v8009, %v8070
      %v8270 = vadd.f32 %v8010, %v8070
      %v8271 = vadd.f32 %v8011, %v8070
      %v8272 = vadd.f32 %v8012, %v8070
      %v8273 = vadd.f32 %v8013, %v8070
      %v8274 = vadd.f32 %v8014, %v8070
      %v8275 = vadd.f32 %v8015, %v8070
      %v8276 = vadd.f32 %v8016, %v8070
      %v8277 = vadd.f32 %v8017, %v8070
      %v8278 = vadd.f32 %v8018, %v8070
      %v8279 = vadd.f32 %v8019, %v8070
      %v8280 = vadd.f32 %v8020, %v8070
      %v8281 = vadd.f32 %v8021, %v8070
      %v8282 = vadd.f32 %v8022, %v8070
      %v8283 = vadd.f32 %v8023, %v8070
      %v8284 = vadd.f32 %v8024, %v8070
      %v8285 = vadd.f32 %v8025, %v8070
      %v8286 = vadd.f32 %v8026, %v8070
      %v8287 = vadd.f32 %v8027, %v8070
      %v8288 = vadd.f32 %v8028, %v8070
      %v8289 = vadd.f32 %v8029, %v8070
      %v8290 = vadd.f32 %v8030, %v8070
      %v8291 = vadd.f32 %v8031, %v8070
      %v8292 = vadd.f32 %v8032, %v8070
      %v8293 = vadd.f32 %v8033, %v8070
      %v8294 = vadd.f32 %v8034, %v8070
      %v8295 = vadd.f32 %v8035, %v8070
      %v8296 = vadd.f32 %v8036, %v8070
      %v8297 = vadd.f32 %v8037, %v8070
      %v8298 = vadd.f32 %v8038, %v8070
      %v8299 = vadd.f32 %v8039, %v8070
      %v8300 = vadd.f32 %v8040, %v8070
      %v8301 = vadd.f32 %v8041, %v8070
      %v8302 = vadd.f32 %v8042, %v8070
      %v8303 = vadd.f32 %v8043, %v8070
      %v8304 = vadd.f32 %v8044, %v8070
      %v8305 = vadd.f32 %v8045, %v8070
      %v8306 = vadd.f32 %v8046, %v8070
      %v8307 = vadd.f32 %v8047, %v8070
      %v8308 = vadd.f32 %v8048, %v8070
      %v8309 = vadd.f32 %v8049, %v8070
      %v8310 = vadd.f32 %v8050, %v8070
      %v8311 = vadd.f32 %v8051, %v8070
      %v8312 = vadd.f32 %v8052, %v8070
      %v8313 = vadd.f32 %v8053, %v8070
      %v8314 = vadd.f32 %v8054, %v8070
      %v8315 = vadd.f32 %v8055, %v8070
      %v8316 = vadd.f32 %v8056, %v8070
      %v8317 = vadd.f32 %v8057, %v8070
      %v8318 = vadd.f32 %v8058, %v8070
      %v8319 = vadd.f32 %v8059, %v8070
      %v8320 = vadd.f32 %v8060, %v8070
      %v8321 = vadd.f32 %v8061, %v8070
      %v8322 = vadd.f32 %v8062, %v8070
      %v8323 = vadd.f32 %v8063, %v8070
      %v8324 = vadd.f32 %v8064, %v8070
      %v8325 = vadd.f32 %v8065, %v8070
      %v8326 = vadd.f32 %v8066, %v8070
      %v8327 = vadd.f32 %v8067, %v8070
      %v8328 = vpack.c.bf16 %v8072, %v8072
      %v8329 = vpack.c.bf16 %v8073, %v8073
      %v8330 = vpack.c.bf16 %v8074, %v8074
      %v8331 = vpack.c.bf16 %v8075, %v8075
      %v8332 = vpack.c.bf16 %v8076, %v8076
      %v8333 = vpack.c.bf16 %v8077, %v8077
      %v8334 = vpack.c.bf16 %v8078, %v8078
      %v8335 = vpack.c.bf16 %v8079, %v8079
      %v8336 = vpack.c.bf16 %v8080, %v8080
      %v8337 = vpack.c.bf16 %v8081, %v8081
      %v8338 = vpack.c.bf16 %v8082, %v8082
      %v8339 = vpack.c.bf16 %v8083, %v8083
      %v8340 = vpack.c.bf16 %v8084, %v8084
      %v8341 = vpack.c.bf16 %v8085, %v8085
      %v8342 = vpack.c.bf16 %v8086, %v8086
      %v8343 = vpack.c.bf16 %v8087, %v8087
      %v8344 = vpack.c.bf16 %v8088, %v8088
      %v8345 = vpack.c.bf16 %v8089, %v8089
      %v8346 = vpack.c.bf16 %v8090, %v8090
      %v8347 = vpack.c.bf16 %v8091, %v8091
      %v8348 = vpack.c.bf16 %v8092, %v8092
      %v8349 = vpack.c.bf16 %v8093, %v8093
      %v8350 = vpack.c.bf16 %v8094, %v8094
      %v8351 = vpack.c.bf16 %v8095, %v8095
      %v8352 = vpack.c.bf16 %v8096, %v8096
      %v8353 = vpack.c.bf16 %v8097, %v8097
      %v8354 = vpack.c.bf16 %v8098, %v8098
      %v8355 = vpack.c.bf16 %v8099, %v8099
      %v8356 = vpack.c.bf16 %v8100, %v8100
      %v8357 = vpack.c.bf16 %v8101, %v8101
      %v8358 = vpack.c.bf16 %v8102, %v8102
      %v8359 = vpack.c.bf16 %v8103, %v8103
      %v8360 = vpack.c.bf16 %v8104, %v8104
      %v8361 = vpack.c.bf16 %v8105, %v8105
      %v8362 = vpack.c.bf16 %v8106, %v8106
      %v8363 = vpack.c.bf16 %v8107, %v8107
      %v8364 = vpack.c.bf16 %v8108, %v8108
      %v8365 = vpack.c.bf16 %v8109, %v8109
      %v8366 = vpack.c.bf16 %v8110, %v8110
      %v8367 = vpack.c.bf16 %v8111, %v8111
      %v8368 = vpack.c.bf16 %v8112, %v8112
      %v8369 = vpack.c.bf16 %v8113, %v8113
      %v8370 = vpack.c.bf16 %v8114, %v8114
      %v8371 = vpack.c.bf16 %v8115, %v8115
      %v8372 = vpack.c.bf16 %v8116, %v8116
      %v8373 = vpack.c.bf16 %v8117, %v8117
      %v8374 = vpack.c.bf16 %v8118, %v8118
      %v8375 = vpack.c.bf16 %v8119, %v8119
      %v8376 = vpack.c.bf16 %v8120, %v8120
      %v8377 = vpack.c.bf16 %v8121, %v8121
      %v8378 = vpack.c.bf16 %v8122, %v8122
      %v8379 = vpack.c.bf16 %v8123, %v8123
      %v8380 = vpack.c.bf16 %v8124, %v8124
      %v8381 = vpack.c.bf16 %v8125, %v8125
      %v8382 = vpack.c.bf16 %v8126, %v8126
      %v8383 = vpack.c.bf16 %v8127, %v8127
      %v8384 = vpack.c.bf16 %v8128, %v8128
      %v8385 = vpack.c.bf16 %v8129, %v8129
      %v8386 = vpack.c.bf16 %v8130, %v8130
      %v8387 = vpack.c.bf16 %v8131, %v8131
      %v8388 = vpack.c.bf16 %v8132, %v8132
      %v8389 = vpack.c.bf16 %v8133, %v8133
      %v8390 = vpack.c.bf16 %v8134, %v8134
      %v8391 = vpack.c.bf16 %v8135, %v8135
      %v8392 = vpack.c.bf16 %v8136, %v8136
      %v8393 = vpack.c.bf16 %v8137, %v8137
      %v8394 = vpack.c.bf16 %v8138, %v8138
      %v8395 = vpack.c.bf16 %v8139, %v8139
      %v8396 = vpack.c.bf16 %v8140, %v8140
      %v8397 = vpack.c.bf16 %v8141, %v8141
      %v8398 = vpack.c.bf16 %v8142, %v8142
      %v8399 = vpack.c.bf16 %v8143, %v8143
      %v8400 = vpack.c.bf16 %v8144, %v8144
      %v8401 = vpack.c.bf16 %v8145, %v8145
      %v8402 = vpack.c.bf16 %v8146, %v8146
      %v8403 = vpack.c.bf16 %v8147, %v8147
      %v8404 = vpack.c.bf16 %v8148, %v8148
      %v8405 = vpack.c.bf16 %v8149, %v8149
      %v8406 = vpack.c.bf16 %v8150, %v8150
      %v8407 = vpack.c.bf16 %v8151, %v8151
      %v8408 = vpack.c.bf16 %v8152, %v8152
      %v8409 = vpack.c.bf16 %v8153, %v8153
      %v8410 = vpack.c.bf16 %v8154, %v8154
      %v8411 = vpack.c.bf16 %v8155, %v8155
      %v8412 = vpack.c.bf16 %v8156, %v8156
      %v8413 = vpack.c.bf16 %v8157, %v8157
      %v8414 = vpack.c.bf16 %v8158, %v8158
      %v8415 = vpack.c.bf16 %v8159, %v8159
      %v8416 = vpack.c.bf16 %v8160, %v8160
      %v8417 = vpack.c.bf16 %v8161, %v8161
      %v8418 = vpack.c.bf16 %v8162, %v8162
      %v8419 = vpack.c.bf16 %v8163, %v8163
      %v8420 = vpack.c.bf16 %v8164, %v8164
      %v8421 = vpack.c.bf16 %v8165, %v8165
      %v8422 = vpack.c.bf16 %v8166, %v8166
      %v8423 = vpack.c.bf16 %v8167, %v8167
      %v8424 = vpack.c.bf16 %v8168, %v8168
      %v8425 = vpack.c.bf16 %v8169, %v8169
      %v8426 = vpack.c.bf16 %v8170, %v8170
      %v8427 = vpack.c.bf16 %v8171, %v8171
      %v8428 = vpack.c.bf16 %v8172, %v8172
      %v8429 = vpack.c.bf16 %v8173, %v8173
      %v8430 = vpack.c.bf16 %v8174, %v8174
      %v8431 = vpack.c.bf16 %v8175, %v8175
      %v8432 = vpack.c.bf16 %v8176, %v8176
      %v8433 = vpack.c.bf16 %v8177, %v8177
      %v8434 = vpack.c.bf16 %v8178, %v8178
      %v8435 = vpack.c.bf16 %v8179, %v8179
      %v8436 = vpack.c.bf16 %v8180, %v8180
      %v8437 = vpack.c.bf16 %v8181, %v8181
      %v8438 = vpack.c.bf16 %v8182, %v8182
      %v8439 = vpack.c.bf16 %v8183, %v8183
      %v8440 = vpack.c.bf16 %v8184, %v8184
      %v8441 = vpack.c.bf16 %v8185, %v8185
      %v8442 = vpack.c.bf16 %v8186, %v8186
      %v8443 = vpack.c.bf16 %v8187, %v8187
      %v8444 = vpack.c.bf16 %v8188, %v8188
      %v8445 = vpack.c.bf16 %v8189, %v8189
      %v8446 = vpack.c.bf16 %v8190, %v8190
      %v8447 = vpack.c.bf16 %v8191, %v8191
      %v8448 = vpack.c.bf16 %v8192, %v8192
      %v8449 = vpack.c.bf16 %v8193, %v8193
      %v8450 = vpack.c.bf16 %v8194, %v8194
      %v8451 = vpack.c.bf16 %v8195, %v8195
      %v8452 = vpack.c.bf16 %v8196, %v8196
      %v8453 = vpack.c.bf16 %v8197, %v8197
      %v8454 = vpack.c.bf16 %v8198, %v8198
      %v8455 = vpack.c.bf16 %v8199, %v8199
      %v8456 = vpack.c.bf16 %v8200, %v8200
      %v8457 = vpack.c.bf16 %v8201, %v8201
      %v8458 = vpack.c.bf16 %v8202, %v8202
      %v8459 = vpack.c.bf16 %v8203, %v8203
      %v8460 = vpack.c.bf16 %v8204, %v8204
      %v8461 = vpack.c.bf16 %v8205, %v8205
      %v8462 = vpack.c.bf16 %v8206, %v8206
      %v8463 = vpack.c.bf16 %v8207, %v8207
      %v8464 = vpack.c.bf16 %v8208, %v8208
      %v8465 = vpack.c.bf16 %v8209, %v8209
      %v8466 = vpack.c.bf16 %v8210, %v8210
      %v8467 = vpack.c.bf16 %v8211, %v8211
      %v8468 = vpack.c.bf16 %v8212, %v8212
      %v8469 = vpack.c.bf16 %v8213, %v8213
      %v8470 = vpack.c.bf16 %v8214, %v8214
      %v8471 = vpack.c.bf16 %v8215, %v8215
      %v8472 = vpack.c.bf16 %v8216, %v8216
      %v8473 = vpack.c.bf16 %v8217, %v8217
      %v8474 = vpack.c.bf16 %v8218, %v8218
      %v8475 = vpack.c.bf16 %v8219, %v8219
      %v8476 = vpack.c.bf16 %v8220, %v8220
      %v8477 = vpack.c.bf16 %v8221, %v8221
      %v8478 = vpack.c.bf16 %v8222, %v8222
      %v8479 = vpack.c.bf16 %v8223, %v8223
      %v8480 = vpack.c.bf16 %v8224, %v8224
      %v8481 = vpack.c.bf16 %v8225, %v8225
      %v8482 = vpack.c.bf16 %v8226, %v8226
      %v8483 = vpack.c.bf16 %v8227, %v8227
      %v8484 = vpack.c.bf16 %v8228, %v8228
      %v8485 = vpack.c.bf16 %v8229, %v8229
      %v8486 = vpack.c.bf16 %v8230, %v8230
      %v8487 = vpack.c.bf16 %v8231, %v8231
      %v8488 = vpack.c.bf16 %v8232, %v8232
      %v8489 = vpack.c.bf16 %v8233, %v8233
      %v8490 = vpack.c.bf16 %v8234, %v8234
      %v8491 = vpack.c.bf16 %v8235, %v8235
      %v8492 = vpack.c.bf16 %v8236, %v8236
      %v8493 = vpack.c.bf16 %v8237, %v8237
      %v8494 = vpack.c.bf16 %v8238, %v8238
      %v8495 = vpack.c.bf16 %v8239, %v8239
      %v8496 = vpack.c.bf16 %v8240, %v8240
      %v8497 = vpack.c.bf16 %v8241, %v8241
      %v8498 = vpack.c.bf16 %v8242, %v8242
      %v8499 = vpack.c.bf16 %v8243, %v8243
      %v8500 = vpack.c.bf16 %v8244, %v8244
      %v8501 = vpack.c.bf16 %v8245, %v8245
      %v8502 = vpack.c.bf16 %v8246, %v8246
      %v8503 = vpack.c.bf16 %v8247, %v8247
      %v8504 = vpack.c.bf16 %v8248, %v8248
      %v8505 = vpack.c.bf16 %v8249, %v8249
      %v8506 = vpack.c.bf16 %v8250, %v8250
      %v8507 = vpack.c.bf16 %v8251, %v8251
      %v8508 = vpack.c.bf16 %v8252, %v8252
      %v8509 = vpack.c.bf16 %v8253, %v8253
      %v8510 = vpack.c.bf16 %v8254, %v8254
      %v8511 = vpack.c.bf16 %v8255, %v8255
      %v8512 = vpack.c.bf16 %v8256, %v8256
      %v8513 = vpack.c.bf16 %v8257, %v8257
      %v8514 = vpack.c.bf16 %v8258, %v8258
      %v8515 = vpack.c.bf16 %v8259, %v8259
      %v8516 = vpack.c.bf16 %v8260, %v8260
      %v8517 = vpack.c.bf16 %v8261, %v8261
      %v8518 = vpack.c.bf16 %v8262, %v8262
      %v8519 = vpack.c.bf16 %v8263, %v8263
      %v8520 = vpack.c.bf16 %v8264, %v8264
      %v8521 = vpack.c.bf16 %v8265, %v8265
      %v8522 = vpack.c.bf16 %v8266, %v8266
      %v8523 = vpack.c.bf16 %v8267, %v8267
      %v8524 = vpack.c.bf16 %v8268, %v8268
      %v8525 = vpack.c.bf16 %v8269, %v8269
      %v8526 = vpack.c.bf16 %v8270, %v8270
      %v8527 = vpack.c.bf16 %v8271, %v8271
      %v8528 = vpack.c.bf16 %v8272, %v8272
      %v8529 = vpack.c.bf16 %v8273, %v8273
      %v8530 = vpack.c.bf16 %v8274, %v8274
      %v8531 = vpack.c.bf16 %v8275, %v8275
      %v8532 = vpack.c.bf16 %v8276, %v8276
      %v8533 = vpack.c.bf16 %v8277, %v8277
      %v8534 = vpack.c.bf16 %v8278, %v8278
      %v8535 = vpack.c.bf16 %v8279, %v8279
      %v8536 = vpack.c.bf16 %v8280, %v8280
      %v8537 = vpack.c.bf16 %v8281, %v8281
      %v8538 = vpack.c.bf16 %v8282, %v8282
      %v8539 = vpack.c.bf16 %v8283, %v8283
      %v8540 = vpack.c.bf16 %v8284, %v8284
      %v8541 = vpack.c.bf16 %v8285, %v8285
      %v8542 = vpack.c.bf16 %v8286, %v8286
      %v8543 = vpack.c.bf16 %v8287, %v8287
      %v8544 = vpack.c.bf16 %v8288, %v8288
      %v8545 = vpack.c.bf16 %v8289, %v8289
      %v8546 = vpack.c.bf16 %v8290, %v8290
      %v8547 = vpack.c.bf16 %v8291, %v8291
      %v8548 = vpack.c.bf16 %v8292, %v8292
      %v8549 = vpack.c.bf16 %v8293, %v8293
      %v8550 = vpack.c.bf16 %v8294, %v8294
      %v8551 = vpack.c.bf16 %v8295, %v8295
      %v8552 = vpack.c.bf16 %v8296, %v8296
      %v8553 = vpack.c.bf16 %v8297, %v8297
      %v8554 = vpack.c.bf16 %v8298, %v8298
      %v8555 = vpack.c.bf16 %v8299, %v8299
      %v8556 = vpack.c.bf16 %v8300, %v8300
      %v8557 = vpack.c.bf16 %v8301, %v8301
      %v8558 = vpack.c.bf16 %v8302, %v8302
      %v8559 = vpack.c.bf16 %v8303, %v8303
      %v8560 = vpack.c.bf16 %v8304, %v8304
      %v8561 = vpack.c.bf16 %v8305, %v8305
      %v8562 = vpack.c.bf16 %v8306, %v8306
      %v8563 = vpack.c.bf16 %v8307, %v8307
      %v8564 = vpack.c.bf16 %v8308, %v8308
      %v8565 = vpack.c.bf16 %v8309, %v8309
      %v8566 = vpack.c.bf16 %v8310, %v8310
      %v8567 = vpack.c.bf16 %v8311, %v8311
      %v8568 = vpack.c.bf16 %v8312, %v8312
      %v8569 = vpack.c.bf16 %v8313, %v8313
      %v8570 = vpack.c.bf16 %v8314, %v8314
      %v8571 = vpack.c.bf16 %v8315, %v8315
      %v8572 = vpack.c.bf16 %v8316, %v8316
      %v8573 = vpack.c.bf16 %v8317, %v8317
      %v8574 = vpack.c.bf16 %v8318, %v8318
      %v8575 = vpack.c.bf16 %v8319, %v8319
      %v8576 = vpack.c.bf16 %v8320, %v8320
      %v8577 = vpack.c.bf16 %v8321, %v8321
      %v8578 = vpack.c.bf16 %v8322, %v8322
      %v8579 = vpack.c.bf16 %v8323, %v8323
      %v8580 = vpack.c.bf16 %v8324, %v8324
      %v8581 = vpack.c.bf16 %v8325, %v8325
      %v8582 = vpack.c.bf16 %v8326, %v8326
      %v8583 = vpack.c.bf16 %v8327, %v8327
      %vm8584 = vcmask 257024
      %8585 = vst.msk [vmem:[%s226] sm:$0xf] %vm8584, %v8328
      %8586 = vst.msk [vmem:[%s226 + $0x4] sm:$0xf] %vm8584, %v8329
      %8587 = vst.msk [vmem:[%s226 + $0x8] sm:$0xf] %vm8584, %v8330
      %8588 = vst.msk [vmem:[%s226 + $0xc] sm:$0xf] %vm8584, %v8331
      %8589 = vst.msk [vmem:[%s226 + $0x10] sm:$0xf] %vm8584, %v8332
      %8590 = vst.msk [vmem:[%s226 + $0x14] sm:$0xf] %vm8584, %v8333
      %8591 = vst.msk [vmem:[%s226 + $0x18] sm:$0xf] %vm8584, %v8334
      %8592 = vst.msk [vmem:[%s226 + $0x1c] sm:$0xf] %vm8584, %v8335
      %8593 = vst.msk [vmem:[%s226 + $0x20] sm:$0xf] %vm8584, %v8336
      %8594 = vst.msk [vmem:[%s226 + $0x24] sm:$0xf] %vm8584, %v8337
      %8595 = vst.msk [vmem:[%s226 + $0x28] sm:$0xf] %vm8584, %v8338
      %8596 = vst.msk [vmem:[%s226 + $0x2c] sm:$0xf] %vm8584, %v8339
      %8597 = vst.msk [vmem:[%s226 + $0x30] sm:$0xf] %vm8584, %v8340
      %8598 = vst.msk [vmem:[%s226 + $0x34] sm:$0xf] %vm8584, %v8341
      %8599 = vst.msk [vmem:[%s226 + $0x38] sm:$0xf] %vm8584, %v8342
      %8600 = vst.msk [vmem:[%s226 + $0x3c] sm:$0xf] %vm8584, %v8343
      %8601 = vst.msk [vmem:[%s226 + $0x40] sm:$0xf] %vm8584, %v8344
      %8602 = vst.msk [vmem:[%s226 + $0x44] sm:$0xf] %vm8584, %v8345
      %8603 = vst.msk [vmem:[%s226 + $0x48] sm:$0xf] %vm8584, %v8346
      %8604 = vst.msk [vmem:[%s226 + $0x4c] sm:$0xf] %vm8584, %v8347
      %8605 = vst.msk [vmem:[%s226 + $0x50] sm:$0xf] %vm8584, %v8348
      %8606 = vst.msk [vmem:[%s226 + $0x54] sm:$0xf] %vm8584, %v8349
      %8607 = vst.msk [vmem:[%s226 + $0x58] sm:$0xf] %vm8584, %v8350
      %8608 = vst.msk [vmem:[%s226 + $0x5c] sm:$0xf] %vm8584, %v8351
      %8609 = vst.msk [vmem:[%s226 + $0x60] sm:$0xf] %vm8584, %v8352
      %8610 = vst.msk [vmem:[%s226 + $0x64] sm:$0xf] %vm8584, %v8353
      %8611 = vst.msk [vmem:[%s226 + $0x68] sm:$0xf] %vm8584, %v8354
      %8612 = vst.msk [vmem:[%s226 + $0x6c] sm:$0xf] %vm8584, %v8355
      %8613 = vst.msk [vmem:[%s226 + $0x70] sm:$0xf] %vm8584, %v8356
      %8614 = vst.msk [vmem:[%s226 + $0x74] sm:$0xf] %vm8584, %v8357
      %8615 = vst.msk [vmem:[%s226 + $0x78] sm:$0xf] %vm8584, %v8358
      %8616 = vst.msk [vmem:[%s226 + $0x7c] sm:$0xf] %vm8584, %v8359
      %8617 = vst.msk [vmem:[%s226 + $0x80] sm:$0xf] %vm8584, %v8360
      %8618 = vst.msk [vmem:[%s226 + $0x84] sm:$0xf] %vm8584, %v8361
      %8619 = vst.msk [vmem:[%s226 + $0x88] sm:$0xf] %vm8584, %v8362
      %8620 = vst.msk [vmem:[%s226 + $0x8c] sm:$0xf] %vm8584, %v8363
      %8621 = vst.msk [vmem:[%s226 + $0x90] sm:$0xf] %vm8584, %v8364
      %8622 = vst.msk [vmem:[%s226 + $0x94] sm:$0xf] %vm8584, %v8365
      %8623 = vst.msk [vmem:[%s226 + $0x98] sm:$0xf] %vm8584, %v8366
      %8624 = vst.msk [vmem:[%s226 + $0x9c] sm:$0xf] %vm8584, %v8367
      %8625 = vst.msk [vmem:[%s226 + $0xa0] sm:$0xf] %vm8584, %v8368
      %8626 = vst.msk [vmem:[%s226 + $0xa4] sm:$0xf] %vm8584, %v8369
      %8627 = vst.msk [vmem:[%s226 + $0xa8] sm:$0xf] %vm8584, %v8370
      %8628 = vst.msk [vmem:[%s226 + $0xac] sm:$0xf] %vm8584, %v8371
      %8629 = vst.msk [vmem:[%s226 + $0xb0] sm:$0xf] %vm8584, %v8372
      %8630 = vst.msk [vmem:[%s226 + $0xb4] sm:$0xf] %vm8584, %v8373
      %8631 = vst.msk [vmem:[%s226 + $0xb8] sm:$0xf] %vm8584, %v8374
      %8632 = vst.msk [vmem:[%s226 + $0xbc] sm:$0xf] %vm8584, %v8375
      %8633 = vst.msk [vmem:[%s226 + $0xc0] sm:$0xf] %vm8584, %v8376
      %8634 = vst.msk [vmem:[%s226 + $0xc4] sm:$0xf] %vm8584, %v8377
      %8635 = vst.msk [vmem:[%s226 + $0xc8] sm:$0xf] %vm8584, %v8378
      %8636 = vst.msk [vmem:[%s226 + $0xcc] sm:$0xf] %vm8584, %v8379
      %8637 = vst.msk [vmem:[%s226 + $0xd0] sm:$0xf] %vm8584, %v8380
      %8638 = vst.msk [vmem:[%s226 + $0xd4] sm:$0xf] %vm8584, %v8381
      %8639 = vst.msk [vmem:[%s226 + $0xd8] sm:$0xf] %vm8584, %v8382
      %8640 = vst.msk [vmem:[%s226 + $0xdc] sm:$0xf] %vm8584, %v8383
      %8641 = vst.msk [vmem:[%s226 + $0xe0] sm:$0xf] %vm8584, %v8384
      %8642 = vst.msk [vmem:[%s226 + $0xe4] sm:$0xf] %vm8584, %v8385
      %8643 = vst.msk [vmem:[%s226 + $0xe8] sm:$0xf] %vm8584, %v8386
      %8644 = vst.msk [vmem:[%s226 + $0xec] sm:$0xf] %vm8584, %v8387
      %8645 = vst.msk [vmem:[%s226 + $0xf0] sm:$0xf] %vm8584, %v8388
      %8646 = vst.msk [vmem:[%s226 + $0xf4] sm:$0xf] %vm8584, %v8389
      %8647 = vst.msk [vmem:[%s226 + $0xf8] sm:$0xf] %vm8584, %v8390
      %8648 = vst.msk [vmem:[%s226 + $0xfc] sm:$0xf] %vm8584, %v8391
      %8649 = vst.msk [vmem:[%s226 + $0x100] sm:$0xf] %vm8584, %v8392
      %8650 = vst.msk [vmem:[%s226 + $0x104] sm:$0xf] %vm8584, %v8393
      %8651 = vst.msk [vmem:[%s226 + $0x108] sm:$0xf] %vm8584, %v8394
      %8652 = vst.msk [vmem:[%s226 + $0x10c] sm:$0xf] %vm8584, %v8395
      %8653 = vst.msk [vmem:[%s226 + $0x110] sm:$0xf] %vm8584, %v8396
      %8654 = vst.msk [vmem:[%s226 + $0x114] sm:$0xf] %vm8584, %v8397
      %8655 = vst.msk [vmem:[%s226 + $0x118] sm:$0xf] %vm8584, %v8398
      %8656 = vst.msk [vmem:[%s226 + $0x11c] sm:$0xf] %vm8584, %v8399
      %8657 = vst.msk [vmem:[%s226 + $0x120] sm:$0xf] %vm8584, %v8400
      %8658 = vst.msk [vmem:[%s226 + $0x124] sm:$0xf] %vm8584, %v8401
      %8659 = vst.msk [vmem:[%s226 + $0x128] sm:$0xf] %vm8584, %v8402
      %8660 = vst.msk [vmem:[%s226 + $0x12c] sm:$0xf] %vm8584, %v8403
      %8661 = vst.msk [vmem:[%s226 + $0x130] sm:$0xf] %vm8584, %v8404
      %8662 = vst.msk [vmem:[%s226 + $0x134] sm:$0xf] %vm8584, %v8405
      %8663 = vst.msk [vmem:[%s226 + $0x138] sm:$0xf] %vm8584, %v8406
      %8664 = vst.msk [vmem:[%s226 + $0x13c] sm:$0xf] %vm8584, %v8407
      %8665 = vst.msk [vmem:[%s226 + $0x140] sm:$0xf] %vm8584, %v8408
      %8666 = vst.msk [vmem:[%s226 + $0x144] sm:$0xf] %vm8584, %v8409
      %8667 = vst.msk [vmem:[%s226 + $0x148] sm:$0xf] %vm8584, %v8410
      %8668 = vst.msk [vmem:[%s226 + $0x14c] sm:$0xf] %vm8584, %v8411
      %8669 = vst.msk [vmem:[%s226 + $0x150] sm:$0xf] %vm8584, %v8412
      %8670 = vst.msk [vmem:[%s226 + $0x154] sm:$0xf] %vm8584, %v8413
      %8671 = vst.msk [vmem:[%s226 + $0x158] sm:$0xf] %vm8584, %v8414
      %8672 = vst.msk [vmem:[%s226 + $0x15c] sm:$0xf] %vm8584, %v8415
      %8673 = vst.msk [vmem:[%s226 + $0x160] sm:$0xf] %vm8584, %v8416
      %8674 = vst.msk [vmem:[%s226 + $0x164] sm:$0xf] %vm8584, %v8417
      %8675 = vst.msk [vmem:[%s226 + $0x168] sm:$0xf] %vm8584, %v8418
      %8676 = vst.msk [vmem:[%s226 + $0x16c] sm:$0xf] %vm8584, %v8419
      %8677 = vst.msk [vmem:[%s226 + $0x170] sm:$0xf] %vm8584, %v8420
      %8678 = vst.msk [vmem:[%s226 + $0x174] sm:$0xf] %vm8584, %v8421
      %8679 = vst.msk [vmem:[%s226 + $0x178] sm:$0xf] %vm8584, %v8422
      %8680 = vst.msk [vmem:[%s226 + $0x17c] sm:$0xf] %vm8584, %v8423
      %8681 = vst.msk [vmem:[%s226 + $0x180] sm:$0xf] %vm8584, %v8424
      %8682 = vst.msk [vmem:[%s226 + $0x184] sm:$0xf] %vm8584, %v8425
      %8683 = vst.msk [vmem:[%s226 + $0x188] sm:$0xf] %vm8584, %v8426
      %8684 = vst.msk [vmem:[%s226 + $0x18c] sm:$0xf] %vm8584, %v8427
      %8685 = vst.msk [vmem:[%s226 + $0x190] sm:$0xf] %vm8584, %v8428
      %8686 = vst.msk [vmem:[%s226 + $0x194] sm:$0xf] %vm8584, %v8429
      %8687 = vst.msk [vmem:[%s226 + $0x198] sm:$0xf] %vm8584, %v8430
      %8688 = vst.msk [vmem:[%s226 + $0x19c] sm:$0xf] %vm8584, %v8431
      %8689 = vst.msk [vmem:[%s226 + $0x1a0] sm:$0xf] %vm8584, %v8432
      %8690 = vst.msk [vmem:[%s226 + $0x1a4] sm:$0xf] %vm8584, %v8433
      %8691 = vst.msk [vmem:[%s226 + $0x1a8] sm:$0xf] %vm8584, %v8434
      %8692 = vst.msk [vmem:[%s226 + $0x1ac] sm:$0xf] %vm8584, %v8435
      %8693 = vst.msk [vmem:[%s226 + $0x1b0] sm:$0xf] %vm8584, %v8436
      %8694 = vst.msk [vmem:[%s226 + $0x1b4] sm:$0xf] %vm8584, %v8437
      %8695 = vst.msk [vmem:[%s226 + $0x1b8] sm:$0xf] %vm8584, %v8438
      %8696 = vst.msk [vmem:[%s226 + $0x1bc] sm:$0xf] %vm8584, %v8439
      %8697 = vst.msk [vmem:[%s226 + $0x1c0] sm:$0xf] %vm8584, %v8440
      %8698 = vst.msk [vmem:[%s226 + $0x1c4] sm:$0xf] %vm8584, %v8441
      %8699 = vst.msk [vmem:[%s226 + $0x1c8] sm:$0xf] %vm8584, %v8442
      %8700 = vst.msk [vmem:[%s226 + $0x1cc] sm:$0xf] %vm8584, %v8443
      %8701 = vst.msk [vmem:[%s226 + $0x1d0] sm:$0xf] %vm8584, %v8444
      %8702 = vst.msk [vmem:[%s226 + $0x1d4] sm:$0xf] %vm8584, %v8445
      %8703 = vst.msk [vmem:[%s226 + $0x1d8] sm:$0xf] %vm8584, %v8446
      %8704 = vst.msk [vmem:[%s226 + $0x1dc] sm:$0xf] %vm8584, %v8447
      %8705 = vst.msk [vmem:[%s226 + $0x1e0] sm:$0xf] %vm8584, %v8448
      %8706 = vst.msk [vmem:[%s226 + $0x1e4] sm:$0xf] %vm8584, %v8449
      %8707 = vst.msk [vmem:[%s226 + $0x1e8] sm:$0xf] %vm8584, %v8450
      %8708 = vst.msk [vmem:[%s226 + $0x1ec] sm:$0xf] %vm8584, %v8451
      %8709 = vst.msk [vmem:[%s226 + $0x1f0] sm:$0xf] %vm8584, %v8452
      %8710 = vst.msk [vmem:[%s226 + $0x1f4] sm:$0xf] %vm8584, %v8453
      %8711 = vst.msk [vmem:[%s226 + $0x1f8] sm:$0xf] %vm8584, %v8454
      %8712 = vst.msk [vmem:[%s226 + $0x1fc] sm:$0xf] %vm8584, %v8455
      %8713 = vst.msk [vmem:[%s226 + $0x200] sm:$0xf] %vm8584, %v8456
      %8714 = vst.msk [vmem:[%s226 + $0x204] sm:$0xf] %vm8584, %v8457
      %8715 = vst.msk [vmem:[%s226 + $0x208] sm:$0xf] %vm8584, %v8458
      %8716 = vst.msk [vmem:[%s226 + $0x20c] sm:$0xf] %vm8584, %v8459
      %8717 = vst.msk [vmem:[%s226 + $0x210] sm:$0xf] %vm8584, %v8460
      %8718 = vst.msk [vmem:[%s226 + $0x214] sm:$0xf] %vm8584, %v8461
      %8719 = vst.msk [vmem:[%s226 + $0x218] sm:$0xf] %vm8584, %v8462
      %8720 = vst.msk [vmem:[%s226 + $0x21c] sm:$0xf] %vm8584, %v8463
      %8721 = vst.msk [vmem:[%s226 + $0x220] sm:$0xf] %vm8584, %v8464
      %8722 = vst.msk [vmem:[%s226 + $0x224] sm:$0xf] %vm8584, %v8465
      %8723 = vst.msk [vmem:[%s226 + $0x228] sm:$0xf] %vm8584, %v8466
      %8724 = vst.msk [vmem:[%s226 + $0x22c] sm:$0xf] %vm8584, %v8467
      %8725 = vst.msk [vmem:[%s226 + $0x230] sm:$0xf] %vm8584, %v8468
      %8726 = vst.msk [vmem:[%s226 + $0x234] sm:$0xf] %vm8584, %v8469
      %8727 = vst.msk [vmem:[%s226 + $0x238] sm:$0xf] %vm8584, %v8470
      %8728 = vst.msk [vmem:[%s226 + $0x23c] sm:$0xf] %vm8584, %v8471
      %8729 = vst.msk [vmem:[%s226 + $0x240] sm:$0xf] %vm8584, %v8472
      %8730 = vst.msk [vmem:[%s226 + $0x244] sm:$0xf] %vm8584, %v8473
      %8731 = vst.msk [vmem:[%s226 + $0x248] sm:$0xf] %vm8584, %v8474
      %8732 = vst.msk [vmem:[%s226 + $0x24c] sm:$0xf] %vm8584, %v8475
      %8733 = vst.msk [vmem:[%s226 + $0x250] sm:$0xf] %vm8584, %v8476
      %8734 = vst.msk [vmem:[%s226 + $0x254] sm:$0xf] %vm8584, %v8477
      %8735 = vst.msk [vmem:[%s226 + $0x258] sm:$0xf] %vm8584, %v8478
      %8736 = vst.msk [vmem:[%s226 + $0x25c] sm:$0xf] %vm8584, %v8479
      %8737 = vst.msk [vmem:[%s226 + $0x260] sm:$0xf] %vm8584, %v8480
      %8738 = vst.msk [vmem:[%s226 + $0x264] sm:$0xf] %vm8584, %v8481
      %8739 = vst.msk [vmem:[%s226 + $0x268] sm:$0xf] %vm8584, %v8482
      %8740 = vst.msk [vmem:[%s226 + $0x26c] sm:$0xf] %vm8584, %v8483
      %8741 = vst.msk [vmem:[%s226 + $0x270] sm:$0xf] %vm8584, %v8484
      %8742 = vst.msk [vmem:[%s226 + $0x274] sm:$0xf] %vm8584, %v8485
      %8743 = vst.msk [vmem:[%s226 + $0x278] sm:$0xf] %vm8584, %v8486
      %8744 = vst.msk [vmem:[%s226 + $0x27c] sm:$0xf] %vm8584, %v8487
      %8745 = vst.msk [vmem:[%s226 + $0x280] sm:$0xf] %vm8584, %v8488
      %8746 = vst.msk [vmem:[%s226 + $0x284] sm:$0xf] %vm8584, %v8489
      %8747 = vst.msk [vmem:[%s226 + $0x288] sm:$0xf] %vm8584, %v8490
      %8748 = vst.msk [vmem:[%s226 + $0x28c] sm:$0xf] %vm8584, %v8491
      %8749 = vst.msk [vmem:[%s226 + $0x290] sm:$0xf] %vm8584, %v8492
      %8750 = vst.msk [vmem:[%s226 + $0x294] sm:$0xf] %vm8584, %v8493
      %8751 = vst.msk [vmem:[%s226 + $0x298] sm:$0xf] %vm8584, %v8494
      %8752 = vst.msk [vmem:[%s226 + $0x29c] sm:$0xf] %vm8584, %v8495
      %8753 = vst.msk [vmem:[%s226 + $0x2a0] sm:$0xf] %vm8584, %v8496
      %8754 = vst.msk [vmem:[%s226 + $0x2a4] sm:$0xf] %vm8584, %v8497
      %8755 = vst.msk [vmem:[%s226 + $0x2a8] sm:$0xf] %vm8584, %v8498
      %8756 = vst.msk [vmem:[%s226 + $0x2ac] sm:$0xf] %vm8584, %v8499
      %8757 = vst.msk [vmem:[%s226 + $0x2b0] sm:$0xf] %vm8584, %v8500
      %8758 = vst.msk [vmem:[%s226 + $0x2b4] sm:$0xf] %vm8584, %v8501
      %8759 = vst.msk [vmem:[%s226 + $0x2b8] sm:$0xf] %vm8584, %v8502
      %8760 = vst.msk [vmem:[%s226 + $0x2bc] sm:$0xf] %vm8584, %v8503
      %8761 = vst.msk [vmem:[%s226 + $0x2c0] sm:$0xf] %vm8584, %v8504
      %8762 = vst.msk [vmem:[%s226 + $0x2c4] sm:$0xf] %vm8584, %v8505
      %8763 = vst.msk [vmem:[%s226 + $0x2c8] sm:$0xf] %vm8584, %v8506
      %8764 = vst.msk [vmem:[%s226 + $0x2cc] sm:$0xf] %vm8584, %v8507
      %8765 = vst.msk [vmem:[%s226 + $0x2d0] sm:$0xf] %vm8584, %v8508
      %8766 = vst.msk [vmem:[%s226 + $0x2d4] sm:$0xf] %vm8584, %v8509
      %8767 = vst.msk [vmem:[%s226 + $0x2d8] sm:$0xf] %vm8584, %v8510
      %8768 = vst.msk [vmem:[%s226 + $0x2dc] sm:$0xf] %vm8584, %v8511
      %8769 = vst.msk [vmem:[%s226 + $0x2e0] sm:$0xf] %vm8584, %v8512
      %8770 = vst.msk [vmem:[%s226 + $0x2e4] sm:$0xf] %vm8584, %v8513
      %8771 = vst.msk [vmem:[%s226 + $0x2e8] sm:$0xf] %vm8584, %v8514
      %8772 = vst.msk [vmem:[%s226 + $0x2ec] sm:$0xf] %vm8584, %v8515
      %8773 = vst.msk [vmem:[%s226 + $0x2f0] sm:$0xf] %vm8584, %v8516
      %8774 = vst.msk [vmem:[%s226 + $0x2f4] sm:$0xf] %vm8584, %v8517
      %8775 = vst.msk [vmem:[%s226 + $0x2f8] sm:$0xf] %vm8584, %v8518
      %8776 = vst.msk [vmem:[%s226 + $0x2fc] sm:$0xf] %vm8584, %v8519
      %8777 = vst.msk [vmem:[%s226 + $0x300] sm:$0xf] %vm8584, %v8520
      %8778 = vst.msk [vmem:[%s226 + $0x304] sm:$0xf] %vm8584, %v8521
      %8779 = vst.msk [vmem:[%s226 + $0x308] sm:$0xf] %vm8584, %v8522
      %8780 = vst.msk [vmem:[%s226 + $0x30c] sm:$0xf] %vm8584, %v8523
      %8781 = vst.msk [vmem:[%s226 + $0x310] sm:$0xf] %vm8584, %v8524
      %8782 = vst.msk [vmem:[%s226 + $0x314] sm:$0xf] %vm8584, %v8525
      %8783 = vst.msk [vmem:[%s226 + $0x318] sm:$0xf] %vm8584, %v8526
      %8784 = vst.msk [vmem:[%s226 + $0x31c] sm:$0xf] %vm8584, %v8527
      %8785 = vst.msk [vmem:[%s226 + $0x320] sm:$0xf] %vm8584, %v8528
      %8786 = vst.msk [vmem:[%s226 + $0x324] sm:$0xf] %vm8584, %v8529
      %8787 = vst.msk [vmem:[%s226 + $0x328] sm:$0xf] %vm8584, %v8530
      %8788 = vst.msk [vmem:[%s226 + $0x32c] sm:$0xf] %vm8584, %v8531
      %8789 = vst.msk [vmem:[%s226 + $0x330] sm:$0xf] %vm8584, %v8532
      %8790 = vst.msk [vmem:[%s226 + $0x334] sm:$0xf] %vm8584, %v8533
      %8791 = vst.msk [vmem:[%s226 + $0x338] sm:$0xf] %vm8584, %v8534
      %8792 = vst.msk [vmem:[%s226 + $0x33c] sm:$0xf] %vm8584, %v8535
      %8793 = vst.msk [vmem:[%s226 + $0x340] sm:$0xf] %vm8584, %v8536
      %8794 = vst.msk [vmem:[%s226 + $0x344] sm:$0xf] %vm8584, %v8537
      %8795 = vst.msk [vmem:[%s226 + $0x348] sm:$0xf] %vm8584, %v8538
      %8796 = vst.msk [vmem:[%s226 + $0x34c] sm:$0xf] %vm8584, %v8539
      %8797 = vst.msk [vmem:[%s226 + $0x350] sm:$0xf] %vm8584, %v8540
      %8798 = vst.msk [vmem:[%s226 + $0x354] sm:$0xf] %vm8584, %v8541
      %8799 = vst.msk [vmem:[%s226 + $0x358] sm:$0xf] %vm8584, %v8542
      %8800 = vst.msk [vmem:[%s226 + $0x35c] sm:$0xf] %vm8584, %v8543
      %8801 = vst.msk [vmem:[%s226 + $0x360] sm:$0xf] %vm8584, %v8544
      %8802 = vst.msk [vmem:[%s226 + $0x364] sm:$0xf] %vm8584, %v8545
      %8803 = vst.msk [vmem:[%s226 + $0x368] sm:$0xf] %vm8584, %v8546
      %8804 = vst.msk [vmem:[%s226 + $0x36c] sm:$0xf] %vm8584, %v8547
      %8805 = vst.msk [vmem:[%s226 + $0x370] sm:$0xf] %vm8584, %v8548
      %8806 = vst.msk [vmem:[%s226 + $0x374] sm:$0xf] %vm8584, %v8549
      %8807 = vst.msk [vmem:[%s226 + $0x378] sm:$0xf] %vm8584, %v8550
      %8808 = vst.msk [vmem:[%s226 + $0x37c] sm:$0xf] %vm8584, %v8551
      %8809 = vst.msk [vmem:[%s226 + $0x380] sm:$0xf] %vm8584, %v8552
      %8810 = vst.msk [vmem:[%s226 + $0x384] sm:$0xf] %vm8584, %v8553
      %8811 = vst.msk [vmem:[%s226 + $0x388] sm:$0xf] %vm8584, %v8554
      %8812 = vst.msk [vmem:[%s226 + $0x38c] sm:$0xf] %vm8584, %v8555
      %8813 = vst.msk [vmem:[%s226 + $0x390] sm:$0xf] %vm8584, %v8556
      %8814 = vst.msk [vmem:[%s226 + $0x394] sm:$0xf] %vm8584, %v8557
      %8815 = vst.msk [vmem:[%s226 + $0x398] sm:$0xf] %vm8584, %v8558
      %8816 = vst.msk [vmem:[%s226 + $0x39c] sm:$0xf] %vm8584, %v8559
      %8817 = vst.msk [vmem:[%s226 + $0x3a0] sm:$0xf] %vm8584, %v8560
      %8818 = vst.msk [vmem:[%s226 + $0x3a4] sm:$0xf] %vm8584, %v8561
      %8819 = vst.msk [vmem:[%s226 + $0x3a8] sm:$0xf] %vm8584, %v8562
      %8820 = vst.msk [vmem:[%s226 + $0x3ac] sm:$0xf] %vm8584, %v8563
      %8821 = vst.msk [vmem:[%s226 + $0x3b0] sm:$0xf] %vm8584, %v8564
      %8822 = vst.msk [vmem:[%s226 + $0x3b4] sm:$0xf] %vm8584, %v8565
      %8823 = vst.msk [vmem:[%s226 + $0x3b8] sm:$0xf] %vm8584, %v8566
      %8824 = vst.msk [vmem:[%s226 + $0x3bc] sm:$0xf] %vm8584, %v8567
      %8825 = vst.msk [vmem:[%s226 + $0x3c0] sm:$0xf] %vm8584, %v8568
      %8826 = vst.msk [vmem:[%s226 + $0x3c4] sm:$0xf] %vm8584, %v8569
      %8827 = vst.msk [vmem:[%s226 + $0x3c8] sm:$0xf] %vm8584, %v8570
      %8828 = vst.msk [vmem:[%s226 + $0x3cc] sm:$0xf] %vm8584, %v8571
      %8829 = vst.msk [vmem:[%s226 + $0x3d0] sm:$0xf] %vm8584, %v8572
      %8830 = vst.msk [vmem:[%s226 + $0x3d4] sm:$0xf] %vm8584, %v8573
      %8831 = vst.msk [vmem:[%s226 + $0x3d8] sm:$0xf] %vm8584, %v8574
      %8832 = vst.msk [vmem:[%s226 + $0x3dc] sm:$0xf] %vm8584, %v8575
      %8833 = vst.msk [vmem:[%s226 + $0x3e0] sm:$0xf] %vm8584, %v8576
      %8834 = vst.msk [vmem:[%s226 + $0x3e4] sm:$0xf] %vm8584, %v8577
      %8835 = vst.msk [vmem:[%s226 + $0x3e8] sm:$0xf] %vm8584, %v8578
      %8836 = vst.msk [vmem:[%s226 + $0x3ec] sm:$0xf] %vm8584, %v8579
      %8837 = vst.msk [vmem:[%s226 + $0x3f0] sm:$0xf] %vm8584, %v8580
      %8838 = vst.msk [vmem:[%s226 + $0x3f4] sm:$0xf] %vm8584, %v8581
      %8839 = vst.msk [vmem:[%s226 + $0x3f8] sm:$0xf] %vm8584, %v8582
      %8840 = vst.msk [vmem:[%s226 + $0x3fc] sm:$0xf] %vm8584, %v8583
      %s8841 = smul.u32 256, %s16
      %p8842 = scmp.lt.s32.totalorder %s8841, 511
      %s8843 = scalar_select %p8842, %s8841, 511
      %s8844 = smul.addr %s8843, 4
      %s8845 = scalar_lea.vmem %s5, %s8844
      // Predicated region
      $region41: #{tpu_custom_call.1} parent=39 // pred_check
        %p8846 = pneg %p144
      $region42: #{tpu_custom_call.1} parent=39 // pred_check_branch
        %8848 = sbr.rel (%p8846) target = $region44
      $region43: #{tpu_custom_call.1} parent=39 // pred_region
        %s8849 = smul.u32 256, %s16
      $region44: #{tpu_custom_call.1} parent=39 // pred_fallthru
        _
    $region40: #{tpu_custom_call.1} parent=5 // pred_fallthru
      _
    %p8850 = scmp.le.s32.totalorder 2, %s11
    // Predicated region
    $region45: #{tpu_custom_call.1} parent=5 // pred_check
      %p8851 = pneg %p8850
    $region46: #{tpu_custom_call.1} parent=5 // pred_check_branch
      %8853 = sbr.rel (%p8851) target = $region48
    $region47: #{tpu_custom_call.1} parent=5 // pred_region
      %s8854 = ssub.s32 %s11, 2
      // Predicated region
      $region49: #{tpu_custom_call.1} parent=47 // pred_check
        %p8855 = pneg %p150
      $region50: #{tpu_custom_call.1} parent=47 // pred_check_branch
        %8857 = sbr.rel (%p8855) target = $region52
      $region51: #{tpu_custom_call.1} parent=47 // pred_region
        %s8858 = smul.u32 256, %s17
        %p8859 = scmp.lt.s32.totalorder %s8858, 511
        %s8860 = scalar_select %p8859, %s8858, 511
        %s8861 = smul.addr %s8860, 4
        %s8862 = scalar_lea.vmem %s5, %s8861
      $region52: #{tpu_custom_call.1} parent=47 // pred_fallthru
        _
    $region48: #{tpu_custom_call.1} parent=5 // pred_fallthru
      _
  $region6: #{tpu_custom_call.1} parent=0 // loop_footer
    %s15 = sadd.s32 1, %s11
  $region7: #{tpu_custom_call.1} parent=0 // loop_footer_branch
    %10 = sbr.rel target = $region3
  $region8: #{tpu_custom_call.1} parent=0 // loop_exit
    _

</llo_original>
